<compile_context>
chip_gen: v5e
topology: v5e:2x2
jax: 0.10.0
libtpu: 0.0.40
codegen_flags: <defaults>
</compile_context>

<pallas_src>
import jax
import jax.numpy as jnp
from jax.experimental import pallas as pl
from jax.experimental.pallas import tpu as pltpu

IN_DIM = 784
HIDDEN = 512          # original_dim
NUM_EXPERTS = 10
NUM_CLASSES = 10
NC_PAD = 128                      # lane-dense classifier output width (sliced to 10 outside)
RPAD = 128                        # lane-dense routing-logits width (sliced to 10 outside)
VMEM_LIMIT = 16 * 1024 * 1024     # actual need is < 10 MiB even at tb=512


# ---------------------------------------------------------------------------
# Pass 1: layer1 (+ optional bf16 inputs) and fp32 routing logits.
# Grid = (batch_tiles,).  Both outputs are lane-dense (HIDDEN / RPAD wide).
# ---------------------------------------------------------------------------
def layer1_routing_kernel(x_ref, w1_ref, b1_ref, wr_ref, br_ref, h1_ref, logits_ref):
    # layer1: fp32 accumulation regardless of input dtype
    h1 = jnp.dot(x_ref[...], w1_ref[...],
                 preferred_element_type=jnp.float32) + b1_ref[...]
    h1 = jnp.maximum(h1, 0.0)
    h1_ref[...] = h1.astype(jnp.bfloat16)        # bf16 copy feeds the expert matmuls

    # router matmul stays fp32 on the fp32 accumulator (argmax parity with torch)
    logits_ref[...] = jnp.dot(h1, wr_ref[...],
                              preferred_element_type=jnp.float32) + br_ref[...]


# ---------------------------------------------------------------------------
# Pass 2: one row-block per grid step, each block belongs to exactly one expert
# (rows were grouped & padded per expert on the host).  Expert MLP + classifier
# fused; no accumulator, no masking, no dead grid steps.
# ---------------------------------------------------------------------------
def expert_classifier_kernel(bexp_ref, h1_ref, we1_ref, be1_ref, we2_ref, be2_ref,
                             w3_ref, b3_ref, out_ref):
    del bexp_ref                                  # only consumed by the index_maps
    h1 = h1_ref[...]                              # (tb2, HIDDEN) bf16
    eh = jnp.dot(h1, we1_ref[0],
                 preferred_element_type=jnp.float32) + be1_ref[0]
    eh = jnp.maximum(eh, 0.0)
    # TODO(synk): Dropout(p=0.2) treated as identity (eval/inference parity).
    eo = jnp.dot(eh.astype(jnp.bfloat16), we2_ref[0],
                 preferred_element_type=jnp.float32) + be2_ref[0]
    # layer3: ReLU + Linear(512, 10)  (lane-padded to 128 for dense stores)
    h3 = jnp.maximum(eo, 0.0).astype(jnp.bfloat16)
    out_ref[...] = jnp.dot(h3, w3_ref[...],
                           preferred_element_type=jnp.float32) + b3_ref[...]


# ---------------------------------------------------------------------------
# Wrapper
# ---------------------------------------------------------------------------
def mlp_with_switch(x, params, *, tb1=256, tb2=256, layer1_bf16=False):
    """Forward pass of MLPWithSwitch.

    tb1 / tb2: batch row-block sizes for pass 1 / pass 2 (multiples of 8, the
    last dim stays full-width).  Recommended: 256 on v5e, 384-512 on v6e,
    256-384 on v7x (also keep tb small enough that there are >= 2 blocks so
    both v7x TensorCores get work).  layer1_bf16=True casts x/w1 to bf16 for
    the layer-1 matmul (big win on v5e); routing still uses the fp32
    accumulator, but h1 rounding can in rare near-ties flip the argmax vs the
    pure-fp32 reference, so the default is False.
    """
    (w1, b1, wr, br, we1, be1, we2, be2, w3, b3) = params
    B = x.shape[0]
    E = we1.shape[0]

    # ---------------- pass 1: layer1 + routing logits ----------------------
    Bp = -(-B // tb1) * tb1
    T1 = Bp // tb1
    x_p = jnp.pad(x, ((0, Bp - B), (0, 0))) if Bp != B else x
    if layer1_bf16:
        x_in, w1_in = x_p.astype(jnp.bfloat16), w1.astype(jnp.bfloat16)
    else:
        x_in, w1_in = x_p, w1
    wr_p = jnp.zeros((HIDDEN, RPAD), jnp.float32).at[:, :E].set(wr)
    br_p = jnp.zeros((1, RPAD), jnp.float32).at[:, :E].set(br)

    h1, logits_p = pl.pallas_call(
        layer1_routing_kernel,
        out_shape=(jax.ShapeDtypeStruct((Bp, HIDDEN), jnp.bfloat16),
                   jax.ShapeDtypeStruct((Bp, RPAD), jnp.float32)),
        grid_spec=pltpu.PrefetchScalarGridSpec(
            num_scalar_prefetch=0,
            grid=(T1,),
            in_specs=[
                pl.BlockSpec((tb1, IN_DIM), lambda i: (i, 0)),        # x
                pl.BlockSpec((IN_DIM, HIDDEN), lambda i: (0, 0)),     # w1
                pl.BlockSpec((1, HIDDEN), lambda i: (0, 0)),          # b1
                pl.BlockSpec((HIDDEN, RPAD), lambda i: (0, 0)),       # wr (fp32, padded)
                pl.BlockSpec((1, RPAD), lambda i: (0, 0)),            # br (padded)
            ],
            out_specs=[
                pl.BlockSpec((tb1, HIDDEN), lambda i: (i, 0)),        # h1 (bf16)
                pl.BlockSpec((tb1, RPAD), lambda i: (i, 0)),          # routing logits
            ],
        ),
        compiler_params=pltpu.CompilerParams(
            dimension_semantics=("parallel",),
            vmem_limit_bytes=VMEM_LIMIT),
    )(x_in, w1_in, b1, wr_p, br_p)

    # routing argmax (fp32, first-occurrence tie-break == torch.argmax)
    eid = jnp.argmax(logits_p[:B, :E], axis=1).astype(jnp.int32)

    # ------ group rows by expert: O(B) counting sort + per-expert padding ---
    onehot = (eid[:, None] == jnp.arange(E, dtype=jnp.int32)[None, :]).astype(jnp.int32)
    counts = jnp.sum(onehot, axis=0)                               # rows per expert
    blocks_per_e = (counts + tb2 - 1) // tb2                       # row blocks per expert
    blk_start = jnp.concatenate(
        [jnp.zeros((1,), jnp.int32), jnp.cumsum(blocks_per_e)[:-1].astype(jnp.int32)])
    rank = (jnp.cumsum(onehot, axis=0) - onehot)[jnp.arange(B), eid]  # rank within expert
    dst = blk_start[eid] * tb2 + rank                              # grouped-layout row index

    T2 = -(-B // tb2) + E            # static upper bound: sum_e ceil(n_e/tb2) <= B//tb2 + E
    R2 = T2 * tb2
    # block -> expert schedule; unused tail blocks reuse the last expert (DMA elided)
    bexp = jnp.minimum(
        jnp.searchsorted(jnp.cumsum(blocks_per_e),
                         jnp.arange(T2, dtype=jnp.int32), side='right'),
        E - 1).astype(jnp.int32)

    # single scatter of h1 into the padded, expert-grouped layout (bf16)
    h1_g = jnp.zeros((R2, HIDDEN), jnp.bfloat16).at[dst].set(h1[:B])

    # bf16 weights for MXU-native matmuls; biases reshaped so block last-2 dims comply
    we1_bf = we1.astype(jnp.bfloat16)
    we2_bf = we2.astype(jnp.bfloat16)
    be1_r = be1.reshape(E, 1, HIDDEN)
    be2_r = be2.reshape(E, 1, HIDDEN)
    w3_p = jnp.zeros((HIDDEN, NC_PAD), jnp.bfloat16).at[:, :NUM_CLASSES].set(
        w3.astype(jnp.bfloat16))
    b3_p = jnp.zeros((1, NC_PAD), jnp.float32).at[:, :NUM_CLASSES].set(b3)

    # ---------------- pass 2: expert MLP + classifier, 1-D block grid -------
    out_g = pl.pallas_call(
        expert_classifier_kernel,
        out_shape=jax.ShapeDtypeStruct((R2, NC_PAD), jnp.float32),
        grid_spec=pltpu.PrefetchScalarGridSpec(
            num_scalar_prefetch=1,               # bexp: flat 1-D (T2,) int32 in SMEM
            grid=(T2,),
            in_specs=[
                pl.BlockSpec((tb2, HIDDEN), lambda p, be: (p, 0)),          # h1 grouped
                pl.BlockSpec((1, HIDDEN, HIDDEN),
                             lambda p, be: (be[p], 0, 0)),                  # we1 (bf16)
                pl.BlockSpec((1, 1, HIDDEN), lambda p, be: (be[p], 0, 0)),  # be1
                pl.BlockSpec((1, HIDDEN, HIDDEN),
                             lambda p, be: (be[p], 0, 0)),                  # we2 (bf16)
                pl.BlockSpec((1, 1, HIDDEN), lambda p, be: (be[p], 0, 0)),  # be2
                pl.BlockSpec((HIDDEN, NC_PAD), lambda p, be: (0, 0)),       # w3 (padded)
                pl.BlockSpec((1, NC_PAD), lambda p, be: (0, 0)),            # b3 (padded)
            ],
            out_specs=pl.BlockSpec((tb2, NC_PAD), lambda p, be: (p, 0)),
        ),
        compiler_params=pltpu.CompilerParams(
            dimension_semantics=("parallel",),
            vmem_limit_bytes=VMEM_LIMIT),
    )(bexp, h1_g, we1_bf, be1_r, we2_bf, be2_r, w3_p, b3_p)

    # single gather back to original row order; drop class-lane padding
    out = out_g[dst][:, :NUM_CLASSES]
    return out, eid


# ---------------------------------------------------------------------------
# Params + pure-JAX reference (fp32)
# ---------------------------------------------------------------------------
def init_params(key):
    ks = jax.random.split(key, 8)
    s = 0.1  # expert trunc_normal scale from SwitchLayer._init_weights
    w1 = jax.random.normal(ks[0], (IN_DIM, HIDDEN), jnp.float32) / jnp.sqrt(IN_DIM)
    b1 = 0.01 * jax.random.normal(ks[1], (1, HIDDEN), jnp.float32)
    wr = jax.random.normal(ks[2], (HIDDEN, NUM_EXPERTS), jnp.float32) / jnp.sqrt(HIDDEN)
    br = 0.01 * jax.random.normal(ks[3], (1, NUM_EXPERTS), jnp.float32)
    we1 = jax.random.normal(ks[4], (NUM_EXPERTS, HIDDEN, HIDDEN),
                            jnp.float32) * (s / jnp.sqrt(HIDDEN))
    be1 = jnp.zeros((NUM_EXPERTS, HIDDEN), jnp.float32)   # experts: bias init = 0
    we2 = jax.random.normal(ks[5], (NUM_EXPERTS, HIDDEN, HIDDEN),
                            jnp.float32) * (s / jnp.sqrt(HIDDEN))
    be2 = jnp.zeros((NUM_EXPERTS, HIDDEN), jnp.float32)
    w3 = jax.random.normal(ks[6], (HIDDEN, NUM_CLASSES), jnp.float32) / jnp.sqrt(HIDDEN)
    b3 = 0.01 * jax.random.normal(ks[7], (1, NUM_CLASSES), jnp.float32)
    return (w1, b1, wr, br, we1, be1, we2, be2, w3, b3)


def reference(x, params):
    (w1, b1, wr, br, we1, be1, we2, be2, w3, b3) = params
    h1 = jnp.maximum(x @ w1 + b1, 0.0)
    logits = h1 @ wr + br
    eid = jnp.argmax(logits, axis=1).astype(jnp.int32)
    eh = jnp.maximum(jnp.einsum('bi,bih->bh', h1, we1[eid]) + be1[eid], 0.0)
    eo = jnp.einsum('bh,bho->bo', eh, we2[eid]) + be2[eid]
    out = jnp.maximum(eo, 0.0) @ w3 + b3
    return out, eid


if __name__ == "__main__":
    key = jax.random.PRNGKey(0)
    kx, kp = jax.random.split(key)
    B = 16
    x = jax.random.normal(kx, (B, IN_DIM), jnp.float32)
    params = init_params(kp)

    fwd = jax.jit(mlp_with_switch)               # fuses the host-side grouping glue
    out, eid = fwd(x, params)
    jax.block_until_ready((out, eid))

    ref_out, ref_eid = reference(x, params)
    assert out.shape == (B, NUM_CLASSES) and eid.shape == (B,)
    assert bool(jnp.all(eid == ref_eid)), "expert routing mismatch"
    assert bool(jnp.allclose(out, ref_out, atol=1e-2, rtol=1e-2)), "output mismatch"
    print("KERNEL_OK")
</pallas_src>

<mosaic_0001>
module attributes {stable_mosaic.version = 11 : i64} {
  func.func @layer1_routing_kernel(%arg0: i32, %arg1: memref<256x784xf32, #tpu.memory_space<vmem>>, %arg2: memref<784x512xf32, #tpu.memory_space<vmem>>, %arg3: memref<1x512xf32, #tpu.memory_space<vmem>>, %arg4: memref<512x128xf32, #tpu.memory_space<vmem>>, %arg5: memref<1x128xf32, #tpu.memory_space<vmem>>, %arg6: memref<256x512xbf16, #tpu.memory_space<vmem>>, %arg7: memref<256x128xf32, #tpu.memory_space<vmem>>) attributes {dimension_semantics = [#tpu.dimension_semantics<parallel>], iteration_bounds = array<i64: 1>, scalar_prefetch = 0 : i64, scratch_operands = 0 : i64, tpu.core_type = #tpu.core_type<tc>, window_params = [{transform_indices = @transform_0, window_bounds = array<i64: 256, 784>}, {pipeline_mode = #tpu.pipeline_mode<synchronous>, transform_indices = @transform_1, window_bounds = array<i64: 784, 512>}, {pipeline_mode = #tpu.pipeline_mode<synchronous>, transform_indices = @transform_2, window_bounds = array<i64: 1, 512>}, {pipeline_mode = #tpu.pipeline_mode<synchronous>, transform_indices = @transform_3, window_bounds = array<i64: 512, 128>}, {pipeline_mode = #tpu.pipeline_mode<synchronous>, transform_indices = @transform_4, window_bounds = array<i64: 1, 128>}, {transform_indices = @transform_5, window_bounds = array<i64: 256, 512>}, {transform_indices = @transform_6, window_bounds = array<i64: 256, 128>}]} {
    %c0 = arith.constant 0 : index
    %c0_0 = arith.constant 0 : index
    %0 = vector.load %arg1[%c0, %c0_0] : memref<256x784xf32, #tpu.memory_space<vmem>>, vector<256x784xf32>
    %c0_1 = arith.constant 0 : index
    %c0_2 = arith.constant 0 : index
    %1 = vector.load %arg2[%c0_1, %c0_2] : memref<784x512xf32, #tpu.memory_space<vmem>>, vector<784x512xf32>
    %cst = arith.constant dense<0.000000e+00> : vector<256x512xf32>
    %2 = tpu.matmul %0, %1, %cst {dimension_numbers = #tpu.dot_dimension_numbers<[1], [0], [0], [1], [0, 0, 1, 1], [], []>} : vector<256x784xf32>, vector<784x512xf32>, vector<256x512xf32> -> vector<256x512xf32>
    %c0_3 = arith.constant 0 : index
    %c0_4 = arith.constant 0 : index
    %3 = vector.load %arg3[%c0_3, %c0_4] : memref<1x512xf32, #tpu.memory_space<vmem>>, vector<1x512xf32>
    %4 = vector.broadcast %3 : vector<1x512xf32> to vector<256x512xf32>
    %5 = arith.addf %2, %4 : vector<256x512xf32>
    %cst_5 = arith.constant 0.000000e+00 : f32
    %6 = vector.broadcast %cst_5 : f32 to vector<256x512xf32>
    %7 = arith.maximumf %5, %6 : vector<256x512xf32>
    %8 = arith.truncf %7 : vector<256x512xf32> to vector<256x512xbf16>
    %c0_6 = arith.constant 0 : index
    %c0_7 = arith.constant 0 : index
    %9 = vector.load %arg6[%c0_6, %c0_7] : memref<256x512xbf16, #tpu.memory_space<vmem>>, vector<256x512xbf16>
    tpu.vector_store %arg6[%c0_6, %c0_7], %8 {strides = array<i32>} : memref<256x512xbf16, #tpu.memory_space<vmem>>, vector<256x512xbf16>,
    %c0_8 = arith.constant 0 : index
    %c0_9 = arith.constant 0 : index
    %10 = vector.load %arg4[%c0_8, %c0_9] : memref<512x128xf32, #tpu.memory_space<vmem>>, vector<512x128xf32>
    %cst_10 = arith.constant dense<0.000000e+00> : vector<256x128xf32>
    %11 = tpu.matmul %7, %10, %cst_10 {dimension_numbers = #tpu.dot_dimension_numbers<[1], [0], [0], [1], [0, 0, 1, 1], [], []>} : vector<256x512xf32>, vector<512x128xf32>, vector<256x128xf32> -> vector<256x128xf32>
    %c0_11 = arith.constant 0 : index
    %c0_12 = arith.constant 0 : index
    %12 = vector.load %arg5[%c0_11, %c0_12] : memref<1x128xf32, #tpu.memory_space<vmem>>, vector<1x128xf32>
    %13 = vector.broadcast %12 : vector<1x128xf32> to vector<256x128xf32>
    %14 = arith.addf %11, %13 : vector<256x128xf32>
    %c0_13 = arith.constant 0 : index
    %c0_14 = arith.constant 0 : index
    %15 = vector.load %arg7[%c0_13, %c0_14] : memref<256x128xf32, #tpu.memory_space<vmem>>, vector<256x128xf32>
    tpu.vector_store %arg7[%c0_13, %c0_14], %14 {strides = array<i32>} : memref<256x128xf32, #tpu.memory_space<vmem>>, vector<256x128xf32>,
    return
  }
  func.func @transform_0(%arg0: i32) -> (i32, i32) {
    %c0_i32 = arith.constant 0 : i32
    %c0_i32_0 = arith.constant 0 : i32
    return %arg0, %c0_i32 : i32, i32
  }
  func.func @transform_1(%arg0: i32) -> (i32, i32) {
    %c0_i32 = arith.constant 0 : i32
    %c0_i32_0 = arith.constant 0 : i32
    %c0_i32_1 = arith.constant 0 : i32
    return %c0_i32, %c0_i32_0 : i32, i32
  }
  func.func @transform_2(%arg0: i32) -> (i32, i32) {
    %c0_i32 = arith.constant 0 : i32
    %c0_i32_0 = arith.constant 0 : i32
    %c0_i32_1 = arith.constant 0 : i32
    return %c0_i32, %c0_i32_0 : i32, i32
  }
  func.func @transform_3(%arg0: i32) -> (i32, i32) {
    %c0_i32 = arith.constant 0 : i32
    %c0_i32_0 = arith.constant 0 : i32
    %c0_i32_1 = arith.constant 0 : i32
    return %c0_i32, %c0_i32_0 : i32, i32
  }
  func.func @transform_4(%arg0: i32) -> (i32, i32) {
    %c0_i32 = arith.constant 0 : i32
    %c0_i32_0 = arith.constant 0 : i32
    %c0_i32_1 = arith.constant 0 : i32
    return %c0_i32, %c0_i32_0 : i32, i32
  }
  func.func @transform_5(%arg0: i32) -> (i32, i32) {
    %c0_i32 = arith.constant 0 : i32
    %c0_i32_0 = arith.constant 0 : i32
    return %arg0, %c0_i32 : i32, i32
  }
  func.func @transform_6(%arg0: i32) -> (i32, i32) {
    %c0_i32 = arith.constant 0 : i32
    %c0_i32_0 = arith.constant 0 : i32
    return %arg0, %c0_i32 : i32, i32
  }
}

module attributes {stable_mosaic.version = 11 : i64} {
  func.func @expert_classifier_kernel(%arg0: i32, %arg1: memref<11xi32, #tpu.memory_space<smem>>, %arg2: memref<256x512xbf16, #tpu.memory_space<vmem>>, %arg3: memref<1x512x512xbf16, #tpu.memory_space<vmem>>, %arg4: memref<1x1x512xf32, #tpu.memory_space<vmem>>, %arg5: memref<1x512x512xbf16, #tpu.memory_space<vmem>>, %arg6: memref<1x1x512xf32, #tpu.memory_space<vmem>>, %arg7: memref<512x128xbf16, #tpu.memory_space<vmem>>, %arg8: memref<1x128xf32, #tpu.memory_space<vmem>>, %arg9: memref<256x128xf32, #tpu.memory_space<vmem>>) attributes {dimension_semantics = [#tpu.dimension_semantics<parallel>], iteration_bounds = array<i64: 11>, scalar_prefetch = 1 : i64, scratch_operands = 0 : i64, tpu.core_type = #tpu.core_type<tc>, window_params = [{transform_indices = @transform_0, window_bounds = array<i64: 256, 512>}, {transform_indices = @transform_1, window_bounds = array<i64: 1, 512, 512>}, {transform_indices = @transform_2, window_bounds = array<i64: 1, 1, 512>}, {transform_indices = @transform_3, window_bounds = array<i64: 1, 512, 512>}, {transform_indices = @transform_4, window_bounds = array<i64: 1, 1, 512>}, {pipeline_mode = #tpu.pipeline_mode<synchronous>, transform_indices = @transform_5, window_bounds = array<i64: 512, 128>}, {pipeline_mode = #tpu.pipeline_mode<synchronous>, transform_indices = @transform_6, window_bounds = array<i64: 1, 128>}, {transform_indices = @transform_7, window_bounds = array<i64: 256, 128>}]} {
    %c0 = arith.constant 0 : index
    %c0_0 = arith.constant 0 : index
    %0 = vector.load %arg2[%c0, %c0_0] : memref<256x512xbf16, #tpu.memory_space<vmem>>, vector<256x512xbf16>
    %c0_1 = arith.constant 0 : index
    %c0_2 = arith.constant 0 : index
    %c0_3 = arith.constant 0 : index
    %1 = vector.load %arg3[%c0_1, %c0_2, %c0_3] : memref<1x512x512xbf16, #tpu.memory_space<vmem>>, vector<1x512x512xbf16>
    %2 = vector.shape_cast %1 : vector<1x512x512xbf16> to vector<512x512xbf16>
    %cst = arith.constant dense<0.000000e+00> : vector<256x512xf32>
    %3 = tpu.matmul %0, %2, %cst {dimension_numbers = #tpu.dot_dimension_numbers<[1], [0], [0], [1], [0, 0, 1, 1], [], []>} : vector<256x512xbf16>, vector<512x512xbf16>, vector<256x512xf32> -> vector<256x512xf32>
    %c0_4 = arith.constant 0 : index
    %c0_5 = arith.constant 0 : index
    %c0_6 = arith.constant 0 : index
    %4 = vector.load %arg4[%c0_4, %c0_5, %c0_6] : memref<1x1x512xf32, #tpu.memory_space<vmem>>, vector<1x1x512xf32>
    %5 = vector.shape_cast %4 : vector<1x1x512xf32> to vector<1x512xf32>
    %6 = vector.broadcast %5 : vector<1x512xf32> to vector<256x512xf32>
    %7 = arith.addf %3, %6 : vector<256x512xf32>
    %cst_7 = arith.constant 0.000000e+00 : f32
    %8 = vector.broadcast %cst_7 : f32 to vector<256x512xf32>
    %9 = arith.maximumf %7, %8 : vector<256x512xf32>
    %10 = arith.truncf %9 : vector<256x512xf32> to vector<256x512xbf16>
    %c0_8 = arith.constant 0 : index
    %c0_9 = arith.constant 0 : index
    %c0_10 = arith.constant 0 : index
    %11 = vector.load %arg5[%c0_8, %c0_9, %c0_10] : memref<1x512x512xbf16, #tpu.memory_space<vmem>>, vector<1x512x512xbf16>
    %12 = vector.shape_cast %11 : vector<1x512x512xbf16> to vector<512x512xbf16>
    %cst_11 = arith.constant dense<0.000000e+00> : vector<256x512xf32>
    %13 = tpu.matmul %10, %12, %cst_11 {dimension_numbers = #tpu.dot_dimension_numbers<[1], [0], [0], [1], [0, 0, 1, 1], [], []>} : vector<256x512xbf16>, vector<512x512xbf16>, vector<256x512xf32> -> vector<256x512xf32>
    %c0_12 = arith.constant 0 : index
    %c0_13 = arith.constant 0 : index
    %c0_14 = arith.constant 0 : index
    %14 = vector.load %arg6[%c0_12, %c0_13, %c0_14] : memref<1x1x512xf32, #tpu.memory_space<vmem>>, vector<1x1x512xf32>
    %15 = vector.shape_cast %14 : vector<1x1x512xf32> to vector<1x512xf32>
    %16 = vector.broadcast %15 : vector<1x512xf32> to vector<256x512xf32>
    %17 = arith.addf %13, %16 : vector<256x512xf32>
    %cst_15 = arith.constant 0.000000e+00 : f32
    %18 = vector.broadcast %cst_15 : f32 to vector<256x512xf32>
    %19 = arith.maximumf %17, %18 : vector<256x512xf32>
    %20 = arith.truncf %19 : vector<256x512xf32> to vector<256x512xbf16>
    %c0_16 = arith.constant 0 : index
    %c0_17 = arith.constant 0 : index
    %21 = vector.load %arg7[%c0_16, %c0_17] : memref<512x128xbf16, #tpu.memory_space<vmem>>, vector<512x128xbf16>
    %cst_18 = arith.constant dense<0.000000e+00> : vector<256x128xf32>
    %22 = tpu.matmul %20, %21, %cst_18 {dimension_numbers = #tpu.dot_dimension_numbers<[1], [0], [0], [1], [0, 0, 1, 1], [], []>} : vector<256x512xbf16>, vector<512x128xbf16>, vector<256x128xf32> -> vector<256x128xf32>
    %c0_19 = arith.constant 0 : index
    %c0_20 = arith.constant 0 : index
    %23 = vector.load %arg8[%c0_19, %c0_20] : memref<1x128xf32, #tpu.memory_space<vmem>>, vector<1x128xf32>
    %24 = vector.broadcast %23 : vector<1x128xf32> to vector<256x128xf32>
    %25 = arith.addf %22, %24 : vector<256x128xf32>
    %c0_21 = arith.constant 0 : index
    %c0_22 = arith.constant 0 : index
    %26 = vector.load %arg9[%c0_21, %c0_22] : memref<256x128xf32, #tpu.memory_space<vmem>>, vector<256x128xf32>
    tpu.vector_store %arg9[%c0_21, %c0_22], %25 {strides = array<i32>} : memref<256x128xf32, #tpu.memory_space<vmem>>, vector<256x128xf32>,
    return
  }
  func.func @transform_0(%arg0: i32, %arg1: memref<11xi32, #tpu.memory_space<smem>>) -> (i32, i32) {
    %c0_i32 = arith.constant 0 : i32
    %c0_i32_0 = arith.constant 0 : i32
    return %arg0, %c0_i32 : i32, i32
  }
  func.func @transform_1(%arg0: i32, %arg1: memref<11xi32, #tpu.memory_space<smem>>) -> (i32, i32, i32) {
    %0 = arith.index_cast %arg0 : i32 to index
    %1 = memref.load %arg1[%0] : memref<11xi32, #tpu.memory_space<smem>>
    %c0_i32 = arith.constant 0 : i32
    %c0_i32_0 = arith.constant 0 : i32
    %c0_i32_1 = arith.constant 0 : i32
    return %1, %c0_i32, %c0_i32_0 : i32, i32, i32
  }
  func.func @transform_2(%arg0: i32, %arg1: memref<11xi32, #tpu.memory_space<smem>>) -> (i32, i32, i32) {
    %0 = arith.index_cast %arg0 : i32 to index
    %1 = memref.load %arg1[%0] : memref<11xi32, #tpu.memory_space<smem>>
    %c0_i32 = arith.constant 0 : i32
    %c0_i32_0 = arith.constant 0 : i32
    %c0_i32_1 = arith.constant 0 : i32
    return %1, %c0_i32, %c0_i32_0 : i32, i32, i32
  }
  func.func @transform_3(%arg0: i32, %arg1: memref<11xi32, #tpu.memory_space<smem>>) -> (i32, i32, i32) {
    %0 = arith.index_cast %arg0 : i32 to index
    %1 = memref.load %arg1[%0] : memref<11xi32, #tpu.memory_space<smem>>
    %c0_i32 = arith.constant 0 : i32
    %c0_i32_0 = arith.constant 0 : i32
    %c0_i32_1 = arith.constant 0 : i32
    return %1, %c0_i32, %c0_i32_0 : i32, i32, i32
  }
  func.func @transform_4(%arg0: i32, %arg1: memref<11xi32, #tpu.memory_space<smem>>) -> (i32, i32, i32) {
    %0 = arith.index_cast %arg0 : i32 to index
    %1 = memref.load %arg1[%0] : memref<11xi32, #tpu.memory_space<smem>>
    %c0_i32 = arith.constant 0 : i32
    %c0_i32_0 = arith.constant 0 : i32
    %c0_i32_1 = arith.constant 0 : i32
    return %1, %c0_i32, %c0_i32_0 : i32, i32, i32
  }
  func.func @transform_5(%arg0: i32, %arg1: memref<11xi32, #tpu.memory_space<smem>>) -> (i32, i32) {
    %c0_i32 = arith.constant 0 : i32
    %c0_i32_0 = arith.constant 0 : i32
    %c0_i32_1 = arith.constant 0 : i32
    return %c0_i32, %c0_i32_0 : i32, i32
  }
  func.func @transform_6(%arg0: i32, %arg1: memref<11xi32, #tpu.memory_space<smem>>) -> (i32, i32) {
    %c0_i32 = arith.constant 0 : i32
    %c0_i32_0 = arith.constant 0 : i32
    %c0_i32_1 = arith.constant 0 : i32
    return %c0_i32, %c0_i32_0 : i32, i32
  }
  func.func @transform_7(%arg0: i32, %arg1: memref<11xi32, #tpu.memory_space<smem>>) -> (i32, i32) {
    %c0_i32 = arith.constant 0 : i32
    %c0_i32_0 = arith.constant 0 : i32
    return %arg0, %c0_i32 : i32, i32
  }
}

</mosaic_0001>

<llo_original>
// kernel: custom-call.2
$region0: #{custom-call.2}
  %s0 = inlined_call_operand.vmem [shape: u32[11], index: 0, kind: output, shape index: {}]

// kernel: mlp_with_switch.2
$region0: #{mlp_with_switch.2}
  #allocation0 [shape = 'u32[]', space=smem, size = 0x4, offset = 0x4, fixed_abs, tag = 'smem constant byte address 0x4 - core index']
  #allocation1 [shape = 'u32[72,128]{1,0:T(1,128)}', space=vmem, size = 0x9000, scoped, tag = 'internal scratch']
  %s0 = inlined_call_operand.vmem [shape: f32[256,784], index: 0, kind: input, shape index: {}]
  %s1 = inlined_call_operand.hbm [shape: f32[784,512], index: 1, kind: input, shape index: {}]
  %s2 = inlined_call_operand.hbm [shape: f32[1,512], index: 2, kind: input, shape index: {}]
  %s3 = inlined_call_operand.vmem [shape: f32[512,128], index: 3, kind: input, shape index: {}]
  %s4 = inlined_call_operand.vmem [shape: f32[1,128], index: 4, kind: input, shape index: {}]
  %s5 = inlined_call_operand.vmem [shape: bf16[256,512], index: 5, kind: output, shape index: {0}]
  %s6 = inlined_call_operand.vmem [shape: f32[256,128], index: 6, kind: output, shape index: {1}]
  %7 = xla_tuple %s5, %s6
  %s8 = sld [smem:[#allocation0]]
  $region46: #{mlp_with_switch.2} parent=0
    _
  %s10 = ssub.s32 1, %s8
  %s11 = scalar_select 0, %s10, %s8
  $region1: #{mlp_with_switch.2} parent=0
    #allocation2 [shape = 'u8[1605632]{0}', space=vmem, size = 0x188000, scoped, tag = 'input window, operand 1, single buffered']
    #allocation3 [shape = 's32[1]{0}', space=sflag, size = 0x4, scoped, tag = 'scoped memory for mlp_with_switch.2']
    #allocation4 [shape = 'u8[2048]{0}', space=vmem, size = 0x800, scoped, tag = 'input window, operand 2, single buffered']
    #allocation5 [shape = 's32[1]{0}', space=sflag, size = 0x4, scoped, tag = 'scoped memory for mlp_with_switch.2']
    %12 = vsyncpa [#allocation3], 0
    %13 = vsyncpa [#allocation5], 0
    // Predicated region
    $region2: #{mlp_with_switch.2} parent=1 // pred_check
      _
    $region3: #{mlp_with_switch.2} parent=1 // pred_check_branch
      %15 = sbr.rel (0) target = $region5
    $region4: #{mlp_with_switch.2} parent=1 // pred_region
      _
    $region5: #{mlp_with_switch.2} parent=1 // pred_fallthru
      _
    // Predicated region
    $region6: #{mlp_with_switch.2} parent=1 // pred_check
      _
    $region7: #{mlp_with_switch.2} parent=1 // pred_check_branch
      %17 = sbr.rel (0) target = $region9
    $region8: #{mlp_with_switch.2} parent=1 // pred_region
      %19 = vsyncadd [#allocation3], 0
      %s20 = sshll.u32 %s1, 4
      %s21 = int_to_ptr.hbm [resolvable:$true] %s20
      %s22 = sshll.u32 [#allocation2], 4
      %s23 = int_to_ptr.vmem [resolvable:$true] %s22
      %28 = dma.hbm_to_vmem [thread:$0]  %s21, 50176, %s23, [#allocation3], 512, 512, 32
    $region9: #{mlp_with_switch.2} parent=1 // pred_fallthru
      _
    // Predicated region
    $region10: #{mlp_with_switch.2} parent=1 // pred_check
      _
    $region11: #{mlp_with_switch.2} parent=1 // pred_check_branch
      %30 = sbr.rel (0) target = $region13
    $region12: #{mlp_with_switch.2} parent=1 // pred_region
      %32 = vsyncadd [#allocation5], 0
      %s34 = sshll.u32 %s2, 4
      %s35 = int_to_ptr.hbm [resolvable:$true] %s34
      %s36 = sshll.u32 [#allocation4], 4
      %s37 = int_to_ptr.vmem [resolvable:$true] %s36
      %39 = dma.hbm_to_vmem [thread:$0]  %s35, 64, %s37, [#allocation5]
    $region13: #{mlp_with_switch.2} parent=1 // pred_fallthru
      _
    // Predicated region
    $region14: #{mlp_with_switch.2} parent=1 // pred_check
      _
    $region15: #{mlp_with_switch.2} parent=1 // pred_check_branch
      %41 = sbr.rel (0) target = $region17
    $region16: #{mlp_with_switch.2} parent=1 // pred_region
      _
    $region17: #{mlp_with_switch.2} parent=1 // pred_fallthru
      _
    // Predicated region
    $region18: #{mlp_with_switch.2} parent=1 // pred_check
      _
    $region19: #{mlp_with_switch.2} parent=1 // pred_check_branch
      %43 = sbr.rel (0) target = $region21
    $region20: #{mlp_with_switch.2} parent=1 // pred_region
      _
    $region21: #{mlp_with_switch.2} parent=1 // pred_fallthru
      _
    // Predicated region
    $region22: #{mlp_with_switch.2} parent=1 // pred_check
      _
    $region23: #{mlp_with_switch.2} parent=1 // pred_check_branch
      %45 = sbr.rel (0) target = $region25
    $region24: #{mlp_with_switch.2} parent=1 // pred_region
      %47 = dma.done [#allocation3], 50176
    $region25: #{mlp_with_switch.2} parent=1 // pred_fallthru
      _
    // Predicated region
    $region26: #{mlp_with_switch.2} parent=1 // pred_check
      _
    $region27: #{mlp_with_switch.2} parent=1 // pred_check_branch
      %49 = sbr.rel (0) target = $region29
    $region28: #{mlp_with_switch.2} parent=1 // pred_region
      %51 = dma.done [#allocation5], 64
    $region29: #{mlp_with_switch.2} parent=1 // pred_fallthru
      _
    %v52 = vld [vmem:[%s0] sm:$0xff]
    %v53 = vld [vmem:[%s0 + $0x8] sm:$0xff]
    %v54 = vld [vmem:[%s0 + $0x10] sm:$0xff]
    %v55 = vld [vmem:[%s0 + $0x18] sm:$0xff]
    %v56 = vld [vmem:[%s0 + $0x20] sm:$0xff]
    %v57 = vld [vmem:[%s0 + $0x28] sm:$0xff]
    %v58 = vld [vmem:[%s0 + $0x30] sm:$0xff]
    %v59 = vld [vmem:[%s0 + $0x38] sm:$0xff]
    %v60 = vld [vmem:[%s0 + $0x40] sm:$0xff]
    %v61 = vld [vmem:[%s0 + $0x48] sm:$0xff]
    %v62 = vld [vmem:[%s0 + $0x50] sm:$0xff]
    %v63 = vld [vmem:[%s0 + $0x58] sm:$0xff]
    %v64 = vld [vmem:[%s0 + $0x60] sm:$0xff]
    %v65 = vld [vmem:[%s0 + $0x68] sm:$0xff]
    %v66 = vld [vmem:[%s0 + $0x70] sm:$0xff]
    %v67 = vld [vmem:[%s0 + $0x78] sm:$0xff]
    %v68 = vld [vmem:[%s0 + $0x80] sm:$0xff]
    %v69 = vld [vmem:[%s0 + $0x88] sm:$0xff]
    %v70 = vld [vmem:[%s0 + $0x90] sm:$0xff]
    %v71 = vld [vmem:[%s0 + $0x98] sm:$0xff]
    %v72 = vld [vmem:[%s0 + $0xa0] sm:$0xff]
    %v73 = vld [vmem:[%s0 + $0xa8] sm:$0xff]
    %v74 = vld [vmem:[%s0 + $0xb0] sm:$0xff]
    %v75 = vld [vmem:[%s0 + $0xb8] sm:$0xff]
    %v76 = vld [vmem:[%s0 + $0xc0] sm:$0xff]
    %v77 = vld [vmem:[%s0 + $0xc8] sm:$0xff]
    %v78 = vld [vmem:[%s0 + $0xd0] sm:$0xff]
    %v79 = vld [vmem:[%s0 + $0xd8] sm:$0xff]
    %v80 = vld [vmem:[%s0 + $0xe0] sm:$0xff]
    %v81 = vld [vmem:[%s0 + $0xe8] sm:$0xff]
    %v82 = vld [vmem:[%s0 + $0xf0] sm:$0xff]
    %v83 = vld [vmem:[%s0 + $0xf8] sm:$0xff]
    %v84 = vld [vmem:[%s0 + $0x100] sm:$0xff]
    %v85 = vld [vmem:[%s0 + $0x108] sm:$0xff]
    %v86 = vld [vmem:[%s0 + $0x110] sm:$0xff]
    %v87 = vld [vmem:[%s0 + $0x118] sm:$0xff]
    %v88 = vld [vmem:[%s0 + $0x120] sm:$0xff]
    %v89 = vld [vmem:[%s0 + $0x128] sm:$0xff]
    %v90 = vld [vmem:[%s0 + $0x130] sm:$0xff]
    %v91 = vld [vmem:[%s0 + $0x138] sm:$0xff]
    %v92 = vld [vmem:[%s0 + $0x140] sm:$0xff]
    %v93 = vld [vmem:[%s0 + $0x148] sm:$0xff]
    %v94 = vld [vmem:[%s0 + $0x150] sm:$0xff]
    %v95 = vld [vmem:[%s0 + $0x158] sm:$0xff]
    %v96 = vld [vmem:[%s0 + $0x160] sm:$0xff]
    %v97 = vld [vmem:[%s0 + $0x168] sm:$0xff]
    %v98 = vld [vmem:[%s0 + $0x170] sm:$0xff]
    %v99 = vld [vmem:[%s0 + $0x178] sm:$0xff]
    %v100 = vld [vmem:[%s0 + $0x180] sm:$0xff]
    %v101 = vld [vmem:[%s0 + $0x188] sm:$0xff]
    %v102 = vld [vmem:[%s0 + $0x190] sm:$0xff]
    %v103 = vld [vmem:[%s0 + $0x198] sm:$0xff]
    %v104 = vld [vmem:[%s0 + $0x1a0] sm:$0xff]
    %v105 = vld [vmem:[%s0 + $0x1a8] sm:$0xff]
    %v106 = vld [vmem:[%s0 + $0x1b0] sm:$0xff]
    %v107 = vld [vmem:[%s0 + $0x1b8] sm:$0xff]
    %v108 = vld [vmem:[%s0 + $0x1c0] sm:$0xff]
    %v109 = vld [vmem:[%s0 + $0x1c8] sm:$0xff]
    %v110 = vld [vmem:[%s0 + $0x1d0] sm:$0xff]
    %v111 = vld [vmem:[%s0 + $0x1d8] sm:$0xff]
    %v112 = vld [vmem:[%s0 + $0x1e0] sm:$0xff]
    %v113 = vld [vmem:[%s0 + $0x1e8] sm:$0xff]
    %v114 = vld [vmem:[%s0 + $0x1f0] sm:$0xff]
    %v115 = vld [vmem:[%s0 + $0x1f8] sm:$0xff]
    %v116 = vld [vmem:[%s0 + $0x200] sm:$0xff]
    %v117 = vld [vmem:[%s0 + $0x208] sm:$0xff]
    %v118 = vld [vmem:[%s0 + $0x210] sm:$0xff]
    %v119 = vld [vmem:[%s0 + $0x218] sm:$0xff]
    %v120 = vld [vmem:[%s0 + $0x220] sm:$0xff]
    %v121 = vld [vmem:[%s0 + $0x228] sm:$0xff]
    %v122 = vld [vmem:[%s0 + $0x230] sm:$0xff]
    %v123 = vld [vmem:[%s0 + $0x238] sm:$0xff]
    %v124 = vld [vmem:[%s0 + $0x240] sm:$0xff]
    %v125 = vld [vmem:[%s0 + $0x248] sm:$0xff]
    %v126 = vld [vmem:[%s0 + $0x250] sm:$0xff]
    %v127 = vld [vmem:[%s0 + $0x258] sm:$0xff]
    %v128 = vld [vmem:[%s0 + $0x260] sm:$0xff]
    %v129 = vld [vmem:[%s0 + $0x268] sm:$0xff]
    %v130 = vld [vmem:[%s0 + $0x270] sm:$0xff]
    %v131 = vld [vmem:[%s0 + $0x278] sm:$0xff]
    %v132 = vld [vmem:[%s0 + $0x280] sm:$0xff]
    %v133 = vld [vmem:[%s0 + $0x288] sm:$0xff]
    %v134 = vld [vmem:[%s0 + $0x290] sm:$0xff]
    %v135 = vld [vmem:[%s0 + $0x298] sm:$0xff]
    %v136 = vld [vmem:[%s0 + $0x2a0] sm:$0xff]
    %v137 = vld [vmem:[%s0 + $0x2a8] sm:$0xff]
    %v138 = vld [vmem:[%s0 + $0x2b0] sm:$0xff]
    %v139 = vld [vmem:[%s0 + $0x2b8] sm:$0xff]
    %v140 = vld [vmem:[%s0 + $0x2c0] sm:$0xff]
    %v141 = vld [vmem:[%s0 + $0x2c8] sm:$0xff]
    %v142 = vld [vmem:[%s0 + $0x2d0] sm:$0xff]
    %v143 = vld [vmem:[%s0 + $0x2d8] sm:$0xff]
    %v144 = vld [vmem:[%s0 + $0x2e0] sm:$0xff]
    %v145 = vld [vmem:[%s0 + $0x2e8] sm:$0xff]
    %v146 = vld [vmem:[%s0 + $0x2f0] sm:$0xff]
    %v147 = vld [vmem:[%s0 + $0x2f8] sm:$0xff]
    %v148 = vld [vmem:[%s0 + $0x300] sm:$0xff]
    %v149 = vld [vmem:[%s0 + $0x308] sm:$0xff]
    %v150 = vld [vmem:[%s0 + $0x310] sm:$0xff]
    %v151 = vld [vmem:[%s0 + $0x318] sm:$0xff]
    %v152 = vld [vmem:[%s0 + $0x320] sm:$0xff]
    %v153 = vld [vmem:[%s0 + $0x328] sm:$0xff]
    %v154 = vld [vmem:[%s0 + $0x330] sm:$0xff]
    %v155 = vld [vmem:[%s0 + $0x338] sm:$0xff]
    %v156 = vld [vmem:[%s0 + $0x340] sm:$0xff]
    %v157 = vld [vmem:[%s0 + $0x348] sm:$0xff]
    %v158 = vld [vmem:[%s0 + $0x350] sm:$0xff]
    %v159 = vld [vmem:[%s0 + $0x358] sm:$0xff]
    %v160 = vld [vmem:[%s0 + $0x360] sm:$0xff]
    %v161 = vld [vmem:[%s0 + $0x368] sm:$0xff]
    %v162 = vld [vmem:[%s0 + $0x370] sm:$0xff]
    %v163 = vld [vmem:[%s0 + $0x378] sm:$0xff]
    %v164 = vld [vmem:[%s0 + $0x380] sm:$0xff]
    %v165 = vld [vmem:[%s0 + $0x388] sm:$0xff]
    %v166 = vld [vmem:[%s0 + $0x390] sm:$0xff]
    %v167 = vld [vmem:[%s0 + $0x398] sm:$0xff]
    %v168 = vld [vmem:[%s0 + $0x3a0] sm:$0xff]
    %v169 = vld [vmem:[%s0 + $0x3a8] sm:$0xff]
    %v170 = vld [vmem:[%s0 + $0x3b0] sm:$0xff]
    %v171 = vld [vmem:[%s0 + $0x3b8] sm:$0xff]
    %v172 = vld [vmem:[%s0 + $0x3c0] sm:$0xff]
    %v173 = vld [vmem:[%s0 + $0x3c8] sm:$0xff]
    %v174 = vld [vmem:[%s0 + $0x3d0] sm:$0xff]
    %v175 = vld [vmem:[%s0 + $0x3d8] sm:$0xff]
    %v176 = vld [vmem:[%s0 + $0x3e0] sm:$0xff]
    %v177 = vld [vmem:[%s0 + $0x3e8] sm:$0xff]
    %v178 = vld [vmem:[%s0 + $0x3f0] sm:$0xff]
    %v179 = vld [vmem:[%s0 + $0x3f8] sm:$0xff]
    %v180 = vld [vmem:[%s0 + $0x400] sm:$0xff]
    %v181 = vld [vmem:[%s0 + $0x408] sm:$0xff]
    %v182 = vld [vmem:[%s0 + $0x410] sm:$0xff]
    %v183 = vld [vmem:[%s0 + $0x418] sm:$0xff]
    %v184 = vld [vmem:[%s0 + $0x420] sm:$0xff]
    %v185 = vld [vmem:[%s0 + $0x428] sm:$0xff]
    %v186 = vld [vmem:[%s0 + $0x430] sm:$0xff]
    %v187 = vld [vmem:[%s0 + $0x438] sm:$0xff]
    %v188 = vld [vmem:[%s0 + $0x440] sm:$0xff]
    %v189 = vld [vmem:[%s0 + $0x448] sm:$0xff]
    %v190 = vld [vmem:[%s0 + $0x450] sm:$0xff]
    %v191 = vld [vmem:[%s0 + $0x458] sm:$0xff]
    %v192 = vld [vmem:[%s0 + $0x460] sm:$0xff]
    %v193 = vld [vmem:[%s0 + $0x468] sm:$0xff]
    %v194 = vld [vmem:[%s0 + $0x470] sm:$0xff]
    %v195 = vld [vmem:[%s0 + $0x478] sm:$0xff]
    %v196 = vld [vmem:[%s0 + $0x480] sm:$0xff]
    %v197 = vld [vmem:[%s0 + $0x488] sm:$0xff]
    %v198 = vld [vmem:[%s0 + $0x490] sm:$0xff]
    %v199 = vld [vmem:[%s0 + $0x498] sm:$0xff]
    %v200 = vld [vmem:[%s0 + $0x4a0] sm:$0xff]
    %v201 = vld [vmem:[%s0 + $0x4a8] sm:$0xff]
    %v202 = vld [vmem:[%s0 + $0x4b0] sm:$0xff]
    %v203 = vld [vmem:[%s0 + $0x4b8] sm:$0xff]
    %v204 = vld [vmem:[%s0 + $0x4c0] sm:$0xff]
    %v205 = vld [vmem:[%s0 + $0x4c8] sm:$0xff]
    %v206 = vld [vmem:[%s0 + $0x4d0] sm:$0xff]
    %v207 = vld [vmem:[%s0 + $0x4d8] sm:$0xff]
    %v208 = vld [vmem:[%s0 + $0x4e0] sm:$0xff]
    %v209 = vld [vmem:[%s0 + $0x4e8] sm:$0xff]
    %v210 = vld [vmem:[%s0 + $0x4f0] sm:$0xff]
    %v211 = vld [vmem:[%s0 + $0x4f8] sm:$0xff]
    %v212 = vld [vmem:[%s0 + $0x500] sm:$0xff]
    %v213 = vld [vmem:[%s0 + $0x508] sm:$0xff]
    %v214 = vld [vmem:[%s0 + $0x510] sm:$0xff]
    %v215 = vld [vmem:[%s0 + $0x518] sm:$0xff]
    %v216 = vld [vmem:[%s0 + $0x520] sm:$0xff]
    %v217 = vld [vmem:[%s0 + $0x528] sm:$0xff]
    %v218 = vld [vmem:[%s0 + $0x530] sm:$0xff]
    %v219 = vld [vmem:[%s0 + $0x538] sm:$0xff]
    %v220 = vld [vmem:[%s0 + $0x540] sm:$0xff]
    %v221 = vld [vmem:[%s0 + $0x548] sm:$0xff]
    %v222 = vld [vmem:[%s0 + $0x550] sm:$0xff]
    %v223 = vld [vmem:[%s0 + $0x558] sm:$0xff]
    %v224 = vld [vmem:[%s0 + $0x560] sm:$0xff]
    %v225 = vld [vmem:[%s0 + $0x568] sm:$0xff]
    %v226 = vld [vmem:[%s0 + $0x570] sm:$0xff]
    %v227 = vld [vmem:[%s0 + $0x578] sm:$0xff]
    %v228 = vld [vmem:[%s0 + $0x580] sm:$0xff]
    %v229 = vld [vmem:[%s0 + $0x588] sm:$0xff]
    %v230 = vld [vmem:[%s0 + $0x590] sm:$0xff]
    %v231 = vld [vmem:[%s0 + $0x598] sm:$0xff]
    %v232 = vld [vmem:[%s0 + $0x5a0] sm:$0xff]
    %v233 = vld [vmem:[%s0 + $0x5a8] sm:$0xff]
    %v234 = vld [vmem:[%s0 + $0x5b0] sm:$0xff]
    %v235 = vld [vmem:[%s0 + $0x5b8] sm:$0xff]
    %v236 = vld [vmem:[%s0 + $0x5c0] sm:$0xff]
    %v237 = vld [vmem:[%s0 + $0x5c8] sm:$0xff]
    %v238 = vld [vmem:[%s0 + $0x5d0] sm:$0xff]
    %v239 = vld [vmem:[%s0 + $0x5d8] sm:$0xff]
    %v240 = vld [vmem:[%s0 + $0x5e0] sm:$0xff]
    %v241 = vld [vmem:[%s0 + $0x5e8] sm:$0xff]
    %v242 = vld [vmem:[%s0 + $0x5f0] sm:$0xff]
    %v243 = vld [vmem:[%s0 + $0x5f8] sm:$0xff]
    %v244 = vld [vmem:[%s0 + $0x600] sm:$0xff]
    %v245 = vld [vmem:[%s0 + $0x608] sm:$0xff]
    %v246 = vld [vmem:[%s0 + $0x610] sm:$0xff]
    %v247 = vld [vmem:[%s0 + $0x618] sm:$0xff]
    %v248 = vld [vmem:[%s0 + $0x620] sm:$0xff]
    %v249 = vld [vmem:[%s0 + $0x628] sm:$0xff]
    %v250 = vld [vmem:[%s0 + $0x630] sm:$0xff]
    %v251 = vld [vmem:[%s0 + $0x638] sm:$0xff]
    %v252 = vld [vmem:[%s0 + $0x640] sm:$0xff]
    %v253 = vld [vmem:[%s0 + $0x648] sm:$0xff]
    %v254 = vld [vmem:[%s0 + $0x650] sm:$0xff]
    %v255 = vld [vmem:[%s0 + $0x658] sm:$0xff]
    %v256 = vld [vmem:[%s0 + $0x660] sm:$0xff]
    %v257 = vld [vmem:[%s0 + $0x668] sm:$0xff]
    %v258 = vld [vmem:[%s0 + $0x670] sm:$0xff]
    %v259 = vld [vmem:[%s0 + $0x678] sm:$0xff]
    %v260 = vld [vmem:[%s0 + $0x680] sm:$0xff]
    %v261 = vld [vmem:[%s0 + $0x688] sm:$0xff]
    %v262 = vld [vmem:[%s0 + $0x690] sm:$0xff]
    %v263 = vld [vmem:[%s0 + $0x698] sm:$0xff]
    %v264 = vld [vmem:[%s0 + $0x6a0] sm:$0xff]
    %v265 = vld [vmem:[%s0 + $0x6a8] sm:$0xff]
    %v266 = vld [vmem:[%s0 + $0x6b0] sm:$0xff]
    %v267 = vld [vmem:[%s0 + $0x6b8] sm:$0xff]
    %v268 = vld [vmem:[%s0 + $0x6c0] sm:$0xff]
    %v269 = vld [vmem:[%s0 + $0x6c8] sm:$0xff]
    %v270 = vld [vmem:[%s0 + $0x6d0] sm:$0xff]
    %v271 = vld [vmem:[%s0 + $0x6d8] sm:$0xff]
    %v272 = vld [vmem:[%s0 + $0x6e0] sm:$0xff]
    %v273 = vld [vmem:[%s0 + $0x6e8] sm:$0xff]
    %v274 = vld [vmem:[%s0 + $0x6f0] sm:$0xff]
    %v275 = vld [vmem:[%s0 + $0x6f8] sm:$0xff]
    %v276 = vld [vmem:[#allocation2] sm:$0xff]
    %v277 = vld [vmem:[#allocation2 + $0x8] sm:$0xff]
    %v278 = vld [vmem:[#allocation2 + $0x10] sm:$0xff]
    %v279 = vld [vmem:[#allocation2 + $0x18] sm:$0xff]
    %v280 = vld [vmem:[#allocation2 + $0x20] sm:$0xff]
    %v281 = vld [vmem:[#allocation2 + $0x28] sm:$0xff]
    %v282 = vld [vmem:[#allocation2 + $0x30] sm:$0xff]
    %v283 = vld [vmem:[#allocation2 + $0x38] sm:$0xff]
    %v284 = vld [vmem:[#allocation2 + $0x40] sm:$0xff]
    %v285 = vld [vmem:[#allocation2 + $0x48] sm:$0xff]
    %v286 = vld [vmem:[#allocation2 + $0x50] sm:$0xff]
    %v287 = vld [vmem:[#allocation2 + $0x58] sm:$0xff]
    %v288 = vld [vmem:[#allocation2 + $0x60] sm:$0xff]
    %v289 = vld [vmem:[#allocation2 + $0x68] sm:$0xff]
    %v290 = vld [vmem:[#allocation2 + $0x70] sm:$0xff]
    %v291 = vld [vmem:[#allocation2 + $0x78] sm:$0xff]
    %v292 = vld [vmem:[#allocation2 + $0x80] sm:$0xff]
    %v293 = vld [vmem:[#allocation2 + $0x88] sm:$0xff]
    %v294 = vld [vmem:[#allocation2 + $0x90] sm:$0xff]
    %v295 = vld [vmem:[#allocation2 + $0x98] sm:$0xff]
    %v296 = vld [vmem:[#allocation2 + $0xa0] sm:$0xff]
    %v297 = vld [vmem:[#allocation2 + $0xa8] sm:$0xff]
    %v298 = vld [vmem:[#allocation2 + $0xb0] sm:$0xff]
    %v299 = vld [vmem:[#allocation2 + $0xb8] sm:$0xff]
    %v300 = vld [vmem:[#allocation2 + $0xc0] sm:$0xff]
    %v301 = vld [vmem:[#allocation2 + $0xc8] sm:$0xff]
    %v302 = vld [vmem:[#allocation2 + $0xd0] sm:$0xff]
    %v303 = vld [vmem:[#allocation2 + $0xd8] sm:$0xff]
    %v304 = vld [vmem:[#allocation2 + $0xe0] sm:$0xff]
    %v305 = vld [vmem:[#allocation2 + $0xe8] sm:$0xff]
    %v306 = vld [vmem:[#allocation2 + $0xf0] sm:$0xff]
    %v307 = vld [vmem:[#allocation2 + $0xf8] sm:$0xff]
    %v308 = vld [vmem:[#allocation2 + $0x100] sm:$0xff]
    %v309 = vld [vmem:[#allocation2 + $0x108] sm:$0xff]
    %v310 = vld [vmem:[#allocation2 + $0x110] sm:$0xff]
    %v311 = vld [vmem:[#allocation2 + $0x118] sm:$0xff]
    %v312 = vld [vmem:[#allocation2 + $0x120] sm:$0xff]
    %v313 = vld [vmem:[#allocation2 + $0x128] sm:$0xff]
    %v314 = vld [vmem:[#allocation2 + $0x130] sm:$0xff]
    %v315 = vld [vmem:[#allocation2 + $0x138] sm:$0xff]
    %v316 = vld [vmem:[#allocation2 + $0x140] sm:$0xff]
    %v317 = vld [vmem:[#allocation2 + $0x148] sm:$0xff]
    %v318 = vld [vmem:[#allocation2 + $0x150] sm:$0xff]
    %v319 = vld [vmem:[#allocation2 + $0x158] sm:$0xff]
    %v320 = vld [vmem:[#allocation2 + $0x160] sm:$0xff]
    %v321 = vld [vmem:[#allocation2 + $0x168] sm:$0xff]
    %v322 = vld [vmem:[#allocation2 + $0x170] sm:$0xff]
    %v323 = vld [vmem:[#allocation2 + $0x178] sm:$0xff]
    %v324 = vld [vmem:[#allocation2 + $0x180] sm:$0xff]
    %v325 = vld [vmem:[#allocation2 + $0x188] sm:$0xff]
    %v326 = vld [vmem:[#allocation2 + $0x190] sm:$0xff]
    %v327 = vld [vmem:[#allocation2 + $0x198] sm:$0xff]
    %v328 = vld [vmem:[#allocation2 + $0x1a0] sm:$0xff]
    %v329 = vld [vmem:[#allocation2 + $0x1a8] sm:$0xff]
    %v330 = vld [vmem:[#allocation2 + $0x1b0] sm:$0xff]
    %v331 = vld [vmem:[#allocation2 + $0x1b8] sm:$0xff]
    %v332 = vld [vmem:[#allocation2 + $0x1c0] sm:$0xff]
    %v333 = vld [vmem:[#allocation2 + $0x1c8] sm:$0xff]
    %v334 = vld [vmem:[#allocation2 + $0x1d0] sm:$0xff]
    %v335 = vld [vmem:[#allocation2 + $0x1d8] sm:$0xff]
    %v336 = vld [vmem:[#allocation2 + $0x1e0] sm:$0xff]
    %v337 = vld [vmem:[#allocation2 + $0x1e8] sm:$0xff]
    %v338 = vld [vmem:[#allocation2 + $0x1f0] sm:$0xff]
    %v339 = vld [vmem:[#allocation2 + $0x1f8] sm:$0xff]
    %v340 = vld [vmem:[#allocation2 + $0x200] sm:$0xff]
    %v341 = vld [vmem:[#allocation2 + $0x208] sm:$0xff]
    %v342 = vld [vmem:[#allocation2 + $0x210] sm:$0xff]
    %v343 = vld [vmem:[#allocation2 + $0x218] sm:$0xff]
    %v344 = vld [vmem:[#allocation2 + $0x220] sm:$0xff]
    %v345 = vld [vmem:[#allocation2 + $0x228] sm:$0xff]
    %v346 = vld [vmem:[#allocation2 + $0x230] sm:$0xff]
    %v347 = vld [vmem:[#allocation2 + $0x238] sm:$0xff]
    %v348 = vld [vmem:[#allocation2 + $0x240] sm:$0xff]
    %v349 = vld [vmem:[#allocation2 + $0x248] sm:$0xff]
    %v350 = vld [vmem:[#allocation2 + $0x250] sm:$0xff]
    %v351 = vld [vmem:[#allocation2 + $0x258] sm:$0xff]
    %v352 = vld [vmem:[#allocation2 + $0x260] sm:$0xff]
    %v353 = vld [vmem:[#allocation2 + $0x268] sm:$0xff]
    %v354 = vld [vmem:[#allocation2 + $0x270] sm:$0xff]
    %v355 = vld [vmem:[#allocation2 + $0x278] sm:$0xff]
    %v356 = vld [vmem:[#allocation2 + $0x280] sm:$0xff]
    %v357 = vld [vmem:[#allocation2 + $0x288] sm:$0xff]
    %v358 = vld [vmem:[#allocation2 + $0x290] sm:$0xff]
    %v359 = vld [vmem:[#allocation2 + $0x298] sm:$0xff]
    %v360 = vld [vmem:[#allocation2 + $0x2a0] sm:$0xff]
    %v361 = vld [vmem:[#allocation2 + $0x2a8] sm:$0xff]
    %v362 = vld [vmem:[#allocation2 + $0x2b0] sm:$0xff]
    %v363 = vld [vmem:[#allocation2 + $0x2b8] sm:$0xff]
    %v364 = vld [vmem:[#allocation2 + $0x2c0] sm:$0xff]
    %v365 = vld [vmem:[#allocation2 + $0x2c8] sm:$0xff]
    %v366 = vld [vmem:[#allocation2 + $0x2d0] sm:$0xff]
    %v367 = vld [vmem:[#allocation2 + $0x2d8] sm:$0xff]
    %v368 = vld [vmem:[#allocation2 + $0x2e0] sm:$0xff]
    %v369 = vld [vmem:[#allocation2 + $0x2e8] sm:$0xff]
    %v370 = vld [vmem:[#allocation2 + $0x2f0] sm:$0xff]
    %v371 = vld [vmem:[#allocation2 + $0x2f8] sm:$0xff]
    %v372 = vld [vmem:[#allocation2 + $0x300] sm:$0xff]
    %v373 = vld [vmem:[#allocation2 + $0x308] sm:$0xff]
    %v374 = vld [vmem:[#allocation2 + $0x310] sm:$0xff]
    %v375 = vld [vmem:[#allocation2 + $0x318] sm:$0xff]
    %v376 = vld [vmem:[#allocation2 + $0x320] sm:$0xff]
    %v377 = vld [vmem:[#allocation2 + $0x328] sm:$0xff]
    %v378 = vld [vmem:[#allocation2 + $0x330] sm:$0xff]
    %v379 = vld [vmem:[#allocation2 + $0x338] sm:$0xff]
    %v380 = vld [vmem:[#allocation2 + $0x340] sm:$0xff]
    %v381 = vld [vmem:[#allocation2 + $0x348] sm:$0xff]
    %v382 = vld [vmem:[#allocation2 + $0x350] sm:$0xff]
    %v383 = vld [vmem:[#allocation2 + $0x358] sm:$0xff]
    %v384 = vld [vmem:[#allocation2 + $0x360] sm:$0xff]
    %v385 = vld [vmem:[#allocation2 + $0x368] sm:$0xff]
    %v386 = vld [vmem:[#allocation2 + $0x370] sm:$0xff]
    %v387 = vld [vmem:[#allocation2 + $0x378] sm:$0xff]
    %v388 = vld [vmem:[#allocation2 + $0x380] sm:$0xff]
    %v389 = vld [vmem:[#allocation2 + $0x388] sm:$0xff]
    %v390 = vld [vmem:[#allocation2 + $0x390] sm:$0xff]
    %v391 = vld [vmem:[#allocation2 + $0x398] sm:$0xff]
    %v392 = vld [vmem:[#allocation2 + $0x3a0] sm:$0xff]
    %v393 = vld [vmem:[#allocation2 + $0x3a8] sm:$0xff]
    %v394 = vld [vmem:[#allocation2 + $0x3b0] sm:$0xff]
    %v395 = vld [vmem:[#allocation2 + $0x3b8] sm:$0xff]
    %v396 = vld [vmem:[#allocation2 + $0x3c0] sm:$0xff]
    %v397 = vld [vmem:[#allocation2 + $0x3c8] sm:$0xff]
    %v398 = vld [vmem:[#allocation2 + $0x3d0] sm:$0xff]
    %v399 = vld [vmem:[#allocation2 + $0x3d8] sm:$0xff]
    %v400 = vld [vmem:[#allocation2 + $0x3e0] sm:$0xff]
    %v401 = vld [vmem:[#allocation2 + $0x3e8] sm:$0xff]
    %v402 = vld [vmem:[#allocation2 + $0x3f0] sm:$0xff]
    %v403 = vld [vmem:[#allocation2 + $0x3f8] sm:$0xff]
    %v404 = vld [vmem:[#allocation2 + $0x400] sm:$0xff]
    %v405 = vld [vmem:[#allocation2 + $0x408] sm:$0xff]
    %v406 = vld [vmem:[#allocation2 + $0x410] sm:$0xff]
    %v407 = vld [vmem:[#allocation2 + $0x418] sm:$0xff]
    %v408 = vld [vmem:[#allocation2 + $0x420] sm:$0xff]
    %v409 = vld [vmem:[#allocation2 + $0x428] sm:$0xff]
    %v410 = vld [vmem:[#allocation2 + $0x430] sm:$0xff]
    %v411 = vld [vmem:[#allocation2 + $0x438] sm:$0xff]
    %v412 = vld [vmem:[#allocation2 + $0x440] sm:$0xff]
    %v413 = vld [vmem:[#allocation2 + $0x448] sm:$0xff]
    %v414 = vld [vmem:[#allocation2 + $0x450] sm:$0xff]
    %v415 = vld [vmem:[#allocation2 + $0x458] sm:$0xff]
    %v416 = vld [vmem:[#allocation2 + $0x460] sm:$0xff]
    %v417 = vld [vmem:[#allocation2 + $0x468] sm:$0xff]
    %v418 = vld [vmem:[#allocation2 + $0x470] sm:$0xff]
    %v419 = vld [vmem:[#allocation2 + $0x478] sm:$0xff]
    %v420 = vld [vmem:[#allocation2 + $0x480] sm:$0xff]
    %v421 = vld [vmem:[#allocation2 + $0x488] sm:$0xff]
    %v422 = vld [vmem:[#allocation2 + $0x490] sm:$0xff]
    %v423 = vld [vmem:[#allocation2 + $0x498] sm:$0xff]
    %v424 = vld [vmem:[#allocation2 + $0x4a0] sm:$0xff]
    %v425 = vld [vmem:[#allocation2 + $0x4a8] sm:$0xff]
    %v426 = vld [vmem:[#allocation2 + $0x4b0] sm:$0xff]
    %v427 = vld [vmem:[#allocation2 + $0x4b8] sm:$0xff]
    %v428 = vld [vmem:[#allocation2 + $0x4c0] sm:$0xff]
    %v429 = vld [vmem:[#allocation2 + $0x4c8] sm:$0xff]
    %v430 = vld [vmem:[#allocation2 + $0x4d0] sm:$0xff]
    %v431 = vld [vmem:[#allocation2 + $0x4d8] sm:$0xff]
    %v432 = vld [vmem:[#allocation2 + $0x4e0] sm:$0xff]
    %v433 = vld [vmem:[#allocation2 + $0x4e8] sm:$0xff]
    %v434 = vld [vmem:[#allocation2 + $0x4f0] sm:$0xff]
    %v435 = vld [vmem:[#allocation2 + $0x4f8] sm:$0xff]
    %v436 = vld [vmem:[#allocation2 + $0x500] sm:$0xff]
    %v437 = vld [vmem:[#allocation2 + $0x508] sm:$0xff]
    %v438 = vld [vmem:[#allocation2 + $0x510] sm:$0xff]
    %v439 = vld [vmem:[#allocation2 + $0x518] sm:$0xff]
    %v440 = vld [vmem:[#allocation2 + $0x520] sm:$0xff]
    %v441 = vld [vmem:[#allocation2 + $0x528] sm:$0xff]
    %v442 = vld [vmem:[#allocation2 + $0x530] sm:$0xff]
    %v443 = vld [vmem:[#allocation2 + $0x538] sm:$0xff]
    %v444 = vld [vmem:[#allocation2 + $0x540] sm:$0xff]
    %v445 = vld [vmem:[#allocation2 + $0x548] sm:$0xff]
    %v446 = vld [vmem:[#allocation2 + $0x550] sm:$0xff]
    %v447 = vld [vmem:[#allocation2 + $0x558] sm:$0xff]
    %v448 = vld [vmem:[#allocation2 + $0x560] sm:$0xff]
    %v449 = vld [vmem:[#allocation2 + $0x568] sm:$0xff]
    %v450 = vld [vmem:[#allocation2 + $0x570] sm:$0xff]
    %v451 = vld [vmem:[#allocation2 + $0x578] sm:$0xff]
    %v452 = vld [vmem:[#allocation2 + $0x580] sm:$0xff]
    %v453 = vld [vmem:[#allocation2 + $0x588] sm:$0xff]
    %v454 = vld [vmem:[#allocation2 + $0x590] sm:$0xff]
    %v455 = vld [vmem:[#allocation2 + $0x598] sm:$0xff]
    %v456 = vld [vmem:[#allocation2 + $0x5a0] sm:$0xff]
    %v457 = vld [vmem:[#allocation2 + $0x5a8] sm:$0xff]
    %v458 = vld [vmem:[#allocation2 + $0x5b0] sm:$0xff]
    %v459 = vld [vmem:[#allocation2 + $0x5b8] sm:$0xff]
    %v460 = vld [vmem:[#allocation2 + $0x5c0] sm:$0xff]
    %v461 = vld [vmem:[#allocation2 + $0x5c8] sm:$0xff]
    %v462 = vld [vmem:[#allocation2 + $0x5d0] sm:$0xff]
    %v463 = vld [vmem:[#allocation2 + $0x5d8] sm:$0xff]
    %v464 = vld [vmem:[#allocation2 + $0x5e0] sm:$0xff]
    %v465 = vld [vmem:[#allocation2 + $0x5e8] sm:$0xff]
    %v466 = vld [vmem:[#allocation2 + $0x5f0] sm:$0xff]
    %v467 = vld [vmem:[#allocation2 + $0x5f8] sm:$0xff]
    %v468 = vld [vmem:[#allocation2 + $0x600] sm:$0xff]
    %v469 = vld [vmem:[#allocation2 + $0x608] sm:$0xff]
    %v470 = vld [vmem:[#allocation2 + $0x610] sm:$0xff]
    %v471 = vld [vmem:[#allocation2 + $0x618] sm:$0xff]
    %v472 = vld [vmem:[#allocation2 + $0x620] sm:$0xff]
    %v473 = vld [vmem:[#allocation2 + $0x628] sm:$0xff]
    %v474 = vld [vmem:[#allocation2 + $0x630] sm:$0xff]
    %v475 = vld [vmem:[#allocation2 + $0x638] sm:$0xff]
    %v476 = vld [vmem:[#allocation2 + $0x640] sm:$0xff]
    %v477 = vld [vmem:[#allocation2 + $0x648] sm:$0xff]
    %v478 = vld [vmem:[#allocation2 + $0x650] sm:$0xff]
    %v479 = vld [vmem:[#allocation2 + $0x658] sm:$0xff]
    %v480 = vld [vmem:[#allocation2 + $0x660] sm:$0xff]
    %v481 = vld [vmem:[#allocation2 + $0x668] sm:$0xff]
    %v482 = vld [vmem:[#allocation2 + $0x670] sm:$0xff]
    %v483 = vld [vmem:[#allocation2 + $0x678] sm:$0xff]
    %v484 = vld [vmem:[#allocation2 + $0x680] sm:$0xff]
    %v485 = vld [vmem:[#allocation2 + $0x688] sm:$0xff]
    %v486 = vld [vmem:[#allocation2 + $0x690] sm:$0xff]
    %v487 = vld [vmem:[#allocation2 + $0x698] sm:$0xff]
    %v488 = vld [vmem:[#allocation2 + $0x6a0] sm:$0xff]
    %v489 = vld [vmem:[#allocation2 + $0x6a8] sm:$0xff]
    %v490 = vld [vmem:[#allocation2 + $0x6b0] sm:$0xff]
    %v491 = vld [vmem:[#allocation2 + $0x6b8] sm:$0xff]
    %v492 = vld [vmem:[#allocation2 + $0x6c0] sm:$0xff]
    %v493 = vld [vmem:[#allocation2 + $0x6c8] sm:$0xff]
    %v494 = vld [vmem:[#allocation2 + $0x6d0] sm:$0xff]
    %v495 = vld [vmem:[#allocation2 + $0x6d8] sm:$0xff]
    %v496 = vld [vmem:[#allocation2 + $0x6e0] sm:$0xff]
    %v497 = vld [vmem:[#allocation2 + $0x6e8] sm:$0xff]
    %v498 = vld [vmem:[#allocation2 + $0x6f0] sm:$0xff]
    %v499 = vld [vmem:[#allocation2 + $0x6f8] sm:$0xff]
    %v500 = vld [vmem:[#allocation2 + $0x700] sm:$0xff]
    %v501 = vld [vmem:[#allocation2 + $0x708] sm:$0xff]
    %v502 = vld [vmem:[#allocation2 + $0x710] sm:$0xff]
    %v503 = vld [vmem:[#allocation2 + $0x718] sm:$0xff]
    %v504 = vld [vmem:[#allocation2 + $0x720] sm:$0xff]
    %v505 = vld [vmem:[#allocation2 + $0x728] sm:$0xff]
    %v506 = vld [vmem:[#allocation2 + $0x730] sm:$0xff]
    %v507 = vld [vmem:[#allocation2 + $0x738] sm:$0xff]
    %v508 = vld [vmem:[#allocation2 + $0x740] sm:$0xff]
    %v509 = vld [vmem:[#allocation2 + $0x748] sm:$0xff]
    %v510 = vld [vmem:[#allocation2 + $0x750] sm:$0xff]
    %v511 = vld [vmem:[#allocation2 + $0x758] sm:$0xff]
    %v512 = vld [vmem:[#allocation2 + $0x760] sm:$0xff]
    %v513 = vld [vmem:[#allocation2 + $0x768] sm:$0xff]
    %v514 = vld [vmem:[#allocation2 + $0x770] sm:$0xff]
    %v515 = vld [vmem:[#allocation2 + $0x778] sm:$0xff]
    %v516 = vld [vmem:[#allocation2 + $0x780] sm:$0xff]
    %v517 = vld [vmem:[#allocation2 + $0x788] sm:$0xff]
    %v518 = vld [vmem:[#allocation2 + $0x790] sm:$0xff]
    %v519 = vld [vmem:[#allocation2 + $0x798] sm:$0xff]
    %v520 = vld [vmem:[#allocation2 + $0x7a0] sm:$0xff]
    %v521 = vld [vmem:[#allocation2 + $0x7a8] sm:$0xff]
    %v522 = vld [vmem:[#allocation2 + $0x7b0] sm:$0xff]
    %v523 = vld [vmem:[#allocation2 + $0x7b8] sm:$0xff]
    %v524 = vld [vmem:[#allocation2 + $0x7c0] sm:$0xff]
    %v525 = vld [vmem:[#allocation2 + $0x7c8] sm:$0xff]
    %v526 = vld [vmem:[#allocation2 + $0x7d0] sm:$0xff]
    %v527 = vld [vmem:[#allocation2 + $0x7d8] sm:$0xff]
    %v528 = vld [vmem:[#allocation2 + $0x7e0] sm:$0xff]
    %v529 = vld [vmem:[#allocation2 + $0x7e8] sm:$0xff]
    %v530 = vld [vmem:[#allocation2 + $0x7f0] sm:$0xff]
    %v531 = vld [vmem:[#allocation2 + $0x7f8] sm:$0xff]
    %v532 = vld [vmem:[#allocation2 + $0x800] sm:$0xff]
    %v533 = vld [vmem:[#allocation2 + $0x808] sm:$0xff]
    %v534 = vld [vmem:[#allocation2 + $0x810] sm:$0xff]
    %v535 = vld [vmem:[#allocation2 + $0x818] sm:$0xff]
    %v536 = vld [vmem:[#allocation2 + $0x820] sm:$0xff]
    %v537 = vld [vmem:[#allocation2 + $0x828] sm:$0xff]
    %v538 = vld [vmem:[#allocation2 + $0x830] sm:$0xff]
    %v539 = vld [vmem:[#allocation2 + $0x838] sm:$0xff]
    %v540 = vld [vmem:[#allocation2 + $0x840] sm:$0xff]
    %v541 = vld [vmem:[#allocation2 + $0x848] sm:$0xff]
    %v542 = vld [vmem:[#allocation2 + $0x850] sm:$0xff]
    %v543 = vld [vmem:[#allocation2 + $0x858] sm:$0xff]
    %v544 = vld [vmem:[#allocation2 + $0x860] sm:$0xff]
    %v545 = vld [vmem:[#allocation2 + $0x868] sm:$0xff]
    %v546 = vld [vmem:[#allocation2 + $0x870] sm:$0xff]
    %v547 = vld [vmem:[#allocation2 + $0x878] sm:$0xff]
    %v548 = vld [vmem:[#allocation2 + $0x880] sm:$0xff]
    %v549 = vld [vmem:[#allocation2 + $0x888] sm:$0xff]
    %v550 = vld [vmem:[#allocation2 + $0x890] sm:$0xff]
    %v551 = vld [vmem:[#allocation2 + $0x898] sm:$0xff]
    %v552 = vld [vmem:[#allocation2 + $0x8a0] sm:$0xff]
    %v553 = vld [vmem:[#allocation2 + $0x8a8] sm:$0xff]
    %v554 = vld [vmem:[#allocation2 + $0x8b0] sm:$0xff]
    %v555 = vld [vmem:[#allocation2 + $0x8b8] sm:$0xff]
    %v556 = vld [vmem:[#allocation2 + $0x8c0] sm:$0xff]
    %v557 = vld [vmem:[#allocation2 + $0x8c8] sm:$0xff]
    %v558 = vld [vmem:[#allocation2 + $0x8d0] sm:$0xff]
    %v559 = vld [vmem:[#allocation2 + $0x8d8] sm:$0xff]
    %v560 = vld [vmem:[#allocation2 + $0x8e0] sm:$0xff]
    %v561 = vld [vmem:[#allocation2 + $0x8e8] sm:$0xff]
    %v562 = vld [vmem:[#allocation2 + $0x8f0] sm:$0xff]
    %v563 = vld [vmem:[#allocation2 + $0x8f8] sm:$0xff]
    %v564 = vld [vmem:[#allocation2 + $0x900] sm:$0xff]
    %v565 = vld [vmem:[#allocation2 + $0x908] sm:$0xff]
    %v566 = vld [vmem:[#allocation2 + $0x910] sm:$0xff]
    %v567 = vld [vmem:[#allocation2 + $0x918] sm:$0xff]
    %v568 = vld [vmem:[#allocation2 + $0x920] sm:$0xff]
    %v569 = vld [vmem:[#allocation2 + $0x928] sm:$0xff]
    %v570 = vld [vmem:[#allocation2 + $0x930] sm:$0xff]
    %v571 = vld [vmem:[#allocation2 + $0x938] sm:$0xff]
    %v572 = vld [vmem:[#allocation2 + $0x940] sm:$0xff]
    %v573 = vld [vmem:[#allocation2 + $0x948] sm:$0xff]
    %v574 = vld [vmem:[#allocation2 + $0x950] sm:$0xff]
    %v575 = vld [vmem:[#allocation2 + $0x958] sm:$0xff]
    %v576 = vld [vmem:[#allocation2 + $0x960] sm:$0xff]
    %v577 = vld [vmem:[#allocation2 + $0x968] sm:$0xff]
    %v578 = vld [vmem:[#allocation2 + $0x970] sm:$0xff]
    %v579 = vld [vmem:[#allocation2 + $0x978] sm:$0xff]
    %v580 = vld [vmem:[#allocation2 + $0x980] sm:$0xff]
    %v581 = vld [vmem:[#allocation2 + $0x988] sm:$0xff]
    %v582 = vld [vmem:[#allocation2 + $0x990] sm:$0xff]
    %v583 = vld [vmem:[#allocation2 + $0x998] sm:$0xff]
    %v584 = vld [vmem:[#allocation2 + $0x9a0] sm:$0xff]
    %v585 = vld [vmem:[#allocation2 + $0x9a8] sm:$0xff]
    %v586 = vld [vmem:[#allocation2 + $0x9b0] sm:$0xff]
    %v587 = vld [vmem:[#allocation2 + $0x9b8] sm:$0xff]
    %v588 = vld [vmem:[#allocation2 + $0x9c0] sm:$0xff]
    %v589 = vld [vmem:[#allocation2 + $0x9c8] sm:$0xff]
    %v590 = vld [vmem:[#allocation2 + $0x9d0] sm:$0xff]
    %v591 = vld [vmem:[#allocation2 + $0x9d8] sm:$0xff]
    %v592 = vld [vmem:[#allocation2 + $0x9e0] sm:$0xff]
    %v593 = vld [vmem:[#allocation2 + $0x9e8] sm:$0xff]
    %v594 = vld [vmem:[#allocation2 + $0x9f0] sm:$0xff]
    %v595 = vld [vmem:[#allocation2 + $0x9f8] sm:$0xff]
    %v596 = vld [vmem:[#allocation2 + $0xa00] sm:$0xff]
    %v597 = vld [vmem:[#allocation2 + $0xa08] sm:$0xff]
    %v598 = vld [vmem:[#allocation2 + $0xa10] sm:$0xff]
    %v599 = vld [vmem:[#allocation2 + $0xa18] sm:$0xff]
    %v600 = vld [vmem:[#allocation2 + $0xa20] sm:$0xff]
    %v601 = vld [vmem:[#allocation2 + $0xa28] sm:$0xff]
    %v602 = vld [vmem:[#allocation2 + $0xa30] sm:$0xff]
    %v603 = vld [vmem:[#allocation2 + $0xa38] sm:$0xff]
    %v604 = vld [vmem:[#allocation2 + $0xa40] sm:$0xff]
    %v605 = vld [vmem:[#allocation2 + $0xa48] sm:$0xff]
    %v606 = vld [vmem:[#allocation2 + $0xa50] sm:$0xff]
    %v607 = vld [vmem:[#allocation2 + $0xa58] sm:$0xff]
    %v608 = vld [vmem:[#allocation2 + $0xa60] sm:$0xff]
    %v609 = vld [vmem:[#allocation2 + $0xa68] sm:$0xff]
    %v610 = vld [vmem:[#allocation2 + $0xa70] sm:$0xff]
    %v611 = vld [vmem:[#allocation2 + $0xa78] sm:$0xff]
    %v612 = vld [vmem:[#allocation2 + $0xa80] sm:$0xff]
    %v613 = vld [vmem:[#allocation2 + $0xa88] sm:$0xff]
    %v614 = vld [vmem:[#allocation2 + $0xa90] sm:$0xff]
    %v615 = vld [vmem:[#allocation2 + $0xa98] sm:$0xff]
    %v616 = vld [vmem:[#allocation2 + $0xaa0] sm:$0xff]
    %v617 = vld [vmem:[#allocation2 + $0xaa8] sm:$0xff]
    %v618 = vld [vmem:[#allocation2 + $0xab0] sm:$0xff]
    %v619 = vld [vmem:[#allocation2 + $0xab8] sm:$0xff]
    %v620 = vld [vmem:[#allocation2 + $0xac0] sm:$0xff]
    %v621 = vld [vmem:[#allocation2 + $0xac8] sm:$0xff]
    %v622 = vld [vmem:[#allocation2 + $0xad0] sm:$0xff]
    %v623 = vld [vmem:[#allocation2 + $0xad8] sm:$0xff]
    %v624 = vld [vmem:[#allocation2 + $0xae0] sm:$0xff]
    %v625 = vld [vmem:[#allocation2 + $0xae8] sm:$0xff]
    %v626 = vld [vmem:[#allocation2 + $0xaf0] sm:$0xff]
    %v627 = vld [vmem:[#allocation2 + $0xaf8] sm:$0xff]
    %v628 = vld [vmem:[#allocation2 + $0xb00] sm:$0xff]
    %v629 = vld [vmem:[#allocation2 + $0xb08] sm:$0xff]
    %v630 = vld [vmem:[#allocation2 + $0xb10] sm:$0xff]
    %v631 = vld [vmem:[#allocation2 + $0xb18] sm:$0xff]
    %v632 = vld [vmem:[#allocation2 + $0xb20] sm:$0xff]
    %v633 = vld [vmem:[#allocation2 + $0xb28] sm:$0xff]
    %v634 = vld [vmem:[#allocation2 + $0xb30] sm:$0xff]
    %v635 = vld [vmem:[#allocation2 + $0xb38] sm:$0xff]
    %v636 = vld [vmem:[#allocation2 + $0xb40] sm:$0xff]
    %v637 = vld [vmem:[#allocation2 + $0xb48] sm:$0xff]
    %v638 = vld [vmem:[#allocation2 + $0xb50] sm:$0xff]
    %v639 = vld [vmem:[#allocation2 + $0xb58] sm:$0xff]
    %v640 = vld [vmem:[#allocation2 + $0xb60] sm:$0xff]
    %v641 = vld [vmem:[#allocation2 + $0xb68] sm:$0xff]
    %v642 = vld [vmem:[#allocation2 + $0xb70] sm:$0xff]
    %v643 = vld [vmem:[#allocation2 + $0xb78] sm:$0xff]
    %v644 = vld [vmem:[#allocation2 + $0xb80] sm:$0xff]
    %v645 = vld [vmem:[#allocation2 + $0xb88] sm:$0xff]
    %v646 = vld [vmem:[#allocation2 + $0xb90] sm:$0xff]
    %v647 = vld [vmem:[#allocation2 + $0xb98] sm:$0xff]
    %v648 = vld [vmem:[#allocation2 + $0xba0] sm:$0xff]
    %v649 = vld [vmem:[#allocation2 + $0xba8] sm:$0xff]
    %v650 = vld [vmem:[#allocation2 + $0xbb0] sm:$0xff]
    %v651 = vld [vmem:[#allocation2 + $0xbb8] sm:$0xff]
    %v652 = vld [vmem:[#allocation2 + $0xbc0] sm:$0xff]
    %v653 = vld [vmem:[#allocation2 + $0xbc8] sm:$0xff]
    %v654 = vld [vmem:[#allocation2 + $0xbd0] sm:$0xff]
    %v655 = vld [vmem:[#allocation2 + $0xbd8] sm:$0xff]
    %v656 = vld [vmem:[#allocation2 + $0xbe0] sm:$0xff]
    %v657 = vld [vmem:[#allocation2 + $0xbe8] sm:$0xff]
    %v658 = vld [vmem:[#allocation2 + $0xbf0] sm:$0xff]
    %v659 = vld [vmem:[#allocation2 + $0xbf8] sm:$0xff]
    %v660 = vld [vmem:[#allocation2 + $0xc00] sm:$0xff]
    %v661 = vld [vmem:[#allocation2 + $0xc08] sm:$0xff]
    %v662 = vld [vmem:[#allocation2 + $0xc10] sm:$0xff]
    %v663 = vld [vmem:[#allocation2 + $0xc18] sm:$0xff]
    %v664 = vld [vmem:[#allocation2 + $0xc20] sm:$0xff]
    %v665 = vld [vmem:[#allocation2 + $0xc28] sm:$0xff]
    %v666 = vld [vmem:[#allocation2 + $0xc30] sm:$0xff]
    %v667 = vld [vmem:[#allocation2 + $0xc38] sm:$0xff]
    %v668 = vld [vmem:[#allocation4] sm:$0xf]
    %v670 = vperm.slane %v668, 0
    %v671 = vperm.slane %v668, 1
    %v672 = vperm.slane %v668, 2
    %v673 = vperm.slane %v668, 3
    %vm678 = vcmask 130048
    %v680 = vsel %vm678, %v58, 0
    %v683 = vsel %vm678, %v65, 0
    %v686 = vsel %vm678, %v72, 0
    %v689 = vsel %vm678, %v79, 0
    %v692 = vsel %vm678, %v86, 0
    %v695 = vsel %vm678, %v93, 0
    %v698 = vsel %vm678, %v100, 0
    %v701 = vsel %vm678, %v107, 0
    %v704 = vsel %vm678, %v114, 0
    %v707 = vsel %vm678, %v121, 0
    %v710 = vsel %vm678, %v128, 0
    %v713 = vsel %vm678, %v135, 0
    %v716 = vsel %vm678, %v142, 0
    %v719 = vsel %vm678, %v149, 0
    %v722 = vsel %vm678, %v156, 0
    %v725 = vsel %vm678, %v163, 0
    %v728 = vsel %vm678, %v170, 0
    %v731 = vsel %vm678, %v177, 0
    %v734 = vsel %vm678, %v184, 0
    %v737 = vsel %vm678, %v191, 0
    %v740 = vsel %vm678, %v198, 0
    %v743 = vsel %vm678, %v205, 0
    %v746 = vsel %vm678, %v212, 0
    %v749 = vsel %vm678, %v219, 0
    %v752 = vsel %vm678, %v226, 0
    %v755 = vsel %vm678, %v233, 0
    %v758 = vsel %vm678, %v240, 0
    %v761 = vsel %vm678, %v247, 0
    %v764 = vsel %vm678, %v254, 0
    %v767 = vsel %vm678, %v261, 0
    %v770 = vsel %vm678, %v268, 0
    %v773 = vsel %vm678, %v275, 0
    %775 = vmatpush.msra.mxu0 %v336
    %776 = vmatpush.msra.mxu0 %v332
    %777 = vmatpush.msra.mxu0 %v328
    %778 = vmatpush.msra.mxu0 %v324
    %779 = vmatpush.msra.mxu0 %v320
    %780 = vmatpush.msra.mxu0 %v316
    %781 = vmatpush.msra.mxu0 %v312
    %782 = vmatpush.msra.mxu0 %v308
    %783 = vmatpush.msra.mxu0 %v304
    %784 = vmatpush.msra.mxu0 %v300
    %785 = vmatpush.msra.mxu0 %v296
    %786 = vmatpush.msra.mxu0 %v292
    %787 = vmatpush.msra.mxu0 %v288
    %788 = vmatpush.msra.mxu0 %v284
    %789 = vmatpush.msra.mxu0 %v280
    %790 = vmatpush.msra.mxu0 %v276
    %791 = vmatmul.f32.gmra.mxu0 %v52
    %v792 = vpop.f32.mrf.mxu0
    %v793 = vadd.f32 %v670, %v792
    %794 = vmatmul.f32.gmra.mxu0 %v59
    %v795 = vpop.f32.mrf.mxu0
    %v796 = vadd.f32 %v670, %v795
    %797 = vmatmul.f32.gmra.mxu0 %v66
    %v798 = vpop.f32.mrf.mxu0
    %v799 = vadd.f32 %v670, %v798
    %800 = vmatmul.f32.gmra.mxu0 %v73
    %v801 = vpop.f32.mrf.mxu0
    %v802 = vadd.f32 %v670, %v801
    %803 = vmatmul.f32.gmra.mxu0 %v80
    %v804 = vpop.f32.mrf.mxu0
    %v805 = vadd.f32 %v670, %v804
    %806 = vmatmul.f32.gmra.mxu0 %v87
    %v807 = vpop.f32.mrf.mxu0
    %v808 = vadd.f32 %v670, %v807
    %809 = vmatmul.f32.gmra.mxu0 %v94
    %v810 = vpop.f32.mrf.mxu0
    %v811 = vadd.f32 %v670, %v810
    %812 = vmatmul.f32.gmra.mxu0 %v101
    %v813 = vpop.f32.mrf.mxu0
    %v814 = vadd.f32 %v670, %v813
    %815 = vmatmul.f32.gmra.mxu0 %v108
    %v816 = vpop.f32.mrf.mxu0
    %v817 = vadd.f32 %v670, %v816
    %818 = vmatmul.f32.gmra.mxu0 %v115
    %v819 = vpop.f32.mrf.mxu0
    %v820 = vadd.f32 %v670, %v819
    %821 = vmatmul.f32.gmra.mxu0 %v122
    %v822 = vpop.f32.mrf.mxu0
    %v823 = vadd.f32 %v670, %v822
    %824 = vmatmul.f32.gmra.mxu0 %v129
    %v825 = vpop.f32.mrf.mxu0
    %v826 = vadd.f32 %v670, %v825
    %827 = vmatmul.f32.gmra.mxu0 %v136
    %v828 = vpop.f32.mrf.mxu0
    %v829 = vadd.f32 %v670, %v828
    %830 = vmatmul.f32.gmra.mxu0 %v143
    %v831 = vpop.f32.mrf.mxu0
    %v832 = vadd.f32 %v670, %v831
    %833 = vmatmul.f32.gmra.mxu0 %v150
    %v834 = vpop.f32.mrf.mxu0
    %v835 = vadd.f32 %v670, %v834
    %836 = vmatmul.f32.gmra.mxu0 %v157
    %v837 = vpop.f32.mrf.mxu0
    %v838 = vadd.f32 %v670, %v837
    %839 = vmatmul.f32.gmra.mxu0 %v164
    %v840 = vpop.f32.mrf.mxu0
    %v841 = vadd.f32 %v670, %v840
    %842 = vmatmul.f32.gmra.mxu0 %v171
    %v843 = vpop.f32.mrf.mxu0
    %v844 = vadd.f32 %v670, %v843
    %845 = vmatmul.f32.gmra.mxu0 %v178
    %v846 = vpop.f32.mrf.mxu0
    %v847 = vadd.f32 %v670, %v846
    %848 = vmatmul.f32.gmra.mxu0 %v185
    %v849 = vpop.f32.mrf.mxu0
    %v850 = vadd.f32 %v670, %v849
    %851 = vmatmul.f32.gmra.mxu0 %v192
    %v852 = vpop.f32.mrf.mxu0
    %v853 = vadd.f32 %v670, %v852
    %854 = vmatmul.f32.gmra.mxu0 %v199
    %v855 = vpop.f32.mrf.mxu0
    %v856 = vadd.f32 %v670, %v855
    %857 = vmatmul.f32.gmra.mxu0 %v206
    %v858 = vpop.f32.mrf.mxu0
    %v859 = vadd.f32 %v670, %v858
    %860 = vmatmul.f32.gmra.mxu0 %v213
    %v861 = vpop.f32.mrf.mxu0
    %v862 = vadd.f32 %v670, %v861
    %863 = vmatmul.f32.gmra.mxu0 %v220
    %v864 = vpop.f32.mrf.mxu0
    %v865 = vadd.f32 %v670, %v864
    %866 = vmatmul.f32.gmra.mxu0 %v227
    %v867 = vpop.f32.mrf.mxu0
    %v868 = vadd.f32 %v670, %v867
    %869 = vmatmul.f32.gmra.mxu0 %v234
    %v870 = vpop.f32.mrf.mxu0
    %v871 = vadd.f32 %v670, %v870
    %872 = vmatmul.f32.gmra.mxu0 %v241
    %v873 = vpop.f32.mrf.mxu0
    %v874 = vadd.f32 %v670, %v873
    %875 = vmatmul.f32.gmra.mxu0 %v248
    %v876 = vpop.f32.mrf.mxu0
    %v877 = vadd.f32 %v670, %v876
    %878 = vmatmul.f32.gmra.mxu0 %v255
    %v879 = vpop.f32.mrf.mxu0
    %v880 = vadd.f32 %v670, %v879
    %881 = vmatmul.f32.gmra.mxu0 %v262
    %v882 = vpop.f32.mrf.mxu0
    %v883 = vadd.f32 %v670, %v882
    %884 = vmatmul.f32.gmra.mxu0 %v269
    %v885 = vpop.f32.mrf.mxu0
    %v886 = vadd.f32 %v670, %v885
    %887 = vdwg.mxu0
    %888 = vmatpush.msra.mxu0 %v400
    %889 = vmatpush.msra.mxu0 %v396
    %890 = vmatpush.msra.mxu0 %v392
    %891 = vmatpush.msra.mxu0 %v388
    %892 = vmatpush.msra.mxu0 %v384
    %893 = vmatpush.msra.mxu0 %v380
    %894 = vmatpush.msra.mxu0 %v376
    %895 = vmatpush.msra.mxu0 %v372
    %896 = vmatpush.msra.mxu0 %v368
    %897 = vmatpush.msra.mxu0 %v364
    %898 = vmatpush.msra.mxu0 %v360
    %899 = vmatpush.msra.mxu0 %v356
    %900 = vmatpush.msra.mxu0 %v352
    %901 = vmatpush.msra.mxu0 %v348
    %902 = vmatpush.msra.mxu0 %v344
    %903 = vmatpush.msra.mxu0 %v340
    %904 = vmatmul.f32.gmra.mxu0 %v53
    %v905 = vpop.f32.mrf.mxu0
    %v906 = vadd.f32 %v793, %v905
    %907 = vmatmul.f32.gmra.mxu0 %v60
    %v908 = vpop.f32.mrf.mxu0
    %v909 = vadd.f32 %v796, %v908
    %910 = vmatmul.f32.gmra.mxu0 %v67
    %v911 = vpop.f32.mrf.mxu0
    %v912 = vadd.f32 %v799, %v911
    %913 = vmatmul.f32.gmra.mxu0 %v74
    %v914 = vpop.f32.mrf.mxu0
    %v915 = vadd.f32 %v802, %v914
    %916 = vmatmul.f32.gmra.mxu0 %v81
    %v917 = vpop.f32.mrf.mxu0
    %v918 = vadd.f32 %v805, %v917
    %919 = vmatmul.f32.gmra.mxu0 %v88
    %v920 = vpop.f32.mrf.mxu0
    %v921 = vadd.f32 %v808, %v920
    %922 = vmatmul.f32.gmra.mxu0 %v95
    %v923 = vpop.f32.mrf.mxu0
    %v924 = vadd.f32 %v811, %v923
    %925 = vmatmul.f32.gmra.mxu0 %v102
    %v926 = vpop.f32.mrf.mxu0
    %v927 = vadd.f32 %v814, %v926
    %928 = vmatmul.f32.gmra.mxu0 %v109
    %v929 = vpop.f32.mrf.mxu0
    %v930 = vadd.f32 %v817, %v929
    %931 = vmatmul.f32.gmra.mxu0 %v116
    %v932 = vpop.f32.mrf.mxu0
    %v933 = vadd.f32 %v820, %v932
    %934 = vmatmul.f32.gmra.mxu0 %v123
    %v935 = vpop.f32.mrf.mxu0
    %v936 = vadd.f32 %v823, %v935
    %937 = vmatmul.f32.gmra.mxu0 %v130
    %v938 = vpop.f32.mrf.mxu0
    %v939 = vadd.f32 %v826, %v938
    %940 = vmatmul.f32.gmra.mxu0 %v137
    %v941 = vpop.f32.mrf.mxu0
    %v942 = vadd.f32 %v829, %v941
    %943 = vmatmul.f32.gmra.mxu0 %v144
    %v944 = vpop.f32.mrf.mxu0
    %v945 = vadd.f32 %v832, %v944
    %946 = vmatmul.f32.gmra.mxu0 %v151
    %v947 = vpop.f32.mrf.mxu0
    %v948 = vadd.f32 %v835, %v947
    %949 = vmatmul.f32.gmra.mxu0 %v158
    %v950 = vpop.f32.mrf.mxu0
    %v951 = vadd.f32 %v838, %v950
    %952 = vmatmul.f32.gmra.mxu0 %v165
    %v953 = vpop.f32.mrf.mxu0
    %v954 = vadd.f32 %v841, %v953
    %955 = vmatmul.f32.gmra.mxu0 %v172
    %v956 = vpop.f32.mrf.mxu0
    %v957 = vadd.f32 %v844, %v956
    %958 = vmatmul.f32.gmra.mxu0 %v179
    %v959 = vpop.f32.mrf.mxu0
    %v960 = vadd.f32 %v847, %v959
    %961 = vmatmul.f32.gmra.mxu0 %v186
    %v962 = vpop.f32.mrf.mxu0
    %v963 = vadd.f32 %v850, %v962
    %964 = vmatmul.f32.gmra.mxu0 %v193
    %v965 = vpop.f32.mrf.mxu0
    %v966 = vadd.f32 %v853, %v965
    %967 = vmatmul.f32.gmra.mxu0 %v200
    %v968 = vpop.f32.mrf.mxu0
    %v969 = vadd.f32 %v856, %v968
    %970 = vmatmul.f32.gmra.mxu0 %v207
    %v971 = vpop.f32.mrf.mxu0
    %v972 = vadd.f32 %v859, %v971
    %973 = vmatmul.f32.gmra.mxu0 %v214
    %v974 = vpop.f32.mrf.mxu0
    %v975 = vadd.f32 %v862, %v974
    %976 = vmatmul.f32.gmra.mxu0 %v221
    %v977 = vpop.f32.mrf.mxu0
    %v978 = vadd.f32 %v865, %v977
    %979 = vmatmul.f32.gmra.mxu0 %v228
    %v980 = vpop.f32.mrf.mxu0
    %v981 = vadd.f32 %v868, %v980
    %982 = vmatmul.f32.gmra.mxu0 %v235
    %v983 = vpop.f32.mrf.mxu0
    %v984 = vadd.f32 %v871, %v983
    %985 = vmatmul.f32.gmra.mxu0 %v242
    %v986 = vpop.f32.mrf.mxu0
    %v987 = vadd.f32 %v874, %v986
    %988 = vmatmul.f32.gmra.mxu0 %v249
    %v989 = vpop.f32.mrf.mxu0
    %v990 = vadd.f32 %v877, %v989
    %991 = vmatmul.f32.gmra.mxu0 %v256
    %v992 = vpop.f32.mrf.mxu0
    %v993 = vadd.f32 %v880, %v992
    %994 = vmatmul.f32.gmra.mxu0 %v263
    %v995 = vpop.f32.mrf.mxu0
    %v996 = vadd.f32 %v883, %v995
    %997 = vmatmul.f32.gmra.mxu0 %v270
    %v998 = vpop.f32.mrf.mxu0
    %v999 = vadd.f32 %v886, %v998
    %1000 = vdwg.mxu0
    %1001 = vmatpush.msra.mxu0 %v464
    %1002 = vmatpush.msra.mxu0 %v460
    %1003 = vmatpush.msra.mxu0 %v456
    %1004 = vmatpush.msra.mxu0 %v452
    %1005 = vmatpush.msra.mxu0 %v448
    %1006 = vmatpush.msra.mxu0 %v444
    %1007 = vmatpush.msra.mxu0 %v440
    %1008 = vmatpush.msra.mxu0 %v436
    %1009 = vmatpush.msra.mxu0 %v432
    %1010 = vmatpush.msra.mxu0 %v428
    %1011 = vmatpush.msra.mxu0 %v424
    %1012 = vmatpush.msra.mxu0 %v420
    %1013 = vmatpush.msra.mxu0 %v416
    %1014 = vmatpush.msra.mxu0 %v412
    %1015 = vmatpush.msra.mxu0 %v408
    %1016 = vmatpush.msra.mxu0 %v404
    %1017 = vmatmul.f32.gmra.mxu0 %v54
    %v1018 = vpop.f32.mrf.mxu0
    %v1019 = vadd.f32 %v906, %v1018
    %1020 = vmatmul.f32.gmra.mxu0 %v61
    %v1021 = vpop.f32.mrf.mxu0
    %v1022 = vadd.f32 %v909, %v1021
    %1023 = vmatmul.f32.gmra.mxu0 %v68
    %v1024 = vpop.f32.mrf.mxu0
    %v1025 = vadd.f32 %v912, %v1024
    %1026 = vmatmul.f32.gmra.mxu0 %v75
    %v1027 = vpop.f32.mrf.mxu0
    %v1028 = vadd.f32 %v915, %v1027
    %1029 = vmatmul.f32.gmra.mxu0 %v82
    %v1030 = vpop.f32.mrf.mxu0
    %v1031 = vadd.f32 %v918, %v1030
    %1032 = vmatmul.f32.gmra.mxu0 %v89
    %v1033 = vpop.f32.mrf.mxu0
    %v1034 = vadd.f32 %v921, %v1033
    %1035 = vmatmul.f32.gmra.mxu0 %v96
    %v1036 = vpop.f32.mrf.mxu0
    %v1037 = vadd.f32 %v924, %v1036
    %1038 = vmatmul.f32.gmra.mxu0 %v103
    %v1039 = vpop.f32.mrf.mxu0
    %v1040 = vadd.f32 %v927, %v1039
    %1041 = vmatmul.f32.gmra.mxu0 %v110
    %v1042 = vpop.f32.mrf.mxu0
    %v1043 = vadd.f32 %v930, %v1042
    %1044 = vmatmul.f32.gmra.mxu0 %v117
    %v1045 = vpop.f32.mrf.mxu0
    %v1046 = vadd.f32 %v933, %v1045
    %1047 = vmatmul.f32.gmra.mxu0 %v124
    %v1048 = vpop.f32.mrf.mxu0
    %v1049 = vadd.f32 %v936, %v1048
    %1050 = vmatmul.f32.gmra.mxu0 %v131
    %v1051 = vpop.f32.mrf.mxu0
    %v1052 = vadd.f32 %v939, %v1051
    %1053 = vmatmul.f32.gmra.mxu0 %v138
    %v1054 = vpop.f32.mrf.mxu0
    %v1055 = vadd.f32 %v942, %v1054
    %1056 = vmatmul.f32.gmra.mxu0 %v145
    %v1057 = vpop.f32.mrf.mxu0
    %v1058 = vadd.f32 %v945, %v1057
    %1059 = vmatmul.f32.gmra.mxu0 %v152
    %v1060 = vpop.f32.mrf.mxu0
    %v1061 = vadd.f32 %v948, %v1060
    %1062 = vmatmul.f32.gmra.mxu0 %v159
    %v1063 = vpop.f32.mrf.mxu0
    %v1064 = vadd.f32 %v951, %v1063
    %1065 = vmatmul.f32.gmra.mxu0 %v166
    %v1066 = vpop.f32.mrf.mxu0
    %v1067 = vadd.f32 %v954, %v1066
    %1068 = vmatmul.f32.gmra.mxu0 %v173
    %v1069 = vpop.f32.mrf.mxu0
    %v1070 = vadd.f32 %v957, %v1069
    %1071 = vmatmul.f32.gmra.mxu0 %v180
    %v1072 = vpop.f32.mrf.mxu0
    %v1073 = vadd.f32 %v960, %v1072
    %1074 = vmatmul.f32.gmra.mxu0 %v187
    %v1075 = vpop.f32.mrf.mxu0
    %v1076 = vadd.f32 %v963, %v1075
    %1077 = vmatmul.f32.gmra.mxu0 %v194
    %v1078 = vpop.f32.mrf.mxu0
    %v1079 = vadd.f32 %v966, %v1078
    %1080 = vmatmul.f32.gmra.mxu0 %v201
    %v1081 = vpop.f32.mrf.mxu0
    %v1082 = vadd.f32 %v969, %v1081
    %1083 = vmatmul.f32.gmra.mxu0 %v208
    %v1084 = vpop.f32.mrf.mxu0
    %v1085 = vadd.f32 %v972, %v1084
    %1086 = vmatmul.f32.gmra.mxu0 %v215
    %v1087 = vpop.f32.mrf.mxu0
    %v1088 = vadd.f32 %v975, %v1087
    %1089 = vmatmul.f32.gmra.mxu0 %v222
    %v1090 = vpop.f32.mrf.mxu0
    %v1091 = vadd.f32 %v978, %v1090
    %1092 = vmatmul.f32.gmra.mxu0 %v229
    %v1093 = vpop.f32.mrf.mxu0
    %v1094 = vadd.f32 %v981, %v1093
    %1095 = vmatmul.f32.gmra.mxu0 %v236
    %v1096 = vpop.f32.mrf.mxu0
    %v1097 = vadd.f32 %v984, %v1096
    %1098 = vmatmul.f32.gmra.mxu0 %v243
    %v1099 = vpop.f32.mrf.mxu0
    %v1100 = vadd.f32 %v987, %v1099
    %1101 = vmatmul.f32.gmra.mxu0 %v250
    %v1102 = vpop.f32.mrf.mxu0
    %v1103 = vadd.f32 %v990, %v1102
    %1104 = vmatmul.f32.gmra.mxu0 %v257
    %v1105 = vpop.f32.mrf.mxu0
    %v1106 = vadd.f32 %v993, %v1105
    %1107 = vmatmul.f32.gmra.mxu0 %v264
    %v1108 = vpop.f32.mrf.mxu0
    %v1109 = vadd.f32 %v996, %v1108
    %1110 = vmatmul.f32.gmra.mxu0 %v271
    %v1111 = vpop.f32.mrf.mxu0
    %v1112 = vadd.f32 %v999, %v1111
    %1113 = vdwg.mxu0
    %1114 = vmatpush.msra.mxu0 %v528
    %1115 = vmatpush.msra.mxu0 %v524
    %1116 = vmatpush.msra.mxu0 %v520
    %1117 = vmatpush.msra.mxu0 %v516
    %1118 = vmatpush.msra.mxu0 %v512
    %1119 = vmatpush.msra.mxu0 %v508
    %1120 = vmatpush.msra.mxu0 %v504
    %1121 = vmatpush.msra.mxu0 %v500
    %1122 = vmatpush.msra.mxu0 %v496
    %1123 = vmatpush.msra.mxu0 %v492
    %1124 = vmatpush.msra.mxu0 %v488
    %1125 = vmatpush.msra.mxu0 %v484
    %1126 = vmatpush.msra.mxu0 %v480
    %1127 = vmatpush.msra.mxu0 %v476
    %1128 = vmatpush.msra.mxu0 %v472
    %1129 = vmatpush.msra.mxu0 %v468
    %1130 = vmatmul.f32.gmra.mxu0 %v55
    %v1131 = vpop.f32.mrf.mxu0
    %v1132 = vadd.f32 %v1019, %v1131
    %1133 = vmatmul.f32.gmra.mxu0 %v62
    %v1134 = vpop.f32.mrf.mxu0
    %v1135 = vadd.f32 %v1022, %v1134
    %1136 = vmatmul.f32.gmra.mxu0 %v69
    %v1137 = vpop.f32.mrf.mxu0
    %v1138 = vadd.f32 %v1025, %v1137
    %1139 = vmatmul.f32.gmra.mxu0 %v76
    %v1140 = vpop.f32.mrf.mxu0
    %v1141 = vadd.f32 %v1028, %v1140
    %1142 = vmatmul.f32.gmra.mxu0 %v83
    %v1143 = vpop.f32.mrf.mxu0
    %v1144 = vadd.f32 %v1031, %v1143
    %1145 = vmatmul.f32.gmra.mxu0 %v90
    %v1146 = vpop.f32.mrf.mxu0
    %v1147 = vadd.f32 %v1034, %v1146
    %1148 = vmatmul.f32.gmra.mxu0 %v97
    %v1149 = vpop.f32.mrf.mxu0
    %v1150 = vadd.f32 %v1037, %v1149
    %1151 = vmatmul.f32.gmra.mxu0 %v104
    %v1152 = vpop.f32.mrf.mxu0
    %v1153 = vadd.f32 %v1040, %v1152
    %1154 = vmatmul.f32.gmra.mxu0 %v111
    %v1155 = vpop.f32.mrf.mxu0
    %v1156 = vadd.f32 %v1043, %v1155
    %1157 = vmatmul.f32.gmra.mxu0 %v118
    %v1158 = vpop.f32.mrf.mxu0
    %v1159 = vadd.f32 %v1046, %v1158
    %1160 = vmatmul.f32.gmra.mxu0 %v125
    %v1161 = vpop.f32.mrf.mxu0
    %v1162 = vadd.f32 %v1049, %v1161
    %1163 = vmatmul.f32.gmra.mxu0 %v132
    %v1164 = vpop.f32.mrf.mxu0
    %v1165 = vadd.f32 %v1052, %v1164
    %1166 = vmatmul.f32.gmra.mxu0 %v139
    %v1167 = vpop.f32.mrf.mxu0
    %v1168 = vadd.f32 %v1055, %v1167
    %1169 = vmatmul.f32.gmra.mxu0 %v146
    %v1170 = vpop.f32.mrf.mxu0
    %v1171 = vadd.f32 %v1058, %v1170
    %1172 = vmatmul.f32.gmra.mxu0 %v153
    %v1173 = vpop.f32.mrf.mxu0
    %v1174 = vadd.f32 %v1061, %v1173
    %1175 = vmatmul.f32.gmra.mxu0 %v160
    %v1176 = vpop.f32.mrf.mxu0
    %v1177 = vadd.f32 %v1064, %v1176
    %1178 = vmatmul.f32.gmra.mxu0 %v167
    %v1179 = vpop.f32.mrf.mxu0
    %v1180 = vadd.f32 %v1067, %v1179
    %1181 = vmatmul.f32.gmra.mxu0 %v174
    %v1182 = vpop.f32.mrf.mxu0
    %v1183 = vadd.f32 %v1070, %v1182
    %1184 = vmatmul.f32.gmra.mxu0 %v181
    %v1185 = vpop.f32.mrf.mxu0
    %v1186 = vadd.f32 %v1073, %v1185
    %1187 = vmatmul.f32.gmra.mxu0 %v188
    %v1188 = vpop.f32.mrf.mxu0
    %v1189 = vadd.f32 %v1076, %v1188
    %1190 = vmatmul.f32.gmra.mxu0 %v195
    %v1191 = vpop.f32.mrf.mxu0
    %v1192 = vadd.f32 %v1079, %v1191
    %1193 = vmatmul.f32.gmra.mxu0 %v202
    %v1194 = vpop.f32.mrf.mxu0
    %v1195 = vadd.f32 %v1082, %v1194
    %1196 = vmatmul.f32.gmra.mxu0 %v209
    %v1197 = vpop.f32.mrf.mxu0
    %v1198 = vadd.f32 %v1085, %v1197
    %1199 = vmatmul.f32.gmra.mxu0 %v216
    %v1200 = vpop.f32.mrf.mxu0
    %v1201 = vadd.f32 %v1088, %v1200
    %1202 = vmatmul.f32.gmra.mxu0 %v223
    %v1203 = vpop.f32.mrf.mxu0
    %v1204 = vadd.f32 %v1091, %v1203
    %1205 = vmatmul.f32.gmra.mxu0 %v230
    %v1206 = vpop.f32.mrf.mxu0
    %v1207 = vadd.f32 %v1094, %v1206
    %1208 = vmatmul.f32.gmra.mxu0 %v237
    %v1209 = vpop.f32.mrf.mxu0
    %v1210 = vadd.f32 %v1097, %v1209
    %1211 = vmatmul.f32.gmra.mxu0 %v244
    %v1212 = vpop.f32.mrf.mxu0
    %v1213 = vadd.f32 %v1100, %v1212
    %1214 = vmatmul.f32.gmra.mxu0 %v251
    %v1215 = vpop.f32.mrf.mxu0
    %v1216 = vadd.f32 %v1103, %v1215
    %1217 = vmatmul.f32.gmra.mxu0 %v258
    %v1218 = vpop.f32.mrf.mxu0
    %v1219 = vadd.f32 %v1106, %v1218
    %1220 = vmatmul.f32.gmra.mxu0 %v265
    %v1221 = vpop.f32.mrf.mxu0
    %v1222 = vadd.f32 %v1109, %v1221
    %1223 = vmatmul.f32.gmra.mxu0 %v272
    %v1224 = vpop.f32.mrf.mxu0
    %v1225 = vadd.f32 %v1112, %v1224
    %1226 = vdwg.mxu0
    %1227 = vmatpush.msra.mxu0 %v592
    %1228 = vmatpush.msra.mxu0 %v588
    %1229 = vmatpush.msra.mxu0 %v584
    %1230 = vmatpush.msra.mxu0 %v580
    %1231 = vmatpush.msra.mxu0 %v576
    %1232 = vmatpush.msra.mxu0 %v572
    %1233 = vmatpush.msra.mxu0 %v568
    %1234 = vmatpush.msra.mxu0 %v564
    %1235 = vmatpush.msra.mxu0 %v560
    %1236 = vmatpush.msra.mxu0 %v556
    %1237 = vmatpush.msra.mxu0 %v552
    %1238 = vmatpush.msra.mxu0 %v548
    %1239 = vmatpush.msra.mxu0 %v544
    %1240 = vmatpush.msra.mxu0 %v540
    %1241 = vmatpush.msra.mxu0 %v536
    %1242 = vmatpush.msra.mxu0 %v532
    %1243 = vmatmul.f32.gmra.mxu0 %v56
    %v1244 = vpop.f32.mrf.mxu0
    %v1245 = vadd.f32 %v1132, %v1244
    %1246 = vmatmul.f32.gmra.mxu0 %v63
    %v1247 = vpop.f32.mrf.mxu0
    %v1248 = vadd.f32 %v1135, %v1247
    %1249 = vmatmul.f32.gmra.mxu0 %v70
    %v1250 = vpop.f32.mrf.mxu0
    %v1251 = vadd.f32 %v1138, %v1250
    %1252 = vmatmul.f32.gmra.mxu0 %v77
    %v1253 = vpop.f32.mrf.mxu0
    %v1254 = vadd.f32 %v1141, %v1253
    %1255 = vmatmul.f32.gmra.mxu0 %v84
    %v1256 = vpop.f32.mrf.mxu0
    %v1257 = vadd.f32 %v1144, %v1256
    %1258 = vmatmul.f32.gmra.mxu0 %v91
    %v1259 = vpop.f32.mrf.mxu0
    %v1260 = vadd.f32 %v1147, %v1259
    %1261 = vmatmul.f32.gmra.mxu0 %v98
    %v1262 = vpop.f32.mrf.mxu0
    %v1263 = vadd.f32 %v1150, %v1262
    %1264 = vmatmul.f32.gmra.mxu0 %v105
    %v1265 = vpop.f32.mrf.mxu0
    %v1266 = vadd.f32 %v1153, %v1265
    %1267 = vmatmul.f32.gmra.mxu0 %v112
    %v1268 = vpop.f32.mrf.mxu0
    %v1269 = vadd.f32 %v1156, %v1268
    %1270 = vmatmul.f32.gmra.mxu0 %v119
    %v1271 = vpop.f32.mrf.mxu0
    %v1272 = vadd.f32 %v1159, %v1271
    %1273 = vmatmul.f32.gmra.mxu0 %v126
    %v1274 = vpop.f32.mrf.mxu0
    %v1275 = vadd.f32 %v1162, %v1274
    %1276 = vmatmul.f32.gmra.mxu0 %v133
    %v1277 = vpop.f32.mrf.mxu0
    %v1278 = vadd.f32 %v1165, %v1277
    %1279 = vmatmul.f32.gmra.mxu0 %v140
    %v1280 = vpop.f32.mrf.mxu0
    %v1281 = vadd.f32 %v1168, %v1280
    %1282 = vmatmul.f32.gmra.mxu0 %v147
    %v1283 = vpop.f32.mrf.mxu0
    %v1284 = vadd.f32 %v1171, %v1283
    %1285 = vmatmul.f32.gmra.mxu0 %v154
    %v1286 = vpop.f32.mrf.mxu0
    %v1287 = vadd.f32 %v1174, %v1286
    %1288 = vmatmul.f32.gmra.mxu0 %v161
    %v1289 = vpop.f32.mrf.mxu0
    %v1290 = vadd.f32 %v1177, %v1289
    %1291 = vmatmul.f32.gmra.mxu0 %v168
    %v1292 = vpop.f32.mrf.mxu0
    %v1293 = vadd.f32 %v1180, %v1292
    %1294 = vmatmul.f32.gmra.mxu0 %v175
    %v1295 = vpop.f32.mrf.mxu0
    %v1296 = vadd.f32 %v1183, %v1295
    %1297 = vmatmul.f32.gmra.mxu0 %v182
    %v1298 = vpop.f32.mrf.mxu0
    %v1299 = vadd.f32 %v1186, %v1298
    %1300 = vmatmul.f32.gmra.mxu0 %v189
    %v1301 = vpop.f32.mrf.mxu0
    %v1302 = vadd.f32 %v1189, %v1301
    %1303 = vmatmul.f32.gmra.mxu0 %v196
    %v1304 = vpop.f32.mrf.mxu0
    %v1305 = vadd.f32 %v1192, %v1304
    %1306 = vmatmul.f32.gmra.mxu0 %v203
    %v1307 = vpop.f32.mrf.mxu0
    %v1308 = vadd.f32 %v1195, %v1307
    %1309 = vmatmul.f32.gmra.mxu0 %v210
    %v1310 = vpop.f32.mrf.mxu0
    %v1311 = vadd.f32 %v1198, %v1310
    %1312 = vmatmul.f32.gmra.mxu0 %v217
    %v1313 = vpop.f32.mrf.mxu0
    %v1314 = vadd.f32 %v1201, %v1313
    %1315 = vmatmul.f32.gmra.mxu0 %v224
    %v1316 = vpop.f32.mrf.mxu0
    %v1317 = vadd.f32 %v1204, %v1316
    %1318 = vmatmul.f32.gmra.mxu0 %v231
    %v1319 = vpop.f32.mrf.mxu0
    %v1320 = vadd.f32 %v1207, %v1319
    %1321 = vmatmul.f32.gmra.mxu0 %v238
    %v1322 = vpop.f32.mrf.mxu0
    %v1323 = vadd.f32 %v1210, %v1322
    %1324 = vmatmul.f32.gmra.mxu0 %v245
    %v1325 = vpop.f32.mrf.mxu0
    %v1326 = vadd.f32 %v1213, %v1325
    %1327 = vmatmul.f32.gmra.mxu0 %v252
    %v1328 = vpop.f32.mrf.mxu0
    %v1329 = vadd.f32 %v1216, %v1328
    %1330 = vmatmul.f32.gmra.mxu0 %v259
    %v1331 = vpop.f32.mrf.mxu0
    %v1332 = vadd.f32 %v1219, %v1331
    %1333 = vmatmul.f32.gmra.mxu0 %v266
    %v1334 = vpop.f32.mrf.mxu0
    %v1335 = vadd.f32 %v1222, %v1334
    %1336 = vmatmul.f32.gmra.mxu0 %v273
    %v1337 = vpop.f32.mrf.mxu0
    %v1338 = vadd.f32 %v1225, %v1337
    %1339 = vdwg.mxu0
    %1340 = vmatpush.msra.mxu0 %v656
    %1341 = vmatpush.msra.mxu0 %v652
    %1342 = vmatpush.msra.mxu0 %v648
    %1343 = vmatpush.msra.mxu0 %v644
    %1344 = vmatpush.msra.mxu0 %v640
    %1345 = vmatpush.msra.mxu0 %v636
    %1346 = vmatpush.msra.mxu0 %v632
    %1347 = vmatpush.msra.mxu0 %v628
    %1348 = vmatpush.msra.mxu0 %v624
    %1349 = vmatpush.msra.mxu0 %v620
    %1350 = vmatpush.msra.mxu0 %v616
    %1351 = vmatpush.msra.mxu0 %v612
    %1352 = vmatpush.msra.mxu0 %v608
    %1353 = vmatpush.msra.mxu0 %v604
    %1354 = vmatpush.msra.mxu0 %v600
    %1355 = vmatpush.msra.mxu0 %v596
    %1356 = vmatmul.f32.gmra.mxu0 %v57
    %v1357 = vpop.f32.mrf.mxu0
    %v1358 = vadd.f32 %v1245, %v1357
    %1359 = vmatmul.f32.gmra.mxu0 %v64
    %v1360 = vpop.f32.mrf.mxu0
    %v1361 = vadd.f32 %v1248, %v1360
    %1362 = vmatmul.f32.gmra.mxu0 %v71
    %v1363 = vpop.f32.mrf.mxu0
    %v1364 = vadd.f32 %v1251, %v1363
    %1365 = vmatmul.f32.gmra.mxu0 %v78
    %v1366 = vpop.f32.mrf.mxu0
    %v1367 = vadd.f32 %v1254, %v1366
    %1368 = vmatmul.f32.gmra.mxu0 %v85
    %v1369 = vpop.f32.mrf.mxu0
    %v1370 = vadd.f32 %v1257, %v1369
    %1371 = vmatmul.f32.gmra.mxu0 %v92
    %v1372 = vpop.f32.mrf.mxu0
    %v1373 = vadd.f32 %v1260, %v1372
    %1374 = vmatmul.f32.gmra.mxu0 %v99
    %v1375 = vpop.f32.mrf.mxu0
    %v1376 = vadd.f32 %v1263, %v1375
    %1377 = vmatmul.f32.gmra.mxu0 %v106
    %v1378 = vpop.f32.mrf.mxu0
    %v1379 = vadd.f32 %v1266, %v1378
    %1380 = vmatmul.f32.gmra.mxu0 %v113
    %v1381 = vpop.f32.mrf.mxu0
    %v1382 = vadd.f32 %v1269, %v1381
    %1383 = vmatmul.f32.gmra.mxu0 %v120
    %v1384 = vpop.f32.mrf.mxu0
    %v1385 = vadd.f32 %v1272, %v1384
    %1386 = vmatmul.f32.gmra.mxu0 %v127
    %v1387 = vpop.f32.mrf.mxu0
    %v1388 = vadd.f32 %v1275, %v1387
    %1389 = vmatmul.f32.gmra.mxu0 %v134
    %v1390 = vpop.f32.mrf.mxu0
    %v1391 = vadd.f32 %v1278, %v1390
    %1392 = vmatmul.f32.gmra.mxu0 %v141
    %v1393 = vpop.f32.mrf.mxu0
    %v1394 = vadd.f32 %v1281, %v1393
    %1395 = vmatmul.f32.gmra.mxu0 %v148
    %v1396 = vpop.f32.mrf.mxu0
    %v1397 = vadd.f32 %v1284, %v1396
    %1398 = vmatmul.f32.gmra.mxu0 %v155
    %v1399 = vpop.f32.mrf.mxu0
    %v1400 = vadd.f32 %v1287, %v1399
    %1401 = vmatmul.f32.gmra.mxu0 %v162
    %v1402 = vpop.f32.mrf.mxu0
    %v1403 = vadd.f32 %v1290, %v1402
    %1404 = vmatmul.f32.gmra.mxu0 %v169
    %v1405 = vpop.f32.mrf.mxu0
    %v1406 = vadd.f32 %v1293, %v1405
    %1407 = vmatmul.f32.gmra.mxu0 %v176
    %v1408 = vpop.f32.mrf.mxu0
    %v1409 = vadd.f32 %v1296, %v1408
    %1410 = vmatmul.f32.gmra.mxu0 %v183
    %v1411 = vpop.f32.mrf.mxu0
    %v1412 = vadd.f32 %v1299, %v1411
    %1413 = vmatmul.f32.gmra.mxu0 %v190
    %v1414 = vpop.f32.mrf.mxu0
    %v1415 = vadd.f32 %v1302, %v1414
    %1416 = vmatmul.f32.gmra.mxu0 %v197
    %v1417 = vpop.f32.mrf.mxu0
    %v1418 = vadd.f32 %v1305, %v1417
    %1419 = vmatmul.f32.gmra.mxu0 %v204
    %v1420 = vpop.f32.mrf.mxu0
    %v1421 = vadd.f32 %v1308, %v1420
    %1422 = vmatmul.f32.gmra.mxu0 %v211
    %v1423 = vpop.f32.mrf.mxu0
    %v1424 = vadd.f32 %v1311, %v1423
    %1425 = vmatmul.f32.gmra.mxu0 %v218
    %v1426 = vpop.f32.mrf.mxu0
    %v1427 = vadd.f32 %v1314, %v1426
    %1428 = vmatmul.f32.gmra.mxu0 %v225
    %v1429 = vpop.f32.mrf.mxu0
    %v1430 = vadd.f32 %v1317, %v1429
    %1431 = vmatmul.f32.gmra.mxu0 %v232
    %v1432 = vpop.f32.mrf.mxu0
    %v1433 = vadd.f32 %v1320, %v1432
    %1434 = vmatmul.f32.gmra.mxu0 %v239
    %v1435 = vpop.f32.mrf.mxu0
    %v1436 = vadd.f32 %v1323, %v1435
    %1437 = vmatmul.f32.gmra.mxu0 %v246
    %v1438 = vpop.f32.mrf.mxu0
    %v1439 = vadd.f32 %v1326, %v1438
    %1440 = vmatmul.f32.gmra.mxu0 %v253
    %v1441 = vpop.f32.mrf.mxu0
    %v1442 = vadd.f32 %v1329, %v1441
    %1443 = vmatmul.f32.gmra.mxu0 %v260
    %v1444 = vpop.f32.mrf.mxu0
    %v1445 = vadd.f32 %v1332, %v1444
    %1446 = vmatmul.f32.gmra.mxu0 %v267
    %v1447 = vpop.f32.mrf.mxu0
    %v1448 = vadd.f32 %v1335, %v1447
    %1449 = vmatmul.f32.gmra.mxu0 %v274
    %v1450 = vpop.f32.mrf.mxu0
    %v1451 = vadd.f32 %v1338, %v1450
    %1452 = vdwg.mxu0
    %1453 = vmatpush.msra.mxu0 0.0
    %1454 = vmatpush.msra.mxu0 0.0
    %1455 = vmatpush.msra.mxu0 0.0
    %1456 = vmatpush.msra.mxu0 0.0
    %1457 = vmatpush.msra.mxu0 0.0
    %1458 = vmatpush.msra.mxu0 0.0
    %1459 = vmatpush.msra.mxu0 0.0
    %1460 = vmatpush.msra.mxu0 0.0
    %1461 = vmatpush.msra.mxu0 0.0
    %1462 = vmatpush.msra.mxu0 0.0
    %1463 = vmatpush.msra.mxu0 0.0
    %1464 = vmatpush.msra.mxu0 0.0
    %1465 = vmatpush.msra.mxu0 0.0
    %1466 = vmatpush.msra.mxu0 0.0
    %1467 = vmatpush.msra.mxu0 %v664
    %1468 = vmatpush.msra.mxu0 %v660
    %1469 = vmatmul.f32.gmra.mxu0 %v680
    %v1470 = vpop.f32.mrf.mxu0
    %v1471 = vadd.f32 %v1358, %v1470
    %1472 = vmatmul.f32.gmra.mxu0 %v683
    %v1473 = vpop.f32.mrf.mxu0
    %v1474 = vadd.f32 %v1361, %v1473
    %1475 = vmatmul.f32.gmra.mxu0 %v686
    %v1476 = vpop.f32.mrf.mxu0
    %v1477 = vadd.f32 %v1364, %v1476
    %1478 = vmatmul.f32.gmra.mxu0 %v689
    %v1479 = vpop.f32.mrf.mxu0
    %v1480 = vadd.f32 %v1367, %v1479
    %1481 = vmatmul.f32.gmra.mxu0 %v692
    %v1482 = vpop.f32.mrf.mxu0
    %v1483 = vadd.f32 %v1370, %v1482
    %1484 = vmatmul.f32.gmra.mxu0 %v695
    %v1485 = vpop.f32.mrf.mxu0
    %v1486 = vadd.f32 %v1373, %v1485
    %1487 = vmatmul.f32.gmra.mxu0 %v698
    %v1488 = vpop.f32.mrf.mxu0
    %v1489 = vadd.f32 %v1376, %v1488
    %1490 = vmatmul.f32.gmra.mxu0 %v701
    %v1491 = vpop.f32.mrf.mxu0
    %v1492 = vadd.f32 %v1379, %v1491
    %1493 = vmatmul.f32.gmra.mxu0 %v704
    %v1494 = vpop.f32.mrf.mxu0
    %v1495 = vadd.f32 %v1382, %v1494
    %1496 = vmatmul.f32.gmra.mxu0 %v707
    %v1497 = vpop.f32.mrf.mxu0
    %v1498 = vadd.f32 %v1385, %v1497
    %1499 = vmatmul.f32.gmra.mxu0 %v710
    %v1500 = vpop.f32.mrf.mxu0
    %v1501 = vadd.f32 %v1388, %v1500
    %1502 = vmatmul.f32.gmra.mxu0 %v713
    %v1503 = vpop.f32.mrf.mxu0
    %v1504 = vadd.f32 %v1391, %v1503
    %1505 = vmatmul.f32.gmra.mxu0 %v716
    %v1506 = vpop.f32.mrf.mxu0
    %v1507 = vadd.f32 %v1394, %v1506
    %1508 = vmatmul.f32.gmra.mxu0 %v719
    %v1509 = vpop.f32.mrf.mxu0
    %v1510 = vadd.f32 %v1397, %v1509
    %1511 = vmatmul.f32.gmra.mxu0 %v722
    %v1512 = vpop.f32.mrf.mxu0
    %v1513 = vadd.f32 %v1400, %v1512
    %1514 = vmatmul.f32.gmra.mxu0 %v725
    %v1515 = vpop.f32.mrf.mxu0
    %v1516 = vadd.f32 %v1403, %v1515
    %1517 = vmatmul.f32.gmra.mxu0 %v728
    %v1518 = vpop.f32.mrf.mxu0
    %v1519 = vadd.f32 %v1406, %v1518
    %1520 = vmatmul.f32.gmra.mxu0 %v731
    %v1521 = vpop.f32.mrf.mxu0
    %v1522 = vadd.f32 %v1409, %v1521
    %1523 = vmatmul.f32.gmra.mxu0 %v734
    %v1524 = vpop.f32.mrf.mxu0
    %v1525 = vadd.f32 %v1412, %v1524
    %1526 = vmatmul.f32.gmra.mxu0 %v737
    %v1527 = vpop.f32.mrf.mxu0
    %v1528 = vadd.f32 %v1415, %v1527
    %1529 = vmatmul.f32.gmra.mxu0 %v740
    %v1530 = vpop.f32.mrf.mxu0
    %v1531 = vadd.f32 %v1418, %v1530
    %1532 = vmatmul.f32.gmra.mxu0 %v743
    %v1533 = vpop.f32.mrf.mxu0
    %v1534 = vadd.f32 %v1421, %v1533
    %1535 = vmatmul.f32.gmra.mxu0 %v746
    %v1536 = vpop.f32.mrf.mxu0
    %v1537 = vadd.f32 %v1424, %v1536
    %1538 = vmatmul.f32.gmra.mxu0 %v749
    %v1539 = vpop.f32.mrf.mxu0
    %v1540 = vadd.f32 %v1427, %v1539
    %1541 = vmatmul.f32.gmra.mxu0 %v752
    %v1542 = vpop.f32.mrf.mxu0
    %v1543 = vadd.f32 %v1430, %v1542
    %1544 = vmatmul.f32.gmra.mxu0 %v755
    %v1545 = vpop.f32.mrf.mxu0
    %v1546 = vadd.f32 %v1433, %v1545
    %1547 = vmatmul.f32.gmra.mxu0 %v758
    %v1548 = vpop.f32.mrf.mxu0
    %v1549 = vadd.f32 %v1436, %v1548
    %1550 = vmatmul.f32.gmra.mxu0 %v761
    %v1551 = vpop.f32.mrf.mxu0
    %v1552 = vadd.f32 %v1439, %v1551
    %1553 = vmatmul.f32.gmra.mxu0 %v764
    %v1554 = vpop.f32.mrf.mxu0
    %v1555 = vadd.f32 %v1442, %v1554
    %1556 = vmatmul.f32.gmra.mxu0 %v767
    %v1557 = vpop.f32.mrf.mxu0
    %v1558 = vadd.f32 %v1445, %v1557
    %1559 = vmatmul.f32.gmra.mxu0 %v770
    %v1560 = vpop.f32.mrf.mxu0
    %v1561 = vadd.f32 %v1448, %v1560
    %1562 = vmatmul.f32.gmra.mxu0 %v773
    %v1563 = vpop.f32.mrf.mxu0
    %v1564 = vadd.f32 %v1451, %v1563
    %1565 = vdwg.mxu0
    %1566 = vmatpush.msra.mxu0 %v337
    %1567 = vmatpush.msra.mxu0 %v333
    %1568 = vmatpush.msra.mxu0 %v329
    %1569 = vmatpush.msra.mxu0 %v325
    %1570 = vmatpush.msra.mxu0 %v321
    %1571 = vmatpush.msra.mxu0 %v317
    %1572 = vmatpush.msra.mxu0 %v313
    %1573 = vmatpush.msra.mxu0 %v309
    %1574 = vmatpush.msra.mxu0 %v305
    %1575 = vmatpush.msra.mxu0 %v301
    %1576 = vmatpush.msra.mxu0 %v297
    %1577 = vmatpush.msra.mxu0 %v293
    %1578 = vmatpush.msra.mxu0 %v289
    %1579 = vmatpush.msra.mxu0 %v285
    %1580 = vmatpush.msra.mxu0 %v281
    %1581 = vmatpush.msra.mxu0 %v277
    %1582 = vmatmul.f32.gmra.mxu0 %v52
    %v1583 = vpop.f32.mrf.mxu0
    %v1584 = vadd.f32 %v671, %v1583
    %1585 = vmatmul.f32.gmra.mxu0 %v59
    %v1586 = vpop.f32.mrf.mxu0
    %v1587 = vadd.f32 %v671, %v1586
    %1588 = vmatmul.f32.gmra.mxu0 %v66
    %v1589 = vpop.f32.mrf.mxu0
    %v1590 = vadd.f32 %v671, %v1589
    %1591 = vmatmul.f32.gmra.mxu0 %v73
    %v1592 = vpop.f32.mrf.mxu0
    %v1593 = vadd.f32 %v671, %v1592
    %1594 = vmatmul.f32.gmra.mxu0 %v80
    %v1595 = vpop.f32.mrf.mxu0
    %v1596 = vadd.f32 %v671, %v1595
    %1597 = vmatmul.f32.gmra.mxu0 %v87
    %v1598 = vpop.f32.mrf.mxu0
    %v1599 = vadd.f32 %v671, %v1598
    %1600 = vmatmul.f32.gmra.mxu0 %v94
    %v1601 = vpop.f32.mrf.mxu0
    %v1602 = vadd.f32 %v671, %v1601
    %1603 = vmatmul.f32.gmra.mxu0 %v101
    %v1604 = vpop.f32.mrf.mxu0
    %v1605 = vadd.f32 %v671, %v1604
    %1606 = vmatmul.f32.gmra.mxu0 %v108
    %v1607 = vpop.f32.mrf.mxu0
    %v1608 = vadd.f32 %v671, %v1607
    %1609 = vmatmul.f32.gmra.mxu0 %v115
    %v1610 = vpop.f32.mrf.mxu0
    %v1611 = vadd.f32 %v671, %v1610
    %1612 = vmatmul.f32.gmra.mxu0 %v122
    %v1613 = vpop.f32.mrf.mxu0
    %v1614 = vadd.f32 %v671, %v1613
    %1615 = vmatmul.f32.gmra.mxu0 %v129
    %v1616 = vpop.f32.mrf.mxu0
    %v1617 = vadd.f32 %v671, %v1616
    %1618 = vmatmul.f32.gmra.mxu0 %v136
    %v1619 = vpop.f32.mrf.mxu0
    %v1620 = vadd.f32 %v671, %v1619
    %1621 = vmatmul.f32.gmra.mxu0 %v143
    %v1622 = vpop.f32.mrf.mxu0
    %v1623 = vadd.f32 %v671, %v1622
    %1624 = vmatmul.f32.gmra.mxu0 %v150
    %v1625 = vpop.f32.mrf.mxu0
    %v1626 = vadd.f32 %v671, %v1625
    %1627 = vmatmul.f32.gmra.mxu0 %v157
    %v1628 = vpop.f32.mrf.mxu0
    %v1629 = vadd.f32 %v671, %v1628
    %1630 = vmatmul.f32.gmra.mxu0 %v164
    %v1631 = vpop.f32.mrf.mxu0
    %v1632 = vadd.f32 %v671, %v1631
    %1633 = vmatmul.f32.gmra.mxu0 %v171
    %v1634 = vpop.f32.mrf.mxu0
    %v1635 = vadd.f32 %v671, %v1634
    %1636 = vmatmul.f32.gmra.mxu0 %v178
    %v1637 = vpop.f32.mrf.mxu0
    %v1638 = vadd.f32 %v671, %v1637
    %1639 = vmatmul.f32.gmra.mxu0 %v185
    %v1640 = vpop.f32.mrf.mxu0
    %v1641 = vadd.f32 %v671, %v1640
    %1642 = vmatmul.f32.gmra.mxu0 %v192
    %v1643 = vpop.f32.mrf.mxu0
    %v1644 = vadd.f32 %v671, %v1643
    %1645 = vmatmul.f32.gmra.mxu0 %v199
    %v1646 = vpop.f32.mrf.mxu0
    %v1647 = vadd.f32 %v671, %v1646
    %1648 = vmatmul.f32.gmra.mxu0 %v206
    %v1649 = vpop.f32.mrf.mxu0
    %v1650 = vadd.f32 %v671, %v1649
    %1651 = vmatmul.f32.gmra.mxu0 %v213
    %v1652 = vpop.f32.mrf.mxu0
    %v1653 = vadd.f32 %v671, %v1652
    %1654 = vmatmul.f32.gmra.mxu0 %v220
    %v1655 = vpop.f32.mrf.mxu0
    %v1656 = vadd.f32 %v671, %v1655
    %1657 = vmatmul.f32.gmra.mxu0 %v227
    %v1658 = vpop.f32.mrf.mxu0
    %v1659 = vadd.f32 %v671, %v1658
    %1660 = vmatmul.f32.gmra.mxu0 %v234
    %v1661 = vpop.f32.mrf.mxu0
    %v1662 = vadd.f32 %v671, %v1661
    %1663 = vmatmul.f32.gmra.mxu0 %v241
    %v1664 = vpop.f32.mrf.mxu0
    %v1665 = vadd.f32 %v671, %v1664
    %1666 = vmatmul.f32.gmra.mxu0 %v248
    %v1667 = vpop.f32.mrf.mxu0
    %v1668 = vadd.f32 %v671, %v1667
    %1669 = vmatmul.f32.gmra.mxu0 %v255
    %v1670 = vpop.f32.mrf.mxu0
    %v1671 = vadd.f32 %v671, %v1670
    %1672 = vmatmul.f32.gmra.mxu0 %v262
    %v1673 = vpop.f32.mrf.mxu0
    %v1674 = vadd.f32 %v671, %v1673
    %1675 = vmatmul.f32.gmra.mxu0 %v269
    %v1676 = vpop.f32.mrf.mxu0
    %v1677 = vadd.f32 %v671, %v1676
    %1678 = vdwg.mxu0
    %1679 = vmatpush.msra.mxu0 %v401
    %1680 = vmatpush.msra.mxu0 %v397
    %1681 = vmatpush.msra.mxu0 %v393
    %1682 = vmatpush.msra.mxu0 %v389
    %1683 = vmatpush.msra.mxu0 %v385
    %1684 = vmatpush.msra.mxu0 %v381
    %1685 = vmatpush.msra.mxu0 %v377
    %1686 = vmatpush.msra.mxu0 %v373
    %1687 = vmatpush.msra.mxu0 %v369
    %1688 = vmatpush.msra.mxu0 %v365
    %1689 = vmatpush.msra.mxu0 %v361
    %1690 = vmatpush.msra.mxu0 %v357
    %1691 = vmatpush.msra.mxu0 %v353
    %1692 = vmatpush.msra.mxu0 %v349
    %1693 = vmatpush.msra.mxu0 %v345
    %1694 = vmatpush.msra.mxu0 %v341
    %1695 = vmatmul.f32.gmra.mxu0 %v53
    %v1696 = vpop.f32.mrf.mxu0
    %v1697 = vadd.f32 %v1584, %v1696
    %1698 = vmatmul.f32.gmra.mxu0 %v60
    %v1699 = vpop.f32.mrf.mxu0
    %v1700 = vadd.f32 %v1587, %v1699
    %1701 = vmatmul.f32.gmra.mxu0 %v67
    %v1702 = vpop.f32.mrf.mxu0
    %v1703 = vadd.f32 %v1590, %v1702
    %1704 = vmatmul.f32.gmra.mxu0 %v74
    %v1705 = vpop.f32.mrf.mxu0
    %v1706 = vadd.f32 %v1593, %v1705
    %1707 = vmatmul.f32.gmra.mxu0 %v81
    %v1708 = vpop.f32.mrf.mxu0
    %v1709 = vadd.f32 %v1596, %v1708
    %1710 = vmatmul.f32.gmra.mxu0 %v88
    %v1711 = vpop.f32.mrf.mxu0
    %v1712 = vadd.f32 %v1599, %v1711
    %1713 = vmatmul.f32.gmra.mxu0 %v95
    %v1714 = vpop.f32.mrf.mxu0
    %v1715 = vadd.f32 %v1602, %v1714
    %1716 = vmatmul.f32.gmra.mxu0 %v102
    %v1717 = vpop.f32.mrf.mxu0
    %v1718 = vadd.f32 %v1605, %v1717
    %1719 = vmatmul.f32.gmra.mxu0 %v109
    %v1720 = vpop.f32.mrf.mxu0
    %v1721 = vadd.f32 %v1608, %v1720
    %1722 = vmatmul.f32.gmra.mxu0 %v116
    %v1723 = vpop.f32.mrf.mxu0
    %v1724 = vadd.f32 %v1611, %v1723
    %1725 = vmatmul.f32.gmra.mxu0 %v123
    %v1726 = vpop.f32.mrf.mxu0
    %v1727 = vadd.f32 %v1614, %v1726
    %1728 = vmatmul.f32.gmra.mxu0 %v130
    %v1729 = vpop.f32.mrf.mxu0
    %v1730 = vadd.f32 %v1617, %v1729
    %1731 = vmatmul.f32.gmra.mxu0 %v137
    %v1732 = vpop.f32.mrf.mxu0
    %v1733 = vadd.f32 %v1620, %v1732
    %1734 = vmatmul.f32.gmra.mxu0 %v144
    %v1735 = vpop.f32.mrf.mxu0
    %v1736 = vadd.f32 %v1623, %v1735
    %1737 = vmatmul.f32.gmra.mxu0 %v151
    %v1738 = vpop.f32.mrf.mxu0
    %v1739 = vadd.f32 %v1626, %v1738
    %1740 = vmatmul.f32.gmra.mxu0 %v158
    %v1741 = vpop.f32.mrf.mxu0
    %v1742 = vadd.f32 %v1629, %v1741
    %1743 = vmatmul.f32.gmra.mxu0 %v165
    %v1744 = vpop.f32.mrf.mxu0
    %v1745 = vadd.f32 %v1632, %v1744
    %1746 = vmatmul.f32.gmra.mxu0 %v172
    %v1747 = vpop.f32.mrf.mxu0
    %v1748 = vadd.f32 %v1635, %v1747
    %1749 = vmatmul.f32.gmra.mxu0 %v179
    %v1750 = vpop.f32.mrf.mxu0
    %v1751 = vadd.f32 %v1638, %v1750
    %1752 = vmatmul.f32.gmra.mxu0 %v186
    %v1753 = vpop.f32.mrf.mxu0
    %v1754 = vadd.f32 %v1641, %v1753
    %1755 = vmatmul.f32.gmra.mxu0 %v193
    %v1756 = vpop.f32.mrf.mxu0
    %v1757 = vadd.f32 %v1644, %v1756
    %1758 = vmatmul.f32.gmra.mxu0 %v200
    %v1759 = vpop.f32.mrf.mxu0
    %v1760 = vadd.f32 %v1647, %v1759
    %1761 = vmatmul.f32.gmra.mxu0 %v207
    %v1762 = vpop.f32.mrf.mxu0
    %v1763 = vadd.f32 %v1650, %v1762
    %1764 = vmatmul.f32.gmra.mxu0 %v214
    %v1765 = vpop.f32.mrf.mxu0
    %v1766 = vadd.f32 %v1653, %v1765
    %1767 = vmatmul.f32.gmra.mxu0 %v221
    %v1768 = vpop.f32.mrf.mxu0
    %v1769 = vadd.f32 %v1656, %v1768
    %1770 = vmatmul.f32.gmra.mxu0 %v228
    %v1771 = vpop.f32.mrf.mxu0
    %v1772 = vadd.f32 %v1659, %v1771
    %1773 = vmatmul.f32.gmra.mxu0 %v235
    %v1774 = vpop.f32.mrf.mxu0
    %v1775 = vadd.f32 %v1662, %v1774
    %1776 = vmatmul.f32.gmra.mxu0 %v242
    %v1777 = vpop.f32.mrf.mxu0
    %v1778 = vadd.f32 %v1665, %v1777
    %1779 = vmatmul.f32.gmra.mxu0 %v249
    %v1780 = vpop.f32.mrf.mxu0
    %v1781 = vadd.f32 %v1668, %v1780
    %1782 = vmatmul.f32.gmra.mxu0 %v256
    %v1783 = vpop.f32.mrf.mxu0
    %v1784 = vadd.f32 %v1671, %v1783
    %1785 = vmatmul.f32.gmra.mxu0 %v263
    %v1786 = vpop.f32.mrf.mxu0
    %v1787 = vadd.f32 %v1674, %v1786
    %1788 = vmatmul.f32.gmra.mxu0 %v270
    %v1789 = vpop.f32.mrf.mxu0
    %v1790 = vadd.f32 %v1677, %v1789
    %1791 = vdwg.mxu0
    %1792 = vmatpush.msra.mxu0 %v465
    %1793 = vmatpush.msra.mxu0 %v461
    %1794 = vmatpush.msra.mxu0 %v457
    %1795 = vmatpush.msra.mxu0 %v453
    %1796 = vmatpush.msra.mxu0 %v449
    %1797 = vmatpush.msra.mxu0 %v445
    %1798 = vmatpush.msra.mxu0 %v441
    %1799 = vmatpush.msra.mxu0 %v437
    %1800 = vmatpush.msra.mxu0 %v433
    %1801 = vmatpush.msra.mxu0 %v429
    %1802 = vmatpush.msra.mxu0 %v425
    %1803 = vmatpush.msra.mxu0 %v421
    %1804 = vmatpush.msra.mxu0 %v417
    %1805 = vmatpush.msra.mxu0 %v413
    %1806 = vmatpush.msra.mxu0 %v409
    %1807 = vmatpush.msra.mxu0 %v405
    %1808 = vmatmul.f32.gmra.mxu0 %v54
    %v1809 = vpop.f32.mrf.mxu0
    %v1810 = vadd.f32 %v1697, %v1809
    %1811 = vmatmul.f32.gmra.mxu0 %v61
    %v1812 = vpop.f32.mrf.mxu0
    %v1813 = vadd.f32 %v1700, %v1812
    %1814 = vmatmul.f32.gmra.mxu0 %v68
    %v1815 = vpop.f32.mrf.mxu0
    %v1816 = vadd.f32 %v1703, %v1815
    %1817 = vmatmul.f32.gmra.mxu0 %v75
    %v1818 = vpop.f32.mrf.mxu0
    %v1819 = vadd.f32 %v1706, %v1818
    %1820 = vmatmul.f32.gmra.mxu0 %v82
    %v1821 = vpop.f32.mrf.mxu0
    %v1822 = vadd.f32 %v1709, %v1821
    %1823 = vmatmul.f32.gmra.mxu0 %v89
    %v1824 = vpop.f32.mrf.mxu0
    %v1825 = vadd.f32 %v1712, %v1824
    %1826 = vmatmul.f32.gmra.mxu0 %v96
    %v1827 = vpop.f32.mrf.mxu0
    %v1828 = vadd.f32 %v1715, %v1827
    %1829 = vmatmul.f32.gmra.mxu0 %v103
    %v1830 = vpop.f32.mrf.mxu0
    %v1831 = vadd.f32 %v1718, %v1830
    %1832 = vmatmul.f32.gmra.mxu0 %v110
    %v1833 = vpop.f32.mrf.mxu0
    %v1834 = vadd.f32 %v1721, %v1833
    %1835 = vmatmul.f32.gmra.mxu0 %v117
    %v1836 = vpop.f32.mrf.mxu0
    %v1837 = vadd.f32 %v1724, %v1836
    %1838 = vmatmul.f32.gmra.mxu0 %v124
    %v1839 = vpop.f32.mrf.mxu0
    %v1840 = vadd.f32 %v1727, %v1839
    %1841 = vmatmul.f32.gmra.mxu0 %v131
    %v1842 = vpop.f32.mrf.mxu0
    %v1843 = vadd.f32 %v1730, %v1842
    %1844 = vmatmul.f32.gmra.mxu0 %v138
    %v1845 = vpop.f32.mrf.mxu0
    %v1846 = vadd.f32 %v1733, %v1845
    %1847 = vmatmul.f32.gmra.mxu0 %v145
    %v1848 = vpop.f32.mrf.mxu0
    %v1849 = vadd.f32 %v1736, %v1848
    %1850 = vmatmul.f32.gmra.mxu0 %v152
    %v1851 = vpop.f32.mrf.mxu0
    %v1852 = vadd.f32 %v1739, %v1851
    %1853 = vmatmul.f32.gmra.mxu0 %v159
    %v1854 = vpop.f32.mrf.mxu0
    %v1855 = vadd.f32 %v1742, %v1854
    %1856 = vmatmul.f32.gmra.mxu0 %v166
    %v1857 = vpop.f32.mrf.mxu0
    %v1858 = vadd.f32 %v1745, %v1857
    %1859 = vmatmul.f32.gmra.mxu0 %v173
    %v1860 = vpop.f32.mrf.mxu0
    %v1861 = vadd.f32 %v1748, %v1860
    %1862 = vmatmul.f32.gmra.mxu0 %v180
    %v1863 = vpop.f32.mrf.mxu0
    %v1864 = vadd.f32 %v1751, %v1863
    %1865 = vmatmul.f32.gmra.mxu0 %v187
    %v1866 = vpop.f32.mrf.mxu0
    %v1867 = vadd.f32 %v1754, %v1866
    %1868 = vmatmul.f32.gmra.mxu0 %v194
    %v1869 = vpop.f32.mrf.mxu0
    %v1870 = vadd.f32 %v1757, %v1869
    %1871 = vmatmul.f32.gmra.mxu0 %v201
    %v1872 = vpop.f32.mrf.mxu0
    %v1873 = vadd.f32 %v1760, %v1872
    %1874 = vmatmul.f32.gmra.mxu0 %v208
    %v1875 = vpop.f32.mrf.mxu0
    %v1876 = vadd.f32 %v1763, %v1875
    %1877 = vmatmul.f32.gmra.mxu0 %v215
    %v1878 = vpop.f32.mrf.mxu0
    %v1879 = vadd.f32 %v1766, %v1878
    %1880 = vmatmul.f32.gmra.mxu0 %v222
    %v1881 = vpop.f32.mrf.mxu0
    %v1882 = vadd.f32 %v1769, %v1881
    %1883 = vmatmul.f32.gmra.mxu0 %v229
    %v1884 = vpop.f32.mrf.mxu0
    %v1885 = vadd.f32 %v1772, %v1884
    %1886 = vmatmul.f32.gmra.mxu0 %v236
    %v1887 = vpop.f32.mrf.mxu0
    %v1888 = vadd.f32 %v1775, %v1887
    %1889 = vmatmul.f32.gmra.mxu0 %v243
    %v1890 = vpop.f32.mrf.mxu0
    %v1891 = vadd.f32 %v1778, %v1890
    %1892 = vmatmul.f32.gmra.mxu0 %v250
    %v1893 = vpop.f32.mrf.mxu0
    %v1894 = vadd.f32 %v1781, %v1893
    %1895 = vmatmul.f32.gmra.mxu0 %v257
    %v1896 = vpop.f32.mrf.mxu0
    %v1897 = vadd.f32 %v1784, %v1896
    %1898 = vmatmul.f32.gmra.mxu0 %v264
    %v1899 = vpop.f32.mrf.mxu0
    %v1900 = vadd.f32 %v1787, %v1899
    %1901 = vmatmul.f32.gmra.mxu0 %v271
    %v1902 = vpop.f32.mrf.mxu0
    %v1903 = vadd.f32 %v1790, %v1902
    %1904 = vdwg.mxu0
    %1905 = vmatpush.msra.mxu0 %v529
    %1906 = vmatpush.msra.mxu0 %v525
    %1907 = vmatpush.msra.mxu0 %v521
    %1908 = vmatpush.msra.mxu0 %v517
    %1909 = vmatpush.msra.mxu0 %v513
    %1910 = vmatpush.msra.mxu0 %v509
    %1911 = vmatpush.msra.mxu0 %v505
    %1912 = vmatpush.msra.mxu0 %v501
    %1913 = vmatpush.msra.mxu0 %v497
    %1914 = vmatpush.msra.mxu0 %v493
    %1915 = vmatpush.msra.mxu0 %v489
    %1916 = vmatpush.msra.mxu0 %v485
    %1917 = vmatpush.msra.mxu0 %v481
    %1918 = vmatpush.msra.mxu0 %v477
    %1919 = vmatpush.msra.mxu0 %v473
    %1920 = vmatpush.msra.mxu0 %v469
    %1921 = vmatmul.f32.gmra.mxu0 %v55
    %v1922 = vpop.f32.mrf.mxu0
    %v1923 = vadd.f32 %v1810, %v1922
    %1924 = vmatmul.f32.gmra.mxu0 %v62
    %v1925 = vpop.f32.mrf.mxu0
    %v1926 = vadd.f32 %v1813, %v1925
    %1927 = vmatmul.f32.gmra.mxu0 %v69
    %v1928 = vpop.f32.mrf.mxu0
    %v1929 = vadd.f32 %v1816, %v1928
    %1930 = vmatmul.f32.gmra.mxu0 %v76
    %v1931 = vpop.f32.mrf.mxu0
    %v1932 = vadd.f32 %v1819, %v1931
    %1933 = vmatmul.f32.gmra.mxu0 %v83
    %v1934 = vpop.f32.mrf.mxu0
    %v1935 = vadd.f32 %v1822, %v1934
    %1936 = vmatmul.f32.gmra.mxu0 %v90
    %v1937 = vpop.f32.mrf.mxu0
    %v1938 = vadd.f32 %v1825, %v1937
    %1939 = vmatmul.f32.gmra.mxu0 %v97
    %v1940 = vpop.f32.mrf.mxu0
    %v1941 = vadd.f32 %v1828, %v1940
    %1942 = vmatmul.f32.gmra.mxu0 %v104
    %v1943 = vpop.f32.mrf.mxu0
    %v1944 = vadd.f32 %v1831, %v1943
    %1945 = vmatmul.f32.gmra.mxu0 %v111
    %v1946 = vpop.f32.mrf.mxu0
    %v1947 = vadd.f32 %v1834, %v1946
    %1948 = vmatmul.f32.gmra.mxu0 %v118
    %v1949 = vpop.f32.mrf.mxu0
    %v1950 = vadd.f32 %v1837, %v1949
    %1951 = vmatmul.f32.gmra.mxu0 %v125
    %v1952 = vpop.f32.mrf.mxu0
    %v1953 = vadd.f32 %v1840, %v1952
    %1954 = vmatmul.f32.gmra.mxu0 %v132
    %v1955 = vpop.f32.mrf.mxu0
    %v1956 = vadd.f32 %v1843, %v1955
    %1957 = vmatmul.f32.gmra.mxu0 %v139
    %v1958 = vpop.f32.mrf.mxu0
    %v1959 = vadd.f32 %v1846, %v1958
    %1960 = vmatmul.f32.gmra.mxu0 %v146
    %v1961 = vpop.f32.mrf.mxu0
    %v1962 = vadd.f32 %v1849, %v1961
    %1963 = vmatmul.f32.gmra.mxu0 %v153
    %v1964 = vpop.f32.mrf.mxu0
    %v1965 = vadd.f32 %v1852, %v1964
    %1966 = vmatmul.f32.gmra.mxu0 %v160
    %v1967 = vpop.f32.mrf.mxu0
    %v1968 = vadd.f32 %v1855, %v1967
    %1969 = vmatmul.f32.gmra.mxu0 %v167
    %v1970 = vpop.f32.mrf.mxu0
    %v1971 = vadd.f32 %v1858, %v1970
    %1972 = vmatmul.f32.gmra.mxu0 %v174
    %v1973 = vpop.f32.mrf.mxu0
    %v1974 = vadd.f32 %v1861, %v1973
    %1975 = vmatmul.f32.gmra.mxu0 %v181
    %v1976 = vpop.f32.mrf.mxu0
    %v1977 = vadd.f32 %v1864, %v1976
    %1978 = vmatmul.f32.gmra.mxu0 %v188
    %v1979 = vpop.f32.mrf.mxu0
    %v1980 = vadd.f32 %v1867, %v1979
    %1981 = vmatmul.f32.gmra.mxu0 %v195
    %v1982 = vpop.f32.mrf.mxu0
    %v1983 = vadd.f32 %v1870, %v1982
    %1984 = vmatmul.f32.gmra.mxu0 %v202
    %v1985 = vpop.f32.mrf.mxu0
    %v1986 = vadd.f32 %v1873, %v1985
    %1987 = vmatmul.f32.gmra.mxu0 %v209
    %v1988 = vpop.f32.mrf.mxu0
    %v1989 = vadd.f32 %v1876, %v1988
    %1990 = vmatmul.f32.gmra.mxu0 %v216
    %v1991 = vpop.f32.mrf.mxu0
    %v1992 = vadd.f32 %v1879, %v1991
    %1993 = vmatmul.f32.gmra.mxu0 %v223
    %v1994 = vpop.f32.mrf.mxu0
    %v1995 = vadd.f32 %v1882, %v1994
    %1996 = vmatmul.f32.gmra.mxu0 %v230
    %v1997 = vpop.f32.mrf.mxu0
    %v1998 = vadd.f32 %v1885, %v1997
    %1999 = vmatmul.f32.gmra.mxu0 %v237
    %v2000 = vpop.f32.mrf.mxu0
    %v2001 = vadd.f32 %v1888, %v2000
    %2002 = vmatmul.f32.gmra.mxu0 %v244
    %v2003 = vpop.f32.mrf.mxu0
    %v2004 = vadd.f32 %v1891, %v2003
    %2005 = vmatmul.f32.gmra.mxu0 %v251
    %v2006 = vpop.f32.mrf.mxu0
    %v2007 = vadd.f32 %v1894, %v2006
    %2008 = vmatmul.f32.gmra.mxu0 %v258
    %v2009 = vpop.f32.mrf.mxu0
    %v2010 = vadd.f32 %v1897, %v2009
    %2011 = vmatmul.f32.gmra.mxu0 %v265
    %v2012 = vpop.f32.mrf.mxu0
    %v2013 = vadd.f32 %v1900, %v2012
    %2014 = vmatmul.f32.gmra.mxu0 %v272
    %v2015 = vpop.f32.mrf.mxu0
    %v2016 = vadd.f32 %v1903, %v2015
    %2017 = vdwg.mxu0
    %2018 = vmatpush.msra.mxu0 %v593
    %2019 = vmatpush.msra.mxu0 %v589
    %2020 = vmatpush.msra.mxu0 %v585
    %2021 = vmatpush.msra.mxu0 %v581
    %2022 = vmatpush.msra.mxu0 %v577
    %2023 = vmatpush.msra.mxu0 %v573
    %2024 = vmatpush.msra.mxu0 %v569
    %2025 = vmatpush.msra.mxu0 %v565
    %2026 = vmatpush.msra.mxu0 %v561
    %2027 = vmatpush.msra.mxu0 %v557
    %2028 = vmatpush.msra.mxu0 %v553
    %2029 = vmatpush.msra.mxu0 %v549
    %2030 = vmatpush.msra.mxu0 %v545
    %2031 = vmatpush.msra.mxu0 %v541
    %2032 = vmatpush.msra.mxu0 %v537
    %2033 = vmatpush.msra.mxu0 %v533
    %2034 = vmatmul.f32.gmra.mxu0 %v56
    %v2035 = vpop.f32.mrf.mxu0
    %v2036 = vadd.f32 %v1923, %v2035
    %2037 = vmatmul.f32.gmra.mxu0 %v63
    %v2038 = vpop.f32.mrf.mxu0
    %v2039 = vadd.f32 %v1926, %v2038
    %2040 = vmatmul.f32.gmra.mxu0 %v70
    %v2041 = vpop.f32.mrf.mxu0
    %v2042 = vadd.f32 %v1929, %v2041
    %2043 = vmatmul.f32.gmra.mxu0 %v77
    %v2044 = vpop.f32.mrf.mxu0
    %v2045 = vadd.f32 %v1932, %v2044
    %2046 = vmatmul.f32.gmra.mxu0 %v84
    %v2047 = vpop.f32.mrf.mxu0
    %v2048 = vadd.f32 %v1935, %v2047
    %2049 = vmatmul.f32.gmra.mxu0 %v91
    %v2050 = vpop.f32.mrf.mxu0
    %v2051 = vadd.f32 %v1938, %v2050
    %2052 = vmatmul.f32.gmra.mxu0 %v98
    %v2053 = vpop.f32.mrf.mxu0
    %v2054 = vadd.f32 %v1941, %v2053
    %2055 = vmatmul.f32.gmra.mxu0 %v105
    %v2056 = vpop.f32.mrf.mxu0
    %v2057 = vadd.f32 %v1944, %v2056
    %2058 = vmatmul.f32.gmra.mxu0 %v112
    %v2059 = vpop.f32.mrf.mxu0
    %v2060 = vadd.f32 %v1947, %v2059
    %2061 = vmatmul.f32.gmra.mxu0 %v119
    %v2062 = vpop.f32.mrf.mxu0
    %v2063 = vadd.f32 %v1950, %v2062
    %2064 = vmatmul.f32.gmra.mxu0 %v126
    %v2065 = vpop.f32.mrf.mxu0
    %v2066 = vadd.f32 %v1953, %v2065
    %2067 = vmatmul.f32.gmra.mxu0 %v133
    %v2068 = vpop.f32.mrf.mxu0
    %v2069 = vadd.f32 %v1956, %v2068
    %2070 = vmatmul.f32.gmra.mxu0 %v140
    %v2071 = vpop.f32.mrf.mxu0
    %v2072 = vadd.f32 %v1959, %v2071
    %2073 = vmatmul.f32.gmra.mxu0 %v147
    %v2074 = vpop.f32.mrf.mxu0
    %v2075 = vadd.f32 %v1962, %v2074
    %2076 = vmatmul.f32.gmra.mxu0 %v154
    %v2077 = vpop.f32.mrf.mxu0
    %v2078 = vadd.f32 %v1965, %v2077
    %2079 = vmatmul.f32.gmra.mxu0 %v161
    %v2080 = vpop.f32.mrf.mxu0
    %v2081 = vadd.f32 %v1968, %v2080
    %2082 = vmatmul.f32.gmra.mxu0 %v168
    %v2083 = vpop.f32.mrf.mxu0
    %v2084 = vadd.f32 %v1971, %v2083
    %2085 = vmatmul.f32.gmra.mxu0 %v175
    %v2086 = vpop.f32.mrf.mxu0
    %v2087 = vadd.f32 %v1974, %v2086
    %2088 = vmatmul.f32.gmra.mxu0 %v182
    %v2089 = vpop.f32.mrf.mxu0
    %v2090 = vadd.f32 %v1977, %v2089
    %2091 = vmatmul.f32.gmra.mxu0 %v189
    %v2092 = vpop.f32.mrf.mxu0
    %v2093 = vadd.f32 %v1980, %v2092
    %2094 = vmatmul.f32.gmra.mxu0 %v196
    %v2095 = vpop.f32.mrf.mxu0
    %v2096 = vadd.f32 %v1983, %v2095
    %2097 = vmatmul.f32.gmra.mxu0 %v203
    %v2098 = vpop.f32.mrf.mxu0
    %v2099 = vadd.f32 %v1986, %v2098
    %2100 = vmatmul.f32.gmra.mxu0 %v210
    %v2101 = vpop.f32.mrf.mxu0
    %v2102 = vadd.f32 %v1989, %v2101
    %2103 = vmatmul.f32.gmra.mxu0 %v217
    %v2104 = vpop.f32.mrf.mxu0
    %v2105 = vadd.f32 %v1992, %v2104
    %2106 = vmatmul.f32.gmra.mxu0 %v224
    %v2107 = vpop.f32.mrf.mxu0
    %v2108 = vadd.f32 %v1995, %v2107
    %2109 = vmatmul.f32.gmra.mxu0 %v231
    %v2110 = vpop.f32.mrf.mxu0
    %v2111 = vadd.f32 %v1998, %v2110
    %2112 = vmatmul.f32.gmra.mxu0 %v238
    %v2113 = vpop.f32.mrf.mxu0
    %v2114 = vadd.f32 %v2001, %v2113
    %2115 = vmatmul.f32.gmra.mxu0 %v245
    %v2116 = vpop.f32.mrf.mxu0
    %v2117 = vadd.f32 %v2004, %v2116
    %2118 = vmatmul.f32.gmra.mxu0 %v252
    %v2119 = vpop.f32.mrf.mxu0
    %v2120 = vadd.f32 %v2007, %v2119
    %2121 = vmatmul.f32.gmra.mxu0 %v259
    %v2122 = vpop.f32.mrf.mxu0
    %v2123 = vadd.f32 %v2010, %v2122
    %2124 = vmatmul.f32.gmra.mxu0 %v266
    %v2125 = vpop.f32.mrf.mxu0
    %v2126 = vadd.f32 %v2013, %v2125
    %2127 = vmatmul.f32.gmra.mxu0 %v273
    %v2128 = vpop.f32.mrf.mxu0
    %v2129 = vadd.f32 %v2016, %v2128
    %2130 = vdwg.mxu0
    %2131 = vmatpush.msra.mxu0 %v657
    %2132 = vmatpush.msra.mxu0 %v653
    %2133 = vmatpush.msra.mxu0 %v649
    %2134 = vmatpush.msra.mxu0 %v645
    %2135 = vmatpush.msra.mxu0 %v641
    %2136 = vmatpush.msra.mxu0 %v637
    %2137 = vmatpush.msra.mxu0 %v633
    %2138 = vmatpush.msra.mxu0 %v629
    %2139 = vmatpush.msra.mxu0 %v625
    %2140 = vmatpush.msra.mxu0 %v621
    %2141 = vmatpush.msra.mxu0 %v617
    %2142 = vmatpush.msra.mxu0 %v613
    %2143 = vmatpush.msra.mxu0 %v609
    %2144 = vmatpush.msra.mxu0 %v605
    %2145 = vmatpush.msra.mxu0 %v601
    %2146 = vmatpush.msra.mxu0 %v597
    %2147 = vmatmul.f32.gmra.mxu0 %v57
    %v2148 = vpop.f32.mrf.mxu0
    %v2149 = vadd.f32 %v2036, %v2148
    %2150 = vmatmul.f32.gmra.mxu0 %v64
    %v2151 = vpop.f32.mrf.mxu0
    %v2152 = vadd.f32 %v2039, %v2151
    %2153 = vmatmul.f32.gmra.mxu0 %v71
    %v2154 = vpop.f32.mrf.mxu0
    %v2155 = vadd.f32 %v2042, %v2154
    %2156 = vmatmul.f32.gmra.mxu0 %v78
    %v2157 = vpop.f32.mrf.mxu0
    %v2158 = vadd.f32 %v2045, %v2157
    %2159 = vmatmul.f32.gmra.mxu0 %v85
    %v2160 = vpop.f32.mrf.mxu0
    %v2161 = vadd.f32 %v2048, %v2160
    %2162 = vmatmul.f32.gmra.mxu0 %v92
    %v2163 = vpop.f32.mrf.mxu0
    %v2164 = vadd.f32 %v2051, %v2163
    %2165 = vmatmul.f32.gmra.mxu0 %v99
    %v2166 = vpop.f32.mrf.mxu0
    %v2167 = vadd.f32 %v2054, %v2166
    %2168 = vmatmul.f32.gmra.mxu0 %v106
    %v2169 = vpop.f32.mrf.mxu0
    %v2170 = vadd.f32 %v2057, %v2169
    %2171 = vmatmul.f32.gmra.mxu0 %v113
    %v2172 = vpop.f32.mrf.mxu0
    %v2173 = vadd.f32 %v2060, %v2172
    %2174 = vmatmul.f32.gmra.mxu0 %v120
    %v2175 = vpop.f32.mrf.mxu0
    %v2176 = vadd.f32 %v2063, %v2175
    %2177 = vmatmul.f32.gmra.mxu0 %v127
    %v2178 = vpop.f32.mrf.mxu0
    %v2179 = vadd.f32 %v2066, %v2178
    %2180 = vmatmul.f32.gmra.mxu0 %v134
    %v2181 = vpop.f32.mrf.mxu0
    %v2182 = vadd.f32 %v2069, %v2181
    %2183 = vmatmul.f32.gmra.mxu0 %v141
    %v2184 = vpop.f32.mrf.mxu0
    %v2185 = vadd.f32 %v2072, %v2184
    %2186 = vmatmul.f32.gmra.mxu0 %v148
    %v2187 = vpop.f32.mrf.mxu0
    %v2188 = vadd.f32 %v2075, %v2187
    %2189 = vmatmul.f32.gmra.mxu0 %v155
    %v2190 = vpop.f32.mrf.mxu0
    %v2191 = vadd.f32 %v2078, %v2190
    %2192 = vmatmul.f32.gmra.mxu0 %v162
    %v2193 = vpop.f32.mrf.mxu0
    %v2194 = vadd.f32 %v2081, %v2193
    %2195 = vmatmul.f32.gmra.mxu0 %v169
    %v2196 = vpop.f32.mrf.mxu0
    %v2197 = vadd.f32 %v2084, %v2196
    %2198 = vmatmul.f32.gmra.mxu0 %v176
    %v2199 = vpop.f32.mrf.mxu0
    %v2200 = vadd.f32 %v2087, %v2199
    %2201 = vmatmul.f32.gmra.mxu0 %v183
    %v2202 = vpop.f32.mrf.mxu0
    %v2203 = vadd.f32 %v2090, %v2202
    %2204 = vmatmul.f32.gmra.mxu0 %v190
    %v2205 = vpop.f32.mrf.mxu0
    %v2206 = vadd.f32 %v2093, %v2205
    %2207 = vmatmul.f32.gmra.mxu0 %v197
    %v2208 = vpop.f32.mrf.mxu0
    %v2209 = vadd.f32 %v2096, %v2208
    %2210 = vmatmul.f32.gmra.mxu0 %v204
    %v2211 = vpop.f32.mrf.mxu0
    %v2212 = vadd.f32 %v2099, %v2211
    %2213 = vmatmul.f32.gmra.mxu0 %v211
    %v2214 = vpop.f32.mrf.mxu0
    %v2215 = vadd.f32 %v2102, %v2214
    %2216 = vmatmul.f32.gmra.mxu0 %v218
    %v2217 = vpop.f32.mrf.mxu0
    %v2218 = vadd.f32 %v2105, %v2217
    %2219 = vmatmul.f32.gmra.mxu0 %v225
    %v2220 = vpop.f32.mrf.mxu0
    %v2221 = vadd.f32 %v2108, %v2220
    %2222 = vmatmul.f32.gmra.mxu0 %v232
    %v2223 = vpop.f32.mrf.mxu0
    %v2224 = vadd.f32 %v2111, %v2223
    %2225 = vmatmul.f32.gmra.mxu0 %v239
    %v2226 = vpop.f32.mrf.mxu0
    %v2227 = vadd.f32 %v2114, %v2226
    %2228 = vmatmul.f32.gmra.mxu0 %v246
    %v2229 = vpop.f32.mrf.mxu0
    %v2230 = vadd.f32 %v2117, %v2229
    %2231 = vmatmul.f32.gmra.mxu0 %v253
    %v2232 = vpop.f32.mrf.mxu0
    %v2233 = vadd.f32 %v2120, %v2232
    %2234 = vmatmul.f32.gmra.mxu0 %v260
    %v2235 = vpop.f32.mrf.mxu0
    %v2236 = vadd.f32 %v2123, %v2235
    %2237 = vmatmul.f32.gmra.mxu0 %v267
    %v2238 = vpop.f32.mrf.mxu0
    %v2239 = vadd.f32 %v2126, %v2238
    %2240 = vmatmul.f32.gmra.mxu0 %v274
    %v2241 = vpop.f32.mrf.mxu0
    %v2242 = vadd.f32 %v2129, %v2241
    %2243 = vdwg.mxu0
    %2244 = vmatpush.msra.mxu0 0.0
    %2245 = vmatpush.msra.mxu0 0.0
    %2246 = vmatpush.msra.mxu0 0.0
    %2247 = vmatpush.msra.mxu0 0.0
    %2248 = vmatpush.msra.mxu0 0.0
    %2249 = vmatpush.msra.mxu0 0.0
    %2250 = vmatpush.msra.mxu0 0.0
    %2251 = vmatpush.msra.mxu0 0.0
    %2252 = vmatpush.msra.mxu0 0.0
    %2253 = vmatpush.msra.mxu0 0.0
    %2254 = vmatpush.msra.mxu0 0.0
    %2255 = vmatpush.msra.mxu0 0.0
    %2256 = vmatpush.msra.mxu0 0.0
    %2257 = vmatpush.msra.mxu0 0.0
    %2258 = vmatpush.msra.mxu0 %v665
    %2259 = vmatpush.msra.mxu0 %v661
    %2260 = vmatmul.f32.gmra.mxu0 %v680
    %v2261 = vpop.f32.mrf.mxu0
    %v2262 = vadd.f32 %v2149, %v2261
    %2263 = vmatmul.f32.gmra.mxu0 %v683
    %v2264 = vpop.f32.mrf.mxu0
    %v2265 = vadd.f32 %v2152, %v2264
    %2266 = vmatmul.f32.gmra.mxu0 %v686
    %v2267 = vpop.f32.mrf.mxu0
    %v2268 = vadd.f32 %v2155, %v2267
    %2269 = vmatmul.f32.gmra.mxu0 %v689
    %v2270 = vpop.f32.mrf.mxu0
    %v2271 = vadd.f32 %v2158, %v2270
    %2272 = vmatmul.f32.gmra.mxu0 %v692
    %v2273 = vpop.f32.mrf.mxu0
    %v2274 = vadd.f32 %v2161, %v2273
    %2275 = vmatmul.f32.gmra.mxu0 %v695
    %v2276 = vpop.f32.mrf.mxu0
    %v2277 = vadd.f32 %v2164, %v2276
    %2278 = vmatmul.f32.gmra.mxu0 %v698
    %v2279 = vpop.f32.mrf.mxu0
    %v2280 = vadd.f32 %v2167, %v2279
    %2281 = vmatmul.f32.gmra.mxu0 %v701
    %v2282 = vpop.f32.mrf.mxu0
    %v2283 = vadd.f32 %v2170, %v2282
    %2284 = vmatmul.f32.gmra.mxu0 %v704
    %v2285 = vpop.f32.mrf.mxu0
    %v2286 = vadd.f32 %v2173, %v2285
    %2287 = vmatmul.f32.gmra.mxu0 %v707
    %v2288 = vpop.f32.mrf.mxu0
    %v2289 = vadd.f32 %v2176, %v2288
    %2290 = vmatmul.f32.gmra.mxu0 %v710
    %v2291 = vpop.f32.mrf.mxu0
    %v2292 = vadd.f32 %v2179, %v2291
    %2293 = vmatmul.f32.gmra.mxu0 %v713
    %v2294 = vpop.f32.mrf.mxu0
    %v2295 = vadd.f32 %v2182, %v2294
    %2296 = vmatmul.f32.gmra.mxu0 %v716
    %v2297 = vpop.f32.mrf.mxu0
    %v2298 = vadd.f32 %v2185, %v2297
    %2299 = vmatmul.f32.gmra.mxu0 %v719
    %v2300 = vpop.f32.mrf.mxu0
    %v2301 = vadd.f32 %v2188, %v2300
    %2302 = vmatmul.f32.gmra.mxu0 %v722
    %v2303 = vpop.f32.mrf.mxu0
    %v2304 = vadd.f32 %v2191, %v2303
    %2305 = vmatmul.f32.gmra.mxu0 %v725
    %v2306 = vpop.f32.mrf.mxu0
    %v2307 = vadd.f32 %v2194, %v2306
    %2308 = vmatmul.f32.gmra.mxu0 %v728
    %v2309 = vpop.f32.mrf.mxu0
    %v2310 = vadd.f32 %v2197, %v2309
    %2311 = vmatmul.f32.gmra.mxu0 %v731
    %v2312 = vpop.f32.mrf.mxu0
    %v2313 = vadd.f32 %v2200, %v2312
    %2314 = vmatmul.f32.gmra.mxu0 %v734
    %v2315 = vpop.f32.mrf.mxu0
    %v2316 = vadd.f32 %v2203, %v2315
    %2317 = vmatmul.f32.gmra.mxu0 %v737
    %v2318 = vpop.f32.mrf.mxu0
    %v2319 = vadd.f32 %v2206, %v2318
    %2320 = vmatmul.f32.gmra.mxu0 %v740
    %v2321 = vpop.f32.mrf.mxu0
    %v2322 = vadd.f32 %v2209, %v2321
    %2323 = vmatmul.f32.gmra.mxu0 %v743
    %v2324 = vpop.f32.mrf.mxu0
    %v2325 = vadd.f32 %v2212, %v2324
    %2326 = vmatmul.f32.gmra.mxu0 %v746
    %v2327 = vpop.f32.mrf.mxu0
    %v2328 = vadd.f32 %v2215, %v2327
    %2329 = vmatmul.f32.gmra.mxu0 %v749
    %v2330 = vpop.f32.mrf.mxu0
    %v2331 = vadd.f32 %v2218, %v2330
    %2332 = vmatmul.f32.gmra.mxu0 %v752
    %v2333 = vpop.f32.mrf.mxu0
    %v2334 = vadd.f32 %v2221, %v2333
    %2335 = vmatmul.f32.gmra.mxu0 %v755
    %v2336 = vpop.f32.mrf.mxu0
    %v2337 = vadd.f32 %v2224, %v2336
    %2338 = vmatmul.f32.gmra.mxu0 %v758
    %v2339 = vpop.f32.mrf.mxu0
    %v2340 = vadd.f32 %v2227, %v2339
    %2341 = vmatmul.f32.gmra.mxu0 %v761
    %v2342 = vpop.f32.mrf.mxu0
    %v2343 = vadd.f32 %v2230, %v2342
    %2344 = vmatmul.f32.gmra.mxu0 %v764
    %v2345 = vpop.f32.mrf.mxu0
    %v2346 = vadd.f32 %v2233, %v2345
    %2347 = vmatmul.f32.gmra.mxu0 %v767
    %v2348 = vpop.f32.mrf.mxu0
    %v2349 = vadd.f32 %v2236, %v2348
    %2350 = vmatmul.f32.gmra.mxu0 %v770
    %v2351 = vpop.f32.mrf.mxu0
    %v2352 = vadd.f32 %v2239, %v2351
    %2353 = vmatmul.f32.gmra.mxu0 %v773
    %v2354 = vpop.f32.mrf.mxu0
    %v2355 = vadd.f32 %v2242, %v2354
    %2356 = vdwg.mxu0
    %2357 = vmatpush.msra.mxu0 %v338
    %2358 = vmatpush.msra.mxu0 %v334
    %2359 = vmatpush.msra.mxu0 %v330
    %2360 = vmatpush.msra.mxu0 %v326
    %2361 = vmatpush.msra.mxu0 %v322
    %2362 = vmatpush.msra.mxu0 %v318
    %2363 = vmatpush.msra.mxu0 %v314
    %2364 = vmatpush.msra.mxu0 %v310
    %2365 = vmatpush.msra.mxu0 %v306
    %2366 = vmatpush.msra.mxu0 %v302
    %2367 = vmatpush.msra.mxu0 %v298
    %2368 = vmatpush.msra.mxu0 %v294
    %2369 = vmatpush.msra.mxu0 %v290
    %2370 = vmatpush.msra.mxu0 %v286
    %2371 = vmatpush.msra.mxu0 %v282
    %2372 = vmatpush.msra.mxu0 %v278
    %2373 = vmatmul.f32.gmra.mxu0 %v52
    %v2374 = vpop.f32.mrf.mxu0
    %v2375 = vadd.f32 %v672, %v2374
    %2376 = vmatmul.f32.gmra.mxu0 %v59
    %v2377 = vpop.f32.mrf.mxu0
    %v2378 = vadd.f32 %v672, %v2377
    %2379 = vmatmul.f32.gmra.mxu0 %v66
    %v2380 = vpop.f32.mrf.mxu0
    %v2381 = vadd.f32 %v672, %v2380
    %2382 = vmatmul.f32.gmra.mxu0 %v73
    %v2383 = vpop.f32.mrf.mxu0
    %v2384 = vadd.f32 %v672, %v2383
    %2385 = vmatmul.f32.gmra.mxu0 %v80
    %v2386 = vpop.f32.mrf.mxu0
    %v2387 = vadd.f32 %v672, %v2386
    %2388 = vmatmul.f32.gmra.mxu0 %v87
    %v2389 = vpop.f32.mrf.mxu0
    %v2390 = vadd.f32 %v672, %v2389
    %2391 = vmatmul.f32.gmra.mxu0 %v94
    %v2392 = vpop.f32.mrf.mxu0
    %v2393 = vadd.f32 %v672, %v2392
    %2394 = vmatmul.f32.gmra.mxu0 %v101
    %v2395 = vpop.f32.mrf.mxu0
    %v2396 = vadd.f32 %v672, %v2395
    %2397 = vmatmul.f32.gmra.mxu0 %v108
    %v2398 = vpop.f32.mrf.mxu0
    %v2399 = vadd.f32 %v672, %v2398
    %2400 = vmatmul.f32.gmra.mxu0 %v115
    %v2401 = vpop.f32.mrf.mxu0
    %v2402 = vadd.f32 %v672, %v2401
    %2403 = vmatmul.f32.gmra.mxu0 %v122
    %v2404 = vpop.f32.mrf.mxu0
    %v2405 = vadd.f32 %v672, %v2404
    %2406 = vmatmul.f32.gmra.mxu0 %v129
    %v2407 = vpop.f32.mrf.mxu0
    %v2408 = vadd.f32 %v672, %v2407
    %2409 = vmatmul.f32.gmra.mxu0 %v136
    %v2410 = vpop.f32.mrf.mxu0
    %v2411 = vadd.f32 %v672, %v2410
    %2412 = vmatmul.f32.gmra.mxu0 %v143
    %v2413 = vpop.f32.mrf.mxu0
    %v2414 = vadd.f32 %v672, %v2413
    %2415 = vmatmul.f32.gmra.mxu0 %v150
    %v2416 = vpop.f32.mrf.mxu0
    %v2417 = vadd.f32 %v672, %v2416
    %2418 = vmatmul.f32.gmra.mxu0 %v157
    %v2419 = vpop.f32.mrf.mxu0
    %v2420 = vadd.f32 %v672, %v2419
    %2421 = vmatmul.f32.gmra.mxu0 %v164
    %v2422 = vpop.f32.mrf.mxu0
    %v2423 = vadd.f32 %v672, %v2422
    %2424 = vmatmul.f32.gmra.mxu0 %v171
    %v2425 = vpop.f32.mrf.mxu0
    %v2426 = vadd.f32 %v672, %v2425
    %2427 = vmatmul.f32.gmra.mxu0 %v178
    %v2428 = vpop.f32.mrf.mxu0
    %v2429 = vadd.f32 %v672, %v2428
    %2430 = vmatmul.f32.gmra.mxu0 %v185
    %v2431 = vpop.f32.mrf.mxu0
    %v2432 = vadd.f32 %v672, %v2431
    %2433 = vmatmul.f32.gmra.mxu0 %v192
    %v2434 = vpop.f32.mrf.mxu0
    %v2435 = vadd.f32 %v672, %v2434
    %2436 = vmatmul.f32.gmra.mxu0 %v199
    %v2437 = vpop.f32.mrf.mxu0
    %v2438 = vadd.f32 %v672, %v2437
    %2439 = vmatmul.f32.gmra.mxu0 %v206
    %v2440 = vpop.f32.mrf.mxu0
    %v2441 = vadd.f32 %v672, %v2440
    %2442 = vmatmul.f32.gmra.mxu0 %v213
    %v2443 = vpop.f32.mrf.mxu0
    %v2444 = vadd.f32 %v672, %v2443
    %2445 = vmatmul.f32.gmra.mxu0 %v220
    %v2446 = vpop.f32.mrf.mxu0
    %v2447 = vadd.f32 %v672, %v2446
    %2448 = vmatmul.f32.gmra.mxu0 %v227
    %v2449 = vpop.f32.mrf.mxu0
    %v2450 = vadd.f32 %v672, %v2449
    %2451 = vmatmul.f32.gmra.mxu0 %v234
    %v2452 = vpop.f32.mrf.mxu0
    %v2453 = vadd.f32 %v672, %v2452
    %2454 = vmatmul.f32.gmra.mxu0 %v241
    %v2455 = vpop.f32.mrf.mxu0
    %v2456 = vadd.f32 %v672, %v2455
    %2457 = vmatmul.f32.gmra.mxu0 %v248
    %v2458 = vpop.f32.mrf.mxu0
    %v2459 = vadd.f32 %v672, %v2458
    %2460 = vmatmul.f32.gmra.mxu0 %v255
    %v2461 = vpop.f32.mrf.mxu0
    %v2462 = vadd.f32 %v672, %v2461
    %2463 = vmatmul.f32.gmra.mxu0 %v262
    %v2464 = vpop.f32.mrf.mxu0
    %v2465 = vadd.f32 %v672, %v2464
    %2466 = vmatmul.f32.gmra.mxu0 %v269
    %v2467 = vpop.f32.mrf.mxu0
    %v2468 = vadd.f32 %v672, %v2467
    %2469 = vdwg.mxu0
    %2470 = vmatpush.msra.mxu0 %v402
    %2471 = vmatpush.msra.mxu0 %v398
    %2472 = vmatpush.msra.mxu0 %v394
    %2473 = vmatpush.msra.mxu0 %v390
    %2474 = vmatpush.msra.mxu0 %v386
    %2475 = vmatpush.msra.mxu0 %v382
    %2476 = vmatpush.msra.mxu0 %v378
    %2477 = vmatpush.msra.mxu0 %v374
    %2478 = vmatpush.msra.mxu0 %v370
    %2479 = vmatpush.msra.mxu0 %v366
    %2480 = vmatpush.msra.mxu0 %v362
    %2481 = vmatpush.msra.mxu0 %v358
    %2482 = vmatpush.msra.mxu0 %v354
    %2483 = vmatpush.msra.mxu0 %v350
    %2484 = vmatpush.msra.mxu0 %v346
    %2485 = vmatpush.msra.mxu0 %v342
    %2486 = vmatmul.f32.gmra.mxu0 %v53
    %v2487 = vpop.f32.mrf.mxu0
    %v2488 = vadd.f32 %v2375, %v2487
    %2489 = vmatmul.f32.gmra.mxu0 %v60
    %v2490 = vpop.f32.mrf.mxu0
    %v2491 = vadd.f32 %v2378, %v2490
    %2492 = vmatmul.f32.gmra.mxu0 %v67
    %v2493 = vpop.f32.mrf.mxu0
    %v2494 = vadd.f32 %v2381, %v2493
    %2495 = vmatmul.f32.gmra.mxu0 %v74
    %v2496 = vpop.f32.mrf.mxu0
    %v2497 = vadd.f32 %v2384, %v2496
    %2498 = vmatmul.f32.gmra.mxu0 %v81
    %v2499 = vpop.f32.mrf.mxu0
    %v2500 = vadd.f32 %v2387, %v2499
    %2501 = vmatmul.f32.gmra.mxu0 %v88
    %v2502 = vpop.f32.mrf.mxu0
    %v2503 = vadd.f32 %v2390, %v2502
    %2504 = vmatmul.f32.gmra.mxu0 %v95
    %v2505 = vpop.f32.mrf.mxu0
    %v2506 = vadd.f32 %v2393, %v2505
    %2507 = vmatmul.f32.gmra.mxu0 %v102
    %v2508 = vpop.f32.mrf.mxu0
    %v2509 = vadd.f32 %v2396, %v2508
    %2510 = vmatmul.f32.gmra.mxu0 %v109
    %v2511 = vpop.f32.mrf.mxu0
    %v2512 = vadd.f32 %v2399, %v2511
    %2513 = vmatmul.f32.gmra.mxu0 %v116
    %v2514 = vpop.f32.mrf.mxu0
    %v2515 = vadd.f32 %v2402, %v2514
    %2516 = vmatmul.f32.gmra.mxu0 %v123
    %v2517 = vpop.f32.mrf.mxu0
    %v2518 = vadd.f32 %v2405, %v2517
    %2519 = vmatmul.f32.gmra.mxu0 %v130
    %v2520 = vpop.f32.mrf.mxu0
    %v2521 = vadd.f32 %v2408, %v2520
    %2522 = vmatmul.f32.gmra.mxu0 %v137
    %v2523 = vpop.f32.mrf.mxu0
    %v2524 = vadd.f32 %v2411, %v2523
    %2525 = vmatmul.f32.gmra.mxu0 %v144
    %v2526 = vpop.f32.mrf.mxu0
    %v2527 = vadd.f32 %v2414, %v2526
    %2528 = vmatmul.f32.gmra.mxu0 %v151
    %v2529 = vpop.f32.mrf.mxu0
    %v2530 = vadd.f32 %v2417, %v2529
    %2531 = vmatmul.f32.gmra.mxu0 %v158
    %v2532 = vpop.f32.mrf.mxu0
    %v2533 = vadd.f32 %v2420, %v2532
    %2534 = vmatmul.f32.gmra.mxu0 %v165
    %v2535 = vpop.f32.mrf.mxu0
    %v2536 = vadd.f32 %v2423, %v2535
    %2537 = vmatmul.f32.gmra.mxu0 %v172
    %v2538 = vpop.f32.mrf.mxu0
    %v2539 = vadd.f32 %v2426, %v2538
    %2540 = vmatmul.f32.gmra.mxu0 %v179
    %v2541 = vpop.f32.mrf.mxu0
    %v2542 = vadd.f32 %v2429, %v2541
    %2543 = vmatmul.f32.gmra.mxu0 %v186
    %v2544 = vpop.f32.mrf.mxu0
    %v2545 = vadd.f32 %v2432, %v2544
    %2546 = vmatmul.f32.gmra.mxu0 %v193
    %v2547 = vpop.f32.mrf.mxu0
    %v2548 = vadd.f32 %v2435, %v2547
    %2549 = vmatmul.f32.gmra.mxu0 %v200
    %v2550 = vpop.f32.mrf.mxu0
    %v2551 = vadd.f32 %v2438, %v2550
    %2552 = vmatmul.f32.gmra.mxu0 %v207
    %v2553 = vpop.f32.mrf.mxu0
    %v2554 = vadd.f32 %v2441, %v2553
    %2555 = vmatmul.f32.gmra.mxu0 %v214
    %v2556 = vpop.f32.mrf.mxu0
    %v2557 = vadd.f32 %v2444, %v2556
    %2558 = vmatmul.f32.gmra.mxu0 %v221
    %v2559 = vpop.f32.mrf.mxu0
    %v2560 = vadd.f32 %v2447, %v2559
    %2561 = vmatmul.f32.gmra.mxu0 %v228
    %v2562 = vpop.f32.mrf.mxu0
    %v2563 = vadd.f32 %v2450, %v2562
    %2564 = vmatmul.f32.gmra.mxu0 %v235
    %v2565 = vpop.f32.mrf.mxu0
    %v2566 = vadd.f32 %v2453, %v2565
    %2567 = vmatmul.f32.gmra.mxu0 %v242
    %v2568 = vpop.f32.mrf.mxu0
    %v2569 = vadd.f32 %v2456, %v2568
    %2570 = vmatmul.f32.gmra.mxu0 %v249
    %v2571 = vpop.f32.mrf.mxu0
    %v2572 = vadd.f32 %v2459, %v2571
    %2573 = vmatmul.f32.gmra.mxu0 %v256
    %v2574 = vpop.f32.mrf.mxu0
    %v2575 = vadd.f32 %v2462, %v2574
    %2576 = vmatmul.f32.gmra.mxu0 %v263
    %v2577 = vpop.f32.mrf.mxu0
    %v2578 = vadd.f32 %v2465, %v2577
    %2579 = vmatmul.f32.gmra.mxu0 %v270
    %v2580 = vpop.f32.mrf.mxu0
    %v2581 = vadd.f32 %v2468, %v2580
    %2582 = vdwg.mxu0
    %2583 = vmatpush.msra.mxu0 %v466
    %2584 = vmatpush.msra.mxu0 %v462
    %2585 = vmatpush.msra.mxu0 %v458
    %2586 = vmatpush.msra.mxu0 %v454
    %2587 = vmatpush.msra.mxu0 %v450
    %2588 = vmatpush.msra.mxu0 %v446
    %2589 = vmatpush.msra.mxu0 %v442
    %2590 = vmatpush.msra.mxu0 %v438
    %2591 = vmatpush.msra.mxu0 %v434
    %2592 = vmatpush.msra.mxu0 %v430
    %2593 = vmatpush.msra.mxu0 %v426
    %2594 = vmatpush.msra.mxu0 %v422
    %2595 = vmatpush.msra.mxu0 %v418
    %2596 = vmatpush.msra.mxu0 %v414
    %2597 = vmatpush.msra.mxu0 %v410
    %2598 = vmatpush.msra.mxu0 %v406
    %2599 = vmatmul.f32.gmra.mxu0 %v54
    %v2600 = vpop.f32.mrf.mxu0
    %v2601 = vadd.f32 %v2488, %v2600
    %2602 = vmatmul.f32.gmra.mxu0 %v61
    %v2603 = vpop.f32.mrf.mxu0
    %v2604 = vadd.f32 %v2491, %v2603
    %2605 = vmatmul.f32.gmra.mxu0 %v68
    %v2606 = vpop.f32.mrf.mxu0
    %v2607 = vadd.f32 %v2494, %v2606
    %2608 = vmatmul.f32.gmra.mxu0 %v75
    %v2609 = vpop.f32.mrf.mxu0
    %v2610 = vadd.f32 %v2497, %v2609
    %2611 = vmatmul.f32.gmra.mxu0 %v82
    %v2612 = vpop.f32.mrf.mxu0
    %v2613 = vadd.f32 %v2500, %v2612
    %2614 = vmatmul.f32.gmra.mxu0 %v89
    %v2615 = vpop.f32.mrf.mxu0
    %v2616 = vadd.f32 %v2503, %v2615
    %2617 = vmatmul.f32.gmra.mxu0 %v96
    %v2618 = vpop.f32.mrf.mxu0
    %v2619 = vadd.f32 %v2506, %v2618
    %2620 = vmatmul.f32.gmra.mxu0 %v103
    %v2621 = vpop.f32.mrf.mxu0
    %v2622 = vadd.f32 %v2509, %v2621
    %2623 = vmatmul.f32.gmra.mxu0 %v110
    %v2624 = vpop.f32.mrf.mxu0
    %v2625 = vadd.f32 %v2512, %v2624
    %2626 = vmatmul.f32.gmra.mxu0 %v117
    %v2627 = vpop.f32.mrf.mxu0
    %v2628 = vadd.f32 %v2515, %v2627
    %2629 = vmatmul.f32.gmra.mxu0 %v124
    %v2630 = vpop.f32.mrf.mxu0
    %v2631 = vadd.f32 %v2518, %v2630
    %2632 = vmatmul.f32.gmra.mxu0 %v131
    %v2633 = vpop.f32.mrf.mxu0
    %v2634 = vadd.f32 %v2521, %v2633
    %2635 = vmatmul.f32.gmra.mxu0 %v138
    %v2636 = vpop.f32.mrf.mxu0
    %v2637 = vadd.f32 %v2524, %v2636
    %2638 = vmatmul.f32.gmra.mxu0 %v145
    %v2639 = vpop.f32.mrf.mxu0
    %v2640 = vadd.f32 %v2527, %v2639
    %2641 = vmatmul.f32.gmra.mxu0 %v152
    %v2642 = vpop.f32.mrf.mxu0
    %v2643 = vadd.f32 %v2530, %v2642
    %2644 = vmatmul.f32.gmra.mxu0 %v159
    %v2645 = vpop.f32.mrf.mxu0
    %v2646 = vadd.f32 %v2533, %v2645
    %2647 = vmatmul.f32.gmra.mxu0 %v166
    %v2648 = vpop.f32.mrf.mxu0
    %v2649 = vadd.f32 %v2536, %v2648
    %2650 = vmatmul.f32.gmra.mxu0 %v173
    %v2651 = vpop.f32.mrf.mxu0
    %v2652 = vadd.f32 %v2539, %v2651
    %2653 = vmatmul.f32.gmra.mxu0 %v180
    %v2654 = vpop.f32.mrf.mxu0
    %v2655 = vadd.f32 %v2542, %v2654
    %2656 = vmatmul.f32.gmra.mxu0 %v187
    %v2657 = vpop.f32.mrf.mxu0
    %v2658 = vadd.f32 %v2545, %v2657
    %2659 = vmatmul.f32.gmra.mxu0 %v194
    %v2660 = vpop.f32.mrf.mxu0
    %v2661 = vadd.f32 %v2548, %v2660
    %2662 = vmatmul.f32.gmra.mxu0 %v201
    %v2663 = vpop.f32.mrf.mxu0
    %v2664 = vadd.f32 %v2551, %v2663
    %2665 = vmatmul.f32.gmra.mxu0 %v208
    %v2666 = vpop.f32.mrf.mxu0
    %v2667 = vadd.f32 %v2554, %v2666
    %2668 = vmatmul.f32.gmra.mxu0 %v215
    %v2669 = vpop.f32.mrf.mxu0
    %v2670 = vadd.f32 %v2557, %v2669
    %2671 = vmatmul.f32.gmra.mxu0 %v222
    %v2672 = vpop.f32.mrf.mxu0
    %v2673 = vadd.f32 %v2560, %v2672
    %2674 = vmatmul.f32.gmra.mxu0 %v229
    %v2675 = vpop.f32.mrf.mxu0
    %v2676 = vadd.f32 %v2563, %v2675
    %2677 = vmatmul.f32.gmra.mxu0 %v236
    %v2678 = vpop.f32.mrf.mxu0
    %v2679 = vadd.f32 %v2566, %v2678
    %2680 = vmatmul.f32.gmra.mxu0 %v243
    %v2681 = vpop.f32.mrf.mxu0
    %v2682 = vadd.f32 %v2569, %v2681
    %2683 = vmatmul.f32.gmra.mxu0 %v250
    %v2684 = vpop.f32.mrf.mxu0
    %v2685 = vadd.f32 %v2572, %v2684
    %2686 = vmatmul.f32.gmra.mxu0 %v257
    %v2687 = vpop.f32.mrf.mxu0
    %v2688 = vadd.f32 %v2575, %v2687
    %2689 = vmatmul.f32.gmra.mxu0 %v264
    %v2690 = vpop.f32.mrf.mxu0
    %v2691 = vadd.f32 %v2578, %v2690
    %2692 = vmatmul.f32.gmra.mxu0 %v271
    %v2693 = vpop.f32.mrf.mxu0
    %v2694 = vadd.f32 %v2581, %v2693
    %2695 = vdwg.mxu0
    %2696 = vmatpush.msra.mxu0 %v530
    %2697 = vmatpush.msra.mxu0 %v526
    %2698 = vmatpush.msra.mxu0 %v522
    %2699 = vmatpush.msra.mxu0 %v518
    %2700 = vmatpush.msra.mxu0 %v514
    %2701 = vmatpush.msra.mxu0 %v510
    %2702 = vmatpush.msra.mxu0 %v506
    %2703 = vmatpush.msra.mxu0 %v502
    %2704 = vmatpush.msra.mxu0 %v498
    %2705 = vmatpush.msra.mxu0 %v494
    %2706 = vmatpush.msra.mxu0 %v490
    %2707 = vmatpush.msra.mxu0 %v486
    %2708 = vmatpush.msra.mxu0 %v482
    %2709 = vmatpush.msra.mxu0 %v478
    %2710 = vmatpush.msra.mxu0 %v474
    %2711 = vmatpush.msra.mxu0 %v470
    %2712 = vmatmul.f32.gmra.mxu0 %v55
    %v2713 = vpop.f32.mrf.mxu0
    %v2714 = vadd.f32 %v2601, %v2713
    %2715 = vmatmul.f32.gmra.mxu0 %v62
    %v2716 = vpop.f32.mrf.mxu0
    %v2717 = vadd.f32 %v2604, %v2716
    %2718 = vmatmul.f32.gmra.mxu0 %v69
    %v2719 = vpop.f32.mrf.mxu0
    %v2720 = vadd.f32 %v2607, %v2719
    %2721 = vmatmul.f32.gmra.mxu0 %v76
    %v2722 = vpop.f32.mrf.mxu0
    %v2723 = vadd.f32 %v2610, %v2722
    %2724 = vmatmul.f32.gmra.mxu0 %v83
    %v2725 = vpop.f32.mrf.mxu0
    %v2726 = vadd.f32 %v2613, %v2725
    %2727 = vmatmul.f32.gmra.mxu0 %v90
    %v2728 = vpop.f32.mrf.mxu0
    %v2729 = vadd.f32 %v2616, %v2728
    %2730 = vmatmul.f32.gmra.mxu0 %v97
    %v2731 = vpop.f32.mrf.mxu0
    %v2732 = vadd.f32 %v2619, %v2731
    %2733 = vmatmul.f32.gmra.mxu0 %v104
    %v2734 = vpop.f32.mrf.mxu0
    %v2735 = vadd.f32 %v2622, %v2734
    %2736 = vmatmul.f32.gmra.mxu0 %v111
    %v2737 = vpop.f32.mrf.mxu0
    %v2738 = vadd.f32 %v2625, %v2737
    %2739 = vmatmul.f32.gmra.mxu0 %v118
    %v2740 = vpop.f32.mrf.mxu0
    %v2741 = vadd.f32 %v2628, %v2740
    %2742 = vmatmul.f32.gmra.mxu0 %v125
    %v2743 = vpop.f32.mrf.mxu0
    %v2744 = vadd.f32 %v2631, %v2743
    %2745 = vmatmul.f32.gmra.mxu0 %v132
    %v2746 = vpop.f32.mrf.mxu0
    %v2747 = vadd.f32 %v2634, %v2746
    %2748 = vmatmul.f32.gmra.mxu0 %v139
    %v2749 = vpop.f32.mrf.mxu0
    %v2750 = vadd.f32 %v2637, %v2749
    %2751 = vmatmul.f32.gmra.mxu0 %v146
    %v2752 = vpop.f32.mrf.mxu0
    %v2753 = vadd.f32 %v2640, %v2752
    %2754 = vmatmul.f32.gmra.mxu0 %v153
    %v2755 = vpop.f32.mrf.mxu0
    %v2756 = vadd.f32 %v2643, %v2755
    %2757 = vmatmul.f32.gmra.mxu0 %v160
    %v2758 = vpop.f32.mrf.mxu0
    %v2759 = vadd.f32 %v2646, %v2758
    %2760 = vmatmul.f32.gmra.mxu0 %v167
    %v2761 = vpop.f32.mrf.mxu0
    %v2762 = vadd.f32 %v2649, %v2761
    %2763 = vmatmul.f32.gmra.mxu0 %v174
    %v2764 = vpop.f32.mrf.mxu0
    %v2765 = vadd.f32 %v2652, %v2764
    %2766 = vmatmul.f32.gmra.mxu0 %v181
    %v2767 = vpop.f32.mrf.mxu0
    %v2768 = vadd.f32 %v2655, %v2767
    %2769 = vmatmul.f32.gmra.mxu0 %v188
    %v2770 = vpop.f32.mrf.mxu0
    %v2771 = vadd.f32 %v2658, %v2770
    %2772 = vmatmul.f32.gmra.mxu0 %v195
    %v2773 = vpop.f32.mrf.mxu0
    %v2774 = vadd.f32 %v2661, %v2773
    %2775 = vmatmul.f32.gmra.mxu0 %v202
    %v2776 = vpop.f32.mrf.mxu0
    %v2777 = vadd.f32 %v2664, %v2776
    %2778 = vmatmul.f32.gmra.mxu0 %v209
    %v2779 = vpop.f32.mrf.mxu0
    %v2780 = vadd.f32 %v2667, %v2779
    %2781 = vmatmul.f32.gmra.mxu0 %v216
    %v2782 = vpop.f32.mrf.mxu0
    %v2783 = vadd.f32 %v2670, %v2782
    %2784 = vmatmul.f32.gmra.mxu0 %v223
    %v2785 = vpop.f32.mrf.mxu0
    %v2786 = vadd.f32 %v2673, %v2785
    %2787 = vmatmul.f32.gmra.mxu0 %v230
    %v2788 = vpop.f32.mrf.mxu0
    %v2789 = vadd.f32 %v2676, %v2788
    %2790 = vmatmul.f32.gmra.mxu0 %v237
    %v2791 = vpop.f32.mrf.mxu0
    %v2792 = vadd.f32 %v2679, %v2791
    %2793 = vmatmul.f32.gmra.mxu0 %v244
    %v2794 = vpop.f32.mrf.mxu0
    %v2795 = vadd.f32 %v2682, %v2794
    %2796 = vmatmul.f32.gmra.mxu0 %v251
    %v2797 = vpop.f32.mrf.mxu0
    %v2798 = vadd.f32 %v2685, %v2797
    %2799 = vmatmul.f32.gmra.mxu0 %v258
    %v2800 = vpop.f32.mrf.mxu0
    %v2801 = vadd.f32 %v2688, %v2800
    %2802 = vmatmul.f32.gmra.mxu0 %v265
    %v2803 = vpop.f32.mrf.mxu0
    %v2804 = vadd.f32 %v2691, %v2803
    %2805 = vmatmul.f32.gmra.mxu0 %v272
    %v2806 = vpop.f32.mrf.mxu0
    %v2807 = vadd.f32 %v2694, %v2806
    %2808 = vdwg.mxu0
    %2809 = vmatpush.msra.mxu0 %v594
    %2810 = vmatpush.msra.mxu0 %v590
    %2811 = vmatpush.msra.mxu0 %v586
    %2812 = vmatpush.msra.mxu0 %v582
    %2813 = vmatpush.msra.mxu0 %v578
    %2814 = vmatpush.msra.mxu0 %v574
    %2815 = vmatpush.msra.mxu0 %v570
    %2816 = vmatpush.msra.mxu0 %v566
    %2817 = vmatpush.msra.mxu0 %v562
    %2818 = vmatpush.msra.mxu0 %v558
    %2819 = vmatpush.msra.mxu0 %v554
    %2820 = vmatpush.msra.mxu0 %v550
    %2821 = vmatpush.msra.mxu0 %v546
    %2822 = vmatpush.msra.mxu0 %v542
    %2823 = vmatpush.msra.mxu0 %v538
    %2824 = vmatpush.msra.mxu0 %v534
    %2825 = vmatmul.f32.gmra.mxu0 %v56
    %v2826 = vpop.f32.mrf.mxu0
    %v2827 = vadd.f32 %v2714, %v2826
    %2828 = vmatmul.f32.gmra.mxu0 %v63
    %v2829 = vpop.f32.mrf.mxu0
    %v2830 = vadd.f32 %v2717, %v2829
    %2831 = vmatmul.f32.gmra.mxu0 %v70
    %v2832 = vpop.f32.mrf.mxu0
    %v2833 = vadd.f32 %v2720, %v2832
    %2834 = vmatmul.f32.gmra.mxu0 %v77
    %v2835 = vpop.f32.mrf.mxu0
    %v2836 = vadd.f32 %v2723, %v2835
    %2837 = vmatmul.f32.gmra.mxu0 %v84
    %v2838 = vpop.f32.mrf.mxu0
    %v2839 = vadd.f32 %v2726, %v2838
    %2840 = vmatmul.f32.gmra.mxu0 %v91
    %v2841 = vpop.f32.mrf.mxu0
    %v2842 = vadd.f32 %v2729, %v2841
    %2843 = vmatmul.f32.gmra.mxu0 %v98
    %v2844 = vpop.f32.mrf.mxu0
    %v2845 = vadd.f32 %v2732, %v2844
    %2846 = vmatmul.f32.gmra.mxu0 %v105
    %v2847 = vpop.f32.mrf.mxu0
    %v2848 = vadd.f32 %v2735, %v2847
    %2849 = vmatmul.f32.gmra.mxu0 %v112
    %v2850 = vpop.f32.mrf.mxu0
    %v2851 = vadd.f32 %v2738, %v2850
    %2852 = vmatmul.f32.gmra.mxu0 %v119
    %v2853 = vpop.f32.mrf.mxu0
    %v2854 = vadd.f32 %v2741, %v2853
    %2855 = vmatmul.f32.gmra.mxu0 %v126
    %v2856 = vpop.f32.mrf.mxu0
    %v2857 = vadd.f32 %v2744, %v2856
    %2858 = vmatmul.f32.gmra.mxu0 %v133
    %v2859 = vpop.f32.mrf.mxu0
    %v2860 = vadd.f32 %v2747, %v2859
    %2861 = vmatmul.f32.gmra.mxu0 %v140
    %v2862 = vpop.f32.mrf.mxu0
    %v2863 = vadd.f32 %v2750, %v2862
    %2864 = vmatmul.f32.gmra.mxu0 %v147
    %v2865 = vpop.f32.mrf.mxu0
    %v2866 = vadd.f32 %v2753, %v2865
    %2867 = vmatmul.f32.gmra.mxu0 %v154
    %v2868 = vpop.f32.mrf.mxu0
    %v2869 = vadd.f32 %v2756, %v2868
    %2870 = vmatmul.f32.gmra.mxu0 %v161
    %v2871 = vpop.f32.mrf.mxu0
    %v2872 = vadd.f32 %v2759, %v2871
    %2873 = vmatmul.f32.gmra.mxu0 %v168
    %v2874 = vpop.f32.mrf.mxu0
    %v2875 = vadd.f32 %v2762, %v2874
    %2876 = vmatmul.f32.gmra.mxu0 %v175
    %v2877 = vpop.f32.mrf.mxu0
    %v2878 = vadd.f32 %v2765, %v2877
    %2879 = vmatmul.f32.gmra.mxu0 %v182
    %v2880 = vpop.f32.mrf.mxu0
    %v2881 = vadd.f32 %v2768, %v2880
    %2882 = vmatmul.f32.gmra.mxu0 %v189
    %v2883 = vpop.f32.mrf.mxu0
    %v2884 = vadd.f32 %v2771, %v2883
    %2885 = vmatmul.f32.gmra.mxu0 %v196
    %v2886 = vpop.f32.mrf.mxu0
    %v2887 = vadd.f32 %v2774, %v2886
    %2888 = vmatmul.f32.gmra.mxu0 %v203
    %v2889 = vpop.f32.mrf.mxu0
    %v2890 = vadd.f32 %v2777, %v2889
    %2891 = vmatmul.f32.gmra.mxu0 %v210
    %v2892 = vpop.f32.mrf.mxu0
    %v2893 = vadd.f32 %v2780, %v2892
    %2894 = vmatmul.f32.gmra.mxu0 %v217
    %v2895 = vpop.f32.mrf.mxu0
    %v2896 = vadd.f32 %v2783, %v2895
    %2897 = vmatmul.f32.gmra.mxu0 %v224
    %v2898 = vpop.f32.mrf.mxu0
    %v2899 = vadd.f32 %v2786, %v2898
    %2900 = vmatmul.f32.gmra.mxu0 %v231
    %v2901 = vpop.f32.mrf.mxu0
    %v2902 = vadd.f32 %v2789, %v2901
    %2903 = vmatmul.f32.gmra.mxu0 %v238
    %v2904 = vpop.f32.mrf.mxu0
    %v2905 = vadd.f32 %v2792, %v2904
    %2906 = vmatmul.f32.gmra.mxu0 %v245
    %v2907 = vpop.f32.mrf.mxu0
    %v2908 = vadd.f32 %v2795, %v2907
    %2909 = vmatmul.f32.gmra.mxu0 %v252
    %v2910 = vpop.f32.mrf.mxu0
    %v2911 = vadd.f32 %v2798, %v2910
    %2912 = vmatmul.f32.gmra.mxu0 %v259
    %v2913 = vpop.f32.mrf.mxu0
    %v2914 = vadd.f32 %v2801, %v2913
    %2915 = vmatmul.f32.gmra.mxu0 %v266
    %v2916 = vpop.f32.mrf.mxu0
    %v2917 = vadd.f32 %v2804, %v2916
    %2918 = vmatmul.f32.gmra.mxu0 %v273
    %v2919 = vpop.f32.mrf.mxu0
    %v2920 = vadd.f32 %v2807, %v2919
    %2921 = vdwg.mxu0
    %2922 = vmatpush.msra.mxu0 %v658
    %2923 = vmatpush.msra.mxu0 %v654
    %2924 = vmatpush.msra.mxu0 %v650
    %2925 = vmatpush.msra.mxu0 %v646
    %2926 = vmatpush.msra.mxu0 %v642
    %2927 = vmatpush.msra.mxu0 %v638
    %2928 = vmatpush.msra.mxu0 %v634
    %2929 = vmatpush.msra.mxu0 %v630
    %2930 = vmatpush.msra.mxu0 %v626
    %2931 = vmatpush.msra.mxu0 %v622
    %2932 = vmatpush.msra.mxu0 %v618
    %2933 = vmatpush.msra.mxu0 %v614
    %2934 = vmatpush.msra.mxu0 %v610
    %2935 = vmatpush.msra.mxu0 %v606
    %2936 = vmatpush.msra.mxu0 %v602
    %2937 = vmatpush.msra.mxu0 %v598
    %2938 = vmatmul.f32.gmra.mxu0 %v57
    %v2939 = vpop.f32.mrf.mxu0
    %v2940 = vadd.f32 %v2827, %v2939
    %2941 = vmatmul.f32.gmra.mxu0 %v64
    %v2942 = vpop.f32.mrf.mxu0
    %v2943 = vadd.f32 %v2830, %v2942
    %2944 = vmatmul.f32.gmra.mxu0 %v71
    %v2945 = vpop.f32.mrf.mxu0
    %v2946 = vadd.f32 %v2833, %v2945
    %2947 = vmatmul.f32.gmra.mxu0 %v78
    %v2948 = vpop.f32.mrf.mxu0
    %v2949 = vadd.f32 %v2836, %v2948
    %2950 = vmatmul.f32.gmra.mxu0 %v85
    %v2951 = vpop.f32.mrf.mxu0
    %v2952 = vadd.f32 %v2839, %v2951
    %2953 = vmatmul.f32.gmra.mxu0 %v92
    %v2954 = vpop.f32.mrf.mxu0
    %v2955 = vadd.f32 %v2842, %v2954
    %2956 = vmatmul.f32.gmra.mxu0 %v99
    %v2957 = vpop.f32.mrf.mxu0
    %v2958 = vadd.f32 %v2845, %v2957
    %2959 = vmatmul.f32.gmra.mxu0 %v106
    %v2960 = vpop.f32.mrf.mxu0
    %v2961 = vadd.f32 %v2848, %v2960
    %2962 = vmatmul.f32.gmra.mxu0 %v113
    %v2963 = vpop.f32.mrf.mxu0
    %v2964 = vadd.f32 %v2851, %v2963
    %2965 = vmatmul.f32.gmra.mxu0 %v120
    %v2966 = vpop.f32.mrf.mxu0
    %v2967 = vadd.f32 %v2854, %v2966
    %2968 = vmatmul.f32.gmra.mxu0 %v127
    %v2969 = vpop.f32.mrf.mxu0
    %v2970 = vadd.f32 %v2857, %v2969
    %2971 = vmatmul.f32.gmra.mxu0 %v134
    %v2972 = vpop.f32.mrf.mxu0
    %v2973 = vadd.f32 %v2860, %v2972
    %2974 = vmatmul.f32.gmra.mxu0 %v141
    %v2975 = vpop.f32.mrf.mxu0
    %v2976 = vadd.f32 %v2863, %v2975
    %2977 = vmatmul.f32.gmra.mxu0 %v148
    %v2978 = vpop.f32.mrf.mxu0
    %v2979 = vadd.f32 %v2866, %v2978
    %2980 = vmatmul.f32.gmra.mxu0 %v155
    %v2981 = vpop.f32.mrf.mxu0
    %v2982 = vadd.f32 %v2869, %v2981
    %2983 = vmatmul.f32.gmra.mxu0 %v162
    %v2984 = vpop.f32.mrf.mxu0
    %v2985 = vadd.f32 %v2872, %v2984
    %2986 = vmatmul.f32.gmra.mxu0 %v169
    %v2987 = vpop.f32.mrf.mxu0
    %v2988 = vadd.f32 %v2875, %v2987
    %2989 = vmatmul.f32.gmra.mxu0 %v176
    %v2990 = vpop.f32.mrf.mxu0
    %v2991 = vadd.f32 %v2878, %v2990
    %2992 = vmatmul.f32.gmra.mxu0 %v183
    %v2993 = vpop.f32.mrf.mxu0
    %v2994 = vadd.f32 %v2881, %v2993
    %2995 = vmatmul.f32.gmra.mxu0 %v190
    %v2996 = vpop.f32.mrf.mxu0
    %v2997 = vadd.f32 %v2884, %v2996
    %2998 = vmatmul.f32.gmra.mxu0 %v197
    %v2999 = vpop.f32.mrf.mxu0
    %v3000 = vadd.f32 %v2887, %v2999
    %3001 = vmatmul.f32.gmra.mxu0 %v204
    %v3002 = vpop.f32.mrf.mxu0
    %v3003 = vadd.f32 %v2890, %v3002
    %3004 = vmatmul.f32.gmra.mxu0 %v211
    %v3005 = vpop.f32.mrf.mxu0
    %v3006 = vadd.f32 %v2893, %v3005
    %3007 = vmatmul.f32.gmra.mxu0 %v218
    %v3008 = vpop.f32.mrf.mxu0
    %v3009 = vadd.f32 %v2896, %v3008
    %3010 = vmatmul.f32.gmra.mxu0 %v225
    %v3011 = vpop.f32.mrf.mxu0
    %v3012 = vadd.f32 %v2899, %v3011
    %3013 = vmatmul.f32.gmra.mxu0 %v232
    %v3014 = vpop.f32.mrf.mxu0
    %v3015 = vadd.f32 %v2902, %v3014
    %3016 = vmatmul.f32.gmra.mxu0 %v239
    %v3017 = vpop.f32.mrf.mxu0
    %v3018 = vadd.f32 %v2905, %v3017
    %3019 = vmatmul.f32.gmra.mxu0 %v246
    %v3020 = vpop.f32.mrf.mxu0
    %v3021 = vadd.f32 %v2908, %v3020
    %3022 = vmatmul.f32.gmra.mxu0 %v253
    %v3023 = vpop.f32.mrf.mxu0
    %v3024 = vadd.f32 %v2911, %v3023
    %3025 = vmatmul.f32.gmra.mxu0 %v260
    %v3026 = vpop.f32.mrf.mxu0
    %v3027 = vadd.f32 %v2914, %v3026
    %3028 = vmatmul.f32.gmra.mxu0 %v267
    %v3029 = vpop.f32.mrf.mxu0
    %v3030 = vadd.f32 %v2917, %v3029
    %3031 = vmatmul.f32.gmra.mxu0 %v274
    %v3032 = vpop.f32.mrf.mxu0
    %v3033 = vadd.f32 %v2920, %v3032
    %3034 = vdwg.mxu0
    %3035 = vmatpush.msra.mxu0 0.0
    %3036 = vmatpush.msra.mxu0 0.0
    %3037 = vmatpush.msra.mxu0 0.0
    %3038 = vmatpush.msra.mxu0 0.0
    %3039 = vmatpush.msra.mxu0 0.0
    %3040 = vmatpush.msra.mxu0 0.0
    %3041 = vmatpush.msra.mxu0 0.0
    %3042 = vmatpush.msra.mxu0 0.0
    %3043 = vmatpush.msra.mxu0 0.0
    %3044 = vmatpush.msra.mxu0 0.0
    %3045 = vmatpush.msra.mxu0 0.0
    %3046 = vmatpush.msra.mxu0 0.0
    %3047 = vmatpush.msra.mxu0 0.0
    %3048 = vmatpush.msra.mxu0 0.0
    %3049 = vmatpush.msra.mxu0 %v666
    %3050 = vmatpush.msra.mxu0 %v662
    %3051 = vmatmul.f32.gmra.mxu0 %v680
    %v3052 = vpop.f32.mrf.mxu0
    %v3053 = vadd.f32 %v2940, %v3052
    %3054 = vmatmul.f32.gmra.mxu0 %v683
    %v3055 = vpop.f32.mrf.mxu0
    %v3056 = vadd.f32 %v2943, %v3055
    %3057 = vmatmul.f32.gmra.mxu0 %v686
    %v3058 = vpop.f32.mrf.mxu0
    %v3059 = vadd.f32 %v2946, %v3058
    %3060 = vmatmul.f32.gmra.mxu0 %v689
    %v3061 = vpop.f32.mrf.mxu0
    %v3062 = vadd.f32 %v2949, %v3061
    %3063 = vmatmul.f32.gmra.mxu0 %v692
    %v3064 = vpop.f32.mrf.mxu0
    %v3065 = vadd.f32 %v2952, %v3064
    %3066 = vmatmul.f32.gmra.mxu0 %v695
    %v3067 = vpop.f32.mrf.mxu0
    %v3068 = vadd.f32 %v2955, %v3067
    %3069 = vmatmul.f32.gmra.mxu0 %v698
    %v3070 = vpop.f32.mrf.mxu0
    %v3071 = vadd.f32 %v2958, %v3070
    %3072 = vmatmul.f32.gmra.mxu0 %v701
    %v3073 = vpop.f32.mrf.mxu0
    %v3074 = vadd.f32 %v2961, %v3073
    %3075 = vmatmul.f32.gmra.mxu0 %v704
    %v3076 = vpop.f32.mrf.mxu0
    %v3077 = vadd.f32 %v2964, %v3076
    %3078 = vmatmul.f32.gmra.mxu0 %v707
    %v3079 = vpop.f32.mrf.mxu0
    %v3080 = vadd.f32 %v2967, %v3079
    %3081 = vmatmul.f32.gmra.mxu0 %v710
    %v3082 = vpop.f32.mrf.mxu0
    %v3083 = vadd.f32 %v2970, %v3082
    %3084 = vmatmul.f32.gmra.mxu0 %v713
    %v3085 = vpop.f32.mrf.mxu0
    %v3086 = vadd.f32 %v2973, %v3085
    %3087 = vmatmul.f32.gmra.mxu0 %v716
    %v3088 = vpop.f32.mrf.mxu0
    %v3089 = vadd.f32 %v2976, %v3088
    %3090 = vmatmul.f32.gmra.mxu0 %v719
    %v3091 = vpop.f32.mrf.mxu0
    %v3092 = vadd.f32 %v2979, %v3091
    %3093 = vmatmul.f32.gmra.mxu0 %v722
    %v3094 = vpop.f32.mrf.mxu0
    %v3095 = vadd.f32 %v2982, %v3094
    %3096 = vmatmul.f32.gmra.mxu0 %v725
    %v3097 = vpop.f32.mrf.mxu0
    %v3098 = vadd.f32 %v2985, %v3097
    %3099 = vmatmul.f32.gmra.mxu0 %v728
    %v3100 = vpop.f32.mrf.mxu0
    %v3101 = vadd.f32 %v2988, %v3100
    %3102 = vmatmul.f32.gmra.mxu0 %v731
    %v3103 = vpop.f32.mrf.mxu0
    %v3104 = vadd.f32 %v2991, %v3103
    %3105 = vmatmul.f32.gmra.mxu0 %v734
    %v3106 = vpop.f32.mrf.mxu0
    %v3107 = vadd.f32 %v2994, %v3106
    %3108 = vmatmul.f32.gmra.mxu0 %v737
    %v3109 = vpop.f32.mrf.mxu0
    %v3110 = vadd.f32 %v2997, %v3109
    %3111 = vmatmul.f32.gmra.mxu0 %v740
    %v3112 = vpop.f32.mrf.mxu0
    %v3113 = vadd.f32 %v3000, %v3112
    %3114 = vmatmul.f32.gmra.mxu0 %v743
    %v3115 = vpop.f32.mrf.mxu0
    %v3116 = vadd.f32 %v3003, %v3115
    %3117 = vmatmul.f32.gmra.mxu0 %v746
    %v3118 = vpop.f32.mrf.mxu0
    %v3119 = vadd.f32 %v3006, %v3118
    %3120 = vmatmul.f32.gmra.mxu0 %v749
    %v3121 = vpop.f32.mrf.mxu0
    %v3122 = vadd.f32 %v3009, %v3121
    %3123 = vmatmul.f32.gmra.mxu0 %v752
    %v3124 = vpop.f32.mrf.mxu0
    %v3125 = vadd.f32 %v3012, %v3124
    %3126 = vmatmul.f32.gmra.mxu0 %v755
    %v3127 = vpop.f32.mrf.mxu0
    %v3128 = vadd.f32 %v3015, %v3127
    %3129 = vmatmul.f32.gmra.mxu0 %v758
    %v3130 = vpop.f32.mrf.mxu0
    %v3131 = vadd.f32 %v3018, %v3130
    %3132 = vmatmul.f32.gmra.mxu0 %v761
    %v3133 = vpop.f32.mrf.mxu0
    %v3134 = vadd.f32 %v3021, %v3133
    %3135 = vmatmul.f32.gmra.mxu0 %v764
    %v3136 = vpop.f32.mrf.mxu0
    %v3137 = vadd.f32 %v3024, %v3136
    %3138 = vmatmul.f32.gmra.mxu0 %v767
    %v3139 = vpop.f32.mrf.mxu0
    %v3140 = vadd.f32 %v3027, %v3139
    %3141 = vmatmul.f32.gmra.mxu0 %v770
    %v3142 = vpop.f32.mrf.mxu0
    %v3143 = vadd.f32 %v3030, %v3142
    %3144 = vmatmul.f32.gmra.mxu0 %v773
    %v3145 = vpop.f32.mrf.mxu0
    %v3146 = vadd.f32 %v3033, %v3145
    %3147 = vdwg.mxu0
    %3148 = vmatpush.msra.mxu0 %v339
    %3149 = vmatpush.msra.mxu0 %v335
    %3150 = vmatpush.msra.mxu0 %v331
    %3151 = vmatpush.msra.mxu0 %v327
    %3152 = vmatpush.msra.mxu0 %v323
    %3153 = vmatpush.msra.mxu0 %v319
    %3154 = vmatpush.msra.mxu0 %v315
    %3155 = vmatpush.msra.mxu0 %v311
    %3156 = vmatpush.msra.mxu0 %v307
    %3157 = vmatpush.msra.mxu0 %v303
    %3158 = vmatpush.msra.mxu0 %v299
    %3159 = vmatpush.msra.mxu0 %v295
    %3160 = vmatpush.msra.mxu0 %v291
    %3161 = vmatpush.msra.mxu0 %v287
    %3162 = vmatpush.msra.mxu0 %v283
    %3163 = vmatpush.msra.mxu0 %v279
    %3164 = vmatmul.f32.gmra.mxu0 %v52
    %v3165 = vpop.f32.mrf.mxu0
    %v3166 = vadd.f32 %v673, %v3165
    %3167 = vmatmul.f32.gmra.mxu0 %v59
    %v3168 = vpop.f32.mrf.mxu0
    %v3169 = vadd.f32 %v673, %v3168
    %3170 = vmatmul.f32.gmra.mxu0 %v66
    %v3171 = vpop.f32.mrf.mxu0
    %v3172 = vadd.f32 %v673, %v3171
    %3173 = vmatmul.f32.gmra.mxu0 %v73
    %v3174 = vpop.f32.mrf.mxu0
    %v3175 = vadd.f32 %v673, %v3174
    %3176 = vmatmul.f32.gmra.mxu0 %v80
    %v3177 = vpop.f32.mrf.mxu0
    %v3178 = vadd.f32 %v673, %v3177
    %3179 = vmatmul.f32.gmra.mxu0 %v87
    %v3180 = vpop.f32.mrf.mxu0
    %v3181 = vadd.f32 %v673, %v3180
    %3182 = vmatmul.f32.gmra.mxu0 %v94
    %v3183 = vpop.f32.mrf.mxu0
    %v3184 = vadd.f32 %v673, %v3183
    %3185 = vmatmul.f32.gmra.mxu0 %v101
    %v3186 = vpop.f32.mrf.mxu0
    %v3187 = vadd.f32 %v673, %v3186
    %3188 = vmatmul.f32.gmra.mxu0 %v108
    %v3189 = vpop.f32.mrf.mxu0
    %v3190 = vadd.f32 %v673, %v3189
    %3191 = vmatmul.f32.gmra.mxu0 %v115
    %v3192 = vpop.f32.mrf.mxu0
    %v3193 = vadd.f32 %v673, %v3192
    %3194 = vmatmul.f32.gmra.mxu0 %v122
    %v3195 = vpop.f32.mrf.mxu0
    %v3196 = vadd.f32 %v673, %v3195
    %3197 = vmatmul.f32.gmra.mxu0 %v129
    %v3198 = vpop.f32.mrf.mxu0
    %v3199 = vadd.f32 %v673, %v3198
    %3200 = vmatmul.f32.gmra.mxu0 %v136
    %v3201 = vpop.f32.mrf.mxu0
    %v3202 = vadd.f32 %v673, %v3201
    %3203 = vmatmul.f32.gmra.mxu0 %v143
    %v3204 = vpop.f32.mrf.mxu0
    %v3205 = vadd.f32 %v673, %v3204
    %3206 = vmatmul.f32.gmra.mxu0 %v150
    %v3207 = vpop.f32.mrf.mxu0
    %v3208 = vadd.f32 %v673, %v3207
    %3209 = vmatmul.f32.gmra.mxu0 %v157
    %v3210 = vpop.f32.mrf.mxu0
    %v3211 = vadd.f32 %v673, %v3210
    %3212 = vmatmul.f32.gmra.mxu0 %v164
    %v3213 = vpop.f32.mrf.mxu0
    %v3214 = vadd.f32 %v673, %v3213
    %3215 = vmatmul.f32.gmra.mxu0 %v171
    %v3216 = vpop.f32.mrf.mxu0
    %v3217 = vadd.f32 %v673, %v3216
    %3218 = vmatmul.f32.gmra.mxu0 %v178
    %v3219 = vpop.f32.mrf.mxu0
    %v3220 = vadd.f32 %v673, %v3219
    %3221 = vmatmul.f32.gmra.mxu0 %v185
    %v3222 = vpop.f32.mrf.mxu0
    %v3223 = vadd.f32 %v673, %v3222
    %3224 = vmatmul.f32.gmra.mxu0 %v192
    %v3225 = vpop.f32.mrf.mxu0
    %v3226 = vadd.f32 %v673, %v3225
    %3227 = vmatmul.f32.gmra.mxu0 %v199
    %v3228 = vpop.f32.mrf.mxu0
    %v3229 = vadd.f32 %v673, %v3228
    %3230 = vmatmul.f32.gmra.mxu0 %v206
    %v3231 = vpop.f32.mrf.mxu0
    %v3232 = vadd.f32 %v673, %v3231
    %3233 = vmatmul.f32.gmra.mxu0 %v213
    %v3234 = vpop.f32.mrf.mxu0
    %v3235 = vadd.f32 %v673, %v3234
    %3236 = vmatmul.f32.gmra.mxu0 %v220
    %v3237 = vpop.f32.mrf.mxu0
    %v3238 = vadd.f32 %v673, %v3237
    %3239 = vmatmul.f32.gmra.mxu0 %v227
    %v3240 = vpop.f32.mrf.mxu0
    %v3241 = vadd.f32 %v673, %v3240
    %3242 = vmatmul.f32.gmra.mxu0 %v234
    %v3243 = vpop.f32.mrf.mxu0
    %v3244 = vadd.f32 %v673, %v3243
    %3245 = vmatmul.f32.gmra.mxu0 %v241
    %v3246 = vpop.f32.mrf.mxu0
    %v3247 = vadd.f32 %v673, %v3246
    %3248 = vmatmul.f32.gmra.mxu0 %v248
    %v3249 = vpop.f32.mrf.mxu0
    %v3250 = vadd.f32 %v673, %v3249
    %3251 = vmatmul.f32.gmra.mxu0 %v255
    %v3252 = vpop.f32.mrf.mxu0
    %v3253 = vadd.f32 %v673, %v3252
    %3254 = vmatmul.f32.gmra.mxu0 %v262
    %v3255 = vpop.f32.mrf.mxu0
    %v3256 = vadd.f32 %v673, %v3255
    %3257 = vmatmul.f32.gmra.mxu0 %v269
    %v3258 = vpop.f32.mrf.mxu0
    %v3259 = vadd.f32 %v673, %v3258
    %3260 = vdwg.mxu0
    %3261 = vmatpush.msra.mxu0 %v403
    %3262 = vmatpush.msra.mxu0 %v399
    %3263 = vmatpush.msra.mxu0 %v395
    %3264 = vmatpush.msra.mxu0 %v391
    %3265 = vmatpush.msra.mxu0 %v387
    %3266 = vmatpush.msra.mxu0 %v383
    %3267 = vmatpush.msra.mxu0 %v379
    %3268 = vmatpush.msra.mxu0 %v375
    %3269 = vmatpush.msra.mxu0 %v371
    %3270 = vmatpush.msra.mxu0 %v367
    %3271 = vmatpush.msra.mxu0 %v363
    %3272 = vmatpush.msra.mxu0 %v359
    %3273 = vmatpush.msra.mxu0 %v355
    %3274 = vmatpush.msra.mxu0 %v351
    %3275 = vmatpush.msra.mxu0 %v347
    %3276 = vmatpush.msra.mxu0 %v343
    %3277 = vmatmul.f32.gmra.mxu0 %v53
    %v3278 = vpop.f32.mrf.mxu0
    %v3279 = vadd.f32 %v3166, %v3278
    %3280 = vmatmul.f32.gmra.mxu0 %v60
    %v3281 = vpop.f32.mrf.mxu0
    %v3282 = vadd.f32 %v3169, %v3281
    %3283 = vmatmul.f32.gmra.mxu0 %v67
    %v3284 = vpop.f32.mrf.mxu0
    %v3285 = vadd.f32 %v3172, %v3284
    %3286 = vmatmul.f32.gmra.mxu0 %v74
    %v3287 = vpop.f32.mrf.mxu0
    %v3288 = vadd.f32 %v3175, %v3287
    %3289 = vmatmul.f32.gmra.mxu0 %v81
    %v3290 = vpop.f32.mrf.mxu0
    %v3291 = vadd.f32 %v3178, %v3290
    %3292 = vmatmul.f32.gmra.mxu0 %v88
    %v3293 = vpop.f32.mrf.mxu0
    %v3294 = vadd.f32 %v3181, %v3293
    %3295 = vmatmul.f32.gmra.mxu0 %v95
    %v3296 = vpop.f32.mrf.mxu0
    %v3297 = vadd.f32 %v3184, %v3296
    %3298 = vmatmul.f32.gmra.mxu0 %v102
    %v3299 = vpop.f32.mrf.mxu0
    %v3300 = vadd.f32 %v3187, %v3299
    %3301 = vmatmul.f32.gmra.mxu0 %v109
    %v3302 = vpop.f32.mrf.mxu0
    %v3303 = vadd.f32 %v3190, %v3302
    %3304 = vmatmul.f32.gmra.mxu0 %v116
    %v3305 = vpop.f32.mrf.mxu0
    %v3306 = vadd.f32 %v3193, %v3305
    %3307 = vmatmul.f32.gmra.mxu0 %v123
    %v3308 = vpop.f32.mrf.mxu0
    %v3309 = vadd.f32 %v3196, %v3308
    %3310 = vmatmul.f32.gmra.mxu0 %v130
    %v3311 = vpop.f32.mrf.mxu0
    %v3312 = vadd.f32 %v3199, %v3311
    %3313 = vmatmul.f32.gmra.mxu0 %v137
    %v3314 = vpop.f32.mrf.mxu0
    %v3315 = vadd.f32 %v3202, %v3314
    %3316 = vmatmul.f32.gmra.mxu0 %v144
    %v3317 = vpop.f32.mrf.mxu0
    %v3318 = vadd.f32 %v3205, %v3317
    %3319 = vmatmul.f32.gmra.mxu0 %v151
    %v3320 = vpop.f32.mrf.mxu0
    %v3321 = vadd.f32 %v3208, %v3320
    %3322 = vmatmul.f32.gmra.mxu0 %v158
    %v3323 = vpop.f32.mrf.mxu0
    %v3324 = vadd.f32 %v3211, %v3323
    %3325 = vmatmul.f32.gmra.mxu0 %v165
    %v3326 = vpop.f32.mrf.mxu0
    %v3327 = vadd.f32 %v3214, %v3326
    %3328 = vmatmul.f32.gmra.mxu0 %v172
    %v3329 = vpop.f32.mrf.mxu0
    %v3330 = vadd.f32 %v3217, %v3329
    %3331 = vmatmul.f32.gmra.mxu0 %v179
    %v3332 = vpop.f32.mrf.mxu0
    %v3333 = vadd.f32 %v3220, %v3332
    %3334 = vmatmul.f32.gmra.mxu0 %v186
    %v3335 = vpop.f32.mrf.mxu0
    %v3336 = vadd.f32 %v3223, %v3335
    %3337 = vmatmul.f32.gmra.mxu0 %v193
    %v3338 = vpop.f32.mrf.mxu0
    %v3339 = vadd.f32 %v3226, %v3338
    %3340 = vmatmul.f32.gmra.mxu0 %v200
    %v3341 = vpop.f32.mrf.mxu0
    %v3342 = vadd.f32 %v3229, %v3341
    %3343 = vmatmul.f32.gmra.mxu0 %v207
    %v3344 = vpop.f32.mrf.mxu0
    %v3345 = vadd.f32 %v3232, %v3344
    %3346 = vmatmul.f32.gmra.mxu0 %v214
    %v3347 = vpop.f32.mrf.mxu0
    %v3348 = vadd.f32 %v3235, %v3347
    %3349 = vmatmul.f32.gmra.mxu0 %v221
    %v3350 = vpop.f32.mrf.mxu0
    %v3351 = vadd.f32 %v3238, %v3350
    %3352 = vmatmul.f32.gmra.mxu0 %v228
    %v3353 = vpop.f32.mrf.mxu0
    %v3354 = vadd.f32 %v3241, %v3353
    %3355 = vmatmul.f32.gmra.mxu0 %v235
    %v3356 = vpop.f32.mrf.mxu0
    %v3357 = vadd.f32 %v3244, %v3356
    %3358 = vmatmul.f32.gmra.mxu0 %v242
    %v3359 = vpop.f32.mrf.mxu0
    %v3360 = vadd.f32 %v3247, %v3359
    %3361 = vmatmul.f32.gmra.mxu0 %v249
    %v3362 = vpop.f32.mrf.mxu0
    %v3363 = vadd.f32 %v3250, %v3362
    %3364 = vmatmul.f32.gmra.mxu0 %v256
    %v3365 = vpop.f32.mrf.mxu0
    %v3366 = vadd.f32 %v3253, %v3365
    %3367 = vmatmul.f32.gmra.mxu0 %v263
    %v3368 = vpop.f32.mrf.mxu0
    %v3369 = vadd.f32 %v3256, %v3368
    %3370 = vmatmul.f32.gmra.mxu0 %v270
    %v3371 = vpop.f32.mrf.mxu0
    %v3372 = vadd.f32 %v3259, %v3371
    %3373 = vdwg.mxu0
    %3374 = vmatpush.msra.mxu0 %v467
    %3375 = vmatpush.msra.mxu0 %v463
    %3376 = vmatpush.msra.mxu0 %v459
    %3377 = vmatpush.msra.mxu0 %v455
    %3378 = vmatpush.msra.mxu0 %v451
    %3379 = vmatpush.msra.mxu0 %v447
    %3380 = vmatpush.msra.mxu0 %v443
    %3381 = vmatpush.msra.mxu0 %v439
    %3382 = vmatpush.msra.mxu0 %v435
    %3383 = vmatpush.msra.mxu0 %v431
    %3384 = vmatpush.msra.mxu0 %v427
    %3385 = vmatpush.msra.mxu0 %v423
    %3386 = vmatpush.msra.mxu0 %v419
    %3387 = vmatpush.msra.mxu0 %v415
    %3388 = vmatpush.msra.mxu0 %v411
    %3389 = vmatpush.msra.mxu0 %v407
    %3390 = vmatmul.f32.gmra.mxu0 %v54
    %v3391 = vpop.f32.mrf.mxu0
    %v3392 = vadd.f32 %v3279, %v3391
    %3393 = vmatmul.f32.gmra.mxu0 %v61
    %v3394 = vpop.f32.mrf.mxu0
    %v3395 = vadd.f32 %v3282, %v3394
    %3396 = vmatmul.f32.gmra.mxu0 %v68
    %v3397 = vpop.f32.mrf.mxu0
    %v3398 = vadd.f32 %v3285, %v3397
    %3399 = vmatmul.f32.gmra.mxu0 %v75
    %v3400 = vpop.f32.mrf.mxu0
    %v3401 = vadd.f32 %v3288, %v3400
    %3402 = vmatmul.f32.gmra.mxu0 %v82
    %v3403 = vpop.f32.mrf.mxu0
    %v3404 = vadd.f32 %v3291, %v3403
    %3405 = vmatmul.f32.gmra.mxu0 %v89
    %v3406 = vpop.f32.mrf.mxu0
    %v3407 = vadd.f32 %v3294, %v3406
    %3408 = vmatmul.f32.gmra.mxu0 %v96
    %v3409 = vpop.f32.mrf.mxu0
    %v3410 = vadd.f32 %v3297, %v3409
    %3411 = vmatmul.f32.gmra.mxu0 %v103
    %v3412 = vpop.f32.mrf.mxu0
    %v3413 = vadd.f32 %v3300, %v3412
    %3414 = vmatmul.f32.gmra.mxu0 %v110
    %v3415 = vpop.f32.mrf.mxu0
    %v3416 = vadd.f32 %v3303, %v3415
    %3417 = vmatmul.f32.gmra.mxu0 %v117
    %v3418 = vpop.f32.mrf.mxu0
    %v3419 = vadd.f32 %v3306, %v3418
    %3420 = vmatmul.f32.gmra.mxu0 %v124
    %v3421 = vpop.f32.mrf.mxu0
    %v3422 = vadd.f32 %v3309, %v3421
    %3423 = vmatmul.f32.gmra.mxu0 %v131
    %v3424 = vpop.f32.mrf.mxu0
    %v3425 = vadd.f32 %v3312, %v3424
    %3426 = vmatmul.f32.gmra.mxu0 %v138
    %v3427 = vpop.f32.mrf.mxu0
    %v3428 = vadd.f32 %v3315, %v3427
    %3429 = vmatmul.f32.gmra.mxu0 %v145
    %v3430 = vpop.f32.mrf.mxu0
    %v3431 = vadd.f32 %v3318, %v3430
    %3432 = vmatmul.f32.gmra.mxu0 %v152
    %v3433 = vpop.f32.mrf.mxu0
    %v3434 = vadd.f32 %v3321, %v3433
    %3435 = vmatmul.f32.gmra.mxu0 %v159
    %v3436 = vpop.f32.mrf.mxu0
    %v3437 = vadd.f32 %v3324, %v3436
    %3438 = vmatmul.f32.gmra.mxu0 %v166
    %v3439 = vpop.f32.mrf.mxu0
    %v3440 = vadd.f32 %v3327, %v3439
    %3441 = vmatmul.f32.gmra.mxu0 %v173
    %v3442 = vpop.f32.mrf.mxu0
    %v3443 = vadd.f32 %v3330, %v3442
    %3444 = vmatmul.f32.gmra.mxu0 %v180
    %v3445 = vpop.f32.mrf.mxu0
    %v3446 = vadd.f32 %v3333, %v3445
    %3447 = vmatmul.f32.gmra.mxu0 %v187
    %v3448 = vpop.f32.mrf.mxu0
    %v3449 = vadd.f32 %v3336, %v3448
    %3450 = vmatmul.f32.gmra.mxu0 %v194
    %v3451 = vpop.f32.mrf.mxu0
    %v3452 = vadd.f32 %v3339, %v3451
    %3453 = vmatmul.f32.gmra.mxu0 %v201
    %v3454 = vpop.f32.mrf.mxu0
    %v3455 = vadd.f32 %v3342, %v3454
    %3456 = vmatmul.f32.gmra.mxu0 %v208
    %v3457 = vpop.f32.mrf.mxu0
    %v3458 = vadd.f32 %v3345, %v3457
    %3459 = vmatmul.f32.gmra.mxu0 %v215
    %v3460 = vpop.f32.mrf.mxu0
    %v3461 = vadd.f32 %v3348, %v3460
    %3462 = vmatmul.f32.gmra.mxu0 %v222
    %v3463 = vpop.f32.mrf.mxu0
    %v3464 = vadd.f32 %v3351, %v3463
    %3465 = vmatmul.f32.gmra.mxu0 %v229
    %v3466 = vpop.f32.mrf.mxu0
    %v3467 = vadd.f32 %v3354, %v3466
    %3468 = vmatmul.f32.gmra.mxu0 %v236
    %v3469 = vpop.f32.mrf.mxu0
    %v3470 = vadd.f32 %v3357, %v3469
    %3471 = vmatmul.f32.gmra.mxu0 %v243
    %v3472 = vpop.f32.mrf.mxu0
    %v3473 = vadd.f32 %v3360, %v3472
    %3474 = vmatmul.f32.gmra.mxu0 %v250
    %v3475 = vpop.f32.mrf.mxu0
    %v3476 = vadd.f32 %v3363, %v3475
    %3477 = vmatmul.f32.gmra.mxu0 %v257
    %v3478 = vpop.f32.mrf.mxu0
    %v3479 = vadd.f32 %v3366, %v3478
    %3480 = vmatmul.f32.gmra.mxu0 %v264
    %v3481 = vpop.f32.mrf.mxu0
    %v3482 = vadd.f32 %v3369, %v3481
    %3483 = vmatmul.f32.gmra.mxu0 %v271
    %v3484 = vpop.f32.mrf.mxu0
    %v3485 = vadd.f32 %v3372, %v3484
    %3486 = vdwg.mxu0
    %3487 = vmatpush.msra.mxu0 %v531
    %3488 = vmatpush.msra.mxu0 %v527
    %3489 = vmatpush.msra.mxu0 %v523
    %3490 = vmatpush.msra.mxu0 %v519
    %3491 = vmatpush.msra.mxu0 %v515
    %3492 = vmatpush.msra.mxu0 %v511
    %3493 = vmatpush.msra.mxu0 %v507
    %3494 = vmatpush.msra.mxu0 %v503
    %3495 = vmatpush.msra.mxu0 %v499
    %3496 = vmatpush.msra.mxu0 %v495
    %3497 = vmatpush.msra.mxu0 %v491
    %3498 = vmatpush.msra.mxu0 %v487
    %3499 = vmatpush.msra.mxu0 %v483
    %3500 = vmatpush.msra.mxu0 %v479
    %3501 = vmatpush.msra.mxu0 %v475
    %3502 = vmatpush.msra.mxu0 %v471
    %3503 = vmatmul.f32.gmra.mxu0 %v55
    %v3504 = vpop.f32.mrf.mxu0
    %v3505 = vadd.f32 %v3392, %v3504
    %3506 = vmatmul.f32.gmra.mxu0 %v62
    %v3507 = vpop.f32.mrf.mxu0
    %v3508 = vadd.f32 %v3395, %v3507
    %3509 = vmatmul.f32.gmra.mxu0 %v69
    %v3510 = vpop.f32.mrf.mxu0
    %v3511 = vadd.f32 %v3398, %v3510
    %3512 = vmatmul.f32.gmra.mxu0 %v76
    %v3513 = vpop.f32.mrf.mxu0
    %v3514 = vadd.f32 %v3401, %v3513
    %3515 = vmatmul.f32.gmra.mxu0 %v83
    %v3516 = vpop.f32.mrf.mxu0
    %v3517 = vadd.f32 %v3404, %v3516
    %3518 = vmatmul.f32.gmra.mxu0 %v90
    %v3519 = vpop.f32.mrf.mxu0
    %v3520 = vadd.f32 %v3407, %v3519
    %3521 = vmatmul.f32.gmra.mxu0 %v97
    %v3522 = vpop.f32.mrf.mxu0
    %v3523 = vadd.f32 %v3410, %v3522
    %3524 = vmatmul.f32.gmra.mxu0 %v104
    %v3525 = vpop.f32.mrf.mxu0
    %v3526 = vadd.f32 %v3413, %v3525
    %3527 = vmatmul.f32.gmra.mxu0 %v111
    %v3528 = vpop.f32.mrf.mxu0
    %v3529 = vadd.f32 %v3416, %v3528
    %3530 = vmatmul.f32.gmra.mxu0 %v118
    %v3531 = vpop.f32.mrf.mxu0
    %v3532 = vadd.f32 %v3419, %v3531
    %3533 = vmatmul.f32.gmra.mxu0 %v125
    %v3534 = vpop.f32.mrf.mxu0
    %v3535 = vadd.f32 %v3422, %v3534
    %3536 = vmatmul.f32.gmra.mxu0 %v132
    %v3537 = vpop.f32.mrf.mxu0
    %v3538 = vadd.f32 %v3425, %v3537
    %3539 = vmatmul.f32.gmra.mxu0 %v139
    %v3540 = vpop.f32.mrf.mxu0
    %v3541 = vadd.f32 %v3428, %v3540
    %3542 = vmatmul.f32.gmra.mxu0 %v146
    %v3543 = vpop.f32.mrf.mxu0
    %v3544 = vadd.f32 %v3431, %v3543
    %3545 = vmatmul.f32.gmra.mxu0 %v153
    %v3546 = vpop.f32.mrf.mxu0
    %v3547 = vadd.f32 %v3434, %v3546
    %3548 = vmatmul.f32.gmra.mxu0 %v160
    %v3549 = vpop.f32.mrf.mxu0
    %v3550 = vadd.f32 %v3437, %v3549
    %3551 = vmatmul.f32.gmra.mxu0 %v167
    %v3552 = vpop.f32.mrf.mxu0
    %v3553 = vadd.f32 %v3440, %v3552
    %3554 = vmatmul.f32.gmra.mxu0 %v174
    %v3555 = vpop.f32.mrf.mxu0
    %v3556 = vadd.f32 %v3443, %v3555
    %3557 = vmatmul.f32.gmra.mxu0 %v181
    %v3558 = vpop.f32.mrf.mxu0
    %v3559 = vadd.f32 %v3446, %v3558
    %3560 = vmatmul.f32.gmra.mxu0 %v188
    %v3561 = vpop.f32.mrf.mxu0
    %v3562 = vadd.f32 %v3449, %v3561
    %3563 = vmatmul.f32.gmra.mxu0 %v195
    %v3564 = vpop.f32.mrf.mxu0
    %v3565 = vadd.f32 %v3452, %v3564
    %3566 = vmatmul.f32.gmra.mxu0 %v202
    %v3567 = vpop.f32.mrf.mxu0
    %v3568 = vadd.f32 %v3455, %v3567
    %3569 = vmatmul.f32.gmra.mxu0 %v209
    %v3570 = vpop.f32.mrf.mxu0
    %v3571 = vadd.f32 %v3458, %v3570
    %3572 = vmatmul.f32.gmra.mxu0 %v216
    %v3573 = vpop.f32.mrf.mxu0
    %v3574 = vadd.f32 %v3461, %v3573
    %3575 = vmatmul.f32.gmra.mxu0 %v223
    %v3576 = vpop.f32.mrf.mxu0
    %v3577 = vadd.f32 %v3464, %v3576
    %3578 = vmatmul.f32.gmra.mxu0 %v230
    %v3579 = vpop.f32.mrf.mxu0
    %v3580 = vadd.f32 %v3467, %v3579
    %3581 = vmatmul.f32.gmra.mxu0 %v237
    %v3582 = vpop.f32.mrf.mxu0
    %v3583 = vadd.f32 %v3470, %v3582
    %3584 = vmatmul.f32.gmra.mxu0 %v244
    %v3585 = vpop.f32.mrf.mxu0
    %v3586 = vadd.f32 %v3473, %v3585
    %3587 = vmatmul.f32.gmra.mxu0 %v251
    %v3588 = vpop.f32.mrf.mxu0
    %v3589 = vadd.f32 %v3476, %v3588
    %3590 = vmatmul.f32.gmra.mxu0 %v258
    %v3591 = vpop.f32.mrf.mxu0
    %v3592 = vadd.f32 %v3479, %v3591
    %3593 = vmatmul.f32.gmra.mxu0 %v265
    %v3594 = vpop.f32.mrf.mxu0
    %v3595 = vadd.f32 %v3482, %v3594
    %3596 = vmatmul.f32.gmra.mxu0 %v272
    %v3597 = vpop.f32.mrf.mxu0
    %v3598 = vadd.f32 %v3485, %v3597
    %3599 = vdwg.mxu0
    %3600 = vmatpush.msra.mxu0 %v595
    %3601 = vmatpush.msra.mxu0 %v591
    %3602 = vmatpush.msra.mxu0 %v587
    %3603 = vmatpush.msra.mxu0 %v583
    %3604 = vmatpush.msra.mxu0 %v579
    %3605 = vmatpush.msra.mxu0 %v575
    %3606 = vmatpush.msra.mxu0 %v571
    %3607 = vmatpush.msra.mxu0 %v567
    %3608 = vmatpush.msra.mxu0 %v563
    %3609 = vmatpush.msra.mxu0 %v559
    %3610 = vmatpush.msra.mxu0 %v555
    %3611 = vmatpush.msra.mxu0 %v551
    %3612 = vmatpush.msra.mxu0 %v547
    %3613 = vmatpush.msra.mxu0 %v543
    %3614 = vmatpush.msra.mxu0 %v539
    %3615 = vmatpush.msra.mxu0 %v535
    %3616 = vmatmul.f32.gmra.mxu0 %v56
    %v3617 = vpop.f32.mrf.mxu0
    %v3618 = vadd.f32 %v3505, %v3617
    %3619 = vmatmul.f32.gmra.mxu0 %v63
    %v3620 = vpop.f32.mrf.mxu0
    %v3621 = vadd.f32 %v3508, %v3620
    %3622 = vmatmul.f32.gmra.mxu0 %v70
    %v3623 = vpop.f32.mrf.mxu0
    %v3624 = vadd.f32 %v3511, %v3623
    %3625 = vmatmul.f32.gmra.mxu0 %v77
    %v3626 = vpop.f32.mrf.mxu0
    %v3627 = vadd.f32 %v3514, %v3626
    %3628 = vmatmul.f32.gmra.mxu0 %v84
    %v3629 = vpop.f32.mrf.mxu0
    %v3630 = vadd.f32 %v3517, %v3629
    %3631 = vmatmul.f32.gmra.mxu0 %v91
    %v3632 = vpop.f32.mrf.mxu0
    %v3633 = vadd.f32 %v3520, %v3632
    %3634 = vmatmul.f32.gmra.mxu0 %v98
    %v3635 = vpop.f32.mrf.mxu0
    %v3636 = vadd.f32 %v3523, %v3635
    %3637 = vmatmul.f32.gmra.mxu0 %v105
    %v3638 = vpop.f32.mrf.mxu0
    %v3639 = vadd.f32 %v3526, %v3638
    %3640 = vmatmul.f32.gmra.mxu0 %v112
    %v3641 = vpop.f32.mrf.mxu0
    %v3642 = vadd.f32 %v3529, %v3641
    %3643 = vmatmul.f32.gmra.mxu0 %v119
    %v3644 = vpop.f32.mrf.mxu0
    %v3645 = vadd.f32 %v3532, %v3644
    %3646 = vmatmul.f32.gmra.mxu0 %v126
    %v3647 = vpop.f32.mrf.mxu0
    %v3648 = vadd.f32 %v3535, %v3647
    %3649 = vmatmul.f32.gmra.mxu0 %v133
    %v3650 = vpop.f32.mrf.mxu0
    %v3651 = vadd.f32 %v3538, %v3650
    %3652 = vmatmul.f32.gmra.mxu0 %v140
    %v3653 = vpop.f32.mrf.mxu0
    %v3654 = vadd.f32 %v3541, %v3653
    %3655 = vmatmul.f32.gmra.mxu0 %v147
    %v3656 = vpop.f32.mrf.mxu0
    %v3657 = vadd.f32 %v3544, %v3656
    %3658 = vmatmul.f32.gmra.mxu0 %v154
    %v3659 = vpop.f32.mrf.mxu0
    %v3660 = vadd.f32 %v3547, %v3659
    %3661 = vmatmul.f32.gmra.mxu0 %v161
    %v3662 = vpop.f32.mrf.mxu0
    %v3663 = vadd.f32 %v3550, %v3662
    %3664 = vmatmul.f32.gmra.mxu0 %v168
    %v3665 = vpop.f32.mrf.mxu0
    %v3666 = vadd.f32 %v3553, %v3665
    %3667 = vmatmul.f32.gmra.mxu0 %v175
    %v3668 = vpop.f32.mrf.mxu0
    %v3669 = vadd.f32 %v3556, %v3668
    %3670 = vmatmul.f32.gmra.mxu0 %v182
    %v3671 = vpop.f32.mrf.mxu0
    %v3672 = vadd.f32 %v3559, %v3671
    %3673 = vmatmul.f32.gmra.mxu0 %v189
    %v3674 = vpop.f32.mrf.mxu0
    %v3675 = vadd.f32 %v3562, %v3674
    %3676 = vmatmul.f32.gmra.mxu0 %v196
    %v3677 = vpop.f32.mrf.mxu0
    %v3678 = vadd.f32 %v3565, %v3677
    %3679 = vmatmul.f32.gmra.mxu0 %v203
    %v3680 = vpop.f32.mrf.mxu0
    %v3681 = vadd.f32 %v3568, %v3680
    %3682 = vmatmul.f32.gmra.mxu0 %v210
    %v3683 = vpop.f32.mrf.mxu0
    %v3684 = vadd.f32 %v3571, %v3683
    %3685 = vmatmul.f32.gmra.mxu0 %v217
    %v3686 = vpop.f32.mrf.mxu0
    %v3687 = vadd.f32 %v3574, %v3686
    %3688 = vmatmul.f32.gmra.mxu0 %v224
    %v3689 = vpop.f32.mrf.mxu0
    %v3690 = vadd.f32 %v3577, %v3689
    %3691 = vmatmul.f32.gmra.mxu0 %v231
    %v3692 = vpop.f32.mrf.mxu0
    %v3693 = vadd.f32 %v3580, %v3692
    %3694 = vmatmul.f32.gmra.mxu0 %v238
    %v3695 = vpop.f32.mrf.mxu0
    %v3696 = vadd.f32 %v3583, %v3695
    %3697 = vmatmul.f32.gmra.mxu0 %v245
    %v3698 = vpop.f32.mrf.mxu0
    %v3699 = vadd.f32 %v3586, %v3698
    %3700 = vmatmul.f32.gmra.mxu0 %v252
    %v3701 = vpop.f32.mrf.mxu0
    %v3702 = vadd.f32 %v3589, %v3701
    %3703 = vmatmul.f32.gmra.mxu0 %v259
    %v3704 = vpop.f32.mrf.mxu0
    %v3705 = vadd.f32 %v3592, %v3704
    %3706 = vmatmul.f32.gmra.mxu0 %v266
    %v3707 = vpop.f32.mrf.mxu0
    %v3708 = vadd.f32 %v3595, %v3707
    %3709 = vmatmul.f32.gmra.mxu0 %v273
    %v3710 = vpop.f32.mrf.mxu0
    %v3711 = vadd.f32 %v3598, %v3710
    %3712 = vdwg.mxu0
    %3713 = vmatpush.msra.mxu0 %v659
    %3714 = vmatpush.msra.mxu0 %v655
    %3715 = vmatpush.msra.mxu0 %v651
    %3716 = vmatpush.msra.mxu0 %v647
    %3717 = vmatpush.msra.mxu0 %v643
    %3718 = vmatpush.msra.mxu0 %v639
    %3719 = vmatpush.msra.mxu0 %v635
    %3720 = vmatpush.msra.mxu0 %v631
    %3721 = vmatpush.msra.mxu0 %v627
    %3722 = vmatpush.msra.mxu0 %v623
    %3723 = vmatpush.msra.mxu0 %v619
    %3724 = vmatpush.msra.mxu0 %v615
    %3725 = vmatpush.msra.mxu0 %v611
    %3726 = vmatpush.msra.mxu0 %v607
    %3727 = vmatpush.msra.mxu0 %v603
    %3728 = vmatpush.msra.mxu0 %v599
    %3729 = vmatmul.f32.gmra.mxu0 %v57
    %v3730 = vpop.f32.mrf.mxu0
    %v3731 = vadd.f32 %v3618, %v3730
    %3732 = vmatmul.f32.gmra.mxu0 %v64
    %v3733 = vpop.f32.mrf.mxu0
    %v3734 = vadd.f32 %v3621, %v3733
    %3735 = vmatmul.f32.gmra.mxu0 %v71
    %v3736 = vpop.f32.mrf.mxu0
    %v3737 = vadd.f32 %v3624, %v3736
    %3738 = vmatmul.f32.gmra.mxu0 %v78
    %v3739 = vpop.f32.mrf.mxu0
    %v3740 = vadd.f32 %v3627, %v3739
    %3741 = vmatmul.f32.gmra.mxu0 %v85
    %v3742 = vpop.f32.mrf.mxu0
    %v3743 = vadd.f32 %v3630, %v3742
    %3744 = vmatmul.f32.gmra.mxu0 %v92
    %v3745 = vpop.f32.mrf.mxu0
    %v3746 = vadd.f32 %v3633, %v3745
    %3747 = vmatmul.f32.gmra.mxu0 %v99
    %v3748 = vpop.f32.mrf.mxu0
    %v3749 = vadd.f32 %v3636, %v3748
    %3750 = vmatmul.f32.gmra.mxu0 %v106
    %v3751 = vpop.f32.mrf.mxu0
    %v3752 = vadd.f32 %v3639, %v3751
    %3753 = vmatmul.f32.gmra.mxu0 %v113
    %v3754 = vpop.f32.mrf.mxu0
    %v3755 = vadd.f32 %v3642, %v3754
    %3756 = vmatmul.f32.gmra.mxu0 %v120
    %v3757 = vpop.f32.mrf.mxu0
    %v3758 = vadd.f32 %v3645, %v3757
    %3759 = vmatmul.f32.gmra.mxu0 %v127
    %v3760 = vpop.f32.mrf.mxu0
    %v3761 = vadd.f32 %v3648, %v3760
    %3762 = vmatmul.f32.gmra.mxu0 %v134
    %v3763 = vpop.f32.mrf.mxu0
    %v3764 = vadd.f32 %v3651, %v3763
    %3765 = vmatmul.f32.gmra.mxu0 %v141
    %v3766 = vpop.f32.mrf.mxu0
    %v3767 = vadd.f32 %v3654, %v3766
    %3768 = vmatmul.f32.gmra.mxu0 %v148
    %v3769 = vpop.f32.mrf.mxu0
    %v3770 = vadd.f32 %v3657, %v3769
    %3771 = vmatmul.f32.gmra.mxu0 %v155
    %v3772 = vpop.f32.mrf.mxu0
    %v3773 = vadd.f32 %v3660, %v3772
    %3774 = vmatmul.f32.gmra.mxu0 %v162
    %v3775 = vpop.f32.mrf.mxu0
    %v3776 = vadd.f32 %v3663, %v3775
    %3777 = vmatmul.f32.gmra.mxu0 %v169
    %v3778 = vpop.f32.mrf.mxu0
    %v3779 = vadd.f32 %v3666, %v3778
    %3780 = vmatmul.f32.gmra.mxu0 %v176
    %v3781 = vpop.f32.mrf.mxu0
    %v3782 = vadd.f32 %v3669, %v3781
    %3783 = vmatmul.f32.gmra.mxu0 %v183
    %v3784 = vpop.f32.mrf.mxu0
    %v3785 = vadd.f32 %v3672, %v3784
    %3786 = vmatmul.f32.gmra.mxu0 %v190
    %v3787 = vpop.f32.mrf.mxu0
    %v3788 = vadd.f32 %v3675, %v3787
    %3789 = vmatmul.f32.gmra.mxu0 %v197
    %v3790 = vpop.f32.mrf.mxu0
    %v3791 = vadd.f32 %v3678, %v3790
    %3792 = vmatmul.f32.gmra.mxu0 %v204
    %v3793 = vpop.f32.mrf.mxu0
    %v3794 = vadd.f32 %v3681, %v3793
    %3795 = vmatmul.f32.gmra.mxu0 %v211
    %v3796 = vpop.f32.mrf.mxu0
    %v3797 = vadd.f32 %v3684, %v3796
    %3798 = vmatmul.f32.gmra.mxu0 %v218
    %v3799 = vpop.f32.mrf.mxu0
    %v3800 = vadd.f32 %v3687, %v3799
    %3801 = vmatmul.f32.gmra.mxu0 %v225
    %v3802 = vpop.f32.mrf.mxu0
    %v3803 = vadd.f32 %v3690, %v3802
    %3804 = vmatmul.f32.gmra.mxu0 %v232
    %v3805 = vpop.f32.mrf.mxu0
    %v3806 = vadd.f32 %v3693, %v3805
    %3807 = vmatmul.f32.gmra.mxu0 %v239
    %v3808 = vpop.f32.mrf.mxu0
    %v3809 = vadd.f32 %v3696, %v3808
    %3810 = vmatmul.f32.gmra.mxu0 %v246
    %v3811 = vpop.f32.mrf.mxu0
    %v3812 = vadd.f32 %v3699, %v3811
    %3813 = vmatmul.f32.gmra.mxu0 %v253
    %v3814 = vpop.f32.mrf.mxu0
    %v3815 = vadd.f32 %v3702, %v3814
    %3816 = vmatmul.f32.gmra.mxu0 %v260
    %v3817 = vpop.f32.mrf.mxu0
    %v3818 = vadd.f32 %v3705, %v3817
    %3819 = vmatmul.f32.gmra.mxu0 %v267
    %v3820 = vpop.f32.mrf.mxu0
    %v3821 = vadd.f32 %v3708, %v3820
    %3822 = vmatmul.f32.gmra.mxu0 %v274
    %v3823 = vpop.f32.mrf.mxu0
    %v3824 = vadd.f32 %v3711, %v3823
    %3825 = vdwg.mxu0
    %3826 = vmatpush.msra.mxu0 0.0
    %3827 = vmatpush.msra.mxu0 0.0
    %3828 = vmatpush.msra.mxu0 0.0
    %3829 = vmatpush.msra.mxu0 0.0
    %3830 = vmatpush.msra.mxu0 0.0
    %3831 = vmatpush.msra.mxu0 0.0
    %3832 = vmatpush.msra.mxu0 0.0
    %3833 = vmatpush.msra.mxu0 0.0
    %3834 = vmatpush.msra.mxu0 0.0
    %3835 = vmatpush.msra.mxu0 0.0
    %3836 = vmatpush.msra.mxu0 0.0
    %3837 = vmatpush.msra.mxu0 0.0
    %3838 = vmatpush.msra.mxu0 0.0
    %3839 = vmatpush.msra.mxu0 0.0
    %3840 = vmatpush.msra.mxu0 %v667
    %3841 = vmatpush.msra.mxu0 %v663
    %3842 = vmatmul.f32.gmra.mxu0 %v680
    %v3843 = vpop.f32.mrf.mxu0
    %v3844 = vadd.f32 %v3731, %v3843
    %3845 = vmatmul.f32.gmra.mxu0 %v683
    %v3846 = vpop.f32.mrf.mxu0
    %v3847 = vadd.f32 %v3734, %v3846
    %3848 = vmatmul.f32.gmra.mxu0 %v686
    %v3849 = vpop.f32.mrf.mxu0
    %v3850 = vadd.f32 %v3737, %v3849
    %3851 = vmatmul.f32.gmra.mxu0 %v689
    %v3852 = vpop.f32.mrf.mxu0
    %v3853 = vadd.f32 %v3740, %v3852
    %3854 = vmatmul.f32.gmra.mxu0 %v692
    %v3855 = vpop.f32.mrf.mxu0
    %v3856 = vadd.f32 %v3743, %v3855
    %3857 = vmatmul.f32.gmra.mxu0 %v695
    %v3858 = vpop.f32.mrf.mxu0
    %v3859 = vadd.f32 %v3746, %v3858
    %3860 = vmatmul.f32.gmra.mxu0 %v698
    %v3861 = vpop.f32.mrf.mxu0
    %v3862 = vadd.f32 %v3749, %v3861
    %3863 = vmatmul.f32.gmra.mxu0 %v701
    %v3864 = vpop.f32.mrf.mxu0
    %v3865 = vadd.f32 %v3752, %v3864
    %3866 = vmatmul.f32.gmra.mxu0 %v704
    %v3867 = vpop.f32.mrf.mxu0
    %v3868 = vadd.f32 %v3755, %v3867
    %3869 = vmatmul.f32.gmra.mxu0 %v707
    %v3870 = vpop.f32.mrf.mxu0
    %v3871 = vadd.f32 %v3758, %v3870
    %3872 = vmatmul.f32.gmra.mxu0 %v710
    %v3873 = vpop.f32.mrf.mxu0
    %v3874 = vadd.f32 %v3761, %v3873
    %3875 = vmatmul.f32.gmra.mxu0 %v713
    %v3876 = vpop.f32.mrf.mxu0
    %v3877 = vadd.f32 %v3764, %v3876
    %3878 = vmatmul.f32.gmra.mxu0 %v716
    %v3879 = vpop.f32.mrf.mxu0
    %v3880 = vadd.f32 %v3767, %v3879
    %3881 = vmatmul.f32.gmra.mxu0 %v719
    %v3882 = vpop.f32.mrf.mxu0
    %v3883 = vadd.f32 %v3770, %v3882
    %3884 = vmatmul.f32.gmra.mxu0 %v722
    %v3885 = vpop.f32.mrf.mxu0
    %v3886 = vadd.f32 %v3773, %v3885
    %3887 = vmatmul.f32.gmra.mxu0 %v725
    %v3888 = vpop.f32.mrf.mxu0
    %v3889 = vadd.f32 %v3776, %v3888
    %3890 = vmatmul.f32.gmra.mxu0 %v728
    %v3891 = vpop.f32.mrf.mxu0
    %v3892 = vadd.f32 %v3779, %v3891
    %3893 = vmatmul.f32.gmra.mxu0 %v731
    %v3894 = vpop.f32.mrf.mxu0
    %v3895 = vadd.f32 %v3782, %v3894
    %3896 = vmatmul.f32.gmra.mxu0 %v734
    %v3897 = vpop.f32.mrf.mxu0
    %v3898 = vadd.f32 %v3785, %v3897
    %3899 = vmatmul.f32.gmra.mxu0 %v737
    %v3900 = vpop.f32.mrf.mxu0
    %v3901 = vadd.f32 %v3788, %v3900
    %3902 = vmatmul.f32.gmra.mxu0 %v740
    %v3903 = vpop.f32.mrf.mxu0
    %v3904 = vadd.f32 %v3791, %v3903
    %3905 = vmatmul.f32.gmra.mxu0 %v743
    %v3906 = vpop.f32.mrf.mxu0
    %v3907 = vadd.f32 %v3794, %v3906
    %3908 = vmatmul.f32.gmra.mxu0 %v746
    %v3909 = vpop.f32.mrf.mxu0
    %v3910 = vadd.f32 %v3797, %v3909
    %3911 = vmatmul.f32.gmra.mxu0 %v749
    %v3912 = vpop.f32.mrf.mxu0
    %v3913 = vadd.f32 %v3800, %v3912
    %3914 = vmatmul.f32.gmra.mxu0 %v752
    %v3915 = vpop.f32.mrf.mxu0
    %v3916 = vadd.f32 %v3803, %v3915
    %3917 = vmatmul.f32.gmra.mxu0 %v755
    %v3918 = vpop.f32.mrf.mxu0
    %v3919 = vadd.f32 %v3806, %v3918
    %3920 = vmatmul.f32.gmra.mxu0 %v758
    %v3921 = vpop.f32.mrf.mxu0
    %v3922 = vadd.f32 %v3809, %v3921
    %3923 = vmatmul.f32.gmra.mxu0 %v761
    %v3924 = vpop.f32.mrf.mxu0
    %v3925 = vadd.f32 %v3812, %v3924
    %3926 = vmatmul.f32.gmra.mxu0 %v764
    %v3927 = vpop.f32.mrf.mxu0
    %v3928 = vadd.f32 %v3815, %v3927
    %3929 = vmatmul.f32.gmra.mxu0 %v767
    %v3930 = vpop.f32.mrf.mxu0
    %v3931 = vadd.f32 %v3818, %v3930
    %3932 = vmatmul.f32.gmra.mxu0 %v770
    %v3933 = vpop.f32.mrf.mxu0
    %v3934 = vadd.f32 %v3821, %v3933
    %3935 = vmatmul.f32.gmra.mxu0 %v773
    %v3936 = vpop.f32.mrf.mxu0
    %v3937 = vadd.f32 %v3824, %v3936
    %3938 = vdwg.mxu0
    %v3939 = vmax.f32 %v1471, 0.0
    %v3940 = vmax.f32 %v2262, 0.0
    %v3941 = vmax.f32 %v3053, 0.0
    %v3942 = vmax.f32 %v3844, 0.0
    %v3943 = vmax.f32 %v1474, 0.0
    %v3944 = vmax.f32 %v2265, 0.0
    %v3945 = vmax.f32 %v3056, 0.0
    %v3946 = vmax.f32 %v3847, 0.0
    %v3947 = vmax.f32 %v1477, 0.0
    %v3948 = vmax.f32 %v2268, 0.0
    %v3949 = vmax.f32 %v3059, 0.0
    %v3950 = vmax.f32 %v3850, 0.0
    %v3951 = vmax.f32 %v1480, 0.0
    %v3952 = vmax.f32 %v2271, 0.0
    %v3953 = vmax.f32 %v3062, 0.0
    %v3954 = vmax.f32 %v3853, 0.0
    %v3955 = vmax.f32 %v1483, 0.0
    %v3956 = vmax.f32 %v2274, 0.0
    %v3957 = vmax.f32 %v3065, 0.0
    %v3958 = vmax.f32 %v3856, 0.0
    %v3959 = vmax.f32 %v1486, 0.0
    %v3960 = vmax.f32 %v2277, 0.0
    %v3961 = vmax.f32 %v3068, 0.0
    %v3962 = vmax.f32 %v3859, 0.0
    %v3963 = vmax.f32 %v1489, 0.0
    %v3964 = vmax.f32 %v2280, 0.0
    %v3965 = vmax.f32 %v3071, 0.0
    %v3966 = vmax.f32 %v3862, 0.0
    %v3967 = vmax.f32 %v1492, 0.0
    %v3968 = vmax.f32 %v2283, 0.0
    %v3969 = vmax.f32 %v3074, 0.0
    %v3970 = vmax.f32 %v3865, 0.0
    %v3971 = vmax.f32 %v1495, 0.0
    %v3972 = vmax.f32 %v2286, 0.0
    %v3973 = vmax.f32 %v3077, 0.0
    %v3974 = vmax.f32 %v3868, 0.0
    %v3975 = vmax.f32 %v1498, 0.0
    %v3976 = vmax.f32 %v2289, 0.0
    %v3977 = vmax.f32 %v3080, 0.0
    %v3978 = vmax.f32 %v3871, 0.0
    %v3979 = vmax.f32 %v1501, 0.0
    %v3980 = vmax.f32 %v2292, 0.0
    %v3981 = vmax.f32 %v3083, 0.0
    %v3982 = vmax.f32 %v3874, 0.0
    %v3983 = vmax.f32 %v1504, 0.0
    %v3984 = vmax.f32 %v2295, 0.0
    %v3985 = vmax.f32 %v3086, 0.0
    %v3986 = vmax.f32 %v3877, 0.0
    %v3987 = vmax.f32 %v1507, 0.0
    %v3988 = vmax.f32 %v2298, 0.0
    %v3989 = vmax.f32 %v3089, 0.0
    %v3990 = vmax.f32 %v3880, 0.0
    %v3991 = vmax.f32 %v1510, 0.0
    %v3992 = vmax.f32 %v2301, 0.0
    %v3993 = vmax.f32 %v3092, 0.0
    %v3994 = vmax.f32 %v3883, 0.0
    %v3995 = vmax.f32 %v1513, 0.0
    %v3996 = vmax.f32 %v2304, 0.0
    %v3997 = vmax.f32 %v3095, 0.0
    %v3998 = vmax.f32 %v3886, 0.0
    %v3999 = vmax.f32 %v1516, 0.0
    %v4000 = vmax.f32 %v2307, 0.0
    %v4001 = vmax.f32 %v3098, 0.0
    %v4002 = vmax.f32 %v3889, 0.0
    %v4003 = vmax.f32 %v1519, 0.0
    %v4004 = vmax.f32 %v2310, 0.0
    %v4005 = vmax.f32 %v3101, 0.0
    %v4006 = vmax.f32 %v3892, 0.0
    %v4007 = vmax.f32 %v1522, 0.0
    %v4008 = vmax.f32 %v2313, 0.0
    %v4009 = vmax.f32 %v3104, 0.0
    %v4010 = vmax.f32 %v3895, 0.0
    %v4011 = vmax.f32 %v1525, 0.0
    %v4012 = vmax.f32 %v2316, 0.0
    %v4013 = vmax.f32 %v3107, 0.0
    %v4014 = vmax.f32 %v3898, 0.0
    %v4015 = vmax.f32 %v1528, 0.0
    %v4016 = vmax.f32 %v2319, 0.0
    %v4017 = vmax.f32 %v3110, 0.0
    %v4018 = vmax.f32 %v3901, 0.0
    %v4019 = vmax.f32 %v1531, 0.0
    %v4020 = vmax.f32 %v2322, 0.0
    %v4021 = vmax.f32 %v3113, 0.0
    %v4022 = vmax.f32 %v3904, 0.0
    %v4023 = vmax.f32 %v1534, 0.0
    %v4024 = vmax.f32 %v2325, 0.0
    %v4025 = vmax.f32 %v3116, 0.0
    %v4026 = vmax.f32 %v3907, 0.0
    %v4027 = vmax.f32 %v1537, 0.0
    %v4028 = vmax.f32 %v2328, 0.0
    %v4029 = vmax.f32 %v3119, 0.0
    %v4030 = vmax.f32 %v3910, 0.0
    %v4031 = vmax.f32 %v1540, 0.0
    %v4032 = vmax.f32 %v2331, 0.0
    %v4033 = vmax.f32 %v3122, 0.0
    %v4034 = vmax.f32 %v3913, 0.0
    %v4035 = vmax.f32 %v1543, 0.0
    %v4036 = vmax.f32 %v2334, 0.0
    %v4037 = vmax.f32 %v3125, 0.0
    %v4038 = vmax.f32 %v3916, 0.0
    %v4039 = vmax.f32 %v1546, 0.0
    %v4040 = vmax.f32 %v2337, 0.0
    %v4041 = vmax.f32 %v3128, 0.0
    %v4042 = vmax.f32 %v3919, 0.0
    %v4043 = vmax.f32 %v1549, 0.0
    %v4044 = vmax.f32 %v2340, 0.0
    %v4045 = vmax.f32 %v3131, 0.0
    %v4046 = vmax.f32 %v3922, 0.0
    %v4047 = vmax.f32 %v1552, 0.0
    %v4048 = vmax.f32 %v2343, 0.0
    %v4049 = vmax.f32 %v3134, 0.0
    %v4050 = vmax.f32 %v3925, 0.0
    %v4051 = vmax.f32 %v1555, 0.0
    %v4052 = vmax.f32 %v2346, 0.0
    %v4053 = vmax.f32 %v3137, 0.0
    %v4054 = vmax.f32 %v3928, 0.0
    %v4055 = vmax.f32 %v1558, 0.0
    %v4056 = vmax.f32 %v2349, 0.0
    %v4057 = vmax.f32 %v3140, 0.0
    %v4058 = vmax.f32 %v3931, 0.0
    %v4059 = vmax.f32 %v1561, 0.0
    %v4060 = vmax.f32 %v2352, 0.0
    %v4061 = vmax.f32 %v3143, 0.0
    %v4062 = vmax.f32 %v3934, 0.0
    %v4063 = vmax.f32 %v1564, 0.0
    %v4064 = vmax.f32 %v2355, 0.0
    %v4065 = vmax.f32 %v3146, 0.0
    %v4066 = vmax.f32 %v3937, 0.0
    %v4067 = vpack.c.bf16 %v3940, %v3939
    %v4068 = vpack.c.bf16 %v3942, %v3941
    %v4069 = vpack.c.bf16 %v3944, %v3943
    %v4070 = vpack.c.bf16 %v3946, %v3945
    %v4071 = vpack.c.bf16 %v3948, %v3947
    %v4072 = vpack.c.bf16 %v3950, %v3949
    %v4073 = vpack.c.bf16 %v3952, %v3951
    %v4074 = vpack.c.bf16 %v3954, %v3953
    %v4075 = vpack.c.bf16 %v3956, %v3955
    %v4076 = vpack.c.bf16 %v3958, %v3957
    %v4077 = vpack.c.bf16 %v3960, %v3959
    %v4078 = vpack.c.bf16 %v3962, %v3961
    %v4079 = vpack.c.bf16 %v3964, %v3963
    %v4080 = vpack.c.bf16 %v3966, %v3965
    %v4081 = vpack.c.bf16 %v3968, %v3967
    %v4082 = vpack.c.bf16 %v3970, %v3969
    %v4083 = vpack.c.bf16 %v3972, %v3971
    %v4084 = vpack.c.bf16 %v3974, %v3973
    %v4085 = vpack.c.bf16 %v3976, %v3975
    %v4086 = vpack.c.bf16 %v3978, %v3977
    %v4087 = vpack.c.bf16 %v3980, %v3979
    %v4088 = vpack.c.bf16 %v3982, %v3981
    %v4089 = vpack.c.bf16 %v3984, %v3983
    %v4090 = vpack.c.bf16 %v3986, %v3985
    %v4091 = vpack.c.bf16 %v3988, %v3987
    %v4092 = vpack.c.bf16 %v3990, %v3989
    %v4093 = vpack.c.bf16 %v3992, %v3991
    %v4094 = vpack.c.bf16 %v3994, %v3993
    %v4095 = vpack.c.bf16 %v3996, %v3995
    %v4096 = vpack.c.bf16 %v3998, %v3997
    %v4097 = vpack.c.bf16 %v4000, %v3999
    %v4098 = vpack.c.bf16 %v4002, %v4001
    %v4099 = vpack.c.bf16 %v4004, %v4003
    %v4100 = vpack.c.bf16 %v4006, %v4005
    %v4101 = vpack.c.bf16 %v4008, %v4007
    %v4102 = vpack.c.bf16 %v4010, %v4009
    %v4103 = vpack.c.bf16 %v4012, %v4011
    %v4104 = vpack.c.bf16 %v4014, %v4013
    %v4105 = vpack.c.bf16 %v4016, %v4015
    %v4106 = vpack.c.bf16 %v4018, %v4017
    %v4107 = vpack.c.bf16 %v4020, %v4019
    %v4108 = vpack.c.bf16 %v4022, %v4021
    %v4109 = vpack.c.bf16 %v4024, %v4023
    %v4110 = vpack.c.bf16 %v4026, %v4025
    %v4111 = vpack.c.bf16 %v4028, %v4027
    %v4112 = vpack.c.bf16 %v4030, %v4029
    %v4113 = vpack.c.bf16 %v4032, %v4031
    %v4114 = vpack.c.bf16 %v4034, %v4033
    %v4115 = vpack.c.bf16 %v4036, %v4035
    %v4116 = vpack.c.bf16 %v4038, %v4037
    %v4117 = vpack.c.bf16 %v4040, %v4039
    %v4118 = vpack.c.bf16 %v4042, %v4041
    %v4119 = vpack.c.bf16 %v4044, %v4043
    %v4120 = vpack.c.bf16 %v4046, %v4045
    %v4121 = vpack.c.bf16 %v4048, %v4047
    %v4122 = vpack.c.bf16 %v4050, %v4049
    %v4123 = vpack.c.bf16 %v4052, %v4051
    %v4124 = vpack.c.bf16 %v4054, %v4053
    %v4125 = vpack.c.bf16 %v4056, %v4055
    %v4126 = vpack.c.bf16 %v4058, %v4057
    %v4127 = vpack.c.bf16 %v4060, %v4059
    %v4128 = vpack.c.bf16 %v4062, %v4061
    %v4129 = vpack.c.bf16 %v4064, %v4063
    %v4130 = vpack.c.bf16 %v4066, %v4065
    %4131 = vst [vmem:[%s5] sm:$0xff] %v4067
    %4132 = vst [vmem:[%s5 + $0x8] sm:$0xff] %v4068
    %4133 = vst [vmem:[%s5 + $0x10] sm:$0xff] %v4069
    %4134 = vst [vmem:[%s5 + $0x18] sm:$0xff] %v4070
    %4135 = vst [vmem:[%s5 + $0x20] sm:$0xff] %v4071
    %4136 = vst [vmem:[%s5 + $0x28] sm:$0xff] %v4072
    %4137 = vst [vmem:[%s5 + $0x30] sm:$0xff] %v4073
    %4138 = vst [vmem:[%s5 + $0x38] sm:$0xff] %v4074
    %4139 = vst [vmem:[%s5 + $0x40] sm:$0xff] %v4075
    %4140 = vst [vmem:[%s5 + $0x48] sm:$0xff] %v4076
    %4141 = vst [vmem:[%s5 + $0x50] sm:$0xff] %v4077
    %4142 = vst [vmem:[%s5 + $0x58] sm:$0xff] %v4078
    %4143 = vst [vmem:[%s5 + $0x60] sm:$0xff] %v4079
    %4144 = vst [vmem:[%s5 + $0x68] sm:$0xff] %v4080
    %4145 = vst [vmem:[%s5 + $0x70] sm:$0xff] %v4081
    %4146 = vst [vmem:[%s5 + $0x78] sm:$0xff] %v4082
    %4147 = vst [vmem:[%s5 + $0x80] sm:$0xff] %v4083
    %4148 = vst [vmem:[%s5 + $0x88] sm:$0xff] %v4084
    %4149 = vst [vmem:[%s5 + $0x90] sm:$0xff] %v4085
    %4150 = vst [vmem:[%s5 + $0x98] sm:$0xff] %v4086
    %4151 = vst [vmem:[%s5 + $0xa0] sm:$0xff] %v4087
    %4152 = vst [vmem:[%s5 + $0xa8] sm:$0xff] %v4088
    %4153 = vst [vmem:[%s5 + $0xb0] sm:$0xff] %v4089
    %4154 = vst [vmem:[%s5 + $0xb8] sm:$0xff] %v4090
    %4155 = vst [vmem:[%s5 + $0xc0] sm:$0xff] %v4091
    %4156 = vst [vmem:[%s5 + $0xc8] sm:$0xff] %v4092
    %4157 = vst [vmem:[%s5 + $0xd0] sm:$0xff] %v4093
    %4158 = vst [vmem:[%s5 + $0xd8] sm:$0xff] %v4094
    %4159 = vst [vmem:[%s5 + $0xe0] sm:$0xff] %v4095
    %4160 = vst [vmem:[%s5 + $0xe8] sm:$0xff] %v4096
    %4161 = vst [vmem:[%s5 + $0xf0] sm:$0xff] %v4097
    %4162 = vst [vmem:[%s5 + $0xf8] sm:$0xff] %v4098
    %4163 = vst [vmem:[%s5 + $0x100] sm:$0xff] %v4099
    %4164 = vst [vmem:[%s5 + $0x108] sm:$0xff] %v4100
    %4165 = vst [vmem:[%s5 + $0x110] sm:$0xff] %v4101
    %4166 = vst [vmem:[%s5 + $0x118] sm:$0xff] %v4102
    %4167 = vst [vmem:[%s5 + $0x120] sm:$0xff] %v4103
    %4168 = vst [vmem:[%s5 + $0x128] sm:$0xff] %v4104
    %4169 = vst [vmem:[%s5 + $0x130] sm:$0xff] %v4105
    %4170 = vst [vmem:[%s5 + $0x138] sm:$0xff] %v4106
    %4171 = vst [vmem:[%s5 + $0x140] sm:$0xff] %v4107
    %4172 = vst [vmem:[%s5 + $0x148] sm:$0xff] %v4108
    %4173 = vst [vmem:[%s5 + $0x150] sm:$0xff] %v4109
    %4174 = vst [vmem:[%s5 + $0x158] sm:$0xff] %v4110
    %4175 = vst [vmem:[%s5 + $0x160] sm:$0xff] %v4111
    %4176 = vst [vmem:[%s5 + $0x168] sm:$0xff] %v4112
    %4177 = vst [vmem:[%s5 + $0x170] sm:$0xff] %v4113
    %4178 = vst [vmem:[%s5 + $0x178] sm:$0xff] %v4114
    %4179 = vst [vmem:[%s5 + $0x180] sm:$0xff] %v4115
    %4180 = vst [vmem:[%s5 + $0x188] sm:$0xff] %v4116
    %4181 = vst [vmem:[%s5 + $0x190] sm:$0xff] %v4117
    %4182 = vst [vmem:[%s5 + $0x198] sm:$0xff] %v4118
    %4183 = vst [vmem:[%s5 + $0x1a0] sm:$0xff] %v4119
    %4184 = vst [vmem:[%s5 + $0x1a8] sm:$0xff] %v4120
    %4185 = vst [vmem:[%s5 + $0x1b0] sm:$0xff] %v4121
    %4186 = vst [vmem:[%s5 + $0x1b8] sm:$0xff] %v4122
    %4187 = vst [vmem:[%s5 + $0x1c0] sm:$0xff] %v4123
    %4188 = vst [vmem:[%s5 + $0x1c8] sm:$0xff] %v4124
    %4189 = vst [vmem:[%s5 + $0x1d0] sm:$0xff] %v4125
    %4190 = vst [vmem:[%s5 + $0x1d8] sm:$0xff] %v4126
    %4191 = vst [vmem:[%s5 + $0x1e0] sm:$0xff] %v4127
    %4192 = vst [vmem:[%s5 + $0x1e8] sm:$0xff] %v4128
    %4193 = vst [vmem:[%s5 + $0x1f0] sm:$0xff] %v4129
    %4194 = vst [vmem:[%s5 + $0x1f8] sm:$0xff] %v4130
    %v4195 = vld [vmem:[%s3] sm:$0xff]
    %v4196 = vld [vmem:[%s3 + $0x8] sm:$0xff]
    %v4197 = vld [vmem:[%s3 + $0x10] sm:$0xff]
    %v4198 = vld [vmem:[%s3 + $0x18] sm:$0xff]
    %v4199 = vld [vmem:[%s3 + $0x20] sm:$0xff]
    %v4200 = vld [vmem:[%s3 + $0x28] sm:$0xff]
    %v4201 = vld [vmem:[%s3 + $0x30] sm:$0xff]
    %v4202 = vld [vmem:[%s3 + $0x38] sm:$0xff]
    %v4203 = vld [vmem:[%s3 + $0x40] sm:$0xff]
    %v4204 = vld [vmem:[%s3 + $0x48] sm:$0xff]
    %v4205 = vld [vmem:[%s3 + $0x50] sm:$0xff]
    %v4206 = vld [vmem:[%s3 + $0x58] sm:$0xff]
    %v4207 = vld [vmem:[%s3 + $0x60] sm:$0xff]
    %v4208 = vld [vmem:[%s3 + $0x68] sm:$0xff]
    %v4209 = vld [vmem:[%s3 + $0x70] sm:$0xff]
    %v4210 = vld [vmem:[%s3 + $0x78] sm:$0xff]
    %v4211 = vld [vmem:[%s3 + $0x80] sm:$0xff]
    %v4212 = vld [vmem:[%s3 + $0x88] sm:$0xff]
    %v4213 = vld [vmem:[%s3 + $0x90] sm:$0xff]
    %v4214 = vld [vmem:[%s3 + $0x98] sm:$0xff]
    %v4215 = vld [vmem:[%s3 + $0xa0] sm:$0xff]
    %v4216 = vld [vmem:[%s3 + $0xa8] sm:$0xff]
    %v4217 = vld [vmem:[%s3 + $0xb0] sm:$0xff]
    %v4218 = vld [vmem:[%s3 + $0xb8] sm:$0xff]
    %v4219 = vld [vmem:[%s3 + $0xc0] sm:$0xff]
    %v4220 = vld [vmem:[%s3 + $0xc8] sm:$0xff]
    %v4221 = vld [vmem:[%s3 + $0xd0] sm:$0xff]
    %v4222 = vld [vmem:[%s3 + $0xd8] sm:$0xff]
    %v4223 = vld [vmem:[%s3 + $0xe0] sm:$0xff]
    %v4224 = vld [vmem:[%s3 + $0xe8] sm:$0xff]
    %v4225 = vld [vmem:[%s3 + $0xf0] sm:$0xff]
    %v4226 = vld [vmem:[%s3 + $0xf8] sm:$0xff]
    %v4227 = vld [vmem:[%s3 + $0x100] sm:$0xff]
    %v4228 = vld [vmem:[%s3 + $0x108] sm:$0xff]
    %v4229 = vld [vmem:[%s3 + $0x110] sm:$0xff]
    %v4230 = vld [vmem:[%s3 + $0x118] sm:$0xff]
    %v4231 = vld [vmem:[%s3 + $0x120] sm:$0xff]
    %v4232 = vld [vmem:[%s3 + $0x128] sm:$0xff]
    %v4233 = vld [vmem:[%s3 + $0x130] sm:$0xff]
    %v4234 = vld [vmem:[%s3 + $0x138] sm:$0xff]
    %v4235 = vld [vmem:[%s3 + $0x140] sm:$0xff]
    %v4236 = vld [vmem:[%s3 + $0x148] sm:$0xff]
    %v4237 = vld [vmem:[%s3 + $0x150] sm:$0xff]
    %v4238 = vld [vmem:[%s3 + $0x158] sm:$0xff]
    %v4239 = vld [vmem:[%s3 + $0x160] sm:$0xff]
    %v4240 = vld [vmem:[%s3 + $0x168] sm:$0xff]
    %v4241 = vld [vmem:[%s3 + $0x170] sm:$0xff]
    %v4242 = vld [vmem:[%s3 + $0x178] sm:$0xff]
    %v4243 = vld [vmem:[%s3 + $0x180] sm:$0xff]
    %v4244 = vld [vmem:[%s3 + $0x188] sm:$0xff]
    %v4245 = vld [vmem:[%s3 + $0x190] sm:$0xff]
    %v4246 = vld [vmem:[%s3 + $0x198] sm:$0xff]
    %v4247 = vld [vmem:[%s3 + $0x1a0] sm:$0xff]
    %v4248 = vld [vmem:[%s3 + $0x1a8] sm:$0xff]
    %v4249 = vld [vmem:[%s3 + $0x1b0] sm:$0xff]
    %v4250 = vld [vmem:[%s3 + $0x1b8] sm:$0xff]
    %v4251 = vld [vmem:[%s3 + $0x1c0] sm:$0xff]
    %v4252 = vld [vmem:[%s3 + $0x1c8] sm:$0xff]
    %v4253 = vld [vmem:[%s3 + $0x1d0] sm:$0xff]
    %v4254 = vld [vmem:[%s3 + $0x1d8] sm:$0xff]
    %v4255 = vld [vmem:[%s3 + $0x1e0] sm:$0xff]
    %v4256 = vld [vmem:[%s3 + $0x1e8] sm:$0xff]
    %v4257 = vld [vmem:[%s3 + $0x1f0] sm:$0xff]
    %v4258 = vld [vmem:[%s3 + $0x1f8] sm:$0xff]
    %v4259 = vld [vmem:[%s4] sm:$0x1]
    %v4261 = vperm.slane %v4259, 0
    %4263 = vmatpush.msra.mxu0 %v4210
    %4264 = vmatpush.msra.mxu0 %v4209
    %4265 = vmatpush.msra.mxu0 %v4208
    %4266 = vmatpush.msra.mxu0 %v4207
    %4267 = vmatpush.msra.mxu0 %v4206
    %4268 = vmatpush.msra.mxu0 %v4205
    %4269 = vmatpush.msra.mxu0 %v4204
    %4270 = vmatpush.msra.mxu0 %v4203
    %4271 = vmatpush.msra.mxu0 %v4202
    %4272 = vmatpush.msra.mxu0 %v4201
    %4273 = vmatpush.msra.mxu0 %v4200
    %4274 = vmatpush.msra.mxu0 %v4199
    %4275 = vmatpush.msra.mxu0 %v4198
    %4276 = vmatpush.msra.mxu0 %v4197
    %4277 = vmatpush.msra.mxu0 %v4196
    %4278 = vmatpush.msra.mxu0 %v4195
    %4279 = vmatmul.f32.gmra.mxu0 %v3939
    %v4280 = vpop.f32.mrf.mxu0
    %v4281 = vadd.f32 %v4261, %v4280
    %4282 = vmatmul.f32.gmra.mxu0 %v3943
    %v4283 = vpop.f32.mrf.mxu0
    %v4284 = vadd.f32 %v4261, %v4283
    %4285 = vmatmul.f32.gmra.mxu0 %v3947
    %v4286 = vpop.f32.mrf.mxu0
    %v4287 = vadd.f32 %v4261, %v4286
    %4288 = vmatmul.f32.gmra.mxu0 %v3951
    %v4289 = vpop.f32.mrf.mxu0
    %v4290 = vadd.f32 %v4261, %v4289
    %4291 = vmatmul.f32.gmra.mxu0 %v3955
    %v4292 = vpop.f32.mrf.mxu0
    %v4293 = vadd.f32 %v4261, %v4292
    %4294 = vmatmul.f32.gmra.mxu0 %v3959
    %v4295 = vpop.f32.mrf.mxu0
    %v4296 = vadd.f32 %v4261, %v4295
    %4297 = vmatmul.f32.gmra.mxu0 %v3963
    %v4298 = vpop.f32.mrf.mxu0
    %v4299 = vadd.f32 %v4261, %v4298
    %4300 = vmatmul.f32.gmra.mxu0 %v3967
    %v4301 = vpop.f32.mrf.mxu0
    %v4302 = vadd.f32 %v4261, %v4301
    %4303 = vmatmul.f32.gmra.mxu0 %v3971
    %v4304 = vpop.f32.mrf.mxu0
    %v4305 = vadd.f32 %v4261, %v4304
    %4306 = vmatmul.f32.gmra.mxu0 %v3975
    %v4307 = vpop.f32.mrf.mxu0
    %v4308 = vadd.f32 %v4261, %v4307
    %4309 = vmatmul.f32.gmra.mxu0 %v3979
    %v4310 = vpop.f32.mrf.mxu0
    %v4311 = vadd.f32 %v4261, %v4310
    %4312 = vmatmul.f32.gmra.mxu0 %v3983
    %v4313 = vpop.f32.mrf.mxu0
    %v4314 = vadd.f32 %v4261, %v4313
    %4315 = vmatmul.f32.gmra.mxu0 %v3987
    %v4316 = vpop.f32.mrf.mxu0
    %v4317 = vadd.f32 %v4261, %v4316
    %4318 = vmatmul.f32.gmra.mxu0 %v3991
    %v4319 = vpop.f32.mrf.mxu0
    %v4320 = vadd.f32 %v4261, %v4319
    %4321 = vmatmul.f32.gmra.mxu0 %v3995
    %v4322 = vpop.f32.mrf.mxu0
    %v4323 = vadd.f32 %v4261, %v4322
    %4324 = vmatmul.f32.gmra.mxu0 %v3999
    %v4325 = vpop.f32.mrf.mxu0
    %v4326 = vadd.f32 %v4261, %v4325
    %4327 = vmatmul.f32.gmra.mxu0 %v4003
    %v4328 = vpop.f32.mrf.mxu0
    %v4329 = vadd.f32 %v4261, %v4328
    %4330 = vmatmul.f32.gmra.mxu0 %v4007
    %v4331 = vpop.f32.mrf.mxu0
    %v4332 = vadd.f32 %v4261, %v4331
    %4333 = vmatmul.f32.gmra.mxu0 %v4011
    %v4334 = vpop.f32.mrf.mxu0
    %v4335 = vadd.f32 %v4261, %v4334
    %4336 = vmatmul.f32.gmra.mxu0 %v4015
    %v4337 = vpop.f32.mrf.mxu0
    %v4338 = vadd.f32 %v4261, %v4337
    %4339 = vmatmul.f32.gmra.mxu0 %v4019
    %v4340 = vpop.f32.mrf.mxu0
    %v4341 = vadd.f32 %v4261, %v4340
    %4342 = vmatmul.f32.gmra.mxu0 %v4023
    %v4343 = vpop.f32.mrf.mxu0
    %v4344 = vadd.f32 %v4261, %v4343
    %4345 = vmatmul.f32.gmra.mxu0 %v4027
    %v4346 = vpop.f32.mrf.mxu0
    %v4347 = vadd.f32 %v4261, %v4346
    %4348 = vmatmul.f32.gmra.mxu0 %v4031
    %v4349 = vpop.f32.mrf.mxu0
    %v4350 = vadd.f32 %v4261, %v4349
    %4351 = vmatmul.f32.gmra.mxu0 %v4035
    %v4352 = vpop.f32.mrf.mxu0
    %v4353 = vadd.f32 %v4261, %v4352
    %4354 = vmatmul.f32.gmra.mxu0 %v4039
    %v4355 = vpop.f32.mrf.mxu0
    %v4356 = vadd.f32 %v4261, %v4355
    %4357 = vmatmul.f32.gmra.mxu0 %v4043
    %v4358 = vpop.f32.mrf.mxu0
    %v4359 = vadd.f32 %v4261, %v4358
    %4360 = vmatmul.f32.gmra.mxu0 %v4047
    %v4361 = vpop.f32.mrf.mxu0
    %v4362 = vadd.f32 %v4261, %v4361
    %4363 = vmatmul.f32.gmra.mxu0 %v4051
    %v4364 = vpop.f32.mrf.mxu0
    %v4365 = vadd.f32 %v4261, %v4364
    %4366 = vmatmul.f32.gmra.mxu0 %v4055
    %v4367 = vpop.f32.mrf.mxu0
    %v4368 = vadd.f32 %v4261, %v4367
    %4369 = vmatmul.f32.gmra.mxu0 %v4059
    %v4370 = vpop.f32.mrf.mxu0
    %v4371 = vadd.f32 %v4261, %v4370
    %4372 = vmatmul.f32.gmra.mxu0 %v4063
    %v4373 = vpop.f32.mrf.mxu0
    %v4374 = vadd.f32 %v4261, %v4373
    %4375 = vdwg.mxu0
    %4376 = vmatpush.msra.mxu0 %v4226
    %4377 = vmatpush.msra.mxu0 %v4225
    %4378 = vmatpush.msra.mxu0 %v4224
    %4379 = vmatpush.msra.mxu0 %v4223
    %4380 = vmatpush.msra.mxu0 %v4222
    %4381 = vmatpush.msra.mxu0 %v4221
    %4382 = vmatpush.msra.mxu0 %v4220
    %4383 = vmatpush.msra.mxu0 %v4219
    %4384 = vmatpush.msra.mxu0 %v4218
    %4385 = vmatpush.msra.mxu0 %v4217
    %4386 = vmatpush.msra.mxu0 %v4216
    %4387 = vmatpush.msra.mxu0 %v4215
    %4388 = vmatpush.msra.mxu0 %v4214
    %4389 = vmatpush.msra.mxu0 %v4213
    %4390 = vmatpush.msra.mxu0 %v4212
    %4391 = vmatpush.msra.mxu0 %v4211
    %4392 = vmatmul.f32.gmra.mxu0 %v3940
    %v4393 = vpop.f32.mrf.mxu0
    %v4394 = vadd.f32 %v4281, %v4393
    %4395 = vmatmul.f32.gmra.mxu0 %v3944
    %v4396 = vpop.f32.mrf.mxu0
    %v4397 = vadd.f32 %v4284, %v4396
    %4398 = vmatmul.f32.gmra.mxu0 %v3948
    %v4399 = vpop.f32.mrf.mxu0
    %v4400 = vadd.f32 %v4287, %v4399
    %4401 = vmatmul.f32.gmra.mxu0 %v3952
    %v4402 = vpop.f32.mrf.mxu0
    %v4403 = vadd.f32 %v4290, %v4402
    %4404 = vmatmul.f32.gmra.mxu0 %v3956
    %v4405 = vpop.f32.mrf.mxu0
    %v4406 = vadd.f32 %v4293, %v4405
    %4407 = vmatmul.f32.gmra.mxu0 %v3960
    %v4408 = vpop.f32.mrf.mxu0
    %v4409 = vadd.f32 %v4296, %v4408
    %4410 = vmatmul.f32.gmra.mxu0 %v3964
    %v4411 = vpop.f32.mrf.mxu0
    %v4412 = vadd.f32 %v4299, %v4411
    %4413 = vmatmul.f32.gmra.mxu0 %v3968
    %v4414 = vpop.f32.mrf.mxu0
    %v4415 = vadd.f32 %v4302, %v4414
    %4416 = vmatmul.f32.gmra.mxu0 %v3972
    %v4417 = vpop.f32.mrf.mxu0
    %v4418 = vadd.f32 %v4305, %v4417
    %4419 = vmatmul.f32.gmra.mxu0 %v3976
    %v4420 = vpop.f32.mrf.mxu0
    %v4421 = vadd.f32 %v4308, %v4420
    %4422 = vmatmul.f32.gmra.mxu0 %v3980
    %v4423 = vpop.f32.mrf.mxu0
    %v4424 = vadd.f32 %v4311, %v4423
    %4425 = vmatmul.f32.gmra.mxu0 %v3984
    %v4426 = vpop.f32.mrf.mxu0
    %v4427 = vadd.f32 %v4314, %v4426
    %4428 = vmatmul.f32.gmra.mxu0 %v3988
    %v4429 = vpop.f32.mrf.mxu0
    %v4430 = vadd.f32 %v4317, %v4429
    %4431 = vmatmul.f32.gmra.mxu0 %v3992
    %v4432 = vpop.f32.mrf.mxu0
    %v4433 = vadd.f32 %v4320, %v4432
    %4434 = vmatmul.f32.gmra.mxu0 %v3996
    %v4435 = vpop.f32.mrf.mxu0
    %v4436 = vadd.f32 %v4323, %v4435
    %4437 = vmatmul.f32.gmra.mxu0 %v4000
    %v4438 = vpop.f32.mrf.mxu0
    %v4439 = vadd.f32 %v4326, %v4438
    %4440 = vmatmul.f32.gmra.mxu0 %v4004
    %v4441 = vpop.f32.mrf.mxu0
    %v4442 = vadd.f32 %v4329, %v4441
    %4443 = vmatmul.f32.gmra.mxu0 %v4008
    %v4444 = vpop.f32.mrf.mxu0
    %v4445 = vadd.f32 %v4332, %v4444
    %4446 = vmatmul.f32.gmra.mxu0 %v4012
    %v4447 = vpop.f32.mrf.mxu0
    %v4448 = vadd.f32 %v4335, %v4447
    %4449 = vmatmul.f32.gmra.mxu0 %v4016
    %v4450 = vpop.f32.mrf.mxu0
    %v4451 = vadd.f32 %v4338, %v4450
    %4452 = vmatmul.f32.gmra.mxu0 %v4020
    %v4453 = vpop.f32.mrf.mxu0
    %v4454 = vadd.f32 %v4341, %v4453
    %4455 = vmatmul.f32.gmra.mxu0 %v4024
    %v4456 = vpop.f32.mrf.mxu0
    %v4457 = vadd.f32 %v4344, %v4456
    %4458 = vmatmul.f32.gmra.mxu0 %v4028
    %v4459 = vpop.f32.mrf.mxu0
    %v4460 = vadd.f32 %v4347, %v4459
    %4461 = vmatmul.f32.gmra.mxu0 %v4032
    %v4462 = vpop.f32.mrf.mxu0
    %v4463 = vadd.f32 %v4350, %v4462
    %4464 = vmatmul.f32.gmra.mxu0 %v4036
    %v4465 = vpop.f32.mrf.mxu0
    %v4466 = vadd.f32 %v4353, %v4465
    %4467 = vmatmul.f32.gmra.mxu0 %v4040
    %v4468 = vpop.f32.mrf.mxu0
    %v4469 = vadd.f32 %v4356, %v4468
    %4470 = vmatmul.f32.gmra.mxu0 %v4044
    %v4471 = vpop.f32.mrf.mxu0
    %v4472 = vadd.f32 %v4359, %v4471
    %4473 = vmatmul.f32.gmra.mxu0 %v4048
    %v4474 = vpop.f32.mrf.mxu0
    %v4475 = vadd.f32 %v4362, %v4474
    %4476 = vmatmul.f32.gmra.mxu0 %v4052
    %v4477 = vpop.f32.mrf.mxu0
    %v4478 = vadd.f32 %v4365, %v4477
    %4479 = vmatmul.f32.gmra.mxu0 %v4056
    %v4480 = vpop.f32.mrf.mxu0
    %v4481 = vadd.f32 %v4368, %v4480
    %4482 = vmatmul.f32.gmra.mxu0 %v4060
    %v4483 = vpop.f32.mrf.mxu0
    %v4484 = vadd.f32 %v4371, %v4483
    %4485 = vmatmul.f32.gmra.mxu0 %v4064
    %v4486 = vpop.f32.mrf.mxu0
    %v4487 = vadd.f32 %v4374, %v4486
    %4488 = vdwg.mxu0
    %4489 = vmatpush.msra.mxu0 %v4242
    %4490 = vmatpush.msra.mxu0 %v4241
    %4491 = vmatpush.msra.mxu0 %v4240
    %4492 = vmatpush.msra.mxu0 %v4239
    %4493 = vmatpush.msra.mxu0 %v4238
    %4494 = vmatpush.msra.mxu0 %v4237
    %4495 = vmatpush.msra.mxu0 %v4236
    %4496 = vmatpush.msra.mxu0 %v4235
    %4497 = vmatpush.msra.mxu0 %v4234
    %4498 = vmatpush.msra.mxu0 %v4233
    %4499 = vmatpush.msra.mxu0 %v4232
    %4500 = vmatpush.msra.mxu0 %v4231
    %4501 = vmatpush.msra.mxu0 %v4230
    %4502 = vmatpush.msra.mxu0 %v4229
    %4503 = vmatpush.msra.mxu0 %v4228
    %4504 = vmatpush.msra.mxu0 %v4227
    %4505 = vmatmul.f32.gmra.mxu0 %v3941
    %v4506 = vpop.f32.mrf.mxu0
    %v4507 = vadd.f32 %v4394, %v4506
    %4508 = vmatmul.f32.gmra.mxu0 %v3945
    %v4509 = vpop.f32.mrf.mxu0
    %v4510 = vadd.f32 %v4397, %v4509
    %4511 = vmatmul.f32.gmra.mxu0 %v3949
    %v4512 = vpop.f32.mrf.mxu0
    %v4513 = vadd.f32 %v4400, %v4512
    %4514 = vmatmul.f32.gmra.mxu0 %v3953
    %v4515 = vpop.f32.mrf.mxu0
    %v4516 = vadd.f32 %v4403, %v4515
    %4517 = vmatmul.f32.gmra.mxu0 %v3957
    %v4518 = vpop.f32.mrf.mxu0
    %v4519 = vadd.f32 %v4406, %v4518
    %4520 = vmatmul.f32.gmra.mxu0 %v3961
    %v4521 = vpop.f32.mrf.mxu0
    %v4522 = vadd.f32 %v4409, %v4521
    %4523 = vmatmul.f32.gmra.mxu0 %v3965
    %v4524 = vpop.f32.mrf.mxu0
    %v4525 = vadd.f32 %v4412, %v4524
    %4526 = vmatmul.f32.gmra.mxu0 %v3969
    %v4527 = vpop.f32.mrf.mxu0
    %v4528 = vadd.f32 %v4415, %v4527
    %4529 = vmatmul.f32.gmra.mxu0 %v3973
    %v4530 = vpop.f32.mrf.mxu0
    %v4531 = vadd.f32 %v4418, %v4530
    %4532 = vmatmul.f32.gmra.mxu0 %v3977
    %v4533 = vpop.f32.mrf.mxu0
    %v4534 = vadd.f32 %v4421, %v4533
    %4535 = vmatmul.f32.gmra.mxu0 %v3981
    %v4536 = vpop.f32.mrf.mxu0
    %v4537 = vadd.f32 %v4424, %v4536
    %4538 = vmatmul.f32.gmra.mxu0 %v3985
    %v4539 = vpop.f32.mrf.mxu0
    %v4540 = vadd.f32 %v4427, %v4539
    %4541 = vmatmul.f32.gmra.mxu0 %v3989
    %v4542 = vpop.f32.mrf.mxu0
    %v4543 = vadd.f32 %v4430, %v4542
    %4544 = vmatmul.f32.gmra.mxu0 %v3993
    %v4545 = vpop.f32.mrf.mxu0
    %v4546 = vadd.f32 %v4433, %v4545
    %4547 = vmatmul.f32.gmra.mxu0 %v3997
    %v4548 = vpop.f32.mrf.mxu0
    %v4549 = vadd.f32 %v4436, %v4548
    %4550 = vmatmul.f32.gmra.mxu0 %v4001
    %v4551 = vpop.f32.mrf.mxu0
    %v4552 = vadd.f32 %v4439, %v4551
    %4553 = vmatmul.f32.gmra.mxu0 %v4005
    %v4554 = vpop.f32.mrf.mxu0
    %v4555 = vadd.f32 %v4442, %v4554
    %4556 = vmatmul.f32.gmra.mxu0 %v4009
    %v4557 = vpop.f32.mrf.mxu0
    %v4558 = vadd.f32 %v4445, %v4557
    %4559 = vmatmul.f32.gmra.mxu0 %v4013
    %v4560 = vpop.f32.mrf.mxu0
    %v4561 = vadd.f32 %v4448, %v4560
    %4562 = vmatmul.f32.gmra.mxu0 %v4017
    %v4563 = vpop.f32.mrf.mxu0
    %v4564 = vadd.f32 %v4451, %v4563
    %4565 = vmatmul.f32.gmra.mxu0 %v4021
    %v4566 = vpop.f32.mrf.mxu0
    %v4567 = vadd.f32 %v4454, %v4566
    %4568 = vmatmul.f32.gmra.mxu0 %v4025
    %v4569 = vpop.f32.mrf.mxu0
    %v4570 = vadd.f32 %v4457, %v4569
    %4571 = vmatmul.f32.gmra.mxu0 %v4029
    %v4572 = vpop.f32.mrf.mxu0
    %v4573 = vadd.f32 %v4460, %v4572
    %4574 = vmatmul.f32.gmra.mxu0 %v4033
    %v4575 = vpop.f32.mrf.mxu0
    %v4576 = vadd.f32 %v4463, %v4575
    %4577 = vmatmul.f32.gmra.mxu0 %v4037
    %v4578 = vpop.f32.mrf.mxu0
    %v4579 = vadd.f32 %v4466, %v4578
    %4580 = vmatmul.f32.gmra.mxu0 %v4041
    %v4581 = vpop.f32.mrf.mxu0
    %v4582 = vadd.f32 %v4469, %v4581
    %4583 = vmatmul.f32.gmra.mxu0 %v4045
    %v4584 = vpop.f32.mrf.mxu0
    %v4585 = vadd.f32 %v4472, %v4584
    %4586 = vmatmul.f32.gmra.mxu0 %v4049
    %v4587 = vpop.f32.mrf.mxu0
    %v4588 = vadd.f32 %v4475, %v4587
    %4589 = vmatmul.f32.gmra.mxu0 %v4053
    %v4590 = vpop.f32.mrf.mxu0
    %v4591 = vadd.f32 %v4478, %v4590
    %4592 = vmatmul.f32.gmra.mxu0 %v4057
    %v4593 = vpop.f32.mrf.mxu0
    %v4594 = vadd.f32 %v4481, %v4593
    %4595 = vmatmul.f32.gmra.mxu0 %v4061
    %v4596 = vpop.f32.mrf.mxu0
    %v4597 = vadd.f32 %v4484, %v4596
    %4598 = vmatmul.f32.gmra.mxu0 %v4065
    %v4599 = vpop.f32.mrf.mxu0
    %v4600 = vadd.f32 %v4487, %v4599
    %4601 = vdwg.mxu0
    %4602 = vmatpush.msra.mxu0 %v4258
    %4603 = vmatpush.msra.mxu0 %v4257
    %4604 = vmatpush.msra.mxu0 %v4256
    %4605 = vmatpush.msra.mxu0 %v4255
    %4606 = vmatpush.msra.mxu0 %v4254
    %4607 = vmatpush.msra.mxu0 %v4253
    %4608 = vmatpush.msra.mxu0 %v4252
    %4609 = vmatpush.msra.mxu0 %v4251
    %4610 = vmatpush.msra.mxu0 %v4250
    %4611 = vmatpush.msra.mxu0 %v4249
    %4612 = vmatpush.msra.mxu0 %v4248
    %4613 = vmatpush.msra.mxu0 %v4247
    %4614 = vmatpush.msra.mxu0 %v4246
    %4615 = vmatpush.msra.mxu0 %v4245
    %4616 = vmatpush.msra.mxu0 %v4244
    %4617 = vmatpush.msra.mxu0 %v4243
    %4618 = vmatmul.f32.gmra.mxu0 %v3942
    %v4619 = vpop.f32.mrf.mxu0
    %v4620 = vadd.f32 %v4507, %v4619
    %4621 = vmatmul.f32.gmra.mxu0 %v3946
    %v4622 = vpop.f32.mrf.mxu0
    %v4623 = vadd.f32 %v4510, %v4622
    %4624 = vmatmul.f32.gmra.mxu0 %v3950
    %v4625 = vpop.f32.mrf.mxu0
    %v4626 = vadd.f32 %v4513, %v4625
    %4627 = vmatmul.f32.gmra.mxu0 %v3954
    %v4628 = vpop.f32.mrf.mxu0
    %v4629 = vadd.f32 %v4516, %v4628
    %4630 = vmatmul.f32.gmra.mxu0 %v3958
    %v4631 = vpop.f32.mrf.mxu0
    %v4632 = vadd.f32 %v4519, %v4631
    %4633 = vmatmul.f32.gmra.mxu0 %v3962
    %v4634 = vpop.f32.mrf.mxu0
    %v4635 = vadd.f32 %v4522, %v4634
    %4636 = vmatmul.f32.gmra.mxu0 %v3966
    %v4637 = vpop.f32.mrf.mxu0
    %v4638 = vadd.f32 %v4525, %v4637
    %4639 = vmatmul.f32.gmra.mxu0 %v3970
    %v4640 = vpop.f32.mrf.mxu0
    %v4641 = vadd.f32 %v4528, %v4640
    %4642 = vmatmul.f32.gmra.mxu0 %v3974
    %v4643 = vpop.f32.mrf.mxu0
    %v4644 = vadd.f32 %v4531, %v4643
    %4645 = vmatmul.f32.gmra.mxu0 %v3978
    %v4646 = vpop.f32.mrf.mxu0
    %v4647 = vadd.f32 %v4534, %v4646
    %4648 = vmatmul.f32.gmra.mxu0 %v3982
    %v4649 = vpop.f32.mrf.mxu0
    %v4650 = vadd.f32 %v4537, %v4649
    %4651 = vmatmul.f32.gmra.mxu0 %v3986
    %v4652 = vpop.f32.mrf.mxu0
    %v4653 = vadd.f32 %v4540, %v4652
    %4654 = vmatmul.f32.gmra.mxu0 %v3990
    %v4655 = vpop.f32.mrf.mxu0
    %v4656 = vadd.f32 %v4543, %v4655
    %4657 = vmatmul.f32.gmra.mxu0 %v3994
    %v4658 = vpop.f32.mrf.mxu0
    %v4659 = vadd.f32 %v4546, %v4658
    %4660 = vmatmul.f32.gmra.mxu0 %v3998
    %v4661 = vpop.f32.mrf.mxu0
    %v4662 = vadd.f32 %v4549, %v4661
    %4663 = vmatmul.f32.gmra.mxu0 %v4002
    %v4664 = vpop.f32.mrf.mxu0
    %v4665 = vadd.f32 %v4552, %v4664
    %4666 = vmatmul.f32.gmra.mxu0 %v4006
    %v4667 = vpop.f32.mrf.mxu0
    %v4668 = vadd.f32 %v4555, %v4667
    %4669 = vmatmul.f32.gmra.mxu0 %v4010
    %v4670 = vpop.f32.mrf.mxu0
    %v4671 = vadd.f32 %v4558, %v4670
    %4672 = vmatmul.f32.gmra.mxu0 %v4014
    %v4673 = vpop.f32.mrf.mxu0
    %v4674 = vadd.f32 %v4561, %v4673
    %4675 = vmatmul.f32.gmra.mxu0 %v4018
    %v4676 = vpop.f32.mrf.mxu0
    %v4677 = vadd.f32 %v4564, %v4676
    %4678 = vmatmul.f32.gmra.mxu0 %v4022
    %v4679 = vpop.f32.mrf.mxu0
    %v4680 = vadd.f32 %v4567, %v4679
    %4681 = vmatmul.f32.gmra.mxu0 %v4026
    %v4682 = vpop.f32.mrf.mxu0
    %v4683 = vadd.f32 %v4570, %v4682
    %4684 = vmatmul.f32.gmra.mxu0 %v4030
    %v4685 = vpop.f32.mrf.mxu0
    %v4686 = vadd.f32 %v4573, %v4685
    %4687 = vmatmul.f32.gmra.mxu0 %v4034
    %v4688 = vpop.f32.mrf.mxu0
    %v4689 = vadd.f32 %v4576, %v4688
    %4690 = vmatmul.f32.gmra.mxu0 %v4038
    %v4691 = vpop.f32.mrf.mxu0
    %v4692 = vadd.f32 %v4579, %v4691
    %4693 = vmatmul.f32.gmra.mxu0 %v4042
    %v4694 = vpop.f32.mrf.mxu0
    %v4695 = vadd.f32 %v4582, %v4694
    %4696 = vmatmul.f32.gmra.mxu0 %v4046
    %v4697 = vpop.f32.mrf.mxu0
    %v4698 = vadd.f32 %v4585, %v4697
    %4699 = vmatmul.f32.gmra.mxu0 %v4050
    %v4700 = vpop.f32.mrf.mxu0
    %v4701 = vadd.f32 %v4588, %v4700
    %4702 = vmatmul.f32.gmra.mxu0 %v4054
    %v4703 = vpop.f32.mrf.mxu0
    %v4704 = vadd.f32 %v4591, %v4703
    %4705 = vmatmul.f32.gmra.mxu0 %v4058
    %v4706 = vpop.f32.mrf.mxu0
    %v4707 = vadd.f32 %v4594, %v4706
    %4708 = vmatmul.f32.gmra.mxu0 %v4062
    %v4709 = vpop.f32.mrf.mxu0
    %v4710 = vadd.f32 %v4597, %v4709
    %4711 = vmatmul.f32.gmra.mxu0 %v4066
    %v4712 = vpop.f32.mrf.mxu0
    %v4713 = vadd.f32 %v4600, %v4712
    %4714 = vdwg.mxu0
    %4715 = vst [vmem:[%s6] sm:$0xff] %v4620
    %4716 = vst [vmem:[%s6 + $0x8] sm:$0xff] %v4623
    %4717 = vst [vmem:[%s6 + $0x10] sm:$0xff] %v4626
    %4718 = vst [vmem:[%s6 + $0x18] sm:$0xff] %v4629
    %4719 = vst [vmem:[%s6 + $0x20] sm:$0xff] %v4632
    %4720 = vst [vmem:[%s6 + $0x28] sm:$0xff] %v4635
    %4721 = vst [vmem:[%s6 + $0x30] sm:$0xff] %v4638
    %4722 = vst [vmem:[%s6 + $0x38] sm:$0xff] %v4641
    %4723 = vst [vmem:[%s6 + $0x40] sm:$0xff] %v4644
    %4724 = vst [vmem:[%s6 + $0x48] sm:$0xff] %v4647
    %4725 = vst [vmem:[%s6 + $0x50] sm:$0xff] %v4650
    %4726 = vst [vmem:[%s6 + $0x58] sm:$0xff] %v4653
    %4727 = vst [vmem:[%s6 + $0x60] sm:$0xff] %v4656
    %4728 = vst [vmem:[%s6 + $0x68] sm:$0xff] %v4659
    %4729 = vst [vmem:[%s6 + $0x70] sm:$0xff] %v4662
    %4730 = vst [vmem:[%s6 + $0x78] sm:$0xff] %v4665
    %4731 = vst [vmem:[%s6 + $0x80] sm:$0xff] %v4668
    %4732 = vst [vmem:[%s6 + $0x88] sm:$0xff] %v4671
    %4733 = vst [vmem:[%s6 + $0x90] sm:$0xff] %v4674
    %4734 = vst [vmem:[%s6 + $0x98] sm:$0xff] %v4677
    %4735 = vst [vmem:[%s6 + $0xa0] sm:$0xff] %v4680
    %4736 = vst [vmem:[%s6 + $0xa8] sm:$0xff] %v4683
    %4737 = vst [vmem:[%s6 + $0xb0] sm:$0xff] %v4686
    %4738 = vst [vmem:[%s6 + $0xb8] sm:$0xff] %v4689
    %4739 = vst [vmem:[%s6 + $0xc0] sm:$0xff] %v4692
    %4740 = vst [vmem:[%s6 + $0xc8] sm:$0xff] %v4695
    %4741 = vst [vmem:[%s6 + $0xd0] sm:$0xff] %v4698
    %4742 = vst [vmem:[%s6 + $0xd8] sm:$0xff] %v4701
    %4743 = vst [vmem:[%s6 + $0xe0] sm:$0xff] %v4704
    %4744 = vst [vmem:[%s6 + $0xe8] sm:$0xff] %v4707
    %4745 = vst [vmem:[%s6 + $0xf0] sm:$0xff] %v4710
    %4746 = vst [vmem:[%s6 + $0xf8] sm:$0xff] %v4713
    // Predicated region
    $region30: #{mlp_with_switch.2} parent=1 // pred_check
      _
    $region31: #{mlp_with_switch.2} parent=1 // pred_check_branch
      %4748 = sbr.rel (0) target = $region33
    $region32: #{mlp_with_switch.2} parent=1 // pred_region
      _
    $region33: #{mlp_with_switch.2} parent=1 // pred_fallthru
      _
    // Predicated region
    $region34: #{mlp_with_switch.2} parent=1 // pred_check
      _
    $region35: #{mlp_with_switch.2} parent=1 // pred_check_branch
      %4750 = sbr.rel (0) target = $region37
    $region36: #{mlp_with_switch.2} parent=1 // pred_region
      _
    $region37: #{mlp_with_switch.2} parent=1 // pred_fallthru
      _
    // Predicated region
    $region38: #{mlp_with_switch.2} parent=1 // pred_check
      _
    $region39: #{mlp_with_switch.2} parent=1 // pred_check_branch
      %4752 = sbr.rel (0) target = $region41
    $region40: #{mlp_with_switch.2} parent=1 // pred_region
      _
    $region41: #{mlp_with_switch.2} parent=1 // pred_fallthru
      _
    // Predicated region
    $region42: #{mlp_with_switch.2} parent=1 // pred_check
      _
    $region43: #{mlp_with_switch.2} parent=1 // pred_check_branch
      %4754 = sbr.rel (0) target = $region45
    $region44: #{mlp_with_switch.2} parent=1 // pred_region
      _
    $region45: #{mlp_with_switch.2} parent=1 // pred_fallthru
      _
    %4755 = vsyncpa [#allocation3], 1
    %4756 = vsyncpa [#allocation5], 1

// kernel: mlp_with_switch.3
$region0: #{mlp_with_switch.3}
  #allocation0 [shape = 'u32[]', space=smem, size = 0x4, offset = 0x4, fixed_abs, tag = 'smem constant byte address 0x4 - core index']
  #allocation1 [shape = 'u32[72,128]{1,0:T(1,128)}', space=vmem, size = 0x9000, scoped, tag = 'internal scratch']
  #allocation2 [shape = 's32[1]{0}', space=sflag, size = 0x4, scoped, tag = 'scoped memory for mlp_with_switch.3']
  #allocation3 [shape = 'u8[512]{0}', space=smem, size = 0x200, scoped, tag = 'prefetched SMEM operand 0']
  %s0 = inlined_call_operand.vmem [shape: s32[11], index: 0, kind: input, shape index: {}]
  %s1 = inlined_call_operand.vmem [shape: bf16[2816,512], index: 1, kind: input, shape index: {}]
  %s2 = inlined_call_operand.vmem [shape: bf16[10,512,512], index: 2, kind: input, shape index: {}]
  %s3 = inlined_call_operand.vmem [shape: f32[10,1,512], index: 3, kind: input, shape index: {}]
  %s4 = inlined_call_operand.vmem [shape: bf16[10,512,512], index: 4, kind: input, shape index: {}]
  %s5 = inlined_call_operand.vmem [shape: f32[10,1,512], index: 5, kind: input, shape index: {}]
  %s6 = inlined_call_operand.vmem [shape: bf16[512,128], index: 6, kind: input, shape index: {}]
  %s7 = inlined_call_operand.vmem [shape: f32[1,128], index: 7, kind: input, shape index: {}]
  %s8 = inlined_call_operand.vmem [shape: f32[2816,128], index: 8, kind: output, shape index: {}]
  %s9 = sld [smem:[#allocation0]]
  $region61: #{mlp_with_switch.3} parent=0
    _
  %s11 = ssub.s32 1, %s9
  %s12 = scalar_select 0, %s11, %s9
  %s14 = sshll.u32 %s0, 4
  %s15 = int_to_ptr.vmem [resolvable:$true] %s14
  %17 = dma.vmem_to_smem %s15, 16, [#allocation3], [#allocation2]
  %19 = dma.done [#allocation2], 16
  %20 = sfence
  loop: start=0, step=1, limit=13
  $region2: #{mlp_with_switch.3} parent=0 // loop_pre_header
    _
  $region3: #{mlp_with_switch.3} parent=0 // loop_header
    %s22 = sphi 0, %s26
    %p23 = scmp.ge.s32.totalorder %s22, 13
    %s32 = sphi 0, %s34
    %s35 = sphi 0, %s32
    %s36 = sphi 0, %s35
    %s52 = sphi 0, %s36
    %s60 = sphi 0, %s62
    %s63 = sphi 0, %s60
    %s64 = sphi 0, %s63
    %s80 = sphi 0, %s64
    %s88 = sphi 0, %s90
    %s91 = sphi 0, %s88
    %s92 = sphi 0, %s91
    %s108 = sphi 0, %s92
    %s116 = sphi 0, %s118
    %s119 = sphi 0, %s116
    %s120 = sphi 0, %s119
    %s136 = sphi 0, %s120
    %s144 = sphi 0, %s146
    %s147 = sphi 0, %s144
    %s148 = sphi 0, %s147
    %s164 = sphi 0, %s148
    %s168 = sphi 0, %s168
    %s170 = sphi 0, %s168
    %s171 = sphi 0, %s170
    %s185 = sphi 0, %s171
    %s189 = sphi 0, %s189
    %s191 = sphi 0, %s189
    %s192 = sphi 0, %s191
    %s206 = sphi 0, %s192
    %s212 = sphi 0, %s214
    %s215 = sphi 0, %s212
    %s216 = sphi 0, %s215
    %s232 = sphi 0, %s216
  $region4: #{mlp_with_switch.3} parent=0 // loop_header_branch
    %25 = sbr.rel (%p23) target = $region8
  $region5: #{mlp_with_switch.3} parent=0 // loop_body
    %s27 = ssub.s32 %s22, 1
    %s28 = ssub.s32 %s22, 2
    %s29 = sadd.s32 %s22, 1
    %s30 = ssub.s32 %s22, %s29
    %p31 = scmp.eq.s32.totalorder %s30, 0
    %s33 = sadd.s32 %s32, 1
    %s34 = scalar_select %p31, %s32, %s33
    %p37 = pneg %p31
    %p38 = scmp.eq.s32.totalorder %s22, 10
    %p39 = por %p37, %p38
    %p40 = scmp.ne.s32.totalorder %s32, %s35
    %p41 = scmp.eq.s32.totalorder %s22, 0
    %p42 = por %p40, %p41
    %p43 = scmp.ne.s32.totalorder %s32, %s35
    %p44 = scmp.eq.s32.totalorder %s27, 10
    %p45 = por %p43, %p44
    %p46 = scmp.ne.s32.totalorder %s35, %s36
    %p47 = scmp.eq.s32.totalorder %s27, 0
    %p48 = por %p46, %p47
    %p49 = scmp.ne.s32.totalorder %s35, %s36
    %p50 = scmp.eq.s32.totalorder %s28, 10
    %p51 = por %p49, %p50
    %p53 = scmp.ne.s32.totalorder %s36, %s52
    %p54 = scmp.eq.s32.totalorder %s28, 0
    %p55 = por %p53, %p54
    %s56 = sld [smem:[#allocation3 + %s22]]
    %s57 = sld [smem:[#allocation3 + %s29]]
    %s58 = ssub.s32 %s56, %s57
    %p59 = scmp.eq.s32.totalorder %s58, 0
    %s61 = sadd.s32 %s60, 1
    %s62 = scalar_select %p59, %s60, %s61
    %p65 = pneg %p59
    %p66 = scmp.eq.s32.totalorder %s22, 10
    %p67 = por %p65, %p66
    %p68 = scmp.ne.s32.totalorder %s60, %s63
    %p69 = scmp.eq.s32.totalorder %s22, 0
    %p70 = por %p68, %p69
    %p71 = scmp.ne.s32.totalorder %s60, %s63
    %p72 = scmp.eq.s32.totalorder %s27, 10
    %p73 = por %p71, %p72
    %p74 = scmp.ne.s32.totalorder %s63, %s64
    %p75 = scmp.eq.s32.totalorder %s27, 0
    %p76 = por %p74, %p75
    %p77 = scmp.ne.s32.totalorder %s63, %s64
    %p78 = scmp.eq.s32.totalorder %s28, 10
    %p79 = por %p77, %p78
    %p81 = scmp.ne.s32.totalorder %s64, %s80
    %p82 = scmp.eq.s32.totalorder %s28, 0
    %p83 = por %p81, %p82
    %s84 = sld [smem:[#allocation3 + %s22]]
    %s85 = sld [smem:[#allocation3 + %s29]]
    %s86 = ssub.s32 %s84, %s85
    %p87 = scmp.eq.s32.totalorder %s86, 0
    %s89 = sadd.s32 %s88, 1
    %s90 = scalar_select %p87, %s88, %s89
    %p93 = pneg %p87
    %p94 = scmp.eq.s32.totalorder %s22, 10
    %p95 = por %p93, %p94
    %p96 = scmp.ne.s32.totalorder %s88, %s91
    %p97 = scmp.eq.s32.totalorder %s22, 0
    %p98 = por %p96, %p97
    %p99 = scmp.ne.s32.totalorder %s88, %s91
    %p100 = scmp.eq.s32.totalorder %s27, 10
    %p101 = por %p99, %p100
    %p102 = scmp.ne.s32.totalorder %s91, %s92
    %p103 = scmp.eq.s32.totalorder %s27, 0
    %p104 = por %p102, %p103
    %p105 = scmp.ne.s32.totalorder %s91, %s92
    %p106 = scmp.eq.s32.totalorder %s28, 10
    %p107 = por %p105, %p106
    %p109 = scmp.ne.s32.totalorder %s92, %s108
    %p110 = scmp.eq.s32.totalorder %s28, 0
    %p111 = por %p109, %p110
    %s112 = sld [smem:[#allocation3 + %s22]]
    %s113 = sld [smem:[#allocation3 + %s29]]
    %s114 = ssub.s32 %s112, %s113
    %p115 = scmp.eq.s32.totalorder %s114, 0
    %s117 = sadd.s32 %s116, 1
    %s118 = scalar_select %p115, %s116, %s117
    %p121 = pneg %p115
    %p122 = scmp.eq.s32.totalorder %s22, 10
    %p123 = por %p121, %p122
    %p124 = scmp.ne.s32.totalorder %s116, %s119
    %p125 = scmp.eq.s32.totalorder %s22, 0
    %p126 = por %p124, %p125
    %p127 = scmp.ne.s32.totalorder %s116, %s119
    %p128 = scmp.eq.s32.totalorder %s27, 10
    %p129 = por %p127, %p128
    %p130 = scmp.ne.s32.totalorder %s119, %s120
    %p131 = scmp.eq.s32.totalorder %s27, 0
    %p132 = por %p130, %p131
    %p133 = scmp.ne.s32.totalorder %s119, %s120
    %p134 = scmp.eq.s32.totalorder %s28, 10
    %p135 = por %p133, %p134
    %p137 = scmp.ne.s32.totalorder %s120, %s136
    %p138 = scmp.eq.s32.totalorder %s28, 0
    %p139 = por %p137, %p138
    %s140 = sld [smem:[#allocation3 + %s22]]
    %s141 = sld [smem:[#allocation3 + %s29]]
    %s142 = ssub.s32 %s140, %s141
    %p143 = scmp.eq.s32.totalorder %s142, 0
    %s145 = sadd.s32 %s144, 1
    %s146 = scalar_select %p143, %s144, %s145
    %p149 = pneg %p143
    %p150 = scmp.eq.s32.totalorder %s22, 10
    %p151 = por %p149, %p150
    %p152 = scmp.ne.s32.totalorder %s144, %s147
    %p153 = scmp.eq.s32.totalorder %s22, 0
    %p154 = por %p152, %p153
    %p155 = scmp.ne.s32.totalorder %s144, %s147
    %p156 = scmp.eq.s32.totalorder %s27, 10
    %p157 = por %p155, %p156
    %p158 = scmp.ne.s32.totalorder %s147, %s148
    %p159 = scmp.eq.s32.totalorder %s27, 0
    %p160 = por %p158, %p159
    %p161 = scmp.ne.s32.totalorder %s147, %s148
    %p162 = scmp.eq.s32.totalorder %s28, 10
    %p163 = por %p161, %p162
    %p165 = scmp.ne.s32.totalorder %s148, %s164
    %p166 = scmp.eq.s32.totalorder %s28, 0
    %p167 = por %p165, %p166
    %s169 = sadd.s32 %s168, 1
    %p172 = scmp.eq.s32.totalorder %s22, 10
    %p173 = scmp.ne.s32.totalorder %s168, %s170
    %p174 = scmp.eq.s32.totalorder %s22, 0
    %p175 = por %p173, %p174
    %p176 = scmp.ne.s32.totalorder %s168, %s170
    %p177 = scmp.eq.s32.totalorder %s27, 10
    %p178 = por %p176, %p177
    %p179 = scmp.ne.s32.totalorder %s170, %s171
    %p180 = scmp.eq.s32.totalorder %s27, 0
    %p181 = por %p179, %p180
    %p182 = scmp.ne.s32.totalorder %s170, %s171
    %p183 = scmp.eq.s32.totalorder %s28, 10
    %p184 = por %p182, %p183
    %p186 = scmp.ne.s32.totalorder %s171, %s185
    %p187 = scmp.eq.s32.totalorder %s28, 0
    %p188 = por %p186, %p187
    %s190 = sadd.s32 %s189, 1
    %p193 = scmp.eq.s32.totalorder %s22, 10
    %p194 = scmp.ne.s32.totalorder %s189, %s191
    %p195 = scmp.eq.s32.totalorder %s22, 0
    %p196 = por %p194, %p195
    %p197 = scmp.ne.s32.totalorder %s189, %s191
    %p198 = scmp.eq.s32.totalorder %s27, 10
    %p199 = por %p197, %p198
    %p200 = scmp.ne.s32.totalorder %s191, %s192
    %p201 = scmp.eq.s32.totalorder %s27, 0
    %p202 = por %p200, %p201
    %p203 = scmp.ne.s32.totalorder %s191, %s192
    %p204 = scmp.eq.s32.totalorder %s28, 10
    %p205 = por %p203, %p204
    %p207 = scmp.ne.s32.totalorder %s192, %s206
    %p208 = scmp.eq.s32.totalorder %s28, 0
    %p209 = por %p207, %p208
    %s210 = ssub.s32 %s22, %s29
    %p211 = scmp.eq.s32.totalorder %s210, 0
    %s213 = sadd.s32 %s212, 1
    %s214 = scalar_select %p211, %s212, %s213
    %p217 = pneg %p211
    %p218 = scmp.eq.s32.totalorder %s22, 10
    %p219 = por %p217, %p218
    %p220 = scmp.ne.s32.totalorder %s212, %s215
    %p221 = scmp.eq.s32.totalorder %s22, 0
    %p222 = por %p220, %p221
    %p223 = scmp.ne.s32.totalorder %s212, %s215
    %p224 = scmp.eq.s32.totalorder %s27, 10
    %p225 = por %p223, %p224
    %p226 = scmp.ne.s32.totalorder %s215, %s216
    %p227 = scmp.eq.s32.totalorder %s27, 0
    %p228 = por %p226, %p227
    %p229 = scmp.ne.s32.totalorder %s215, %s216
    %p230 = scmp.eq.s32.totalorder %s28, 10
    %p231 = por %p229, %p230
    %p233 = scmp.ne.s32.totalorder %s216, %s232
    %p234 = scmp.eq.s32.totalorder %s28, 0
    %p235 = por %p233, %p234
    %p236 = scmp.le.s32.totalorder 1, %s22
    %p237 = scmp.lt.s32.totalorder %s22, 12
    %p238 = pnand %p236, %p237
    %p239 = pneg %p238
    // Predicated region
    $region9: #{mlp_with_switch.3} parent=5 // pred_check
      _
    $region10: #{mlp_with_switch.3} parent=5 // pred_check_branch
      %241 = sbr.rel (%p238) target = $region12
    $region11: #{mlp_with_switch.3} parent=5 // pred_region
      %s242 = ssub.s32 %s22, 1
      // Predicated region
      $region13: #{mlp_with_switch.3} parent=11 // pred_check
        %p243 = pneg %p181
      $region14: #{mlp_with_switch.3} parent=11 // pred_check_branch
        %245 = sbr.rel (%p243) target = $region16
      $region15: #{mlp_with_switch.3} parent=11 // pred_region
        _
      $region16: #{mlp_with_switch.3} parent=11 // pred_fallthru
        _
      // Predicated region
      $region17: #{mlp_with_switch.3} parent=11 // pred_check
        %p246 = pneg %p202
      $region18: #{mlp_with_switch.3} parent=11 // pred_check_branch
        %248 = sbr.rel (%p246) target = $region20
      $region19: #{mlp_with_switch.3} parent=11 // pred_region
        _
      $region20: #{mlp_with_switch.3} parent=11 // pred_fallthru
        _
    $region12: #{mlp_with_switch.3} parent=5 // pred_fallthru
      _
    %p249 = scmp.lt.s32.totalorder %s22, 11
    // Predicated region
    $region21: #{mlp_with_switch.3} parent=5 // pred_check
      %p250 = pneg %p249
    $region22: #{mlp_with_switch.3} parent=5 // pred_check_branch
      %252 = sbr.rel (%p250) target = $region24
    $region23: #{mlp_with_switch.3} parent=5 // pred_region
      // Predicated region
      $region25: #{mlp_with_switch.3} parent=23 // pred_check
        %p253 = pneg %p42
      $region26: #{mlp_with_switch.3} parent=23 // pred_check_branch
        %255 = sbr.rel (%p253) target = $region28
      $region27: #{mlp_with_switch.3} parent=23 // pred_region
        %s256 = smul.u32 32, %s22
        %p257 = scmp.lt.s32.totalorder %s256, 351
        %s258 = scalar_select %p257, %s256, 351
        %s259 = smul.addr %s258, 4
        %s260 = smul.addr %s259, 4
        %s261 = scalar_lea.vmem %s1, %s260
        %s262 = smul.u32 32, %s22
      $region28: #{mlp_with_switch.3} parent=23 // pred_fallthru
        _
      // Predicated region
      $region29: #{mlp_with_switch.3} parent=23 // pred_check
        %p263 = pneg %p70
      $region30: #{mlp_with_switch.3} parent=23 // pred_check_branch
        %265 = sbr.rel (%p263) target = $region32
      $region31: #{mlp_with_switch.3} parent=23 // pred_region
        %s266 = sld [smem:[#allocation3 + %s22]]
        %p267 = scmp.lt.s32.totalorder %s266, 9
        %s268 = scalar_select %p267, %s266, 9
        %s269 = smul.addr %s268, 256
        %s270 = smul.addr %s269, 4
        %s271 = scalar_lea.vmem %s2, %s270
        %s272 = sld [smem:[#allocation3 + %s22]]
      $region32: #{mlp_with_switch.3} parent=23 // pred_fallthru
        _
      // Predicated region
      $region33: #{mlp_with_switch.3} parent=23 // pred_check
        %p273 = pneg %p98
      $region34: #{mlp_with_switch.3} parent=23 // pred_check_branch
        %275 = sbr.rel (%p273) target = $region36
      $region35: #{mlp_with_switch.3} parent=23 // pred_region
        %s276 = sld [smem:[#allocation3 + %s22]]
        %p277 = scmp.lt.s32.totalorder %s276, 9
        %s278 = scalar_select %p277, %s276, 9
        %s279 = smul.addr %s278, 4
        %s280 = scalar_lea.vmem %s3, %s279
        %s281 = sld [smem:[#allocation3 + %s22]]
      $region36: #{mlp_with_switch.3} parent=23 // pred_fallthru
        _
      // Predicated region
      $region37: #{mlp_with_switch.3} parent=23 // pred_check
        %p282 = pneg %p126
      $region38: #{mlp_with_switch.3} parent=23 // pred_check_branch
        %284 = sbr.rel (%p282) target = $region40
      $region39: #{mlp_with_switch.3} parent=23 // pred_region
        %s285 = sld [smem:[#allocation3 + %s22]]
        %p286 = scmp.lt.s32.totalorder %s285, 9
        %s287 = scalar_select %p286, %s285, 9
        %s288 = smul.addr %s287, 256
        %s289 = smul.addr %s288, 4
        %s290 = scalar_lea.vmem %s4, %s289
        %s291 = sld [smem:[#allocation3 + %s22]]
      $region40: #{mlp_with_switch.3} parent=23 // pred_fallthru
        _
      // Predicated region
      $region41: #{mlp_with_switch.3} parent=23 // pred_check
        %p292 = pneg %p154
      $region42: #{mlp_with_switch.3} parent=23 // pred_check_branch
        %294 = sbr.rel (%p292) target = $region44
      $region43: #{mlp_with_switch.3} parent=23 // pred_region
        %s295 = sld [smem:[#allocation3 + %s22]]
        %p296 = scmp.lt.s32.totalorder %s295, 9
        %s297 = scalar_select %p296, %s295, 9
        %s298 = smul.addr %s297, 4
        %s299 = scalar_lea.vmem %s5, %s298
        %s300 = sld [smem:[#allocation3 + %s22]]
      $region44: #{mlp_with_switch.3} parent=23 // pred_fallthru
        _
    $region24: #{mlp_with_switch.3} parent=5 // pred_fallthru
      _
    %p301 = scmp.le.s32.totalorder 1, %s22
    %p302 = scmp.lt.s32.totalorder %s22, 12
    %p303 = pnand %p301, %p302
    %p304 = pneg %p303
    // Predicated region
    $region45: #{mlp_with_switch.3} parent=5 // pred_check
      _
    $region46: #{mlp_with_switch.3} parent=5 // pred_check_branch
      %306 = sbr.rel (%p303) target = $region48
    $region47: #{mlp_with_switch.3} parent=5 // pred_region
      %s307 = ssub.s32 %s22, 1
      %s308 = smul.u32 32, %s27
      %p309 = scmp.lt.s32.totalorder %s308, 351
      %s310 = scalar_select %p309, %s308, 351
      %s311 = smul.addr %s310, 4
      %s312 = smul.addr %s311, 4
      %s313 = scalar_lea.vmem %s1, %s312
      %p314 = pneg %p48
      %p315 = pneg %p45
      %s316 = sld [smem:[#allocation3 + %s27]]
      %p317 = scmp.lt.s32.totalorder %s316, 9
      %s318 = scalar_select %p317, %s316, 9
      %s319 = smul.addr %s318, 256
      %s320 = smul.addr %s319, 4
      %s321 = scalar_lea.vmem %s2, %s320
      %p322 = pneg %p76
      %p323 = pneg %p73
      %s324 = sld [smem:[#allocation3 + %s27]]
      %p325 = scmp.lt.s32.totalorder %s324, 9
      %s326 = scalar_select %p325, %s324, 9
      %s327 = smul.addr %s326, 4
      %s328 = scalar_lea.vmem %s3, %s327
      %p329 = pneg %p104
      %p330 = pneg %p101
      %s331 = sld [smem:[#allocation3 + %s27]]
      %p332 = scmp.lt.s32.totalorder %s331, 9
      %s333 = scalar_select %p332, %s331, 9
      %s334 = smul.addr %s333, 256
      %s335 = smul.addr %s334, 4
      %s336 = scalar_lea.vmem %s4, %s335
      %p337 = pneg %p132
      %p338 = pneg %p129
      %s339 = sld [smem:[#allocation3 + %s27]]
      %p340 = scmp.lt.s32.totalorder %s339, 9
      %s341 = scalar_select %p340, %s339, 9
      %s342 = smul.addr %s341, 4
      %s343 = scalar_lea.vmem %s5, %s342
      %p344 = pneg %p160
      %p345 = pneg %p157
      %p346 = pneg %p181
      %p347 = pneg %p178
      %p348 = pneg %p202
      %p349 = pneg %p199
      %p350 = pneg %p228
      %p351 = pneg %p225
      %s352 = smul.u32 32, %s27
      %p353 = scmp.lt.s32.totalorder %s352, 351
      %s354 = scalar_select %p353, %s352, 351
      %s355 = smul.addr %s354, 8
      %s356 = scalar_lea.vmem %s8, %s355
      %s357 = smul.u32 32, %s27
      %p358 = scmp.lt.s32.totalorder %s357, 351
      %s359 = scalar_select %p358, %s357, 351
      %s360 = smul.addr %s359, 4
      %s361 = smul.addr %s360, 4
      %s362 = scalar_lea.vmem %s1, %s361
      %s363 = smul.u32 32, %s27
      %s364 = sld [smem:[#allocation3 + %s27]]
      %p365 = scmp.lt.s32.totalorder %s364, 9
      %s366 = scalar_select %p365, %s364, 9
      %s367 = smul.addr %s366, 256
      %s368 = smul.addr %s367, 4
      %s369 = scalar_lea.vmem %s2, %s368
      %s370 = sld [smem:[#allocation3 + %s27]]
      %s371 = sld [smem:[#allocation3 + %s27]]
      %p372 = scmp.lt.s32.totalorder %s371, 9
      %s373 = scalar_select %p372, %s371, 9
      %s374 = smul.addr %s373, 4
      %s375 = scalar_lea.vmem %s3, %s374
      %s376 = sld [smem:[#allocation3 + %s27]]
      %s377 = sld [smem:[#allocation3 + %s27]]
      %p378 = scmp.lt.s32.totalorder %s377, 9
      %s379 = scalar_select %p378, %s377, 9
      %s380 = smul.addr %s379, 256
      %s381 = smul.addr %s380, 4
      %s382 = scalar_lea.vmem %s4, %s381
      %s383 = sld [smem:[#allocation3 + %s27]]
      %s384 = sld [smem:[#allocation3 + %s27]]
      %p385 = scmp.lt.s32.totalorder %s384, 9
      %s386 = scalar_select %p385, %s384, 9
      %s387 = smul.addr %s386, 4
      %s388 = scalar_lea.vmem %s5, %s387
      %s389 = sld [smem:[#allocation3 + %s27]]
      %s390 = smul.u32 32, %s27
      %p391 = scmp.lt.s32.totalorder %s390, 351
      %s392 = scalar_select %p391, %s390, 351
      %s393 = smul.addr %s392, 8
      %s394 = scalar_lea.vmem %s8, %s393
      %s395 = smul.u32 32, %s27
      %v396 = vld [vmem:[%s362] sm:$0xff]
      %v397 = vld [vmem:[%s362 + $0x8] sm:$0xff]
      %v398 = vld [vmem:[%s362 + $0x10] sm:$0xff]
      %v399 = vld [vmem:[%s362 + $0x18] sm:$0xff]
      %v400 = vld [vmem:[%s362 + $0x20] sm:$0xff]
      %v401 = vld [vmem:[%s362 + $0x28] sm:$0xff]
      %v402 = vld [vmem:[%s362 + $0x30] sm:$0xff]
      %v403 = vld [vmem:[%s362 + $0x38] sm:$0xff]
      %v404 = vld [vmem:[%s362 + $0x40] sm:$0xff]
      %v405 = vld [vmem:[%s362 + $0x48] sm:$0xff]
      %v406 = vld [vmem:[%s362 + $0x50] sm:$0xff]
      %v407 = vld [vmem:[%s362 + $0x58] sm:$0xff]
      %v408 = vld [vmem:[%s362 + $0x60] sm:$0xff]
      %v409 = vld [vmem:[%s362 + $0x68] sm:$0xff]
      %v410 = vld [vmem:[%s362 + $0x70] sm:$0xff]
      %v411 = vld [vmem:[%s362 + $0x78] sm:$0xff]
      %v412 = vld [vmem:[%s362 + $0x80] sm:$0xff]
      %v413 = vld [vmem:[%s362 + $0x88] sm:$0xff]
      %v414 = vld [vmem:[%s362 + $0x90] sm:$0xff]
      %v415 = vld [vmem:[%s362 + $0x98] sm:$0xff]
      %v416 = vld [vmem:[%s362 + $0xa0] sm:$0xff]
      %v417 = vld [vmem:[%s362 + $0xa8] sm:$0xff]
      %v418 = vld [vmem:[%s362 + $0xb0] sm:$0xff]
      %v419 = vld [vmem:[%s362 + $0xb8] sm:$0xff]
      %v420 = vld [vmem:[%s362 + $0xc0] sm:$0xff]
      %v421 = vld [vmem:[%s362 + $0xc8] sm:$0xff]
      %v422 = vld [vmem:[%s362 + $0xd0] sm:$0xff]
      %v423 = vld [vmem:[%s362 + $0xd8] sm:$0xff]
      %v424 = vld [vmem:[%s362 + $0xe0] sm:$0xff]
      %v425 = vld [vmem:[%s362 + $0xe8] sm:$0xff]
      %v426 = vld [vmem:[%s362 + $0xf0] sm:$0xff]
      %v427 = vld [vmem:[%s362 + $0xf8] sm:$0xff]
      %v428 = vld [vmem:[%s362 + $0x100] sm:$0xff]
      %v429 = vld [vmem:[%s362 + $0x108] sm:$0xff]
      %v430 = vld [vmem:[%s362 + $0x110] sm:$0xff]
      %v431 = vld [vmem:[%s362 + $0x118] sm:$0xff]
      %v432 = vld [vmem:[%s362 + $0x120] sm:$0xff]
      %v433 = vld [vmem:[%s362 + $0x128] sm:$0xff]
      %v434 = vld [vmem:[%s362 + $0x130] sm:$0xff]
      %v435 = vld [vmem:[%s362 + $0x138] sm:$0xff]
      %v436 = vld [vmem:[%s362 + $0x140] sm:$0xff]
      %v437 = vld [vmem:[%s362 + $0x148] sm:$0xff]
      %v438 = vld [vmem:[%s362 + $0x150] sm:$0xff]
      %v439 = vld [vmem:[%s362 + $0x158] sm:$0xff]
      %v440 = vld [vmem:[%s362 + $0x160] sm:$0xff]
      %v441 = vld [vmem:[%s362 + $0x168] sm:$0xff]
      %v442 = vld [vmem:[%s362 + $0x170] sm:$0xff]
      %v443 = vld [vmem:[%s362 + $0x178] sm:$0xff]
      %v444 = vld [vmem:[%s362 + $0x180] sm:$0xff]
      %v445 = vld [vmem:[%s362 + $0x188] sm:$0xff]
      %v446 = vld [vmem:[%s362 + $0x190] sm:$0xff]
      %v447 = vld [vmem:[%s362 + $0x198] sm:$0xff]
      %v448 = vld [vmem:[%s362 + $0x1a0] sm:$0xff]
      %v449 = vld [vmem:[%s362 + $0x1a8] sm:$0xff]
      %v450 = vld [vmem:[%s362 + $0x1b0] sm:$0xff]
      %v451 = vld [vmem:[%s362 + $0x1b8] sm:$0xff]
      %v452 = vld [vmem:[%s362 + $0x1c0] sm:$0xff]
      %v453 = vld [vmem:[%s362 + $0x1c8] sm:$0xff]
      %v454 = vld [vmem:[%s362 + $0x1d0] sm:$0xff]
      %v455 = vld [vmem:[%s362 + $0x1d8] sm:$0xff]
      %v456 = vld [vmem:[%s362 + $0x1e0] sm:$0xff]
      %v457 = vld [vmem:[%s362 + $0x1e8] sm:$0xff]
      %v458 = vld [vmem:[%s362 + $0x1f0] sm:$0xff]
      %v459 = vld [vmem:[%s362 + $0x1f8] sm:$0xff]
      %v460 = vld [vmem:[%s369] sm:$0xff]
      %v461 = vld [vmem:[%s369 + $0x8] sm:$0xff]
      %v462 = vld [vmem:[%s369 + $0x10] sm:$0xff]
      %v463 = vld [vmem:[%s369 + $0x18] sm:$0xff]
      %v464 = vld [vmem:[%s369 + $0x20] sm:$0xff]
      %v465 = vld [vmem:[%s369 + $0x28] sm:$0xff]
      %v466 = vld [vmem:[%s369 + $0x30] sm:$0xff]
      %v467 = vld [vmem:[%s369 + $0x38] sm:$0xff]
      %v468 = vld [vmem:[%s369 + $0x40] sm:$0xff]
      %v469 = vld [vmem:[%s369 + $0x48] sm:$0xff]
      %v470 = vld [vmem:[%s369 + $0x50] sm:$0xff]
      %v471 = vld [vmem:[%s369 + $0x58] sm:$0xff]
      %v472 = vld [vmem:[%s369 + $0x60] sm:$0xff]
      %v473 = vld [vmem:[%s369 + $0x68] sm:$0xff]
      %v474 = vld [vmem:[%s369 + $0x70] sm:$0xff]
      %v475 = vld [vmem:[%s369 + $0x78] sm:$0xff]
      %v476 = vld [vmem:[%s369 + $0x80] sm:$0xff]
      %v477 = vld [vmem:[%s369 + $0x88] sm:$0xff]
      %v478 = vld [vmem:[%s369 + $0x90] sm:$0xff]
      %v479 = vld [vmem:[%s369 + $0x98] sm:$0xff]
      %v480 = vld [vmem:[%s369 + $0xa0] sm:$0xff]
      %v481 = vld [vmem:[%s369 + $0xa8] sm:$0xff]
      %v482 = vld [vmem:[%s369 + $0xb0] sm:$0xff]
      %v483 = vld [vmem:[%s369 + $0xb8] sm:$0xff]
      %v484 = vld [vmem:[%s369 + $0xc0] sm:$0xff]
      %v485 = vld [vmem:[%s369 + $0xc8] sm:$0xff]
      %v486 = vld [vmem:[%s369 + $0xd0] sm:$0xff]
      %v487 = vld [vmem:[%s369 + $0xd8] sm:$0xff]
      %v488 = vld [vmem:[%s369 + $0xe0] sm:$0xff]
      %v489 = vld [vmem:[%s369 + $0xe8] sm:$0xff]
      %v490 = vld [vmem:[%s369 + $0xf0] sm:$0xff]
      %v491 = vld [vmem:[%s369 + $0xf8] sm:$0xff]
      %v492 = vld [vmem:[%s369 + $0x100] sm:$0xff]
      %v493 = vld [vmem:[%s369 + $0x108] sm:$0xff]
      %v494 = vld [vmem:[%s369 + $0x110] sm:$0xff]
      %v495 = vld [vmem:[%s369 + $0x118] sm:$0xff]
      %v496 = vld [vmem:[%s369 + $0x120] sm:$0xff]
      %v497 = vld [vmem:[%s369 + $0x128] sm:$0xff]
      %v498 = vld [vmem:[%s369 + $0x130] sm:$0xff]
      %v499 = vld [vmem:[%s369 + $0x138] sm:$0xff]
      %v500 = vld [vmem:[%s369 + $0x140] sm:$0xff]
      %v501 = vld [vmem:[%s369 + $0x148] sm:$0xff]
      %v502 = vld [vmem:[%s369 + $0x150] sm:$0xff]
      %v503 = vld [vmem:[%s369 + $0x158] sm:$0xff]
      %v504 = vld [vmem:[%s369 + $0x160] sm:$0xff]
      %v505 = vld [vmem:[%s369 + $0x168] sm:$0xff]
      %v506 = vld [vmem:[%s369 + $0x170] sm:$0xff]
      %v507 = vld [vmem:[%s369 + $0x178] sm:$0xff]
      %v508 = vld [vmem:[%s369 + $0x180] sm:$0xff]
      %v509 = vld [vmem:[%s369 + $0x188] sm:$0xff]
      %v510 = vld [vmem:[%s369 + $0x190] sm:$0xff]
      %v511 = vld [vmem:[%s369 + $0x198] sm:$0xff]
      %v512 = vld [vmem:[%s369 + $0x1a0] sm:$0xff]
      %v513 = vld [vmem:[%s369 + $0x1a8] sm:$0xff]
      %v514 = vld [vmem:[%s369 + $0x1b0] sm:$0xff]
      %v515 = vld [vmem:[%s369 + $0x1b8] sm:$0xff]
      %v516 = vld [vmem:[%s369 + $0x1c0] sm:$0xff]
      %v517 = vld [vmem:[%s369 + $0x1c8] sm:$0xff]
      %v518 = vld [vmem:[%s369 + $0x1d0] sm:$0xff]
      %v519 = vld [vmem:[%s369 + $0x1d8] sm:$0xff]
      %v520 = vld [vmem:[%s369 + $0x1e0] sm:$0xff]
      %v521 = vld [vmem:[%s369 + $0x1e8] sm:$0xff]
      %v522 = vld [vmem:[%s369 + $0x1f0] sm:$0xff]
      %v523 = vld [vmem:[%s369 + $0x1f8] sm:$0xff]
      %v524 = vld [vmem:[%s369 + $0x200] sm:$0xff]
      %v525 = vld [vmem:[%s369 + $0x208] sm:$0xff]
      %v526 = vld [vmem:[%s369 + $0x210] sm:$0xff]
      %v527 = vld [vmem:[%s369 + $0x218] sm:$0xff]
      %v528 = vld [vmem:[%s369 + $0x220] sm:$0xff]
      %v529 = vld [vmem:[%s369 + $0x228] sm:$0xff]
      %v530 = vld [vmem:[%s369 + $0x230] sm:$0xff]
      %v531 = vld [vmem:[%s369 + $0x238] sm:$0xff]
      %v532 = vld [vmem:[%s369 + $0x240] sm:$0xff]
      %v533 = vld [vmem:[%s369 + $0x248] sm:$0xff]
      %v534 = vld [vmem:[%s369 + $0x250] sm:$0xff]
      %v535 = vld [vmem:[%s369 + $0x258] sm:$0xff]
      %v536 = vld [vmem:[%s369 + $0x260] sm:$0xff]
      %v537 = vld [vmem:[%s369 + $0x268] sm:$0xff]
      %v538 = vld [vmem:[%s369 + $0x270] sm:$0xff]
      %v539 = vld [vmem:[%s369 + $0x278] sm:$0xff]
      %v540 = vld [vmem:[%s369 + $0x280] sm:$0xff]
      %v541 = vld [vmem:[%s369 + $0x288] sm:$0xff]
      %v542 = vld [vmem:[%s369 + $0x290] sm:$0xff]
      %v543 = vld [vmem:[%s369 + $0x298] sm:$0xff]
      %v544 = vld [vmem:[%s369 + $0x2a0] sm:$0xff]
      %v545 = vld [vmem:[%s369 + $0x2a8] sm:$0xff]
      %v546 = vld [vmem:[%s369 + $0x2b0] sm:$0xff]
      %v547 = vld [vmem:[%s369 + $0x2b8] sm:$0xff]
      %v548 = vld [vmem:[%s369 + $0x2c0] sm:$0xff]
      %v549 = vld [vmem:[%s369 + $0x2c8] sm:$0xff]
      %v550 = vld [vmem:[%s369 + $0x2d0] sm:$0xff]
      %v551 = vld [vmem:[%s369 + $0x2d8] sm:$0xff]
      %v552 = vld [vmem:[%s369 + $0x2e0] sm:$0xff]
      %v553 = vld [vmem:[%s369 + $0x2e8] sm:$0xff]
      %v554 = vld [vmem:[%s369 + $0x2f0] sm:$0xff]
      %v555 = vld [vmem:[%s369 + $0x2f8] sm:$0xff]
      %v556 = vld [vmem:[%s369 + $0x300] sm:$0xff]
      %v557 = vld [vmem:[%s369 + $0x308] sm:$0xff]
      %v558 = vld [vmem:[%s369 + $0x310] sm:$0xff]
      %v559 = vld [vmem:[%s369 + $0x318] sm:$0xff]
      %v560 = vld [vmem:[%s369 + $0x320] sm:$0xff]
      %v561 = vld [vmem:[%s369 + $0x328] sm:$0xff]
      %v562 = vld [vmem:[%s369 + $0x330] sm:$0xff]
      %v563 = vld [vmem:[%s369 + $0x338] sm:$0xff]
      %v564 = vld [vmem:[%s369 + $0x340] sm:$0xff]
      %v565 = vld [vmem:[%s369 + $0x348] sm:$0xff]
      %v566 = vld [vmem:[%s369 + $0x350] sm:$0xff]
      %v567 = vld [vmem:[%s369 + $0x358] sm:$0xff]
      %v568 = vld [vmem:[%s369 + $0x360] sm:$0xff]
      %v569 = vld [vmem:[%s369 + $0x368] sm:$0xff]
      %v570 = vld [vmem:[%s369 + $0x370] sm:$0xff]
      %v571 = vld [vmem:[%s369 + $0x378] sm:$0xff]
      %v572 = vld [vmem:[%s369 + $0x380] sm:$0xff]
      %v573 = vld [vmem:[%s369 + $0x388] sm:$0xff]
      %v574 = vld [vmem:[%s369 + $0x390] sm:$0xff]
      %v575 = vld [vmem:[%s369 + $0x398] sm:$0xff]
      %v576 = vld [vmem:[%s369 + $0x3a0] sm:$0xff]
      %v577 = vld [vmem:[%s369 + $0x3a8] sm:$0xff]
      %v578 = vld [vmem:[%s369 + $0x3b0] sm:$0xff]
      %v579 = vld [vmem:[%s369 + $0x3b8] sm:$0xff]
      %v580 = vld [vmem:[%s369 + $0x3c0] sm:$0xff]
      %v581 = vld [vmem:[%s369 + $0x3c8] sm:$0xff]
      %v582 = vld [vmem:[%s369 + $0x3d0] sm:$0xff]
      %v583 = vld [vmem:[%s369 + $0x3d8] sm:$0xff]
      %v584 = vld [vmem:[%s369 + $0x3e0] sm:$0xff]
      %v585 = vld [vmem:[%s369 + $0x3e8] sm:$0xff]
      %v586 = vld [vmem:[%s369 + $0x3f0] sm:$0xff]
      %v587 = vld [vmem:[%s369 + $0x3f8] sm:$0xff]
      %v588 = vld [vmem:[%s375] sm:$0xf]
      %v590 = vperm.slane %v588, 0
      %v591 = vperm.slane %v588, 1
      %v592 = vperm.slane %v588, 2
      %v593 = vperm.slane %v588, 3
      %v662 = vunpack.c.l.b16 %v396
      %v663 = vunpack.c.h.b16 %v396
      %v664 = vunpack.c.l.b16 %v397
      %v665 = vunpack.c.h.b16 %v397
      %v666 = vunpack.c.l.b16 %v398
      %v667 = vunpack.c.h.b16 %v398
      %v668 = vunpack.c.l.b16 %v399
      %v669 = vunpack.c.h.b16 %v399
      %v670 = vunpack.c.l.b16 %v400
      %v671 = vunpack.c.h.b16 %v400
      %v672 = vunpack.c.l.b16 %v401
      %v673 = vunpack.c.h.b16 %v401
      %v674 = vunpack.c.l.b16 %v402
      %v675 = vunpack.c.h.b16 %v402
      %v676 = vunpack.c.l.b16 %v403
      %v677 = vunpack.c.h.b16 %v403
      %v678 = vunpack.c.l.b16 %v404
      %v679 = vunpack.c.h.b16 %v404
      %v680 = vunpack.c.l.b16 %v405
      %v681 = vunpack.c.h.b16 %v405
      %v682 = vunpack.c.l.b16 %v406
      %v683 = vunpack.c.h.b16 %v406
      %v684 = vunpack.c.l.b16 %v407
      %v685 = vunpack.c.h.b16 %v407
      %v686 = vunpack.c.l.b16 %v408
      %v687 = vunpack.c.h.b16 %v408
      %v688 = vunpack.c.l.b16 %v409
      %v689 = vunpack.c.h.b16 %v409
      %v690 = vunpack.c.l.b16 %v410
      %v691 = vunpack.c.h.b16 %v410
      %v692 = vunpack.c.l.b16 %v411
      %v693 = vunpack.c.h.b16 %v411
      %v694 = vunpack.c.l.b16 %v412
      %v695 = vunpack.c.h.b16 %v412
      %v696 = vunpack.c.l.b16 %v413
      %v697 = vunpack.c.h.b16 %v413
      %v698 = vunpack.c.l.b16 %v414
      %v699 = vunpack.c.h.b16 %v414
      %v700 = vunpack.c.l.b16 %v415
      %v701 = vunpack.c.h.b16 %v415
      %v702 = vunpack.c.l.b16 %v416
      %v703 = vunpack.c.h.b16 %v416
      %v704 = vunpack.c.l.b16 %v417
      %v705 = vunpack.c.h.b16 %v417
      %v706 = vunpack.c.l.b16 %v418
      %v707 = vunpack.c.h.b16 %v418
      %v708 = vunpack.c.l.b16 %v419
      %v709 = vunpack.c.h.b16 %v419
      %v710 = vunpack.c.l.b16 %v420
      %v711 = vunpack.c.h.b16 %v420
      %v712 = vunpack.c.l.b16 %v421
      %v713 = vunpack.c.h.b16 %v421
      %v714 = vunpack.c.l.b16 %v422
      %v715 = vunpack.c.h.b16 %v422
      %v716 = vunpack.c.l.b16 %v423
      %v717 = vunpack.c.h.b16 %v423
      %v718 = vunpack.c.l.b16 %v424
      %v719 = vunpack.c.h.b16 %v424
      %v720 = vunpack.c.l.b16 %v425
      %v721 = vunpack.c.h.b16 %v425
      %v722 = vunpack.c.l.b16 %v426
      %v723 = vunpack.c.h.b16 %v426
      %v724 = vunpack.c.l.b16 %v427
      %v725 = vunpack.c.h.b16 %v427
      %v726 = vunpack.c.l.b16 %v428
      %v727 = vunpack.c.h.b16 %v428
      %v728 = vunpack.c.l.b16 %v429
      %v729 = vunpack.c.h.b16 %v429
      %v730 = vunpack.c.l.b16 %v430
      %v731 = vunpack.c.h.b16 %v430
      %v732 = vunpack.c.l.b16 %v431
      %v733 = vunpack.c.h.b16 %v431
      %v734 = vunpack.c.l.b16 %v432
      %v735 = vunpack.c.h.b16 %v432
      %v736 = vunpack.c.l.b16 %v433
      %v737 = vunpack.c.h.b16 %v433
      %v738 = vunpack.c.l.b16 %v434
      %v739 = vunpack.c.h.b16 %v434
      %v740 = vunpack.c.l.b16 %v435
      %v741 = vunpack.c.h.b16 %v435
      %v742 = vunpack.c.l.b16 %v436
      %v743 = vunpack.c.h.b16 %v436
      %v744 = vunpack.c.l.b16 %v437
      %v745 = vunpack.c.h.b16 %v437
      %v746 = vunpack.c.l.b16 %v438
      %v747 = vunpack.c.h.b16 %v438
      %v748 = vunpack.c.l.b16 %v439
      %v749 = vunpack.c.h.b16 %v439
      %v750 = vunpack.c.l.b16 %v440
      %v751 = vunpack.c.h.b16 %v440
      %v752 = vunpack.c.l.b16 %v441
      %v753 = vunpack.c.h.b16 %v441
      %v754 = vunpack.c.l.b16 %v442
      %v755 = vunpack.c.h.b16 %v442
      %v756 = vunpack.c.l.b16 %v443
      %v757 = vunpack.c.h.b16 %v443
      %v758 = vunpack.c.l.b16 %v444
      %v759 = vunpack.c.h.b16 %v444
      %v760 = vunpack.c.l.b16 %v445
      %v761 = vunpack.c.h.b16 %v445
      %v762 = vunpack.c.l.b16 %v446
      %v763 = vunpack.c.h.b16 %v446
      %v764 = vunpack.c.l.b16 %v447
      %v765 = vunpack.c.h.b16 %v447
      %v766 = vunpack.c.l.b16 %v448
      %v767 = vunpack.c.h.b16 %v448
      %v768 = vunpack.c.l.b16 %v449
      %v769 = vunpack.c.h.b16 %v449
      %v770 = vunpack.c.l.b16 %v450
      %v771 = vunpack.c.h.b16 %v450
      %v772 = vunpack.c.l.b16 %v451
      %v773 = vunpack.c.h.b16 %v451
      %v774 = vunpack.c.l.b16 %v452
      %v775 = vunpack.c.h.b16 %v452
      %v776 = vunpack.c.l.b16 %v453
      %v777 = vunpack.c.h.b16 %v453
      %v778 = vunpack.c.l.b16 %v454
      %v779 = vunpack.c.h.b16 %v454
      %v780 = vunpack.c.l.b16 %v455
      %v781 = vunpack.c.h.b16 %v455
      %v782 = vunpack.c.l.b16 %v456
      %v783 = vunpack.c.h.b16 %v456
      %v784 = vunpack.c.l.b16 %v457
      %v785 = vunpack.c.h.b16 %v457
      %v786 = vunpack.c.l.b16 %v458
      %v787 = vunpack.c.h.b16 %v458
      %v788 = vunpack.c.l.b16 %v459
      %v789 = vunpack.c.h.b16 %v459
      %v790 = vpack.c.b16 %v666, %v662
      %v791 = vpack.c.b16 %v667, %v663
      %v792 = vpack.c.b16 %v668, %v664
      %v793 = vpack.c.b16 %v669, %v665
      %v794 = vpack.c.b16 %v674, %v670
      %v795 = vpack.c.b16 %v675, %v671
      %v796 = vpack.c.b16 %v676, %v672
      %v797 = vpack.c.b16 %v677, %v673
      %v798 = vpack.c.b16 %v682, %v678
      %v799 = vpack.c.b16 %v683, %v679
      %v800 = vpack.c.b16 %v684, %v680
      %v801 = vpack.c.b16 %v685, %v681
      %v802 = vpack.c.b16 %v690, %v686
      %v803 = vpack.c.b16 %v691, %v687
      %v804 = vpack.c.b16 %v692, %v688
      %v805 = vpack.c.b16 %v693, %v689
      %v806 = vpack.c.b16 %v698, %v694
      %v807 = vpack.c.b16 %v699, %v695
      %v808 = vpack.c.b16 %v700, %v696
      %v809 = vpack.c.b16 %v701, %v697
      %v810 = vpack.c.b16 %v706, %v702
      %v811 = vpack.c.b16 %v707, %v703
      %v812 = vpack.c.b16 %v708, %v704
      %v813 = vpack.c.b16 %v709, %v705
      %v814 = vpack.c.b16 %v714, %v710
      %v815 = vpack.c.b16 %v715, %v711
      %v816 = vpack.c.b16 %v716, %v712
      %v817 = vpack.c.b16 %v717, %v713
      %v818 = vpack.c.b16 %v722, %v718
      %v819 = vpack.c.b16 %v723, %v719
      %v820 = vpack.c.b16 %v724, %v720
      %v821 = vpack.c.b16 %v725, %v721
      %v822 = vpack.c.b16 %v730, %v726
      %v823 = vpack.c.b16 %v731, %v727
      %v824 = vpack.c.b16 %v732, %v728
      %v825 = vpack.c.b16 %v733, %v729
      %v826 = vpack.c.b16 %v738, %v734
      %v827 = vpack.c.b16 %v739, %v735
      %v828 = vpack.c.b16 %v740, %v736
      %v829 = vpack.c.b16 %v741, %v737
      %v830 = vpack.c.b16 %v746, %v742
      %v831 = vpack.c.b16 %v747, %v743
      %v832 = vpack.c.b16 %v748, %v744
      %v833 = vpack.c.b16 %v749, %v745
      %v834 = vpack.c.b16 %v754, %v750
      %v835 = vpack.c.b16 %v755, %v751
      %v836 = vpack.c.b16 %v756, %v752
      %v837 = vpack.c.b16 %v757, %v753
      %v838 = vpack.c.b16 %v762, %v758
      %v839 = vpack.c.b16 %v763, %v759
      %v840 = vpack.c.b16 %v764, %v760
      %v841 = vpack.c.b16 %v765, %v761
      %v842 = vpack.c.b16 %v770, %v766
      %v843 = vpack.c.b16 %v771, %v767
      %v844 = vpack.c.b16 %v772, %v768
      %v845 = vpack.c.b16 %v773, %v769
      %v846 = vpack.c.b16 %v778, %v774
      %v847 = vpack.c.b16 %v779, %v775
      %v848 = vpack.c.b16 %v780, %v776
      %v849 = vpack.c.b16 %v781, %v777
      %v850 = vpack.c.b16 %v786, %v782
      %v851 = vpack.c.b16 %v787, %v783
      %v852 = vpack.c.b16 %v788, %v784
      %v853 = vpack.c.b16 %v789, %v785
      %v1046 = vunpack.c.l.b16 %v460
      %v1047 = vunpack.c.h.b16 %v460
      %v1048 = vunpack.c.l.b16 %v461
      %v1049 = vunpack.c.h.b16 %v461
      %v1050 = vunpack.c.l.b16 %v462
      %v1051 = vunpack.c.h.b16 %v462
      %v1052 = vunpack.c.l.b16 %v463
      %v1053 = vunpack.c.h.b16 %v463
      %v1054 = vunpack.c.l.b16 %v464
      %v1055 = vunpack.c.h.b16 %v464
      %v1056 = vunpack.c.l.b16 %v465
      %v1057 = vunpack.c.h.b16 %v465
      %v1058 = vunpack.c.l.b16 %v466
      %v1059 = vunpack.c.h.b16 %v466
      %v1060 = vunpack.c.l.b16 %v467
      %v1061 = vunpack.c.h.b16 %v467
      %v1062 = vunpack.c.l.b16 %v468
      %v1063 = vunpack.c.h.b16 %v468
      %v1064 = vunpack.c.l.b16 %v469
      %v1065 = vunpack.c.h.b16 %v469
      %v1066 = vunpack.c.l.b16 %v470
      %v1067 = vunpack.c.h.b16 %v470
      %v1068 = vunpack.c.l.b16 %v471
      %v1069 = vunpack.c.h.b16 %v471
      %v1070 = vunpack.c.l.b16 %v472
      %v1071 = vunpack.c.h.b16 %v472
      %v1072 = vunpack.c.l.b16 %v473
      %v1073 = vunpack.c.h.b16 %v473
      %v1074 = vunpack.c.l.b16 %v474
      %v1075 = vunpack.c.h.b16 %v474
      %v1076 = vunpack.c.l.b16 %v475
      %v1077 = vunpack.c.h.b16 %v475
      %v1078 = vunpack.c.l.b16 %v476
      %v1079 = vunpack.c.h.b16 %v476
      %v1080 = vunpack.c.l.b16 %v477
      %v1081 = vunpack.c.h.b16 %v477
      %v1082 = vunpack.c.l.b16 %v478
      %v1083 = vunpack.c.h.b16 %v478
      %v1084 = vunpack.c.l.b16 %v479
      %v1085 = vunpack.c.h.b16 %v479
      %v1086 = vunpack.c.l.b16 %v480
      %v1087 = vunpack.c.h.b16 %v480
      %v1088 = vunpack.c.l.b16 %v481
      %v1089 = vunpack.c.h.b16 %v481
      %v1090 = vunpack.c.l.b16 %v482
      %v1091 = vunpack.c.h.b16 %v482
      %v1092 = vunpack.c.l.b16 %v483
      %v1093 = vunpack.c.h.b16 %v483
      %v1094 = vunpack.c.l.b16 %v484
      %v1095 = vunpack.c.h.b16 %v484
      %v1096 = vunpack.c.l.b16 %v485
      %v1097 = vunpack.c.h.b16 %v485
      %v1098 = vunpack.c.l.b16 %v486
      %v1099 = vunpack.c.h.b16 %v486
      %v1100 = vunpack.c.l.b16 %v487
      %v1101 = vunpack.c.h.b16 %v487
      %v1102 = vunpack.c.l.b16 %v488
      %v1103 = vunpack.c.h.b16 %v488
      %v1104 = vunpack.c.l.b16 %v489
      %v1105 = vunpack.c.h.b16 %v489
      %v1106 = vunpack.c.l.b16 %v490
      %v1107 = vunpack.c.h.b16 %v490
      %v1108 = vunpack.c.l.b16 %v491
      %v1109 = vunpack.c.h.b16 %v491
      %v1110 = vunpack.c.l.b16 %v492
      %v1111 = vunpack.c.h.b16 %v492
      %v1112 = vunpack.c.l.b16 %v493
      %v1113 = vunpack.c.h.b16 %v493
      %v1114 = vunpack.c.l.b16 %v494
      %v1115 = vunpack.c.h.b16 %v494
      %v1116 = vunpack.c.l.b16 %v495
      %v1117 = vunpack.c.h.b16 %v495
      %v1118 = vunpack.c.l.b16 %v496
      %v1119 = vunpack.c.h.b16 %v496
      %v1120 = vunpack.c.l.b16 %v497
      %v1121 = vunpack.c.h.b16 %v497
      %v1122 = vunpack.c.l.b16 %v498
      %v1123 = vunpack.c.h.b16 %v498
      %v1124 = vunpack.c.l.b16 %v499
      %v1125 = vunpack.c.h.b16 %v499
      %v1126 = vunpack.c.l.b16 %v500
      %v1127 = vunpack.c.h.b16 %v500
      %v1128 = vunpack.c.l.b16 %v501
      %v1129 = vunpack.c.h.b16 %v501
      %v1130 = vunpack.c.l.b16 %v502
      %v1131 = vunpack.c.h.b16 %v502
      %v1132 = vunpack.c.l.b16 %v503
      %v1133 = vunpack.c.h.b16 %v503
      %v1134 = vunpack.c.l.b16 %v504
      %v1135 = vunpack.c.h.b16 %v504
      %v1136 = vunpack.c.l.b16 %v505
      %v1137 = vunpack.c.h.b16 %v505
      %v1138 = vunpack.c.l.b16 %v506
      %v1139 = vunpack.c.h.b16 %v506
      %v1140 = vunpack.c.l.b16 %v507
      %v1141 = vunpack.c.h.b16 %v507
      %v1142 = vunpack.c.l.b16 %v508
      %v1143 = vunpack.c.h.b16 %v508
      %v1144 = vunpack.c.l.b16 %v509
      %v1145 = vunpack.c.h.b16 %v509
      %v1146 = vunpack.c.l.b16 %v510
      %v1147 = vunpack.c.h.b16 %v510
      %v1148 = vunpack.c.l.b16 %v511
      %v1149 = vunpack.c.h.b16 %v511
      %v1150 = vunpack.c.l.b16 %v512
      %v1151 = vunpack.c.h.b16 %v512
      %v1152 = vunpack.c.l.b16 %v513
      %v1153 = vunpack.c.h.b16 %v513
      %v1154 = vunpack.c.l.b16 %v514
      %v1155 = vunpack.c.h.b16 %v514
      %v1156 = vunpack.c.l.b16 %v515
      %v1157 = vunpack.c.h.b16 %v515
      %v1158 = vunpack.c.l.b16 %v516
      %v1159 = vunpack.c.h.b16 %v516
      %v1160 = vunpack.c.l.b16 %v517
      %v1161 = vunpack.c.h.b16 %v517
      %v1162 = vunpack.c.l.b16 %v518
      %v1163 = vunpack.c.h.b16 %v518
      %v1164 = vunpack.c.l.b16 %v519
      %v1165 = vunpack.c.h.b16 %v519
      %v1166 = vunpack.c.l.b16 %v520
      %v1167 = vunpack.c.h.b16 %v520
      %v1168 = vunpack.c.l.b16 %v521
      %v1169 = vunpack.c.h.b16 %v521
      %v1170 = vunpack.c.l.b16 %v522
      %v1171 = vunpack.c.h.b16 %v522
      %v1172 = vunpack.c.l.b16 %v523
      %v1173 = vunpack.c.h.b16 %v523
      %v1174 = vunpack.c.l.b16 %v524
      %v1175 = vunpack.c.h.b16 %v524
      %v1176 = vunpack.c.l.b16 %v525
      %v1177 = vunpack.c.h.b16 %v525
      %v1178 = vunpack.c.l.b16 %v526
      %v1179 = vunpack.c.h.b16 %v526
      %v1180 = vunpack.c.l.b16 %v527
      %v1181 = vunpack.c.h.b16 %v527
      %v1182 = vunpack.c.l.b16 %v528
      %v1183 = vunpack.c.h.b16 %v528
      %v1184 = vunpack.c.l.b16 %v529
      %v1185 = vunpack.c.h.b16 %v529
      %v1186 = vunpack.c.l.b16 %v530
      %v1187 = vunpack.c.h.b16 %v530
      %v1188 = vunpack.c.l.b16 %v531
      %v1189 = vunpack.c.h.b16 %v531
      %v1190 = vunpack.c.l.b16 %v532
      %v1191 = vunpack.c.h.b16 %v532
      %v1192 = vunpack.c.l.b16 %v533
      %v1193 = vunpack.c.h.b16 %v533
      %v1194 = vunpack.c.l.b16 %v534
      %v1195 = vunpack.c.h.b16 %v534
      %v1196 = vunpack.c.l.b16 %v535
      %v1197 = vunpack.c.h.b16 %v535
      %v1198 = vunpack.c.l.b16 %v536
      %v1199 = vunpack.c.h.b16 %v536
      %v1200 = vunpack.c.l.b16 %v537
      %v1201 = vunpack.c.h.b16 %v537
      %v1202 = vunpack.c.l.b16 %v538
      %v1203 = vunpack.c.h.b16 %v538
      %v1204 = vunpack.c.l.b16 %v539
      %v1205 = vunpack.c.h.b16 %v539
      %v1206 = vunpack.c.l.b16 %v540
      %v1207 = vunpack.c.h.b16 %v540
      %v1208 = vunpack.c.l.b16 %v541
      %v1209 = vunpack.c.h.b16 %v541
      %v1210 = vunpack.c.l.b16 %v542
      %v1211 = vunpack.c.h.b16 %v542
      %v1212 = vunpack.c.l.b16 %v543
      %v1213 = vunpack.c.h.b16 %v543
      %v1214 = vunpack.c.l.b16 %v544
      %v1215 = vunpack.c.h.b16 %v544
      %v1216 = vunpack.c.l.b16 %v545
      %v1217 = vunpack.c.h.b16 %v545
      %v1218 = vunpack.c.l.b16 %v546
      %v1219 = vunpack.c.h.b16 %v546
      %v1220 = vunpack.c.l.b16 %v547
      %v1221 = vunpack.c.h.b16 %v547
      %v1222 = vunpack.c.l.b16 %v548
      %v1223 = vunpack.c.h.b16 %v548
      %v1224 = vunpack.c.l.b16 %v549
      %v1225 = vunpack.c.h.b16 %v549
      %v1226 = vunpack.c.l.b16 %v550
      %v1227 = vunpack.c.h.b16 %v550
      %v1228 = vunpack.c.l.b16 %v551
      %v1229 = vunpack.c.h.b16 %v551
      %v1230 = vunpack.c.l.b16 %v552
      %v1231 = vunpack.c.h.b16 %v552
      %v1232 = vunpack.c.l.b16 %v553
      %v1233 = vunpack.c.h.b16 %v553
      %v1234 = vunpack.c.l.b16 %v554
      %v1235 = vunpack.c.h.b16 %v554
      %v1236 = vunpack.c.l.b16 %v555
      %v1237 = vunpack.c.h.b16 %v555
      %v1238 = vunpack.c.l.b16 %v556
      %v1239 = vunpack.c.h.b16 %v556
      %v1240 = vunpack.c.l.b16 %v557
      %v1241 = vunpack.c.h.b16 %v557
      %v1242 = vunpack.c.l.b16 %v558
      %v1243 = vunpack.c.h.b16 %v558
      %v1244 = vunpack.c.l.b16 %v559
      %v1245 = vunpack.c.h.b16 %v559
      %v1246 = vunpack.c.l.b16 %v560
      %v1247 = vunpack.c.h.b16 %v560
      %v1248 = vunpack.c.l.b16 %v561
      %v1249 = vunpack.c.h.b16 %v561
      %v1250 = vunpack.c.l.b16 %v562
      %v1251 = vunpack.c.h.b16 %v562
      %v1252 = vunpack.c.l.b16 %v563
      %v1253 = vunpack.c.h.b16 %v563
      %v1254 = vunpack.c.l.b16 %v564
      %v1255 = vunpack.c.h.b16 %v564
      %v1256 = vunpack.c.l.b16 %v565
      %v1257 = vunpack.c.h.b16 %v565
      %v1258 = vunpack.c.l.b16 %v566
      %v1259 = vunpack.c.h.b16 %v566
      %v1260 = vunpack.c.l.b16 %v567
      %v1261 = vunpack.c.h.b16 %v567
      %v1262 = vunpack.c.l.b16 %v568
      %v1263 = vunpack.c.h.b16 %v568
      %v1264 = vunpack.c.l.b16 %v569
      %v1265 = vunpack.c.h.b16 %v569
      %v1266 = vunpack.c.l.b16 %v570
      %v1267 = vunpack.c.h.b16 %v570
      %v1268 = vunpack.c.l.b16 %v571
      %v1269 = vunpack.c.h.b16 %v571
      %v1270 = vunpack.c.l.b16 %v572
      %v1271 = vunpack.c.h.b16 %v572
      %v1272 = vunpack.c.l.b16 %v573
      %v1273 = vunpack.c.h.b16 %v573
      %v1274 = vunpack.c.l.b16 %v574
      %v1275 = vunpack.c.h.b16 %v574
      %v1276 = vunpack.c.l.b16 %v575
      %v1277 = vunpack.c.h.b16 %v575
      %v1278 = vunpack.c.l.b16 %v576
      %v1279 = vunpack.c.h.b16 %v576
      %v1280 = vunpack.c.l.b16 %v577
      %v1281 = vunpack.c.h.b16 %v577
      %v1282 = vunpack.c.l.b16 %v578
      %v1283 = vunpack.c.h.b16 %v578
      %v1284 = vunpack.c.l.b16 %v579
      %v1285 = vunpack.c.h.b16 %v579
      %v1286 = vunpack.c.l.b16 %v580
      %v1287 = vunpack.c.h.b16 %v580
      %v1288 = vunpack.c.l.b16 %v581
      %v1289 = vunpack.c.h.b16 %v581
      %v1290 = vunpack.c.l.b16 %v582
      %v1291 = vunpack.c.h.b16 %v582
      %v1292 = vunpack.c.l.b16 %v583
      %v1293 = vunpack.c.h.b16 %v583
      %v1294 = vunpack.c.l.b16 %v584
      %v1295 = vunpack.c.h.b16 %v584
      %v1296 = vunpack.c.l.b16 %v585
      %v1297 = vunpack.c.h.b16 %v585
      %v1298 = vunpack.c.l.b16 %v586
      %v1299 = vunpack.c.h.b16 %v586
      %v1300 = vunpack.c.l.b16 %v587
      %v1301 = vunpack.c.h.b16 %v587
      %v1302 = vpack.c.b16 %v1050, %v1046
      %v1303 = vpack.c.b16 %v1051, %v1047
      %v1304 = vpack.c.b16 %v1052, %v1048
      %v1305 = vpack.c.b16 %v1053, %v1049
      %v1306 = vpack.c.b16 %v1058, %v1054
      %v1307 = vpack.c.b16 %v1059, %v1055
      %v1308 = vpack.c.b16 %v1060, %v1056
      %v1309 = vpack.c.b16 %v1061, %v1057
      %v1310 = vpack.c.b16 %v1066, %v1062
      %v1311 = vpack.c.b16 %v1067, %v1063
      %v1312 = vpack.c.b16 %v1068, %v1064
      %v1313 = vpack.c.b16 %v1069, %v1065
      %v1314 = vpack.c.b16 %v1074, %v1070
      %v1315 = vpack.c.b16 %v1075, %v1071
      %v1316 = vpack.c.b16 %v1076, %v1072
      %v1317 = vpack.c.b16 %v1077, %v1073
      %v1318 = vpack.c.b16 %v1082, %v1078
      %v1319 = vpack.c.b16 %v1083, %v1079
      %v1320 = vpack.c.b16 %v1084, %v1080
      %v1321 = vpack.c.b16 %v1085, %v1081
      %v1322 = vpack.c.b16 %v1090, %v1086
      %v1323 = vpack.c.b16 %v1091, %v1087
      %v1324 = vpack.c.b16 %v1092, %v1088
      %v1325 = vpack.c.b16 %v1093, %v1089
      %v1326 = vpack.c.b16 %v1098, %v1094
      %v1327 = vpack.c.b16 %v1099, %v1095
      %v1328 = vpack.c.b16 %v1100, %v1096
      %v1329 = vpack.c.b16 %v1101, %v1097
      %v1330 = vpack.c.b16 %v1106, %v1102
      %v1331 = vpack.c.b16 %v1107, %v1103
      %v1332 = vpack.c.b16 %v1108, %v1104
      %v1333 = vpack.c.b16 %v1109, %v1105
      %v1334 = vpack.c.b16 %v1114, %v1110
      %v1335 = vpack.c.b16 %v1115, %v1111
      %v1336 = vpack.c.b16 %v1116, %v1112
      %v1337 = vpack.c.b16 %v1117, %v1113
      %v1338 = vpack.c.b16 %v1122, %v1118
      %v1339 = vpack.c.b16 %v1123, %v1119
      %v1340 = vpack.c.b16 %v1124, %v1120
      %v1341 = vpack.c.b16 %v1125, %v1121
      %v1342 = vpack.c.b16 %v1130, %v1126
      %v1343 = vpack.c.b16 %v1131, %v1127
      %v1344 = vpack.c.b16 %v1132, %v1128
      %v1345 = vpack.c.b16 %v1133, %v1129
      %v1346 = vpack.c.b16 %v1138, %v1134
      %v1347 = vpack.c.b16 %v1139, %v1135
      %v1348 = vpack.c.b16 %v1140, %v1136
      %v1349 = vpack.c.b16 %v1141, %v1137
      %v1350 = vpack.c.b16 %v1146, %v1142
      %v1351 = vpack.c.b16 %v1147, %v1143
      %v1352 = vpack.c.b16 %v1148, %v1144
      %v1353 = vpack.c.b16 %v1149, %v1145
      %v1354 = vpack.c.b16 %v1154, %v1150
      %v1355 = vpack.c.b16 %v1155, %v1151
      %v1356 = vpack.c.b16 %v1156, %v1152
      %v1357 = vpack.c.b16 %v1157, %v1153
      %v1358 = vpack.c.b16 %v1162, %v1158
      %v1359 = vpack.c.b16 %v1163, %v1159
      %v1360 = vpack.c.b16 %v1164, %v1160
      %v1361 = vpack.c.b16 %v1165, %v1161
      %v1362 = vpack.c.b16 %v1170, %v1166
      %v1363 = vpack.c.b16 %v1171, %v1167
      %v1364 = vpack.c.b16 %v1172, %v1168
      %v1365 = vpack.c.b16 %v1173, %v1169
      %v1366 = vpack.c.b16 %v1178, %v1174
      %v1367 = vpack.c.b16 %v1179, %v1175
      %v1368 = vpack.c.b16 %v1180, %v1176
      %v1369 = vpack.c.b16 %v1181, %v1177
      %v1370 = vpack.c.b16 %v1186, %v1182
      %v1371 = vpack.c.b16 %v1187, %v1183
      %v1372 = vpack.c.b16 %v1188, %v1184
      %v1373 = vpack.c.b16 %v1189, %v1185
      %v1374 = vpack.c.b16 %v1194, %v1190
      %v1375 = vpack.c.b16 %v1195, %v1191
      %v1376 = vpack.c.b16 %v1196, %v1192
      %v1377 = vpack.c.b16 %v1197, %v1193
      %v1378 = vpack.c.b16 %v1202, %v1198
      %v1379 = vpack.c.b16 %v1203, %v1199
      %v1380 = vpack.c.b16 %v1204, %v1200
      %v1381 = vpack.c.b16 %v1205, %v1201
      %v1382 = vpack.c.b16 %v1210, %v1206
      %v1383 = vpack.c.b16 %v1211, %v1207
      %v1384 = vpack.c.b16 %v1212, %v1208
      %v1385 = vpack.c.b16 %v1213, %v1209
      %v1386 = vpack.c.b16 %v1218, %v1214
      %v1387 = vpack.c.b16 %v1219, %v1215
      %v1388 = vpack.c.b16 %v1220, %v1216
      %v1389 = vpack.c.b16 %v1221, %v1217
      %v1390 = vpack.c.b16 %v1226, %v1222
      %v1391 = vpack.c.b16 %v1227, %v1223
      %v1392 = vpack.c.b16 %v1228, %v1224
      %v1393 = vpack.c.b16 %v1229, %v1225
      %v1394 = vpack.c.b16 %v1234, %v1230
      %v1395 = vpack.c.b16 %v1235, %v1231
      %v1396 = vpack.c.b16 %v1236, %v1232
      %v1397 = vpack.c.b16 %v1237, %v1233
      %v1398 = vpack.c.b16 %v1242, %v1238
      %v1399 = vpack.c.b16 %v1243, %v1239
      %v1400 = vpack.c.b16 %v1244, %v1240
      %v1401 = vpack.c.b16 %v1245, %v1241
      %v1402 = vpack.c.b16 %v1250, %v1246
      %v1403 = vpack.c.b16 %v1251, %v1247
      %v1404 = vpack.c.b16 %v1252, %v1248
      %v1405 = vpack.c.b16 %v1253, %v1249
      %v1406 = vpack.c.b16 %v1258, %v1254
      %v1407 = vpack.c.b16 %v1259, %v1255
      %v1408 = vpack.c.b16 %v1260, %v1256
      %v1409 = vpack.c.b16 %v1261, %v1257
      %v1410 = vpack.c.b16 %v1266, %v1262
      %v1411 = vpack.c.b16 %v1267, %v1263
      %v1412 = vpack.c.b16 %v1268, %v1264
      %v1413 = vpack.c.b16 %v1269, %v1265
      %v1414 = vpack.c.b16 %v1274, %v1270
      %v1415 = vpack.c.b16 %v1275, %v1271
      %v1416 = vpack.c.b16 %v1276, %v1272
      %v1417 = vpack.c.b16 %v1277, %v1273
      %v1418 = vpack.c.b16 %v1282, %v1278
      %v1419 = vpack.c.b16 %v1283, %v1279
      %v1420 = vpack.c.b16 %v1284, %v1280
      %v1421 = vpack.c.b16 %v1285, %v1281
      %v1422 = vpack.c.b16 %v1290, %v1286
      %v1423 = vpack.c.b16 %v1291, %v1287
      %v1424 = vpack.c.b16 %v1292, %v1288
      %v1425 = vpack.c.b16 %v1293, %v1289
      %v1426 = vpack.c.b16 %v1298, %v1294
      %v1427 = vpack.c.b16 %v1299, %v1295
      %v1428 = vpack.c.b16 %v1300, %v1296
      %v1429 = vpack.c.b16 %v1301, %v1297
      %1558 = vmatpush.bf16.msra.mxu0 %v1330
      %1559 = vmatpush.bf16.msra.mxu0 %v1326
      %1560 = vmatpush.bf16.msra.mxu0 %v1322
      %1561 = vmatpush.bf16.msra.mxu0 %v1318
      %1562 = vmatpush.bf16.msra.mxu0 %v1314
      %1563 = vmatpush.bf16.msra.mxu0 %v1310
      %1564 = vmatpush.bf16.msra.mxu0 %v1306
      %1565 = vmatpush.bf16.msra.mxu0 %v1302
      %1566 = vmatmul.bf16.gmra.mxu0 %v790
      %v1567 = vpop.f32.mrf.mxu0
      %v1568 = vadd.f32 %v590, %v1567
      %v1569 = vpop.f32.mrf.mxu0
      %v1570 = vadd.f32 %v590, %v1569
      %1571 = vmatmul.bf16.gmra.mxu0 %v794
      %v1572 = vpop.f32.mrf.mxu0
      %v1573 = vadd.f32 %v590, %v1572
      %v1574 = vpop.f32.mrf.mxu0
      %v1575 = vadd.f32 %v590, %v1574
      %1576 = vmatmul.bf16.gmra.mxu0 %v798
      %v1577 = vpop.f32.mrf.mxu0
      %v1578 = vadd.f32 %v590, %v1577
      %v1579 = vpop.f32.mrf.mxu0
      %v1580 = vadd.f32 %v590, %v1579
      %1581 = vmatmul.bf16.gmra.mxu0 %v802
      %v1582 = vpop.f32.mrf.mxu0
      %v1583 = vadd.f32 %v590, %v1582
      %v1584 = vpop.f32.mrf.mxu0
      %v1585 = vadd.f32 %v590, %v1584
      %1586 = vmatmul.bf16.gmra.mxu0 %v806
      %v1587 = vpop.f32.mrf.mxu0
      %v1588 = vadd.f32 %v590, %v1587
      %v1589 = vpop.f32.mrf.mxu0
      %v1590 = vadd.f32 %v590, %v1589
      %1591 = vmatmul.bf16.gmra.mxu0 %v810
      %v1592 = vpop.f32.mrf.mxu0
      %v1593 = vadd.f32 %v590, %v1592
      %v1594 = vpop.f32.mrf.mxu0
      %v1595 = vadd.f32 %v590, %v1594
      %1596 = vmatmul.bf16.gmra.mxu0 %v814
      %v1597 = vpop.f32.mrf.mxu0
      %v1598 = vadd.f32 %v590, %v1597
      %v1599 = vpop.f32.mrf.mxu0
      %v1600 = vadd.f32 %v590, %v1599
      %1601 = vmatmul.bf16.gmra.mxu0 %v818
      %v1602 = vpop.f32.mrf.mxu0
      %v1603 = vadd.f32 %v590, %v1602
      %v1604 = vpop.f32.mrf.mxu0
      %v1605 = vadd.f32 %v590, %v1604
      %1606 = vmatmul.bf16.gmra.mxu0 %v822
      %v1607 = vpop.f32.mrf.mxu0
      %v1608 = vadd.f32 %v590, %v1607
      %v1609 = vpop.f32.mrf.mxu0
      %v1610 = vadd.f32 %v590, %v1609
      %1611 = vmatmul.bf16.gmra.mxu0 %v826
      %v1612 = vpop.f32.mrf.mxu0
      %v1613 = vadd.f32 %v590, %v1612
      %v1614 = vpop.f32.mrf.mxu0
      %v1615 = vadd.f32 %v590, %v1614
      %1616 = vmatmul.bf16.gmra.mxu0 %v830
      %v1617 = vpop.f32.mrf.mxu0
      %v1618 = vadd.f32 %v590, %v1617
      %v1619 = vpop.f32.mrf.mxu0
      %v1620 = vadd.f32 %v590, %v1619
      %1621 = vmatmul.bf16.gmra.mxu0 %v834
      %v1622 = vpop.f32.mrf.mxu0
      %v1623 = vadd.f32 %v590, %v1622
      %v1624 = vpop.f32.mrf.mxu0
      %v1625 = vadd.f32 %v590, %v1624
      %1626 = vmatmul.bf16.gmra.mxu0 %v838
      %v1627 = vpop.f32.mrf.mxu0
      %v1628 = vadd.f32 %v590, %v1627
      %v1629 = vpop.f32.mrf.mxu0
      %v1630 = vadd.f32 %v590, %v1629
      %1631 = vmatmul.bf16.gmra.mxu0 %v842
      %v1632 = vpop.f32.mrf.mxu0
      %v1633 = vadd.f32 %v590, %v1632
      %v1634 = vpop.f32.mrf.mxu0
      %v1635 = vadd.f32 %v590, %v1634
      %1636 = vmatmul.bf16.gmra.mxu0 %v846
      %v1637 = vpop.f32.mrf.mxu0
      %v1638 = vadd.f32 %v590, %v1637
      %v1639 = vpop.f32.mrf.mxu0
      %v1640 = vadd.f32 %v590, %v1639
      %1641 = vmatmul.bf16.gmra.mxu0 %v850
      %v1642 = vpop.f32.mrf.mxu0
      %v1643 = vadd.f32 %v590, %v1642
      %v1644 = vpop.f32.mrf.mxu0
      %v1645 = vadd.f32 %v590, %v1644
      %1646 = vdwg.mxu0
      %1647 = vmatpush.bf16.msra.mxu0 %v1362
      %1648 = vmatpush.bf16.msra.mxu0 %v1358
      %1649 = vmatpush.bf16.msra.mxu0 %v1354
      %1650 = vmatpush.bf16.msra.mxu0 %v1350
      %1651 = vmatpush.bf16.msra.mxu0 %v1346
      %1652 = vmatpush.bf16.msra.mxu0 %v1342
      %1653 = vmatpush.bf16.msra.mxu0 %v1338
      %1654 = vmatpush.bf16.msra.mxu0 %v1334
      %1655 = vmatmul.bf16.gmra.mxu0 %v791
      %v1656 = vpop.f32.mrf.mxu0
      %v1657 = vadd.f32 %v1568, %v1656
      %v1658 = vpop.f32.mrf.mxu0
      %v1659 = vadd.f32 %v1570, %v1658
      %1660 = vmatmul.bf16.gmra.mxu0 %v795
      %v1661 = vpop.f32.mrf.mxu0
      %v1662 = vadd.f32 %v1573, %v1661
      %v1663 = vpop.f32.mrf.mxu0
      %v1664 = vadd.f32 %v1575, %v1663
      %1665 = vmatmul.bf16.gmra.mxu0 %v799
      %v1666 = vpop.f32.mrf.mxu0
      %v1667 = vadd.f32 %v1578, %v1666
      %v1668 = vpop.f32.mrf.mxu0
      %v1669 = vadd.f32 %v1580, %v1668
      %1670 = vmatmul.bf16.gmra.mxu0 %v803
      %v1671 = vpop.f32.mrf.mxu0
      %v1672 = vadd.f32 %v1583, %v1671
      %v1673 = vpop.f32.mrf.mxu0
      %v1674 = vadd.f32 %v1585, %v1673
      %1675 = vmatmul.bf16.gmra.mxu0 %v807
      %v1676 = vpop.f32.mrf.mxu0
      %v1677 = vadd.f32 %v1588, %v1676
      %v1678 = vpop.f32.mrf.mxu0
      %v1679 = vadd.f32 %v1590, %v1678
      %1680 = vmatmul.bf16.gmra.mxu0 %v811
      %v1681 = vpop.f32.mrf.mxu0
      %v1682 = vadd.f32 %v1593, %v1681
      %v1683 = vpop.f32.mrf.mxu0
      %v1684 = vadd.f32 %v1595, %v1683
      %1685 = vmatmul.bf16.gmra.mxu0 %v815
      %v1686 = vpop.f32.mrf.mxu0
      %v1687 = vadd.f32 %v1598, %v1686
      %v1688 = vpop.f32.mrf.mxu0
      %v1689 = vadd.f32 %v1600, %v1688
      %1690 = vmatmul.bf16.gmra.mxu0 %v819
      %v1691 = vpop.f32.mrf.mxu0
      %v1692 = vadd.f32 %v1603, %v1691
      %v1693 = vpop.f32.mrf.mxu0
      %v1694 = vadd.f32 %v1605, %v1693
      %1695 = vmatmul.bf16.gmra.mxu0 %v823
      %v1696 = vpop.f32.mrf.mxu0
      %v1697 = vadd.f32 %v1608, %v1696
      %v1698 = vpop.f32.mrf.mxu0
      %v1699 = vadd.f32 %v1610, %v1698
      %1700 = vmatmul.bf16.gmra.mxu0 %v827
      %v1701 = vpop.f32.mrf.mxu0
      %v1702 = vadd.f32 %v1613, %v1701
      %v1703 = vpop.f32.mrf.mxu0
      %v1704 = vadd.f32 %v1615, %v1703
      %1705 = vmatmul.bf16.gmra.mxu0 %v831
      %v1706 = vpop.f32.mrf.mxu0
      %v1707 = vadd.f32 %v1618, %v1706
      %v1708 = vpop.f32.mrf.mxu0
      %v1709 = vadd.f32 %v1620, %v1708
      %1710 = vmatmul.bf16.gmra.mxu0 %v835
      %v1711 = vpop.f32.mrf.mxu0
      %v1712 = vadd.f32 %v1623, %v1711
      %v1713 = vpop.f32.mrf.mxu0
      %v1714 = vadd.f32 %v1625, %v1713
      %1715 = vmatmul.bf16.gmra.mxu0 %v839
      %v1716 = vpop.f32.mrf.mxu0
      %v1717 = vadd.f32 %v1628, %v1716
      %v1718 = vpop.f32.mrf.mxu0
      %v1719 = vadd.f32 %v1630, %v1718
      %1720 = vmatmul.bf16.gmra.mxu0 %v843
      %v1721 = vpop.f32.mrf.mxu0
      %v1722 = vadd.f32 %v1633, %v1721
      %v1723 = vpop.f32.mrf.mxu0
      %v1724 = vadd.f32 %v1635, %v1723
      %1725 = vmatmul.bf16.gmra.mxu0 %v847
      %v1726 = vpop.f32.mrf.mxu0
      %v1727 = vadd.f32 %v1638, %v1726
      %v1728 = vpop.f32.mrf.mxu0
      %v1729 = vadd.f32 %v1640, %v1728
      %1730 = vmatmul.bf16.gmra.mxu0 %v851
      %v1731 = vpop.f32.mrf.mxu0
      %v1732 = vadd.f32 %v1643, %v1731
      %v1733 = vpop.f32.mrf.mxu0
      %v1734 = vadd.f32 %v1645, %v1733
      %1735 = vdwg.mxu0
      %1736 = vmatpush.bf16.msra.mxu0 %v1394
      %1737 = vmatpush.bf16.msra.mxu0 %v1390
      %1738 = vmatpush.bf16.msra.mxu0 %v1386
      %1739 = vmatpush.bf16.msra.mxu0 %v1382
      %1740 = vmatpush.bf16.msra.mxu0 %v1378
      %1741 = vmatpush.bf16.msra.mxu0 %v1374
      %1742 = vmatpush.bf16.msra.mxu0 %v1370
      %1743 = vmatpush.bf16.msra.mxu0 %v1366
      %1744 = vmatmul.bf16.gmra.mxu0 %v792
      %v1745 = vpop.f32.mrf.mxu0
      %v1746 = vadd.f32 %v1657, %v1745
      %v1747 = vpop.f32.mrf.mxu0
      %v1748 = vadd.f32 %v1659, %v1747
      %1749 = vmatmul.bf16.gmra.mxu0 %v796
      %v1750 = vpop.f32.mrf.mxu0
      %v1751 = vadd.f32 %v1662, %v1750
      %v1752 = vpop.f32.mrf.mxu0
      %v1753 = vadd.f32 %v1664, %v1752
      %1754 = vmatmul.bf16.gmra.mxu0 %v800
      %v1755 = vpop.f32.mrf.mxu0
      %v1756 = vadd.f32 %v1667, %v1755
      %v1757 = vpop.f32.mrf.mxu0
      %v1758 = vadd.f32 %v1669, %v1757
      %1759 = vmatmul.bf16.gmra.mxu0 %v804
      %v1760 = vpop.f32.mrf.mxu0
      %v1761 = vadd.f32 %v1672, %v1760
      %v1762 = vpop.f32.mrf.mxu0
      %v1763 = vadd.f32 %v1674, %v1762
      %1764 = vmatmul.bf16.gmra.mxu0 %v808
      %v1765 = vpop.f32.mrf.mxu0
      %v1766 = vadd.f32 %v1677, %v1765
      %v1767 = vpop.f32.mrf.mxu0
      %v1768 = vadd.f32 %v1679, %v1767
      %1769 = vmatmul.bf16.gmra.mxu0 %v812
      %v1770 = vpop.f32.mrf.mxu0
      %v1771 = vadd.f32 %v1682, %v1770
      %v1772 = vpop.f32.mrf.mxu0
      %v1773 = vadd.f32 %v1684, %v1772
      %1774 = vmatmul.bf16.gmra.mxu0 %v816
      %v1775 = vpop.f32.mrf.mxu0
      %v1776 = vadd.f32 %v1687, %v1775
      %v1777 = vpop.f32.mrf.mxu0
      %v1778 = vadd.f32 %v1689, %v1777
      %1779 = vmatmul.bf16.gmra.mxu0 %v820
      %v1780 = vpop.f32.mrf.mxu0
      %v1781 = vadd.f32 %v1692, %v1780
      %v1782 = vpop.f32.mrf.mxu0
      %v1783 = vadd.f32 %v1694, %v1782
      %1784 = vmatmul.bf16.gmra.mxu0 %v824
      %v1785 = vpop.f32.mrf.mxu0
      %v1786 = vadd.f32 %v1697, %v1785
      %v1787 = vpop.f32.mrf.mxu0
      %v1788 = vadd.f32 %v1699, %v1787
      %1789 = vmatmul.bf16.gmra.mxu0 %v828
      %v1790 = vpop.f32.mrf.mxu0
      %v1791 = vadd.f32 %v1702, %v1790
      %v1792 = vpop.f32.mrf.mxu0
      %v1793 = vadd.f32 %v1704, %v1792
      %1794 = vmatmul.bf16.gmra.mxu0 %v832
      %v1795 = vpop.f32.mrf.mxu0
      %v1796 = vadd.f32 %v1707, %v1795
      %v1797 = vpop.f32.mrf.mxu0
      %v1798 = vadd.f32 %v1709, %v1797
      %1799 = vmatmul.bf16.gmra.mxu0 %v836
      %v1800 = vpop.f32.mrf.mxu0
      %v1801 = vadd.f32 %v1712, %v1800
      %v1802 = vpop.f32.mrf.mxu0
      %v1803 = vadd.f32 %v1714, %v1802
      %1804 = vmatmul.bf16.gmra.mxu0 %v840
      %v1805 = vpop.f32.mrf.mxu0
      %v1806 = vadd.f32 %v1717, %v1805
      %v1807 = vpop.f32.mrf.mxu0
      %v1808 = vadd.f32 %v1719, %v1807
      %1809 = vmatmul.bf16.gmra.mxu0 %v844
      %v1810 = vpop.f32.mrf.mxu0
      %v1811 = vadd.f32 %v1722, %v1810
      %v1812 = vpop.f32.mrf.mxu0
      %v1813 = vadd.f32 %v1724, %v1812
      %1814 = vmatmul.bf16.gmra.mxu0 %v848
      %v1815 = vpop.f32.mrf.mxu0
      %v1816 = vadd.f32 %v1727, %v1815
      %v1817 = vpop.f32.mrf.mxu0
      %v1818 = vadd.f32 %v1729, %v1817
      %1819 = vmatmul.bf16.gmra.mxu0 %v852
      %v1820 = vpop.f32.mrf.mxu0
      %v1821 = vadd.f32 %v1732, %v1820
      %v1822 = vpop.f32.mrf.mxu0
      %v1823 = vadd.f32 %v1734, %v1822
      %1824 = vdwg.mxu0
      %1825 = vmatpush.bf16.msra.mxu0 %v1426
      %1826 = vmatpush.bf16.msra.mxu0 %v1422
      %1827 = vmatpush.bf16.msra.mxu0 %v1418
      %1828 = vmatpush.bf16.msra.mxu0 %v1414
      %1829 = vmatpush.bf16.msra.mxu0 %v1410
      %1830 = vmatpush.bf16.msra.mxu0 %v1406
      %1831 = vmatpush.bf16.msra.mxu0 %v1402
      %1832 = vmatpush.bf16.msra.mxu0 %v1398
      %1833 = vmatmul.bf16.gmra.mxu0 %v793
      %v1834 = vpop.f32.mrf.mxu0
      %v1835 = vadd.f32 %v1746, %v1834
      %v1836 = vpop.f32.mrf.mxu0
      %v1837 = vadd.f32 %v1748, %v1836
      %1838 = vmatmul.bf16.gmra.mxu0 %v797
      %v1839 = vpop.f32.mrf.mxu0
      %v1840 = vadd.f32 %v1751, %v1839
      %v1841 = vpop.f32.mrf.mxu0
      %v1842 = vadd.f32 %v1753, %v1841
      %1843 = vmatmul.bf16.gmra.mxu0 %v801
      %v1844 = vpop.f32.mrf.mxu0
      %v1845 = vadd.f32 %v1756, %v1844
      %v1846 = vpop.f32.mrf.mxu0
      %v1847 = vadd.f32 %v1758, %v1846
      %1848 = vmatmul.bf16.gmra.mxu0 %v805
      %v1849 = vpop.f32.mrf.mxu0
      %v1850 = vadd.f32 %v1761, %v1849
      %v1851 = vpop.f32.mrf.mxu0
      %v1852 = vadd.f32 %v1763, %v1851
      %1853 = vmatmul.bf16.gmra.mxu0 %v809
      %v1854 = vpop.f32.mrf.mxu0
      %v1855 = vadd.f32 %v1766, %v1854
      %v1856 = vpop.f32.mrf.mxu0
      %v1857 = vadd.f32 %v1768, %v1856
      %1858 = vmatmul.bf16.gmra.mxu0 %v813
      %v1859 = vpop.f32.mrf.mxu0
      %v1860 = vadd.f32 %v1771, %v1859
      %v1861 = vpop.f32.mrf.mxu0
      %v1862 = vadd.f32 %v1773, %v1861
      %1863 = vmatmul.bf16.gmra.mxu0 %v817
      %v1864 = vpop.f32.mrf.mxu0
      %v1865 = vadd.f32 %v1776, %v1864
      %v1866 = vpop.f32.mrf.mxu0
      %v1867 = vadd.f32 %v1778, %v1866
      %1868 = vmatmul.bf16.gmra.mxu0 %v821
      %v1869 = vpop.f32.mrf.mxu0
      %v1870 = vadd.f32 %v1781, %v1869
      %v1871 = vpop.f32.mrf.mxu0
      %v1872 = vadd.f32 %v1783, %v1871
      %1873 = vmatmul.bf16.gmra.mxu0 %v825
      %v1874 = vpop.f32.mrf.mxu0
      %v1875 = vadd.f32 %v1786, %v1874
      %v1876 = vpop.f32.mrf.mxu0
      %v1877 = vadd.f32 %v1788, %v1876
      %1878 = vmatmul.bf16.gmra.mxu0 %v829
      %v1879 = vpop.f32.mrf.mxu0
      %v1880 = vadd.f32 %v1791, %v1879
      %v1881 = vpop.f32.mrf.mxu0
      %v1882 = vadd.f32 %v1793, %v1881
      %1883 = vmatmul.bf16.gmra.mxu0 %v833
      %v1884 = vpop.f32.mrf.mxu0
      %v1885 = vadd.f32 %v1796, %v1884
      %v1886 = vpop.f32.mrf.mxu0
      %v1887 = vadd.f32 %v1798, %v1886
      %1888 = vmatmul.bf16.gmra.mxu0 %v837
      %v1889 = vpop.f32.mrf.mxu0
      %v1890 = vadd.f32 %v1801, %v1889
      %v1891 = vpop.f32.mrf.mxu0
      %v1892 = vadd.f32 %v1803, %v1891
      %1893 = vmatmul.bf16.gmra.mxu0 %v841
      %v1894 = vpop.f32.mrf.mxu0
      %v1895 = vadd.f32 %v1806, %v1894
      %v1896 = vpop.f32.mrf.mxu0
      %v1897 = vadd.f32 %v1808, %v1896
      %1898 = vmatmul.bf16.gmra.mxu0 %v845
      %v1899 = vpop.f32.mrf.mxu0
      %v1900 = vadd.f32 %v1811, %v1899
      %v1901 = vpop.f32.mrf.mxu0
      %v1902 = vadd.f32 %v1813, %v1901
      %1903 = vmatmul.bf16.gmra.mxu0 %v849
      %v1904 = vpop.f32.mrf.mxu0
      %v1905 = vadd.f32 %v1816, %v1904
      %v1906 = vpop.f32.mrf.mxu0
      %v1907 = vadd.f32 %v1818, %v1906
      %1908 = vmatmul.bf16.gmra.mxu0 %v853
      %v1909 = vpop.f32.mrf.mxu0
      %v1910 = vadd.f32 %v1821, %v1909
      %v1911 = vpop.f32.mrf.mxu0
      %v1912 = vadd.f32 %v1823, %v1911
      %1913 = vdwg.mxu0
      %1914 = vmatpush.bf16.msra.mxu0 %v1331
      %1915 = vmatpush.bf16.msra.mxu0 %v1327
      %1916 = vmatpush.bf16.msra.mxu0 %v1323
      %1917 = vmatpush.bf16.msra.mxu0 %v1319
      %1918 = vmatpush.bf16.msra.mxu0 %v1315
      %1919 = vmatpush.bf16.msra.mxu0 %v1311
      %1920 = vmatpush.bf16.msra.mxu0 %v1307
      %1921 = vmatpush.bf16.msra.mxu0 %v1303
      %1922 = vmatmul.bf16.gmra.mxu0 %v790
      %v1923 = vpop.f32.mrf.mxu0
      %v1924 = vadd.f32 %v591, %v1923
      %v1925 = vpop.f32.mrf.mxu0
      %v1926 = vadd.f32 %v591, %v1925
      %1927 = vmatmul.bf16.gmra.mxu0 %v794
      %v1928 = vpop.f32.mrf.mxu0
      %v1929 = vadd.f32 %v591, %v1928
      %v1930 = vpop.f32.mrf.mxu0
      %v1931 = vadd.f32 %v591, %v1930
      %1932 = vmatmul.bf16.gmra.mxu0 %v798
      %v1933 = vpop.f32.mrf.mxu0
      %v1934 = vadd.f32 %v591, %v1933
      %v1935 = vpop.f32.mrf.mxu0
      %v1936 = vadd.f32 %v591, %v1935
      %1937 = vmatmul.bf16.gmra.mxu0 %v802
      %v1938 = vpop.f32.mrf.mxu0
      %v1939 = vadd.f32 %v591, %v1938
      %v1940 = vpop.f32.mrf.mxu0
      %v1941 = vadd.f32 %v591, %v1940
      %1942 = vmatmul.bf16.gmra.mxu0 %v806
      %v1943 = vpop.f32.mrf.mxu0
      %v1944 = vadd.f32 %v591, %v1943
      %v1945 = vpop.f32.mrf.mxu0
      %v1946 = vadd.f32 %v591, %v1945
      %1947 = vmatmul.bf16.gmra.mxu0 %v810
      %v1948 = vpop.f32.mrf.mxu0
      %v1949 = vadd.f32 %v591, %v1948
      %v1950 = vpop.f32.mrf.mxu0
      %v1951 = vadd.f32 %v591, %v1950
      %1952 = vmatmul.bf16.gmra.mxu0 %v814
      %v1953 = vpop.f32.mrf.mxu0
      %v1954 = vadd.f32 %v591, %v1953
      %v1955 = vpop.f32.mrf.mxu0
      %v1956 = vadd.f32 %v591, %v1955
      %1957 = vmatmul.bf16.gmra.mxu0 %v818
      %v1958 = vpop.f32.mrf.mxu0
      %v1959 = vadd.f32 %v591, %v1958
      %v1960 = vpop.f32.mrf.mxu0
      %v1961 = vadd.f32 %v591, %v1960
      %1962 = vmatmul.bf16.gmra.mxu0 %v822
      %v1963 = vpop.f32.mrf.mxu0
      %v1964 = vadd.f32 %v591, %v1963
      %v1965 = vpop.f32.mrf.mxu0
      %v1966 = vadd.f32 %v591, %v1965
      %1967 = vmatmul.bf16.gmra.mxu0 %v826
      %v1968 = vpop.f32.mrf.mxu0
      %v1969 = vadd.f32 %v591, %v1968
      %v1970 = vpop.f32.mrf.mxu0
      %v1971 = vadd.f32 %v591, %v1970
      %1972 = vmatmul.bf16.gmra.mxu0 %v830
      %v1973 = vpop.f32.mrf.mxu0
      %v1974 = vadd.f32 %v591, %v1973
      %v1975 = vpop.f32.mrf.mxu0
      %v1976 = vadd.f32 %v591, %v1975
      %1977 = vmatmul.bf16.gmra.mxu0 %v834
      %v1978 = vpop.f32.mrf.mxu0
      %v1979 = vadd.f32 %v591, %v1978
      %v1980 = vpop.f32.mrf.mxu0
      %v1981 = vadd.f32 %v591, %v1980
      %1982 = vmatmul.bf16.gmra.mxu0 %v838
      %v1983 = vpop.f32.mrf.mxu0
      %v1984 = vadd.f32 %v591, %v1983
      %v1985 = vpop.f32.mrf.mxu0
      %v1986 = vadd.f32 %v591, %v1985
      %1987 = vmatmul.bf16.gmra.mxu0 %v842
      %v1988 = vpop.f32.mrf.mxu0
      %v1989 = vadd.f32 %v591, %v1988
      %v1990 = vpop.f32.mrf.mxu0
      %v1991 = vadd.f32 %v591, %v1990
      %1992 = vmatmul.bf16.gmra.mxu0 %v846
      %v1993 = vpop.f32.mrf.mxu0
      %v1994 = vadd.f32 %v591, %v1993
      %v1995 = vpop.f32.mrf.mxu0
      %v1996 = vadd.f32 %v591, %v1995
      %1997 = vmatmul.bf16.gmra.mxu0 %v850
      %v1998 = vpop.f32.mrf.mxu0
      %v1999 = vadd.f32 %v591, %v1998
      %v2000 = vpop.f32.mrf.mxu0
      %v2001 = vadd.f32 %v591, %v2000
      %2002 = vdwg.mxu0
      %2003 = vmatpush.bf16.msra.mxu0 %v1363
      %2004 = vmatpush.bf16.msra.mxu0 %v1359
      %2005 = vmatpush.bf16.msra.mxu0 %v1355
      %2006 = vmatpush.bf16.msra.mxu0 %v1351
      %2007 = vmatpush.bf16.msra.mxu0 %v1347
      %2008 = vmatpush.bf16.msra.mxu0 %v1343
      %2009 = vmatpush.bf16.msra.mxu0 %v1339
      %2010 = vmatpush.bf16.msra.mxu0 %v1335
      %2011 = vmatmul.bf16.gmra.mxu0 %v791
      %v2012 = vpop.f32.mrf.mxu0
      %v2013 = vadd.f32 %v1924, %v2012
      %v2014 = vpop.f32.mrf.mxu0
      %v2015 = vadd.f32 %v1926, %v2014
      %2016 = vmatmul.bf16.gmra.mxu0 %v795
      %v2017 = vpop.f32.mrf.mxu0
      %v2018 = vadd.f32 %v1929, %v2017
      %v2019 = vpop.f32.mrf.mxu0
      %v2020 = vadd.f32 %v1931, %v2019
      %2021 = vmatmul.bf16.gmra.mxu0 %v799
      %v2022 = vpop.f32.mrf.mxu0
      %v2023 = vadd.f32 %v1934, %v2022
      %v2024 = vpop.f32.mrf.mxu0
      %v2025 = vadd.f32 %v1936, %v2024
      %2026 = vmatmul.bf16.gmra.mxu0 %v803
      %v2027 = vpop.f32.mrf.mxu0
      %v2028 = vadd.f32 %v1939, %v2027
      %v2029 = vpop.f32.mrf.mxu0
      %v2030 = vadd.f32 %v1941, %v2029
      %2031 = vmatmul.bf16.gmra.mxu0 %v807
      %v2032 = vpop.f32.mrf.mxu0
      %v2033 = vadd.f32 %v1944, %v2032
      %v2034 = vpop.f32.mrf.mxu0
      %v2035 = vadd.f32 %v1946, %v2034
      %2036 = vmatmul.bf16.gmra.mxu0 %v811
      %v2037 = vpop.f32.mrf.mxu0
      %v2038 = vadd.f32 %v1949, %v2037
      %v2039 = vpop.f32.mrf.mxu0
      %v2040 = vadd.f32 %v1951, %v2039
      %2041 = vmatmul.bf16.gmra.mxu0 %v815
      %v2042 = vpop.f32.mrf.mxu0
      %v2043 = vadd.f32 %v1954, %v2042
      %v2044 = vpop.f32.mrf.mxu0
      %v2045 = vadd.f32 %v1956, %v2044
      %2046 = vmatmul.bf16.gmra.mxu0 %v819
      %v2047 = vpop.f32.mrf.mxu0
      %v2048 = vadd.f32 %v1959, %v2047
      %v2049 = vpop.f32.mrf.mxu0
      %v2050 = vadd.f32 %v1961, %v2049
      %2051 = vmatmul.bf16.gmra.mxu0 %v823
      %v2052 = vpop.f32.mrf.mxu0
      %v2053 = vadd.f32 %v1964, %v2052
      %v2054 = vpop.f32.mrf.mxu0
      %v2055 = vadd.f32 %v1966, %v2054
      %2056 = vmatmul.bf16.gmra.mxu0 %v827
      %v2057 = vpop.f32.mrf.mxu0
      %v2058 = vadd.f32 %v1969, %v2057
      %v2059 = vpop.f32.mrf.mxu0
      %v2060 = vadd.f32 %v1971, %v2059
      %2061 = vmatmul.bf16.gmra.mxu0 %v831
      %v2062 = vpop.f32.mrf.mxu0
      %v2063 = vadd.f32 %v1974, %v2062
      %v2064 = vpop.f32.mrf.mxu0
      %v2065 = vadd.f32 %v1976, %v2064
      %2066 = vmatmul.bf16.gmra.mxu0 %v835
      %v2067 = vpop.f32.mrf.mxu0
      %v2068 = vadd.f32 %v1979, %v2067
      %v2069 = vpop.f32.mrf.mxu0
      %v2070 = vadd.f32 %v1981, %v2069
      %2071 = vmatmul.bf16.gmra.mxu0 %v839
      %v2072 = vpop.f32.mrf.mxu0
      %v2073 = vadd.f32 %v1984, %v2072
      %v2074 = vpop.f32.mrf.mxu0
      %v2075 = vadd.f32 %v1986, %v2074
      %2076 = vmatmul.bf16.gmra.mxu0 %v843
      %v2077 = vpop.f32.mrf.mxu0
      %v2078 = vadd.f32 %v1989, %v2077
      %v2079 = vpop.f32.mrf.mxu0
      %v2080 = vadd.f32 %v1991, %v2079
      %2081 = vmatmul.bf16.gmra.mxu0 %v847
      %v2082 = vpop.f32.mrf.mxu0
      %v2083 = vadd.f32 %v1994, %v2082
      %v2084 = vpop.f32.mrf.mxu0
      %v2085 = vadd.f32 %v1996, %v2084
      %2086 = vmatmul.bf16.gmra.mxu0 %v851
      %v2087 = vpop.f32.mrf.mxu0
      %v2088 = vadd.f32 %v1999, %v2087
      %v2089 = vpop.f32.mrf.mxu0
      %v2090 = vadd.f32 %v2001, %v2089
      %2091 = vdwg.mxu0
      %2092 = vmatpush.bf16.msra.mxu0 %v1395
      %2093 = vmatpush.bf16.msra.mxu0 %v1391
      %2094 = vmatpush.bf16.msra.mxu0 %v1387
      %2095 = vmatpush.bf16.msra.mxu0 %v1383
      %2096 = vmatpush.bf16.msra.mxu0 %v1379
      %2097 = vmatpush.bf16.msra.mxu0 %v1375
      %2098 = vmatpush.bf16.msra.mxu0 %v1371
      %2099 = vmatpush.bf16.msra.mxu0 %v1367
      %2100 = vmatmul.bf16.gmra.mxu0 %v792
      %v2101 = vpop.f32.mrf.mxu0
      %v2102 = vadd.f32 %v2013, %v2101
      %v2103 = vpop.f32.mrf.mxu0
      %v2104 = vadd.f32 %v2015, %v2103
      %2105 = vmatmul.bf16.gmra.mxu0 %v796
      %v2106 = vpop.f32.mrf.mxu0
      %v2107 = vadd.f32 %v2018, %v2106
      %v2108 = vpop.f32.mrf.mxu0
      %v2109 = vadd.f32 %v2020, %v2108
      %2110 = vmatmul.bf16.gmra.mxu0 %v800
      %v2111 = vpop.f32.mrf.mxu0
      %v2112 = vadd.f32 %v2023, %v2111
      %v2113 = vpop.f32.mrf.mxu0
      %v2114 = vadd.f32 %v2025, %v2113
      %2115 = vmatmul.bf16.gmra.mxu0 %v804
      %v2116 = vpop.f32.mrf.mxu0
      %v2117 = vadd.f32 %v2028, %v2116
      %v2118 = vpop.f32.mrf.mxu0
      %v2119 = vadd.f32 %v2030, %v2118
      %2120 = vmatmul.bf16.gmra.mxu0 %v808
      %v2121 = vpop.f32.mrf.mxu0
      %v2122 = vadd.f32 %v2033, %v2121
      %v2123 = vpop.f32.mrf.mxu0
      %v2124 = vadd.f32 %v2035, %v2123
      %2125 = vmatmul.bf16.gmra.mxu0 %v812
      %v2126 = vpop.f32.mrf.mxu0
      %v2127 = vadd.f32 %v2038, %v2126
      %v2128 = vpop.f32.mrf.mxu0
      %v2129 = vadd.f32 %v2040, %v2128
      %2130 = vmatmul.bf16.gmra.mxu0 %v816
      %v2131 = vpop.f32.mrf.mxu0
      %v2132 = vadd.f32 %v2043, %v2131
      %v2133 = vpop.f32.mrf.mxu0
      %v2134 = vadd.f32 %v2045, %v2133
      %2135 = vmatmul.bf16.gmra.mxu0 %v820
      %v2136 = vpop.f32.mrf.mxu0
      %v2137 = vadd.f32 %v2048, %v2136
      %v2138 = vpop.f32.mrf.mxu0
      %v2139 = vadd.f32 %v2050, %v2138
      %2140 = vmatmul.bf16.gmra.mxu0 %v824
      %v2141 = vpop.f32.mrf.mxu0
      %v2142 = vadd.f32 %v2053, %v2141
      %v2143 = vpop.f32.mrf.mxu0
      %v2144 = vadd.f32 %v2055, %v2143
      %2145 = vmatmul.bf16.gmra.mxu0 %v828
      %v2146 = vpop.f32.mrf.mxu0
      %v2147 = vadd.f32 %v2058, %v2146
      %v2148 = vpop.f32.mrf.mxu0
      %v2149 = vadd.f32 %v2060, %v2148
      %2150 = vmatmul.bf16.gmra.mxu0 %v832
      %v2151 = vpop.f32.mrf.mxu0
      %v2152 = vadd.f32 %v2063, %v2151
      %v2153 = vpop.f32.mrf.mxu0
      %v2154 = vadd.f32 %v2065, %v2153
      %2155 = vmatmul.bf16.gmra.mxu0 %v836
      %v2156 = vpop.f32.mrf.mxu0
      %v2157 = vadd.f32 %v2068, %v2156
      %v2158 = vpop.f32.mrf.mxu0
      %v2159 = vadd.f32 %v2070, %v2158
      %2160 = vmatmul.bf16.gmra.mxu0 %v840
      %v2161 = vpop.f32.mrf.mxu0
      %v2162 = vadd.f32 %v2073, %v2161
      %v2163 = vpop.f32.mrf.mxu0
      %v2164 = vadd.f32 %v2075, %v2163
      %2165 = vmatmul.bf16.gmra.mxu0 %v844
      %v2166 = vpop.f32.mrf.mxu0
      %v2167 = vadd.f32 %v2078, %v2166
      %v2168 = vpop.f32.mrf.mxu0
      %v2169 = vadd.f32 %v2080, %v2168
      %2170 = vmatmul.bf16.gmra.mxu0 %v848
      %v2171 = vpop.f32.mrf.mxu0
      %v2172 = vadd.f32 %v2083, %v2171
      %v2173 = vpop.f32.mrf.mxu0
      %v2174 = vadd.f32 %v2085, %v2173
      %2175 = vmatmul.bf16.gmra.mxu0 %v852
      %v2176 = vpop.f32.mrf.mxu0
      %v2177 = vadd.f32 %v2088, %v2176
      %v2178 = vpop.f32.mrf.mxu0
      %v2179 = vadd.f32 %v2090, %v2178
      %2180 = vdwg.mxu0
      %2181 = vmatpush.bf16.msra.mxu0 %v1427
      %2182 = vmatpush.bf16.msra.mxu0 %v1423
      %2183 = vmatpush.bf16.msra.mxu0 %v1419
      %2184 = vmatpush.bf16.msra.mxu0 %v1415
      %2185 = vmatpush.bf16.msra.mxu0 %v1411
      %2186 = vmatpush.bf16.msra.mxu0 %v1407
      %2187 = vmatpush.bf16.msra.mxu0 %v1403
      %2188 = vmatpush.bf16.msra.mxu0 %v1399
      %2189 = vmatmul.bf16.gmra.mxu0 %v793
      %v2190 = vpop.f32.mrf.mxu0
      %v2191 = vadd.f32 %v2102, %v2190
      %v2192 = vpop.f32.mrf.mxu0
      %v2193 = vadd.f32 %v2104, %v2192
      %2194 = vmatmul.bf16.gmra.mxu0 %v797
      %v2195 = vpop.f32.mrf.mxu0
      %v2196 = vadd.f32 %v2107, %v2195
      %v2197 = vpop.f32.mrf.mxu0
      %v2198 = vadd.f32 %v2109, %v2197
      %2199 = vmatmul.bf16.gmra.mxu0 %v801
      %v2200 = vpop.f32.mrf.mxu0
      %v2201 = vadd.f32 %v2112, %v2200
      %v2202 = vpop.f32.mrf.mxu0
      %v2203 = vadd.f32 %v2114, %v2202
      %2204 = vmatmul.bf16.gmra.mxu0 %v805
      %v2205 = vpop.f32.mrf.mxu0
      %v2206 = vadd.f32 %v2117, %v2205
      %v2207 = vpop.f32.mrf.mxu0
      %v2208 = vadd.f32 %v2119, %v2207
      %2209 = vmatmul.bf16.gmra.mxu0 %v809
      %v2210 = vpop.f32.mrf.mxu0
      %v2211 = vadd.f32 %v2122, %v2210
      %v2212 = vpop.f32.mrf.mxu0
      %v2213 = vadd.f32 %v2124, %v2212
      %2214 = vmatmul.bf16.gmra.mxu0 %v813
      %v2215 = vpop.f32.mrf.mxu0
      %v2216 = vadd.f32 %v2127, %v2215
      %v2217 = vpop.f32.mrf.mxu0
      %v2218 = vadd.f32 %v2129, %v2217
      %2219 = vmatmul.bf16.gmra.mxu0 %v817
      %v2220 = vpop.f32.mrf.mxu0
      %v2221 = vadd.f32 %v2132, %v2220
      %v2222 = vpop.f32.mrf.mxu0
      %v2223 = vadd.f32 %v2134, %v2222
      %2224 = vmatmul.bf16.gmra.mxu0 %v821
      %v2225 = vpop.f32.mrf.mxu0
      %v2226 = vadd.f32 %v2137, %v2225
      %v2227 = vpop.f32.mrf.mxu0
      %v2228 = vadd.f32 %v2139, %v2227
      %2229 = vmatmul.bf16.gmra.mxu0 %v825
      %v2230 = vpop.f32.mrf.mxu0
      %v2231 = vadd.f32 %v2142, %v2230
      %v2232 = vpop.f32.mrf.mxu0
      %v2233 = vadd.f32 %v2144, %v2232
      %2234 = vmatmul.bf16.gmra.mxu0 %v829
      %v2235 = vpop.f32.mrf.mxu0
      %v2236 = vadd.f32 %v2147, %v2235
      %v2237 = vpop.f32.mrf.mxu0
      %v2238 = vadd.f32 %v2149, %v2237
      %2239 = vmatmul.bf16.gmra.mxu0 %v833
      %v2240 = vpop.f32.mrf.mxu0
      %v2241 = vadd.f32 %v2152, %v2240
      %v2242 = vpop.f32.mrf.mxu0
      %v2243 = vadd.f32 %v2154, %v2242
      %2244 = vmatmul.bf16.gmra.mxu0 %v837
      %v2245 = vpop.f32.mrf.mxu0
      %v2246 = vadd.f32 %v2157, %v2245
      %v2247 = vpop.f32.mrf.mxu0
      %v2248 = vadd.f32 %v2159, %v2247
      %2249 = vmatmul.bf16.gmra.mxu0 %v841
      %v2250 = vpop.f32.mrf.mxu0
      %v2251 = vadd.f32 %v2162, %v2250
      %v2252 = vpop.f32.mrf.mxu0
      %v2253 = vadd.f32 %v2164, %v2252
      %2254 = vmatmul.bf16.gmra.mxu0 %v845
      %v2255 = vpop.f32.mrf.mxu0
      %v2256 = vadd.f32 %v2167, %v2255
      %v2257 = vpop.f32.mrf.mxu0
      %v2258 = vadd.f32 %v2169, %v2257
      %2259 = vmatmul.bf16.gmra.mxu0 %v849
      %v2260 = vpop.f32.mrf.mxu0
      %v2261 = vadd.f32 %v2172, %v2260
      %v2262 = vpop.f32.mrf.mxu0
      %v2263 = vadd.f32 %v2174, %v2262
      %2264 = vmatmul.bf16.gmra.mxu0 %v853
      %v2265 = vpop.f32.mrf.mxu0
      %v2266 = vadd.f32 %v2177, %v2265
      %v2267 = vpop.f32.mrf.mxu0
      %v2268 = vadd.f32 %v2179, %v2267
      %2269 = vdwg.mxu0
      %2270 = vmatpush.bf16.msra.mxu0 %v1332
      %2271 = vmatpush.bf16.msra.mxu0 %v1328
      %2272 = vmatpush.bf16.msra.mxu0 %v1324
      %2273 = vmatpush.bf16.msra.mxu0 %v1320
      %2274 = vmatpush.bf16.msra.mxu0 %v1316
      %2275 = vmatpush.bf16.msra.mxu0 %v1312
      %2276 = vmatpush.bf16.msra.mxu0 %v1308
      %2277 = vmatpush.bf16.msra.mxu0 %v1304
      %2278 = vmatmul.bf16.gmra.mxu0 %v790
      %v2279 = vpop.f32.mrf.mxu0
      %v2280 = vadd.f32 %v592, %v2279
      %v2281 = vpop.f32.mrf.mxu0
      %v2282 = vadd.f32 %v592, %v2281
      %2283 = vmatmul.bf16.gmra.mxu0 %v794
      %v2284 = vpop.f32.mrf.mxu0
      %v2285 = vadd.f32 %v592, %v2284
      %v2286 = vpop.f32.mrf.mxu0
      %v2287 = vadd.f32 %v592, %v2286
      %2288 = vmatmul.bf16.gmra.mxu0 %v798
      %v2289 = vpop.f32.mrf.mxu0
      %v2290 = vadd.f32 %v592, %v2289
      %v2291 = vpop.f32.mrf.mxu0
      %v2292 = vadd.f32 %v592, %v2291
      %2293 = vmatmul.bf16.gmra.mxu0 %v802
      %v2294 = vpop.f32.mrf.mxu0
      %v2295 = vadd.f32 %v592, %v2294
      %v2296 = vpop.f32.mrf.mxu0
      %v2297 = vadd.f32 %v592, %v2296
      %2298 = vmatmul.bf16.gmra.mxu0 %v806
      %v2299 = vpop.f32.mrf.mxu0
      %v2300 = vadd.f32 %v592, %v2299
      %v2301 = vpop.f32.mrf.mxu0
      %v2302 = vadd.f32 %v592, %v2301
      %2303 = vmatmul.bf16.gmra.mxu0 %v810
      %v2304 = vpop.f32.mrf.mxu0
      %v2305 = vadd.f32 %v592, %v2304
      %v2306 = vpop.f32.mrf.mxu0
      %v2307 = vadd.f32 %v592, %v2306
      %2308 = vmatmul.bf16.gmra.mxu0 %v814
      %v2309 = vpop.f32.mrf.mxu0
      %v2310 = vadd.f32 %v592, %v2309
      %v2311 = vpop.f32.mrf.mxu0
      %v2312 = vadd.f32 %v592, %v2311
      %2313 = vmatmul.bf16.gmra.mxu0 %v818
      %v2314 = vpop.f32.mrf.mxu0
      %v2315 = vadd.f32 %v592, %v2314
      %v2316 = vpop.f32.mrf.mxu0
      %v2317 = vadd.f32 %v592, %v2316
      %2318 = vmatmul.bf16.gmra.mxu0 %v822
      %v2319 = vpop.f32.mrf.mxu0
      %v2320 = vadd.f32 %v592, %v2319
      %v2321 = vpop.f32.mrf.mxu0
      %v2322 = vadd.f32 %v592, %v2321
      %2323 = vmatmul.bf16.gmra.mxu0 %v826
      %v2324 = vpop.f32.mrf.mxu0
      %v2325 = vadd.f32 %v592, %v2324
      %v2326 = vpop.f32.mrf.mxu0
      %v2327 = vadd.f32 %v592, %v2326
      %2328 = vmatmul.bf16.gmra.mxu0 %v830
      %v2329 = vpop.f32.mrf.mxu0
      %v2330 = vadd.f32 %v592, %v2329
      %v2331 = vpop.f32.mrf.mxu0
      %v2332 = vadd.f32 %v592, %v2331
      %2333 = vmatmul.bf16.gmra.mxu0 %v834
      %v2334 = vpop.f32.mrf.mxu0
      %v2335 = vadd.f32 %v592, %v2334
      %v2336 = vpop.f32.mrf.mxu0
      %v2337 = vadd.f32 %v592, %v2336
      %2338 = vmatmul.bf16.gmra.mxu0 %v838
      %v2339 = vpop.f32.mrf.mxu0
      %v2340 = vadd.f32 %v592, %v2339
      %v2341 = vpop.f32.mrf.mxu0
      %v2342 = vadd.f32 %v592, %v2341
      %2343 = vmatmul.bf16.gmra.mxu0 %v842
      %v2344 = vpop.f32.mrf.mxu0
      %v2345 = vadd.f32 %v592, %v2344
      %v2346 = vpop.f32.mrf.mxu0
      %v2347 = vadd.f32 %v592, %v2346
      %2348 = vmatmul.bf16.gmra.mxu0 %v846
      %v2349 = vpop.f32.mrf.mxu0
      %v2350 = vadd.f32 %v592, %v2349
      %v2351 = vpop.f32.mrf.mxu0
      %v2352 = vadd.f32 %v592, %v2351
      %2353 = vmatmul.bf16.gmra.mxu0 %v850
      %v2354 = vpop.f32.mrf.mxu0
      %v2355 = vadd.f32 %v592, %v2354
      %v2356 = vpop.f32.mrf.mxu0
      %v2357 = vadd.f32 %v592, %v2356
      %2358 = vdwg.mxu0
      %2359 = vmatpush.bf16.msra.mxu0 %v1364
      %2360 = vmatpush.bf16.msra.mxu0 %v1360
      %2361 = vmatpush.bf16.msra.mxu0 %v1356
      %2362 = vmatpush.bf16.msra.mxu0 %v1352
      %2363 = vmatpush.bf16.msra.mxu0 %v1348
      %2364 = vmatpush.bf16.msra.mxu0 %v1344
      %2365 = vmatpush.bf16.msra.mxu0 %v1340
      %2366 = vmatpush.bf16.msra.mxu0 %v1336
      %2367 = vmatmul.bf16.gmra.mxu0 %v791
      %v2368 = vpop.f32.mrf.mxu0
      %v2369 = vadd.f32 %v2280, %v2368
      %v2370 = vpop.f32.mrf.mxu0
      %v2371 = vadd.f32 %v2282, %v2370
      %2372 = vmatmul.bf16.gmra.mxu0 %v795
      %v2373 = vpop.f32.mrf.mxu0
      %v2374 = vadd.f32 %v2285, %v2373
      %v2375 = vpop.f32.mrf.mxu0
      %v2376 = vadd.f32 %v2287, %v2375
      %2377 = vmatmul.bf16.gmra.mxu0 %v799
      %v2378 = vpop.f32.mrf.mxu0
      %v2379 = vadd.f32 %v2290, %v2378
      %v2380 = vpop.f32.mrf.mxu0
      %v2381 = vadd.f32 %v2292, %v2380
      %2382 = vmatmul.bf16.gmra.mxu0 %v803
      %v2383 = vpop.f32.mrf.mxu0
      %v2384 = vadd.f32 %v2295, %v2383
      %v2385 = vpop.f32.mrf.mxu0
      %v2386 = vadd.f32 %v2297, %v2385
      %2387 = vmatmul.bf16.gmra.mxu0 %v807
      %v2388 = vpop.f32.mrf.mxu0
      %v2389 = vadd.f32 %v2300, %v2388
      %v2390 = vpop.f32.mrf.mxu0
      %v2391 = vadd.f32 %v2302, %v2390
      %2392 = vmatmul.bf16.gmra.mxu0 %v811
      %v2393 = vpop.f32.mrf.mxu0
      %v2394 = vadd.f32 %v2305, %v2393
      %v2395 = vpop.f32.mrf.mxu0
      %v2396 = vadd.f32 %v2307, %v2395
      %2397 = vmatmul.bf16.gmra.mxu0 %v815
      %v2398 = vpop.f32.mrf.mxu0
      %v2399 = vadd.f32 %v2310, %v2398
      %v2400 = vpop.f32.mrf.mxu0
      %v2401 = vadd.f32 %v2312, %v2400
      %2402 = vmatmul.bf16.gmra.mxu0 %v819
      %v2403 = vpop.f32.mrf.mxu0
      %v2404 = vadd.f32 %v2315, %v2403
      %v2405 = vpop.f32.mrf.mxu0
      %v2406 = vadd.f32 %v2317, %v2405
      %2407 = vmatmul.bf16.gmra.mxu0 %v823
      %v2408 = vpop.f32.mrf.mxu0
      %v2409 = vadd.f32 %v2320, %v2408
      %v2410 = vpop.f32.mrf.mxu0
      %v2411 = vadd.f32 %v2322, %v2410
      %2412 = vmatmul.bf16.gmra.mxu0 %v827
      %v2413 = vpop.f32.mrf.mxu0
      %v2414 = vadd.f32 %v2325, %v2413
      %v2415 = vpop.f32.mrf.mxu0
      %v2416 = vadd.f32 %v2327, %v2415
      %2417 = vmatmul.bf16.gmra.mxu0 %v831
      %v2418 = vpop.f32.mrf.mxu0
      %v2419 = vadd.f32 %v2330, %v2418
      %v2420 = vpop.f32.mrf.mxu0
      %v2421 = vadd.f32 %v2332, %v2420
      %2422 = vmatmul.bf16.gmra.mxu0 %v835
      %v2423 = vpop.f32.mrf.mxu0
      %v2424 = vadd.f32 %v2335, %v2423
      %v2425 = vpop.f32.mrf.mxu0
      %v2426 = vadd.f32 %v2337, %v2425
      %2427 = vmatmul.bf16.gmra.mxu0 %v839
      %v2428 = vpop.f32.mrf.mxu0
      %v2429 = vadd.f32 %v2340, %v2428
      %v2430 = vpop.f32.mrf.mxu0
      %v2431 = vadd.f32 %v2342, %v2430
      %2432 = vmatmul.bf16.gmra.mxu0 %v843
      %v2433 = vpop.f32.mrf.mxu0
      %v2434 = vadd.f32 %v2345, %v2433
      %v2435 = vpop.f32.mrf.mxu0
      %v2436 = vadd.f32 %v2347, %v2435
      %2437 = vmatmul.bf16.gmra.mxu0 %v847
      %v2438 = vpop.f32.mrf.mxu0
      %v2439 = vadd.f32 %v2350, %v2438
      %v2440 = vpop.f32.mrf.mxu0
      %v2441 = vadd.f32 %v2352, %v2440
      %2442 = vmatmul.bf16.gmra.mxu0 %v851
      %v2443 = vpop.f32.mrf.mxu0
      %v2444 = vadd.f32 %v2355, %v2443
      %v2445 = vpop.f32.mrf.mxu0
      %v2446 = vadd.f32 %v2357, %v2445
      %2447 = vdwg.mxu0
      %2448 = vmatpush.bf16.msra.mxu0 %v1396
      %2449 = vmatpush.bf16.msra.mxu0 %v1392
      %2450 = vmatpush.bf16.msra.mxu0 %v1388
      %2451 = vmatpush.bf16.msra.mxu0 %v1384
      %2452 = vmatpush.bf16.msra.mxu0 %v1380
      %2453 = vmatpush.bf16.msra.mxu0 %v1376
      %2454 = vmatpush.bf16.msra.mxu0 %v1372
      %2455 = vmatpush.bf16.msra.mxu0 %v1368
      %2456 = vmatmul.bf16.gmra.mxu0 %v792
      %v2457 = vpop.f32.mrf.mxu0
      %v2458 = vadd.f32 %v2369, %v2457
      %v2459 = vpop.f32.mrf.mxu0
      %v2460 = vadd.f32 %v2371, %v2459
      %2461 = vmatmul.bf16.gmra.mxu0 %v796
      %v2462 = vpop.f32.mrf.mxu0
      %v2463 = vadd.f32 %v2374, %v2462
      %v2464 = vpop.f32.mrf.mxu0
      %v2465 = vadd.f32 %v2376, %v2464
      %2466 = vmatmul.bf16.gmra.mxu0 %v800
      %v2467 = vpop.f32.mrf.mxu0
      %v2468 = vadd.f32 %v2379, %v2467
      %v2469 = vpop.f32.mrf.mxu0
      %v2470 = vadd.f32 %v2381, %v2469
      %2471 = vmatmul.bf16.gmra.mxu0 %v804
      %v2472 = vpop.f32.mrf.mxu0
      %v2473 = vadd.f32 %v2384, %v2472
      %v2474 = vpop.f32.mrf.mxu0
      %v2475 = vadd.f32 %v2386, %v2474
      %2476 = vmatmul.bf16.gmra.mxu0 %v808
      %v2477 = vpop.f32.mrf.mxu0
      %v2478 = vadd.f32 %v2389, %v2477
      %v2479 = vpop.f32.mrf.mxu0
      %v2480 = vadd.f32 %v2391, %v2479
      %2481 = vmatmul.bf16.gmra.mxu0 %v812
      %v2482 = vpop.f32.mrf.mxu0
      %v2483 = vadd.f32 %v2394, %v2482
      %v2484 = vpop.f32.mrf.mxu0
      %v2485 = vadd.f32 %v2396, %v2484
      %2486 = vmatmul.bf16.gmra.mxu0 %v816
      %v2487 = vpop.f32.mrf.mxu0
      %v2488 = vadd.f32 %v2399, %v2487
      %v2489 = vpop.f32.mrf.mxu0
      %v2490 = vadd.f32 %v2401, %v2489
      %2491 = vmatmul.bf16.gmra.mxu0 %v820
      %v2492 = vpop.f32.mrf.mxu0
      %v2493 = vadd.f32 %v2404, %v2492
      %v2494 = vpop.f32.mrf.mxu0
      %v2495 = vadd.f32 %v2406, %v2494
      %2496 = vmatmul.bf16.gmra.mxu0 %v824
      %v2497 = vpop.f32.mrf.mxu0
      %v2498 = vadd.f32 %v2409, %v2497
      %v2499 = vpop.f32.mrf.mxu0
      %v2500 = vadd.f32 %v2411, %v2499
      %2501 = vmatmul.bf16.gmra.mxu0 %v828
      %v2502 = vpop.f32.mrf.mxu0
      %v2503 = vadd.f32 %v2414, %v2502
      %v2504 = vpop.f32.mrf.mxu0
      %v2505 = vadd.f32 %v2416, %v2504
      %2506 = vmatmul.bf16.gmra.mxu0 %v832
      %v2507 = vpop.f32.mrf.mxu0
      %v2508 = vadd.f32 %v2419, %v2507
      %v2509 = vpop.f32.mrf.mxu0
      %v2510 = vadd.f32 %v2421, %v2509
      %2511 = vmatmul.bf16.gmra.mxu0 %v836
      %v2512 = vpop.f32.mrf.mxu0
      %v2513 = vadd.f32 %v2424, %v2512
      %v2514 = vpop.f32.mrf.mxu0
      %v2515 = vadd.f32 %v2426, %v2514
      %2516 = vmatmul.bf16.gmra.mxu0 %v840
      %v2517 = vpop.f32.mrf.mxu0
      %v2518 = vadd.f32 %v2429, %v2517
      %v2519 = vpop.f32.mrf.mxu0
      %v2520 = vadd.f32 %v2431, %v2519
      %2521 = vmatmul.bf16.gmra.mxu0 %v844
      %v2522 = vpop.f32.mrf.mxu0
      %v2523 = vadd.f32 %v2434, %v2522
      %v2524 = vpop.f32.mrf.mxu0
      %v2525 = vadd.f32 %v2436, %v2524
      %2526 = vmatmul.bf16.gmra.mxu0 %v848
      %v2527 = vpop.f32.mrf.mxu0
      %v2528 = vadd.f32 %v2439, %v2527
      %v2529 = vpop.f32.mrf.mxu0
      %v2530 = vadd.f32 %v2441, %v2529
      %2531 = vmatmul.bf16.gmra.mxu0 %v852
      %v2532 = vpop.f32.mrf.mxu0
      %v2533 = vadd.f32 %v2444, %v2532
      %v2534 = vpop.f32.mrf.mxu0
      %v2535 = vadd.f32 %v2446, %v2534
      %2536 = vdwg.mxu0
      %2537 = vmatpush.bf16.msra.mxu0 %v1428
      %2538 = vmatpush.bf16.msra.mxu0 %v1424
      %2539 = vmatpush.bf16.msra.mxu0 %v1420
      %2540 = vmatpush.bf16.msra.mxu0 %v1416
      %2541 = vmatpush.bf16.msra.mxu0 %v1412
      %2542 = vmatpush.bf16.msra.mxu0 %v1408
      %2543 = vmatpush.bf16.msra.mxu0 %v1404
      %2544 = vmatpush.bf16.msra.mxu0 %v1400
      %2545 = vmatmul.bf16.gmra.mxu0 %v793
      %v2546 = vpop.f32.mrf.mxu0
      %v2547 = vadd.f32 %v2458, %v2546
      %v2548 = vpop.f32.mrf.mxu0
      %v2549 = vadd.f32 %v2460, %v2548
      %2550 = vmatmul.bf16.gmra.mxu0 %v797
      %v2551 = vpop.f32.mrf.mxu0
      %v2552 = vadd.f32 %v2463, %v2551
      %v2553 = vpop.f32.mrf.mxu0
      %v2554 = vadd.f32 %v2465, %v2553
      %2555 = vmatmul.bf16.gmra.mxu0 %v801
      %v2556 = vpop.f32.mrf.mxu0
      %v2557 = vadd.f32 %v2468, %v2556
      %v2558 = vpop.f32.mrf.mxu0
      %v2559 = vadd.f32 %v2470, %v2558
      %2560 = vmatmul.bf16.gmra.mxu0 %v805
      %v2561 = vpop.f32.mrf.mxu0
      %v2562 = vadd.f32 %v2473, %v2561
      %v2563 = vpop.f32.mrf.mxu0
      %v2564 = vadd.f32 %v2475, %v2563
      %2565 = vmatmul.bf16.gmra.mxu0 %v809
      %v2566 = vpop.f32.mrf.mxu0
      %v2567 = vadd.f32 %v2478, %v2566
      %v2568 = vpop.f32.mrf.mxu0
      %v2569 = vadd.f32 %v2480, %v2568
      %2570 = vmatmul.bf16.gmra.mxu0 %v813
      %v2571 = vpop.f32.mrf.mxu0
      %v2572 = vadd.f32 %v2483, %v2571
      %v2573 = vpop.f32.mrf.mxu0
      %v2574 = vadd.f32 %v2485, %v2573
      %2575 = vmatmul.bf16.gmra.mxu0 %v817
      %v2576 = vpop.f32.mrf.mxu0
      %v2577 = vadd.f32 %v2488, %v2576
      %v2578 = vpop.f32.mrf.mxu0
      %v2579 = vadd.f32 %v2490, %v2578
      %2580 = vmatmul.bf16.gmra.mxu0 %v821
      %v2581 = vpop.f32.mrf.mxu0
      %v2582 = vadd.f32 %v2493, %v2581
      %v2583 = vpop.f32.mrf.mxu0
      %v2584 = vadd.f32 %v2495, %v2583
      %2585 = vmatmul.bf16.gmra.mxu0 %v825
      %v2586 = vpop.f32.mrf.mxu0
      %v2587 = vadd.f32 %v2498, %v2586
      %v2588 = vpop.f32.mrf.mxu0
      %v2589 = vadd.f32 %v2500, %v2588
      %2590 = vmatmul.bf16.gmra.mxu0 %v829
      %v2591 = vpop.f32.mrf.mxu0
      %v2592 = vadd.f32 %v2503, %v2591
      %v2593 = vpop.f32.mrf.mxu0
      %v2594 = vadd.f32 %v2505, %v2593
      %2595 = vmatmul.bf16.gmra.mxu0 %v833
      %v2596 = vpop.f32.mrf.mxu0
      %v2597 = vadd.f32 %v2508, %v2596
      %v2598 = vpop.f32.mrf.mxu0
      %v2599 = vadd.f32 %v2510, %v2598
      %2600 = vmatmul.bf16.gmra.mxu0 %v837
      %v2601 = vpop.f32.mrf.mxu0
      %v2602 = vadd.f32 %v2513, %v2601
      %v2603 = vpop.f32.mrf.mxu0
      %v2604 = vadd.f32 %v2515, %v2603
      %2605 = vmatmul.bf16.gmra.mxu0 %v841
      %v2606 = vpop.f32.mrf.mxu0
      %v2607 = vadd.f32 %v2518, %v2606
      %v2608 = vpop.f32.mrf.mxu0
      %v2609 = vadd.f32 %v2520, %v2608
      %2610 = vmatmul.bf16.gmra.mxu0 %v845
      %v2611 = vpop.f32.mrf.mxu0
      %v2612 = vadd.f32 %v2523, %v2611
      %v2613 = vpop.f32.mrf.mxu0
      %v2614 = vadd.f32 %v2525, %v2613
      %2615 = vmatmul.bf16.gmra.mxu0 %v849
      %v2616 = vpop.f32.mrf.mxu0
      %v2617 = vadd.f32 %v2528, %v2616
      %v2618 = vpop.f32.mrf.mxu0
      %v2619 = vadd.f32 %v2530, %v2618
      %2620 = vmatmul.bf16.gmra.mxu0 %v853
      %v2621 = vpop.f32.mrf.mxu0
      %v2622 = vadd.f32 %v2533, %v2621
      %v2623 = vpop.f32.mrf.mxu0
      %v2624 = vadd.f32 %v2535, %v2623
      %2625 = vdwg.mxu0
      %2626 = vmatpush.bf16.msra.mxu0 %v1333
      %2627 = vmatpush.bf16.msra.mxu0 %v1329
      %2628 = vmatpush.bf16.msra.mxu0 %v1325
      %2629 = vmatpush.bf16.msra.mxu0 %v1321
      %2630 = vmatpush.bf16.msra.mxu0 %v1317
      %2631 = vmatpush.bf16.msra.mxu0 %v1313
      %2632 = vmatpush.bf16.msra.mxu0 %v1309
      %2633 = vmatpush.bf16.msra.mxu0 %v1305
      %2634 = vmatmul.bf16.gmra.mxu0 %v790
      %v2635 = vpop.f32.mrf.mxu0
      %v2636 = vadd.f32 %v593, %v2635
      %v2637 = vpop.f32.mrf.mxu0
      %v2638 = vadd.f32 %v593, %v2637
      %2639 = vmatmul.bf16.gmra.mxu0 %v794
      %v2640 = vpop.f32.mrf.mxu0
      %v2641 = vadd.f32 %v593, %v2640
      %v2642 = vpop.f32.mrf.mxu0
      %v2643 = vadd.f32 %v593, %v2642
      %2644 = vmatmul.bf16.gmra.mxu0 %v798
      %v2645 = vpop.f32.mrf.mxu0
      %v2646 = vadd.f32 %v593, %v2645
      %v2647 = vpop.f32.mrf.mxu0
      %v2648 = vadd.f32 %v593, %v2647
      %2649 = vmatmul.bf16.gmra.mxu0 %v802
      %v2650 = vpop.f32.mrf.mxu0
      %v2651 = vadd.f32 %v593, %v2650
      %v2652 = vpop.f32.mrf.mxu0
      %v2653 = vadd.f32 %v593, %v2652
      %2654 = vmatmul.bf16.gmra.mxu0 %v806
      %v2655 = vpop.f32.mrf.mxu0
      %v2656 = vadd.f32 %v593, %v2655
      %v2657 = vpop.f32.mrf.mxu0
      %v2658 = vadd.f32 %v593, %v2657
      %2659 = vmatmul.bf16.gmra.mxu0 %v810
      %v2660 = vpop.f32.mrf.mxu0
      %v2661 = vadd.f32 %v593, %v2660
      %v2662 = vpop.f32.mrf.mxu0
      %v2663 = vadd.f32 %v593, %v2662
      %2664 = vmatmul.bf16.gmra.mxu0 %v814
      %v2665 = vpop.f32.mrf.mxu0
      %v2666 = vadd.f32 %v593, %v2665
      %v2667 = vpop.f32.mrf.mxu0
      %v2668 = vadd.f32 %v593, %v2667
      %2669 = vmatmul.bf16.gmra.mxu0 %v818
      %v2670 = vpop.f32.mrf.mxu0
      %v2671 = vadd.f32 %v593, %v2670
      %v2672 = vpop.f32.mrf.mxu0
      %v2673 = vadd.f32 %v593, %v2672
      %2674 = vmatmul.bf16.gmra.mxu0 %v822
      %v2675 = vpop.f32.mrf.mxu0
      %v2676 = vadd.f32 %v593, %v2675
      %v2677 = vpop.f32.mrf.mxu0
      %v2678 = vadd.f32 %v593, %v2677
      %2679 = vmatmul.bf16.gmra.mxu0 %v826
      %v2680 = vpop.f32.mrf.mxu0
      %v2681 = vadd.f32 %v593, %v2680
      %v2682 = vpop.f32.mrf.mxu0
      %v2683 = vadd.f32 %v593, %v2682
      %2684 = vmatmul.bf16.gmra.mxu0 %v830
      %v2685 = vpop.f32.mrf.mxu0
      %v2686 = vadd.f32 %v593, %v2685
      %v2687 = vpop.f32.mrf.mxu0
      %v2688 = vadd.f32 %v593, %v2687
      %2689 = vmatmul.bf16.gmra.mxu0 %v834
      %v2690 = vpop.f32.mrf.mxu0
      %v2691 = vadd.f32 %v593, %v2690
      %v2692 = vpop.f32.mrf.mxu0
      %v2693 = vadd.f32 %v593, %v2692
      %2694 = vmatmul.bf16.gmra.mxu0 %v838
      %v2695 = vpop.f32.mrf.mxu0
      %v2696 = vadd.f32 %v593, %v2695
      %v2697 = vpop.f32.mrf.mxu0
      %v2698 = vadd.f32 %v593, %v2697
      %2699 = vmatmul.bf16.gmra.mxu0 %v842
      %v2700 = vpop.f32.mrf.mxu0
      %v2701 = vadd.f32 %v593, %v2700
      %v2702 = vpop.f32.mrf.mxu0
      %v2703 = vadd.f32 %v593, %v2702
      %2704 = vmatmul.bf16.gmra.mxu0 %v846
      %v2705 = vpop.f32.mrf.mxu0
      %v2706 = vadd.f32 %v593, %v2705
      %v2707 = vpop.f32.mrf.mxu0
      %v2708 = vadd.f32 %v593, %v2707
      %2709 = vmatmul.bf16.gmra.mxu0 %v850
      %v2710 = vpop.f32.mrf.mxu0
      %v2711 = vadd.f32 %v593, %v2710
      %v2712 = vpop.f32.mrf.mxu0
      %v2713 = vadd.f32 %v593, %v2712
      %2714 = vdwg.mxu0
      %2715 = vmatpush.bf16.msra.mxu0 %v1365
      %2716 = vmatpush.bf16.msra.mxu0 %v1361
      %2717 = vmatpush.bf16.msra.mxu0 %v1357
      %2718 = vmatpush.bf16.msra.mxu0 %v1353
      %2719 = vmatpush.bf16.msra.mxu0 %v1349
      %2720 = vmatpush.bf16.msra.mxu0 %v1345
      %2721 = vmatpush.bf16.msra.mxu0 %v1341
      %2722 = vmatpush.bf16.msra.mxu0 %v1337
      %2723 = vmatmul.bf16.gmra.mxu0 %v791
      %v2724 = vpop.f32.mrf.mxu0
      %v2725 = vadd.f32 %v2636, %v2724
      %v2726 = vpop.f32.mrf.mxu0
      %v2727 = vadd.f32 %v2638, %v2726
      %2728 = vmatmul.bf16.gmra.mxu0 %v795
      %v2729 = vpop.f32.mrf.mxu0
      %v2730 = vadd.f32 %v2641, %v2729
      %v2731 = vpop.f32.mrf.mxu0
      %v2732 = vadd.f32 %v2643, %v2731
      %2733 = vmatmul.bf16.gmra.mxu0 %v799
      %v2734 = vpop.f32.mrf.mxu0
      %v2735 = vadd.f32 %v2646, %v2734
      %v2736 = vpop.f32.mrf.mxu0
      %v2737 = vadd.f32 %v2648, %v2736
      %2738 = vmatmul.bf16.gmra.mxu0 %v803
      %v2739 = vpop.f32.mrf.mxu0
      %v2740 = vadd.f32 %v2651, %v2739
      %v2741 = vpop.f32.mrf.mxu0
      %v2742 = vadd.f32 %v2653, %v2741
      %2743 = vmatmul.bf16.gmra.mxu0 %v807
      %v2744 = vpop.f32.mrf.mxu0
      %v2745 = vadd.f32 %v2656, %v2744
      %v2746 = vpop.f32.mrf.mxu0
      %v2747 = vadd.f32 %v2658, %v2746
      %2748 = vmatmul.bf16.gmra.mxu0 %v811
      %v2749 = vpop.f32.mrf.mxu0
      %v2750 = vadd.f32 %v2661, %v2749
      %v2751 = vpop.f32.mrf.mxu0
      %v2752 = vadd.f32 %v2663, %v2751
      %2753 = vmatmul.bf16.gmra.mxu0 %v815
      %v2754 = vpop.f32.mrf.mxu0
      %v2755 = vadd.f32 %v2666, %v2754
      %v2756 = vpop.f32.mrf.mxu0
      %v2757 = vadd.f32 %v2668, %v2756
      %2758 = vmatmul.bf16.gmra.mxu0 %v819
      %v2759 = vpop.f32.mrf.mxu0
      %v2760 = vadd.f32 %v2671, %v2759
      %v2761 = vpop.f32.mrf.mxu0
      %v2762 = vadd.f32 %v2673, %v2761
      %2763 = vmatmul.bf16.gmra.mxu0 %v823
      %v2764 = vpop.f32.mrf.mxu0
      %v2765 = vadd.f32 %v2676, %v2764
      %v2766 = vpop.f32.mrf.mxu0
      %v2767 = vadd.f32 %v2678, %v2766
      %2768 = vmatmul.bf16.gmra.mxu0 %v827
      %v2769 = vpop.f32.mrf.mxu0
      %v2770 = vadd.f32 %v2681, %v2769
      %v2771 = vpop.f32.mrf.mxu0
      %v2772 = vadd.f32 %v2683, %v2771
      %2773 = vmatmul.bf16.gmra.mxu0 %v831
      %v2774 = vpop.f32.mrf.mxu0
      %v2775 = vadd.f32 %v2686, %v2774
      %v2776 = vpop.f32.mrf.mxu0
      %v2777 = vadd.f32 %v2688, %v2776
      %2778 = vmatmul.bf16.gmra.mxu0 %v835
      %v2779 = vpop.f32.mrf.mxu0
      %v2780 = vadd.f32 %v2691, %v2779
      %v2781 = vpop.f32.mrf.mxu0
      %v2782 = vadd.f32 %v2693, %v2781
      %2783 = vmatmul.bf16.gmra.mxu0 %v839
      %v2784 = vpop.f32.mrf.mxu0
      %v2785 = vadd.f32 %v2696, %v2784
      %v2786 = vpop.f32.mrf.mxu0
      %v2787 = vadd.f32 %v2698, %v2786
      %2788 = vmatmul.bf16.gmra.mxu0 %v843
      %v2789 = vpop.f32.mrf.mxu0
      %v2790 = vadd.f32 %v2701, %v2789
      %v2791 = vpop.f32.mrf.mxu0
      %v2792 = vadd.f32 %v2703, %v2791
      %2793 = vmatmul.bf16.gmra.mxu0 %v847
      %v2794 = vpop.f32.mrf.mxu0
      %v2795 = vadd.f32 %v2706, %v2794
      %v2796 = vpop.f32.mrf.mxu0
      %v2797 = vadd.f32 %v2708, %v2796
      %2798 = vmatmul.bf16.gmra.mxu0 %v851
      %v2799 = vpop.f32.mrf.mxu0
      %v2800 = vadd.f32 %v2711, %v2799
      %v2801 = vpop.f32.mrf.mxu0
      %v2802 = vadd.f32 %v2713, %v2801
      %2803 = vdwg.mxu0
      %2804 = vmatpush.bf16.msra.mxu0 %v1397
      %2805 = vmatpush.bf16.msra.mxu0 %v1393
      %2806 = vmatpush.bf16.msra.mxu0 %v1389
      %2807 = vmatpush.bf16.msra.mxu0 %v1385
      %2808 = vmatpush.bf16.msra.mxu0 %v1381
      %2809 = vmatpush.bf16.msra.mxu0 %v1377
      %2810 = vmatpush.bf16.msra.mxu0 %v1373
      %2811 = vmatpush.bf16.msra.mxu0 %v1369
      %2812 = vmatmul.bf16.gmra.mxu0 %v792
      %v2813 = vpop.f32.mrf.mxu0
      %v2814 = vadd.f32 %v2725, %v2813
      %v2815 = vpop.f32.mrf.mxu0
      %v2816 = vadd.f32 %v2727, %v2815
      %2817 = vmatmul.bf16.gmra.mxu0 %v796
      %v2818 = vpop.f32.mrf.mxu0
      %v2819 = vadd.f32 %v2730, %v2818
      %v2820 = vpop.f32.mrf.mxu0
      %v2821 = vadd.f32 %v2732, %v2820
      %2822 = vmatmul.bf16.gmra.mxu0 %v800
      %v2823 = vpop.f32.mrf.mxu0
      %v2824 = vadd.f32 %v2735, %v2823
      %v2825 = vpop.f32.mrf.mxu0
      %v2826 = vadd.f32 %v2737, %v2825
      %2827 = vmatmul.bf16.gmra.mxu0 %v804
      %v2828 = vpop.f32.mrf.mxu0
      %v2829 = vadd.f32 %v2740, %v2828
      %v2830 = vpop.f32.mrf.mxu0
      %v2831 = vadd.f32 %v2742, %v2830
      %2832 = vmatmul.bf16.gmra.mxu0 %v808
      %v2833 = vpop.f32.mrf.mxu0
      %v2834 = vadd.f32 %v2745, %v2833
      %v2835 = vpop.f32.mrf.mxu0
      %v2836 = vadd.f32 %v2747, %v2835
      %2837 = vmatmul.bf16.gmra.mxu0 %v812
      %v2838 = vpop.f32.mrf.mxu0
      %v2839 = vadd.f32 %v2750, %v2838
      %v2840 = vpop.f32.mrf.mxu0
      %v2841 = vadd.f32 %v2752, %v2840
      %2842 = vmatmul.bf16.gmra.mxu0 %v816
      %v2843 = vpop.f32.mrf.mxu0
      %v2844 = vadd.f32 %v2755, %v2843
      %v2845 = vpop.f32.mrf.mxu0
      %v2846 = vadd.f32 %v2757, %v2845
      %2847 = vmatmul.bf16.gmra.mxu0 %v820
      %v2848 = vpop.f32.mrf.mxu0
      %v2849 = vadd.f32 %v2760, %v2848
      %v2850 = vpop.f32.mrf.mxu0
      %v2851 = vadd.f32 %v2762, %v2850
      %2852 = vmatmul.bf16.gmra.mxu0 %v824
      %v2853 = vpop.f32.mrf.mxu0
      %v2854 = vadd.f32 %v2765, %v2853
      %v2855 = vpop.f32.mrf.mxu0
      %v2856 = vadd.f32 %v2767, %v2855
      %2857 = vmatmul.bf16.gmra.mxu0 %v828
      %v2858 = vpop.f32.mrf.mxu0
      %v2859 = vadd.f32 %v2770, %v2858
      %v2860 = vpop.f32.mrf.mxu0
      %v2861 = vadd.f32 %v2772, %v2860
      %2862 = vmatmul.bf16.gmra.mxu0 %v832
      %v2863 = vpop.f32.mrf.mxu0
      %v2864 = vadd.f32 %v2775, %v2863
      %v2865 = vpop.f32.mrf.mxu0
      %v2866 = vadd.f32 %v2777, %v2865
      %2867 = vmatmul.bf16.gmra.mxu0 %v836
      %v2868 = vpop.f32.mrf.mxu0
      %v2869 = vadd.f32 %v2780, %v2868
      %v2870 = vpop.f32.mrf.mxu0
      %v2871 = vadd.f32 %v2782, %v2870
      %2872 = vmatmul.bf16.gmra.mxu0 %v840
      %v2873 = vpop.f32.mrf.mxu0
      %v2874 = vadd.f32 %v2785, %v2873
      %v2875 = vpop.f32.mrf.mxu0
      %v2876 = vadd.f32 %v2787, %v2875
      %2877 = vmatmul.bf16.gmra.mxu0 %v844
      %v2878 = vpop.f32.mrf.mxu0
      %v2879 = vadd.f32 %v2790, %v2878
      %v2880 = vpop.f32.mrf.mxu0
      %v2881 = vadd.f32 %v2792, %v2880
      %2882 = vmatmul.bf16.gmra.mxu0 %v848
      %v2883 = vpop.f32.mrf.mxu0
      %v2884 = vadd.f32 %v2795, %v2883
      %v2885 = vpop.f32.mrf.mxu0
      %v2886 = vadd.f32 %v2797, %v2885
      %2887 = vmatmul.bf16.gmra.mxu0 %v852
      %v2888 = vpop.f32.mrf.mxu0
      %v2889 = vadd.f32 %v2800, %v2888
      %v2890 = vpop.f32.mrf.mxu0
      %v2891 = vadd.f32 %v2802, %v2890
      %2892 = vdwg.mxu0
      %2893 = vmatpush.bf16.msra.mxu0 %v1429
      %2894 = vmatpush.bf16.msra.mxu0 %v1425
      %2895 = vmatpush.bf16.msra.mxu0 %v1421
      %2896 = vmatpush.bf16.msra.mxu0 %v1417
      %2897 = vmatpush.bf16.msra.mxu0 %v1413
      %2898 = vmatpush.bf16.msra.mxu0 %v1409
      %2899 = vmatpush.bf16.msra.mxu0 %v1405
      %2900 = vmatpush.bf16.msra.mxu0 %v1401
      %2901 = vmatmul.bf16.gmra.mxu0 %v793
      %v2902 = vpop.f32.mrf.mxu0
      %v2903 = vadd.f32 %v2814, %v2902
      %v2904 = vpop.f32.mrf.mxu0
      %v2905 = vadd.f32 %v2816, %v2904
      %2906 = vmatmul.bf16.gmra.mxu0 %v797
      %v2907 = vpop.f32.mrf.mxu0
      %v2908 = vadd.f32 %v2819, %v2907
      %v2909 = vpop.f32.mrf.mxu0
      %v2910 = vadd.f32 %v2821, %v2909
      %2911 = vmatmul.bf16.gmra.mxu0 %v801
      %v2912 = vpop.f32.mrf.mxu0
      %v2913 = vadd.f32 %v2824, %v2912
      %v2914 = vpop.f32.mrf.mxu0
      %v2915 = vadd.f32 %v2826, %v2914
      %2916 = vmatmul.bf16.gmra.mxu0 %v805
      %v2917 = vpop.f32.mrf.mxu0
      %v2918 = vadd.f32 %v2829, %v2917
      %v2919 = vpop.f32.mrf.mxu0
      %v2920 = vadd.f32 %v2831, %v2919
      %2921 = vmatmul.bf16.gmra.mxu0 %v809
      %v2922 = vpop.f32.mrf.mxu0
      %v2923 = vadd.f32 %v2834, %v2922
      %v2924 = vpop.f32.mrf.mxu0
      %v2925 = vadd.f32 %v2836, %v2924
      %2926 = vmatmul.bf16.gmra.mxu0 %v813
      %v2927 = vpop.f32.mrf.mxu0
      %v2928 = vadd.f32 %v2839, %v2927
      %v2929 = vpop.f32.mrf.mxu0
      %v2930 = vadd.f32 %v2841, %v2929
      %2931 = vmatmul.bf16.gmra.mxu0 %v817
      %v2932 = vpop.f32.mrf.mxu0
      %v2933 = vadd.f32 %v2844, %v2932
      %v2934 = vpop.f32.mrf.mxu0
      %v2935 = vadd.f32 %v2846, %v2934
      %2936 = vmatmul.bf16.gmra.mxu0 %v821
      %v2937 = vpop.f32.mrf.mxu0
      %v2938 = vadd.f32 %v2849, %v2937
      %v2939 = vpop.f32.mrf.mxu0
      %v2940 = vadd.f32 %v2851, %v2939
      %2941 = vmatmul.bf16.gmra.mxu0 %v825
      %v2942 = vpop.f32.mrf.mxu0
      %v2943 = vadd.f32 %v2854, %v2942
      %v2944 = vpop.f32.mrf.mxu0
      %v2945 = vadd.f32 %v2856, %v2944
      %2946 = vmatmul.bf16.gmra.mxu0 %v829
      %v2947 = vpop.f32.mrf.mxu0
      %v2948 = vadd.f32 %v2859, %v2947
      %v2949 = vpop.f32.mrf.mxu0
      %v2950 = vadd.f32 %v2861, %v2949
      %2951 = vmatmul.bf16.gmra.mxu0 %v833
      %v2952 = vpop.f32.mrf.mxu0
      %v2953 = vadd.f32 %v2864, %v2952
      %v2954 = vpop.f32.mrf.mxu0
      %v2955 = vadd.f32 %v2866, %v2954
      %2956 = vmatmul.bf16.gmra.mxu0 %v837
      %v2957 = vpop.f32.mrf.mxu0
      %v2958 = vadd.f32 %v2869, %v2957
      %v2959 = vpop.f32.mrf.mxu0
      %v2960 = vadd.f32 %v2871, %v2959
      %2961 = vmatmul.bf16.gmra.mxu0 %v841
      %v2962 = vpop.f32.mrf.mxu0
      %v2963 = vadd.f32 %v2874, %v2962
      %v2964 = vpop.f32.mrf.mxu0
      %v2965 = vadd.f32 %v2876, %v2964
      %2966 = vmatmul.bf16.gmra.mxu0 %v845
      %v2967 = vpop.f32.mrf.mxu0
      %v2968 = vadd.f32 %v2879, %v2967
      %v2969 = vpop.f32.mrf.mxu0
      %v2970 = vadd.f32 %v2881, %v2969
      %2971 = vmatmul.bf16.gmra.mxu0 %v849
      %v2972 = vpop.f32.mrf.mxu0
      %v2973 = vadd.f32 %v2884, %v2972
      %v2974 = vpop.f32.mrf.mxu0
      %v2975 = vadd.f32 %v2886, %v2974
      %2976 = vmatmul.bf16.gmra.mxu0 %v853
      %v2977 = vpop.f32.mrf.mxu0
      %v2978 = vadd.f32 %v2889, %v2977
      %v2979 = vpop.f32.mrf.mxu0
      %v2980 = vadd.f32 %v2891, %v2979
      %2981 = vdwg.mxu0
      %v2982 = vmax.f32 %v1835, 0.0
      %v2983 = vmax.f32 %v2191, 0.0
      %v2984 = vmax.f32 %v2547, 0.0
      %v2985 = vmax.f32 %v2903, 0.0
      %v2986 = vmax.f32 %v1837, 0.0
      %v2987 = vmax.f32 %v2193, 0.0
      %v2988 = vmax.f32 %v2549, 0.0
      %v2989 = vmax.f32 %v2905, 0.0
      %v2990 = vmax.f32 %v1840, 0.0
      %v2991 = vmax.f32 %v2196, 0.0
      %v2992 = vmax.f32 %v2552, 0.0
      %v2993 = vmax.f32 %v2908, 0.0
      %v2994 = vmax.f32 %v1842, 0.0
      %v2995 = vmax.f32 %v2198, 0.0
      %v2996 = vmax.f32 %v2554, 0.0
      %v2997 = vmax.f32 %v2910, 0.0
      %v2998 = vmax.f32 %v1845, 0.0
      %v2999 = vmax.f32 %v2201, 0.0
      %v3000 = vmax.f32 %v2557, 0.0
      %v3001 = vmax.f32 %v2913, 0.0
      %v3002 = vmax.f32 %v1847, 0.0
      %v3003 = vmax.f32 %v2203, 0.0
      %v3004 = vmax.f32 %v2559, 0.0
      %v3005 = vmax.f32 %v2915, 0.0
      %v3006 = vmax.f32 %v1850, 0.0
      %v3007 = vmax.f32 %v2206, 0.0
      %v3008 = vmax.f32 %v2562, 0.0
      %v3009 = vmax.f32 %v2918, 0.0
      %v3010 = vmax.f32 %v1852, 0.0
      %v3011 = vmax.f32 %v2208, 0.0
      %v3012 = vmax.f32 %v2564, 0.0
      %v3013 = vmax.f32 %v2920, 0.0
      %v3014 = vmax.f32 %v1855, 0.0
      %v3015 = vmax.f32 %v2211, 0.0
      %v3016 = vmax.f32 %v2567, 0.0
      %v3017 = vmax.f32 %v2923, 0.0
      %v3018 = vmax.f32 %v1857, 0.0
      %v3019 = vmax.f32 %v2213, 0.0
      %v3020 = vmax.f32 %v2569, 0.0
      %v3021 = vmax.f32 %v2925, 0.0
      %v3022 = vmax.f32 %v1860, 0.0
      %v3023 = vmax.f32 %v2216, 0.0
      %v3024 = vmax.f32 %v2572, 0.0
      %v3025 = vmax.f32 %v2928, 0.0
      %v3026 = vmax.f32 %v1862, 0.0
      %v3027 = vmax.f32 %v2218, 0.0
      %v3028 = vmax.f32 %v2574, 0.0
      %v3029 = vmax.f32 %v2930, 0.0
      %v3030 = vmax.f32 %v1865, 0.0
      %v3031 = vmax.f32 %v2221, 0.0
      %v3032 = vmax.f32 %v2577, 0.0
      %v3033 = vmax.f32 %v2933, 0.0
      %v3034 = vmax.f32 %v1867, 0.0
      %v3035 = vmax.f32 %v2223, 0.0
      %v3036 = vmax.f32 %v2579, 0.0
      %v3037 = vmax.f32 %v2935, 0.0
      %v3038 = vmax.f32 %v1870, 0.0
      %v3039 = vmax.f32 %v2226, 0.0
      %v3040 = vmax.f32 %v2582, 0.0
      %v3041 = vmax.f32 %v2938, 0.0
      %v3042 = vmax.f32 %v1872, 0.0
      %v3043 = vmax.f32 %v2228, 0.0
      %v3044 = vmax.f32 %v2584, 0.0
      %v3045 = vmax.f32 %v2940, 0.0
      %v3046 = vmax.f32 %v1875, 0.0
      %v3047 = vmax.f32 %v2231, 0.0
      %v3048 = vmax.f32 %v2587, 0.0
      %v3049 = vmax.f32 %v2943, 0.0
      %v3050 = vmax.f32 %v1877, 0.0
      %v3051 = vmax.f32 %v2233, 0.0
      %v3052 = vmax.f32 %v2589, 0.0
      %v3053 = vmax.f32 %v2945, 0.0
      %v3054 = vmax.f32 %v1880, 0.0
      %v3055 = vmax.f32 %v2236, 0.0
      %v3056 = vmax.f32 %v2592, 0.0
      %v3057 = vmax.f32 %v2948, 0.0
      %v3058 = vmax.f32 %v1882, 0.0
      %v3059 = vmax.f32 %v2238, 0.0
      %v3060 = vmax.f32 %v2594, 0.0
      %v3061 = vmax.f32 %v2950, 0.0
      %v3062 = vmax.f32 %v1885, 0.0
      %v3063 = vmax.f32 %v2241, 0.0
      %v3064 = vmax.f32 %v2597, 0.0
      %v3065 = vmax.f32 %v2953, 0.0
      %v3066 = vmax.f32 %v1887, 0.0
      %v3067 = vmax.f32 %v2243, 0.0
      %v3068 = vmax.f32 %v2599, 0.0
      %v3069 = vmax.f32 %v2955, 0.0
      %v3070 = vmax.f32 %v1890, 0.0
      %v3071 = vmax.f32 %v2246, 0.0
      %v3072 = vmax.f32 %v2602, 0.0
      %v3073 = vmax.f32 %v2958, 0.0
      %v3074 = vmax.f32 %v1892, 0.0
      %v3075 = vmax.f32 %v2248, 0.0
      %v3076 = vmax.f32 %v2604, 0.0
      %v3077 = vmax.f32 %v2960, 0.0
      %v3078 = vmax.f32 %v1895, 0.0
      %v3079 = vmax.f32 %v2251, 0.0
      %v3080 = vmax.f32 %v2607, 0.0
      %v3081 = vmax.f32 %v2963, 0.0
      %v3082 = vmax.f32 %v1897, 0.0
      %v3083 = vmax.f32 %v2253, 0.0
      %v3084 = vmax.f32 %v2609, 0.0
      %v3085 = vmax.f32 %v2965, 0.0
      %v3086 = vmax.f32 %v1900, 0.0
      %v3087 = vmax.f32 %v2256, 0.0
      %v3088 = vmax.f32 %v2612, 0.0
      %v3089 = vmax.f32 %v2968, 0.0
      %v3090 = vmax.f32 %v1902, 0.0
      %v3091 = vmax.f32 %v2258, 0.0
      %v3092 = vmax.f32 %v2614, 0.0
      %v3093 = vmax.f32 %v2970, 0.0
      %v3094 = vmax.f32 %v1905, 0.0
      %v3095 = vmax.f32 %v2261, 0.0
      %v3096 = vmax.f32 %v2617, 0.0
      %v3097 = vmax.f32 %v2973, 0.0
      %v3098 = vmax.f32 %v1907, 0.0
      %v3099 = vmax.f32 %v2263, 0.0
      %v3100 = vmax.f32 %v2619, 0.0
      %v3101 = vmax.f32 %v2975, 0.0
      %v3102 = vmax.f32 %v1910, 0.0
      %v3103 = vmax.f32 %v2266, 0.0
      %v3104 = vmax.f32 %v2622, 0.0
      %v3105 = vmax.f32 %v2978, 0.0
      %v3106 = vmax.f32 %v1912, 0.0
      %v3107 = vmax.f32 %v2268, 0.0
      %v3108 = vmax.f32 %v2624, 0.0
      %v3109 = vmax.f32 %v2980, 0.0
      %v3110 = vpack.c.bf16 %v2986, %v2982
      %v3111 = vpack.c.bf16 %v2987, %v2983
      %v3112 = vpack.c.bf16 %v2988, %v2984
      %v3113 = vpack.c.bf16 %v2989, %v2985
      %v3114 = vpack.c.bf16 %v2994, %v2990
      %v3115 = vpack.c.bf16 %v2995, %v2991
      %v3116 = vpack.c.bf16 %v2996, %v2992
      %v3117 = vpack.c.bf16 %v2997, %v2993
      %v3118 = vpack.c.bf16 %v3002, %v2998
      %v3119 = vpack.c.bf16 %v3003, %v2999
      %v3120 = vpack.c.bf16 %v3004, %v3000
      %v3121 = vpack.c.bf16 %v3005, %v3001
      %v3122 = vpack.c.bf16 %v3010, %v3006
      %v3123 = vpack.c.bf16 %v3011, %v3007
      %v3124 = vpack.c.bf16 %v3012, %v3008
      %v3125 = vpack.c.bf16 %v3013, %v3009
      %v3126 = vpack.c.bf16 %v3018, %v3014
      %v3127 = vpack.c.bf16 %v3019, %v3015
      %v3128 = vpack.c.bf16 %v3020, %v3016
      %v3129 = vpack.c.bf16 %v3021, %v3017
      %v3130 = vpack.c.bf16 %v3026, %v3022
      %v3131 = vpack.c.bf16 %v3027, %v3023
      %v3132 = vpack.c.bf16 %v3028, %v3024
      %v3133 = vpack.c.bf16 %v3029, %v3025
      %v3134 = vpack.c.bf16 %v3034, %v3030
      %v3135 = vpack.c.bf16 %v3035, %v3031
      %v3136 = vpack.c.bf16 %v3036, %v3032
      %v3137 = vpack.c.bf16 %v3037, %v3033
      %v3138 = vpack.c.bf16 %v3042, %v3038
      %v3139 = vpack.c.bf16 %v3043, %v3039
      %v3140 = vpack.c.bf16 %v3044, %v3040
      %v3141 = vpack.c.bf16 %v3045, %v3041
      %v3142 = vpack.c.bf16 %v3050, %v3046
      %v3143 = vpack.c.bf16 %v3051, %v3047
      %v3144 = vpack.c.bf16 %v3052, %v3048
      %v3145 = vpack.c.bf16 %v3053, %v3049
      %v3146 = vpack.c.bf16 %v3058, %v3054
      %v3147 = vpack.c.bf16 %v3059, %v3055
      %v3148 = vpack.c.bf16 %v3060, %v3056
      %v3149 = vpack.c.bf16 %v3061, %v3057
      %v3150 = vpack.c.bf16 %v3066, %v3062
      %v3151 = vpack.c.bf16 %v3067, %v3063
      %v3152 = vpack.c.bf16 %v3068, %v3064
      %v3153 = vpack.c.bf16 %v3069, %v3065
      %v3154 = vpack.c.bf16 %v3074, %v3070
      %v3155 = vpack.c.bf16 %v3075, %v3071
      %v3156 = vpack.c.bf16 %v3076, %v3072
      %v3157 = vpack.c.bf16 %v3077, %v3073
      %v3158 = vpack.c.bf16 %v3082, %v3078
      %v3159 = vpack.c.bf16 %v3083, %v3079
      %v3160 = vpack.c.bf16 %v3084, %v3080
      %v3161 = vpack.c.bf16 %v3085, %v3081
      %v3162 = vpack.c.bf16 %v3090, %v3086
      %v3163 = vpack.c.bf16 %v3091, %v3087
      %v3164 = vpack.c.bf16 %v3092, %v3088
      %v3165 = vpack.c.bf16 %v3093, %v3089
      %v3166 = vpack.c.bf16 %v3098, %v3094
      %v3167 = vpack.c.bf16 %v3099, %v3095
      %v3168 = vpack.c.bf16 %v3100, %v3096
      %v3169 = vpack.c.bf16 %v3101, %v3097
      %v3170 = vpack.c.bf16 %v3106, %v3102
      %v3171 = vpack.c.bf16 %v3107, %v3103
      %v3172 = vpack.c.bf16 %v3108, %v3104
      %v3173 = vpack.c.bf16 %v3109, %v3105
      %v3174 = vld [vmem:[%s382] sm:$0xff]
      %v3175 = vld [vmem:[%s382 + $0x8] sm:$0xff]
      %v3176 = vld [vmem:[%s382 + $0x10] sm:$0xff]
      %v3177 = vld [vmem:[%s382 + $0x18] sm:$0xff]
      %v3178 = vld [vmem:[%s382 + $0x20] sm:$0xff]
      %v3179 = vld [vmem:[%s382 + $0x28] sm:$0xff]
      %v3180 = vld [vmem:[%s382 + $0x30] sm:$0xff]
      %v3181 = vld [vmem:[%s382 + $0x38] sm:$0xff]
      %v3182 = vld [vmem:[%s382 + $0x40] sm:$0xff]
      %v3183 = vld [vmem:[%s382 + $0x48] sm:$0xff]
      %v3184 = vld [vmem:[%s382 + $0x50] sm:$0xff]
      %v3185 = vld [vmem:[%s382 + $0x58] sm:$0xff]
      %v3186 = vld [vmem:[%s382 + $0x60] sm:$0xff]
      %v3187 = vld [vmem:[%s382 + $0x68] sm:$0xff]
      %v3188 = vld [vmem:[%s382 + $0x70] sm:$0xff]
      %v3189 = vld [vmem:[%s382 + $0x78] sm:$0xff]
      %v3190 = vld [vmem:[%s382 + $0x80] sm:$0xff]
      %v3191 = vld [vmem:[%s382 + $0x88] sm:$0xff]
      %v3192 = vld [vmem:[%s382 + $0x90] sm:$0xff]
      %v3193 = vld [vmem:[%s382 + $0x98] sm:$0xff]
      %v3194 = vld [vmem:[%s382 + $0xa0] sm:$0xff]
      %v3195 = vld [vmem:[%s382 + $0xa8] sm:$0xff]
      %v3196 = vld [vmem:[%s382 + $0xb0] sm:$0xff]
      %v3197 = vld [vmem:[%s382 + $0xb8] sm:$0xff]
      %v3198 = vld [vmem:[%s382 + $0xc0] sm:$0xff]
      %v3199 = vld [vmem:[%s382 + $0xc8] sm:$0xff]
      %v3200 = vld [vmem:[%s382 + $0xd0] sm:$0xff]
      %v3201 = vld [vmem:[%s382 + $0xd8] sm:$0xff]
      %v3202 = vld [vmem:[%s382 + $0xe0] sm:$0xff]
      %v3203 = vld [vmem:[%s382 + $0xe8] sm:$0xff]
      %v3204 = vld [vmem:[%s382 + $0xf0] sm:$0xff]
      %v3205 = vld [vmem:[%s382 + $0xf8] sm:$0xff]
      %v3206 = vld [vmem:[%s382 + $0x100] sm:$0xff]
      %v3207 = vld [vmem:[%s382 + $0x108] sm:$0xff]
      %v3208 = vld [vmem:[%s382 + $0x110] sm:$0xff]
      %v3209 = vld [vmem:[%s382 + $0x118] sm:$0xff]
      %v3210 = vld [vmem:[%s382 + $0x120] sm:$0xff]
      %v3211 = vld [vmem:[%s382 + $0x128] sm:$0xff]
      %v3212 = vld [vmem:[%s382 + $0x130] sm:$0xff]
      %v3213 = vld [vmem:[%s382 + $0x138] sm:$0xff]
      %v3214 = vld [vmem:[%s382 + $0x140] sm:$0xff]
      %v3215 = vld [vmem:[%s382 + $0x148] sm:$0xff]
      %v3216 = vld [vmem:[%s382 + $0x150] sm:$0xff]
      %v3217 = vld [vmem:[%s382 + $0x158] sm:$0xff]
      %v3218 = vld [vmem:[%s382 + $0x160] sm:$0xff]
      %v3219 = vld [vmem:[%s382 + $0x168] sm:$0xff]
      %v3220 = vld [vmem:[%s382 + $0x170] sm:$0xff]
      %v3221 = vld [vmem:[%s382 + $0x178] sm:$0xff]
      %v3222 = vld [vmem:[%s382 + $0x180] sm:$0xff]
      %v3223 = vld [vmem:[%s382 + $0x188] sm:$0xff]
      %v3224 = vld [vmem:[%s382 + $0x190] sm:$0xff]
      %v3225 = vld [vmem:[%s382 + $0x198] sm:$0xff]
      %v3226 = vld [vmem:[%s382 + $0x1a0] sm:$0xff]
      %v3227 = vld [vmem:[%s382 + $0x1a8] sm:$0xff]
      %v3228 = vld [vmem:[%s382 + $0x1b0] sm:$0xff]
      %v3229 = vld [vmem:[%s382 + $0x1b8] sm:$0xff]
      %v3230 = vld [vmem:[%s382 + $0x1c0] sm:$0xff]
      %v3231 = vld [vmem:[%s382 + $0x1c8] sm:$0xff]
      %v3232 = vld [vmem:[%s382 + $0x1d0] sm:$0xff]
      %v3233 = vld [vmem:[%s382 + $0x1d8] sm:$0xff]
      %v3234 = vld [vmem:[%s382 + $0x1e0] sm:$0xff]
      %v3235 = vld [vmem:[%s382 + $0x1e8] sm:$0xff]
      %v3236 = vld [vmem:[%s382 + $0x1f0] sm:$0xff]
      %v3237 = vld [vmem:[%s382 + $0x1f8] sm:$0xff]
      %v3238 = vld [vmem:[%s382 + $0x200] sm:$0xff]
      %v3239 = vld [vmem:[%s382 + $0x208] sm:$0xff]
      %v3240 = vld [vmem:[%s382 + $0x210] sm:$0xff]
      %v3241 = vld [vmem:[%s382 + $0x218] sm:$0xff]
      %v3242 = vld [vmem:[%s382 + $0x220] sm:$0xff]
      %v3243 = vld [vmem:[%s382 + $0x228] sm:$0xff]
      %v3244 = vld [vmem:[%s382 + $0x230] sm:$0xff]
      %v3245 = vld [vmem:[%s382 + $0x238] sm:$0xff]
      %v3246 = vld [vmem:[%s382 + $0x240] sm:$0xff]
      %v3247 = vld [vmem:[%s382 + $0x248] sm:$0xff]
      %v3248 = vld [vmem:[%s382 + $0x250] sm:$0xff]
      %v3249 = vld [vmem:[%s382 + $0x258] sm:$0xff]
      %v3250 = vld [vmem:[%s382 + $0x260] sm:$0xff]
      %v3251 = vld [vmem:[%s382 + $0x268] sm:$0xff]
      %v3252 = vld [vmem:[%s382 + $0x270] sm:$0xff]
      %v3253 = vld [vmem:[%s382 + $0x278] sm:$0xff]
      %v3254 = vld [vmem:[%s382 + $0x280] sm:$0xff]
      %v3255 = vld [vmem:[%s382 + $0x288] sm:$0xff]
      %v3256 = vld [vmem:[%s382 + $0x290] sm:$0xff]
      %v3257 = vld [vmem:[%s382 + $0x298] sm:$0xff]
      %v3258 = vld [vmem:[%s382 + $0x2a0] sm:$0xff]
      %v3259 = vld [vmem:[%s382 + $0x2a8] sm:$0xff]
      %v3260 = vld [vmem:[%s382 + $0x2b0] sm:$0xff]
      %v3261 = vld [vmem:[%s382 + $0x2b8] sm:$0xff]
      %v3262 = vld [vmem:[%s382 + $0x2c0] sm:$0xff]
      %v3263 = vld [vmem:[%s382 + $0x2c8] sm:$0xff]
      %v3264 = vld [vmem:[%s382 + $0x2d0] sm:$0xff]
      %v3265 = vld [vmem:[%s382 + $0x2d8] sm:$0xff]
      %v3266 = vld [vmem:[%s382 + $0x2e0] sm:$0xff]
      %v3267 = vld [vmem:[%s382 + $0x2e8] sm:$0xff]
      %v3268 = vld [vmem:[%s382 + $0x2f0] sm:$0xff]
      %v3269 = vld [vmem:[%s382 + $0x2f8] sm:$0xff]
      %v3270 = vld [vmem:[%s382 + $0x300] sm:$0xff]
      %v3271 = vld [vmem:[%s382 + $0x308] sm:$0xff]
      %v3272 = vld [vmem:[%s382 + $0x310] sm:$0xff]
      %v3273 = vld [vmem:[%s382 + $0x318] sm:$0xff]
      %v3274 = vld [vmem:[%s382 + $0x320] sm:$0xff]
      %v3275 = vld [vmem:[%s382 + $0x328] sm:$0xff]
      %v3276 = vld [vmem:[%s382 + $0x330] sm:$0xff]
      %v3277 = vld [vmem:[%s382 + $0x338] sm:$0xff]
      %v3278 = vld [vmem:[%s382 + $0x340] sm:$0xff]
      %v3279 = vld [vmem:[%s382 + $0x348] sm:$0xff]
      %v3280 = vld [vmem:[%s382 + $0x350] sm:$0xff]
      %v3281 = vld [vmem:[%s382 + $0x358] sm:$0xff]
      %v3282 = vld [vmem:[%s382 + $0x360] sm:$0xff]
      %v3283 = vld [vmem:[%s382 + $0x368] sm:$0xff]
      %v3284 = vld [vmem:[%s382 + $0x370] sm:$0xff]
      %v3285 = vld [vmem:[%s382 + $0x378] sm:$0xff]
      %v3286 = vld [vmem:[%s382 + $0x380] sm:$0xff]
      %v3287 = vld [vmem:[%s382 + $0x388] sm:$0xff]
      %v3288 = vld [vmem:[%s382 + $0x390] sm:$0xff]
      %v3289 = vld [vmem:[%s382 + $0x398] sm:$0xff]
      %v3290 = vld [vmem:[%s382 + $0x3a0] sm:$0xff]
      %v3291 = vld [vmem:[%s382 + $0x3a8] sm:$0xff]
      %v3292 = vld [vmem:[%s382 + $0x3b0] sm:$0xff]
      %v3293 = vld [vmem:[%s382 + $0x3b8] sm:$0xff]
      %v3294 = vld [vmem:[%s382 + $0x3c0] sm:$0xff]
      %v3295 = vld [vmem:[%s382 + $0x3c8] sm:$0xff]
      %v3296 = vld [vmem:[%s382 + $0x3d0] sm:$0xff]
      %v3297 = vld [vmem:[%s382 + $0x3d8] sm:$0xff]
      %v3298 = vld [vmem:[%s382 + $0x3e0] sm:$0xff]
      %v3299 = vld [vmem:[%s382 + $0x3e8] sm:$0xff]
      %v3300 = vld [vmem:[%s382 + $0x3f0] sm:$0xff]
      %v3301 = vld [vmem:[%s382 + $0x3f8] sm:$0xff]
      %v3302 = vld [vmem:[%s388] sm:$0xf]
      %v3304 = vperm.slane %v3302, 0
      %v3305 = vperm.slane %v3302, 1
      %v3306 = vperm.slane %v3302, 2
      %v3307 = vperm.slane %v3302, 3
      %v3440 = vunpack.c.l.b16 %v3174
      %v3441 = vunpack.c.h.b16 %v3174
      %v3442 = vunpack.c.l.b16 %v3175
      %v3443 = vunpack.c.h.b16 %v3175
      %v3444 = vunpack.c.l.b16 %v3176
      %v3445 = vunpack.c.h.b16 %v3176
      %v3446 = vunpack.c.l.b16 %v3177
      %v3447 = vunpack.c.h.b16 %v3177
      %v3448 = vunpack.c.l.b16 %v3178
      %v3449 = vunpack.c.h.b16 %v3178
      %v3450 = vunpack.c.l.b16 %v3179
      %v3451 = vunpack.c.h.b16 %v3179
      %v3452 = vunpack.c.l.b16 %v3180
      %v3453 = vunpack.c.h.b16 %v3180
      %v3454 = vunpack.c.l.b16 %v3181
      %v3455 = vunpack.c.h.b16 %v3181
      %v3456 = vunpack.c.l.b16 %v3182
      %v3457 = vunpack.c.h.b16 %v3182
      %v3458 = vunpack.c.l.b16 %v3183
      %v3459 = vunpack.c.h.b16 %v3183
      %v3460 = vunpack.c.l.b16 %v3184
      %v3461 = vunpack.c.h.b16 %v3184
      %v3462 = vunpack.c.l.b16 %v3185
      %v3463 = vunpack.c.h.b16 %v3185
      %v3464 = vunpack.c.l.b16 %v3186
      %v3465 = vunpack.c.h.b16 %v3186
      %v3466 = vunpack.c.l.b16 %v3187
      %v3467 = vunpack.c.h.b16 %v3187
      %v3468 = vunpack.c.l.b16 %v3188
      %v3469 = vunpack.c.h.b16 %v3188
      %v3470 = vunpack.c.l.b16 %v3189
      %v3471 = vunpack.c.h.b16 %v3189
      %v3472 = vunpack.c.l.b16 %v3190
      %v3473 = vunpack.c.h.b16 %v3190
      %v3474 = vunpack.c.l.b16 %v3191
      %v3475 = vunpack.c.h.b16 %v3191
      %v3476 = vunpack.c.l.b16 %v3192
      %v3477 = vunpack.c.h.b16 %v3192
      %v3478 = vunpack.c.l.b16 %v3193
      %v3479 = vunpack.c.h.b16 %v3193
      %v3480 = vunpack.c.l.b16 %v3194
      %v3481 = vunpack.c.h.b16 %v3194
      %v3482 = vunpack.c.l.b16 %v3195
      %v3483 = vunpack.c.h.b16 %v3195
      %v3484 = vunpack.c.l.b16 %v3196
      %v3485 = vunpack.c.h.b16 %v3196
      %v3486 = vunpack.c.l.b16 %v3197
      %v3487 = vunpack.c.h.b16 %v3197
      %v3488 = vunpack.c.l.b16 %v3198
      %v3489 = vunpack.c.h.b16 %v3198
      %v3490 = vunpack.c.l.b16 %v3199
      %v3491 = vunpack.c.h.b16 %v3199
      %v3492 = vunpack.c.l.b16 %v3200
      %v3493 = vunpack.c.h.b16 %v3200
      %v3494 = vunpack.c.l.b16 %v3201
      %v3495 = vunpack.c.h.b16 %v3201
      %v3496 = vunpack.c.l.b16 %v3202
      %v3497 = vunpack.c.h.b16 %v3202
      %v3498 = vunpack.c.l.b16 %v3203
      %v3499 = vunpack.c.h.b16 %v3203
      %v3500 = vunpack.c.l.b16 %v3204
      %v3501 = vunpack.c.h.b16 %v3204
      %v3502 = vunpack.c.l.b16 %v3205
      %v3503 = vunpack.c.h.b16 %v3205
      %v3504 = vunpack.c.l.b16 %v3206
      %v3505 = vunpack.c.h.b16 %v3206
      %v3506 = vunpack.c.l.b16 %v3207
      %v3507 = vunpack.c.h.b16 %v3207
      %v3508 = vunpack.c.l.b16 %v3208
      %v3509 = vunpack.c.h.b16 %v3208
      %v3510 = vunpack.c.l.b16 %v3209
      %v3511 = vunpack.c.h.b16 %v3209
      %v3512 = vunpack.c.l.b16 %v3210
      %v3513 = vunpack.c.h.b16 %v3210
      %v3514 = vunpack.c.l.b16 %v3211
      %v3515 = vunpack.c.h.b16 %v3211
      %v3516 = vunpack.c.l.b16 %v3212
      %v3517 = vunpack.c.h.b16 %v3212
      %v3518 = vunpack.c.l.b16 %v3213
      %v3519 = vunpack.c.h.b16 %v3213
      %v3520 = vunpack.c.l.b16 %v3214
      %v3521 = vunpack.c.h.b16 %v3214
      %v3522 = vunpack.c.l.b16 %v3215
      %v3523 = vunpack.c.h.b16 %v3215
      %v3524 = vunpack.c.l.b16 %v3216
      %v3525 = vunpack.c.h.b16 %v3216
      %v3526 = vunpack.c.l.b16 %v3217
      %v3527 = vunpack.c.h.b16 %v3217
      %v3528 = vunpack.c.l.b16 %v3218
      %v3529 = vunpack.c.h.b16 %v3218
      %v3530 = vunpack.c.l.b16 %v3219
      %v3531 = vunpack.c.h.b16 %v3219
      %v3532 = vunpack.c.l.b16 %v3220
      %v3533 = vunpack.c.h.b16 %v3220
      %v3534 = vunpack.c.l.b16 %v3221
      %v3535 = vunpack.c.h.b16 %v3221
      %v3536 = vunpack.c.l.b16 %v3222
      %v3537 = vunpack.c.h.b16 %v3222
      %v3538 = vunpack.c.l.b16 %v3223
      %v3539 = vunpack.c.h.b16 %v3223
      %v3540 = vunpack.c.l.b16 %v3224
      %v3541 = vunpack.c.h.b16 %v3224
      %v3542 = vunpack.c.l.b16 %v3225
      %v3543 = vunpack.c.h.b16 %v3225
      %v3544 = vunpack.c.l.b16 %v3226
      %v3545 = vunpack.c.h.b16 %v3226
      %v3546 = vunpack.c.l.b16 %v3227
      %v3547 = vunpack.c.h.b16 %v3227
      %v3548 = vunpack.c.l.b16 %v3228
      %v3549 = vunpack.c.h.b16 %v3228
      %v3550 = vunpack.c.l.b16 %v3229
      %v3551 = vunpack.c.h.b16 %v3229
      %v3552 = vunpack.c.l.b16 %v3230
      %v3553 = vunpack.c.h.b16 %v3230
      %v3554 = vunpack.c.l.b16 %v3231
      %v3555 = vunpack.c.h.b16 %v3231
      %v3556 = vunpack.c.l.b16 %v3232
      %v3557 = vunpack.c.h.b16 %v3232
      %v3558 = vunpack.c.l.b16 %v3233
      %v3559 = vunpack.c.h.b16 %v3233
      %v3560 = vunpack.c.l.b16 %v3234
      %v3561 = vunpack.c.h.b16 %v3234
      %v3562 = vunpack.c.l.b16 %v3235
      %v3563 = vunpack.c.h.b16 %v3235
      %v3564 = vunpack.c.l.b16 %v3236
      %v3565 = vunpack.c.h.b16 %v3236
      %v3566 = vunpack.c.l.b16 %v3237
      %v3567 = vunpack.c.h.b16 %v3237
      %v3568 = vunpack.c.l.b16 %v3238
      %v3569 = vunpack.c.h.b16 %v3238
      %v3570 = vunpack.c.l.b16 %v3239
      %v3571 = vunpack.c.h.b16 %v3239
      %v3572 = vunpack.c.l.b16 %v3240
      %v3573 = vunpack.c.h.b16 %v3240
      %v3574 = vunpack.c.l.b16 %v3241
      %v3575 = vunpack.c.h.b16 %v3241
      %v3576 = vunpack.c.l.b16 %v3242
      %v3577 = vunpack.c.h.b16 %v3242
      %v3578 = vunpack.c.l.b16 %v3243
      %v3579 = vunpack.c.h.b16 %v3243
      %v3580 = vunpack.c.l.b16 %v3244
      %v3581 = vunpack.c.h.b16 %v3244
      %v3582 = vunpack.c.l.b16 %v3245
      %v3583 = vunpack.c.h.b16 %v3245
      %v3584 = vunpack.c.l.b16 %v3246
      %v3585 = vunpack.c.h.b16 %v3246
      %v3586 = vunpack.c.l.b16 %v3247
      %v3587 = vunpack.c.h.b16 %v3247
      %v3588 = vunpack.c.l.b16 %v3248
      %v3589 = vunpack.c.h.b16 %v3248
      %v3590 = vunpack.c.l.b16 %v3249
      %v3591 = vunpack.c.h.b16 %v3249
      %v3592 = vunpack.c.l.b16 %v3250
      %v3593 = vunpack.c.h.b16 %v3250
      %v3594 = vunpack.c.l.b16 %v3251
      %v3595 = vunpack.c.h.b16 %v3251
      %v3596 = vunpack.c.l.b16 %v3252
      %v3597 = vunpack.c.h.b16 %v3252
      %v3598 = vunpack.c.l.b16 %v3253
      %v3599 = vunpack.c.h.b16 %v3253
      %v3600 = vunpack.c.l.b16 %v3254
      %v3601 = vunpack.c.h.b16 %v3254
      %v3602 = vunpack.c.l.b16 %v3255
      %v3603 = vunpack.c.h.b16 %v3255
      %v3604 = vunpack.c.l.b16 %v3256
      %v3605 = vunpack.c.h.b16 %v3256
      %v3606 = vunpack.c.l.b16 %v3257
      %v3607 = vunpack.c.h.b16 %v3257
      %v3608 = vunpack.c.l.b16 %v3258
      %v3609 = vunpack.c.h.b16 %v3258
      %v3610 = vunpack.c.l.b16 %v3259
      %v3611 = vunpack.c.h.b16 %v3259
      %v3612 = vunpack.c.l.b16 %v3260
      %v3613 = vunpack.c.h.b16 %v3260
      %v3614 = vunpack.c.l.b16 %v3261
      %v3615 = vunpack.c.h.b16 %v3261
      %v3616 = vunpack.c.l.b16 %v3262
      %v3617 = vunpack.c.h.b16 %v3262
      %v3618 = vunpack.c.l.b16 %v3263
      %v3619 = vunpack.c.h.b16 %v3263
      %v3620 = vunpack.c.l.b16 %v3264
      %v3621 = vunpack.c.h.b16 %v3264
      %v3622 = vunpack.c.l.b16 %v3265
      %v3623 = vunpack.c.h.b16 %v3265
      %v3624 = vunpack.c.l.b16 %v3266
      %v3625 = vunpack.c.h.b16 %v3266
      %v3626 = vunpack.c.l.b16 %v3267
      %v3627 = vunpack.c.h.b16 %v3267
      %v3628 = vunpack.c.l.b16 %v3268
      %v3629 = vunpack.c.h.b16 %v3268
      %v3630 = vunpack.c.l.b16 %v3269
      %v3631 = vunpack.c.h.b16 %v3269
      %v3632 = vunpack.c.l.b16 %v3270
      %v3633 = vunpack.c.h.b16 %v3270
      %v3634 = vunpack.c.l.b16 %v3271
      %v3635 = vunpack.c.h.b16 %v3271
      %v3636 = vunpack.c.l.b16 %v3272
      %v3637 = vunpack.c.h.b16 %v3272
      %v3638 = vunpack.c.l.b16 %v3273
      %v3639 = vunpack.c.h.b16 %v3273
      %v3640 = vunpack.c.l.b16 %v3274
      %v3641 = vunpack.c.h.b16 %v3274
      %v3642 = vunpack.c.l.b16 %v3275
      %v3643 = vunpack.c.h.b16 %v3275
      %v3644 = vunpack.c.l.b16 %v3276
      %v3645 = vunpack.c.h.b16 %v3276
      %v3646 = vunpack.c.l.b16 %v3277
      %v3647 = vunpack.c.h.b16 %v3277
      %v3648 = vunpack.c.l.b16 %v3278
      %v3649 = vunpack.c.h.b16 %v3278
      %v3650 = vunpack.c.l.b16 %v3279
      %v3651 = vunpack.c.h.b16 %v3279
      %v3652 = vunpack.c.l.b16 %v3280
      %v3653 = vunpack.c.h.b16 %v3280
      %v3654 = vunpack.c.l.b16 %v3281
      %v3655 = vunpack.c.h.b16 %v3281
      %v3656 = vunpack.c.l.b16 %v3282
      %v3657 = vunpack.c.h.b16 %v3282
      %v3658 = vunpack.c.l.b16 %v3283
      %v3659 = vunpack.c.h.b16 %v3283
      %v3660 = vunpack.c.l.b16 %v3284
      %v3661 = vunpack.c.h.b16 %v3284
      %v3662 = vunpack.c.l.b16 %v3285
      %v3663 = vunpack.c.h.b16 %v3285
      %v3664 = vunpack.c.l.b16 %v3286
      %v3665 = vunpack.c.h.b16 %v3286
      %v3666 = vunpack.c.l.b16 %v3287
      %v3667 = vunpack.c.h.b16 %v3287
      %v3668 = vunpack.c.l.b16 %v3288
      %v3669 = vunpack.c.h.b16 %v3288
      %v3670 = vunpack.c.l.b16 %v3289
      %v3671 = vunpack.c.h.b16 %v3289
      %v3672 = vunpack.c.l.b16 %v3290
      %v3673 = vunpack.c.h.b16 %v3290
      %v3674 = vunpack.c.l.b16 %v3291
      %v3675 = vunpack.c.h.b16 %v3291
      %v3676 = vunpack.c.l.b16 %v3292
      %v3677 = vunpack.c.h.b16 %v3292
      %v3678 = vunpack.c.l.b16 %v3293
      %v3679 = vunpack.c.h.b16 %v3293
      %v3680 = vunpack.c.l.b16 %v3294
      %v3681 = vunpack.c.h.b16 %v3294
      %v3682 = vunpack.c.l.b16 %v3295
      %v3683 = vunpack.c.h.b16 %v3295
      %v3684 = vunpack.c.l.b16 %v3296
      %v3685 = vunpack.c.h.b16 %v3296
      %v3686 = vunpack.c.l.b16 %v3297
      %v3687 = vunpack.c.h.b16 %v3297
      %v3688 = vunpack.c.l.b16 %v3298
      %v3689 = vunpack.c.h.b16 %v3298
      %v3690 = vunpack.c.l.b16 %v3299
      %v3691 = vunpack.c.h.b16 %v3299
      %v3692 = vunpack.c.l.b16 %v3300
      %v3693 = vunpack.c.h.b16 %v3300
      %v3694 = vunpack.c.l.b16 %v3301
      %v3695 = vunpack.c.h.b16 %v3301
      %v3696 = vpack.c.b16 %v3444, %v3440
      %v3697 = vpack.c.b16 %v3445, %v3441
      %v3698 = vpack.c.b16 %v3446, %v3442
      %v3699 = vpack.c.b16 %v3447, %v3443
      %v3700 = vpack.c.b16 %v3452, %v3448
      %v3701 = vpack.c.b16 %v3453, %v3449
      %v3702 = vpack.c.b16 %v3454, %v3450
      %v3703 = vpack.c.b16 %v3455, %v3451
      %v3704 = vpack.c.b16 %v3460, %v3456
      %v3705 = vpack.c.b16 %v3461, %v3457
      %v3706 = vpack.c.b16 %v3462, %v3458
      %v3707 = vpack.c.b16 %v3463, %v3459
      %v3708 = vpack.c.b16 %v3468, %v3464
      %v3709 = vpack.c.b16 %v3469, %v3465
      %v3710 = vpack.c.b16 %v3470, %v3466
      %v3711 = vpack.c.b16 %v3471, %v3467
      %v3712 = vpack.c.b16 %v3476, %v3472
      %v3713 = vpack.c.b16 %v3477, %v3473
      %v3714 = vpack.c.b16 %v3478, %v3474
      %v3715 = vpack.c.b16 %v3479, %v3475
      %v3716 = vpack.c.b16 %v3484, %v3480
      %v3717 = vpack.c.b16 %v3485, %v3481
      %v3718 = vpack.c.b16 %v3486, %v3482
      %v3719 = vpack.c.b16 %v3487, %v3483
      %v3720 = vpack.c.b16 %v3492, %v3488
      %v3721 = vpack.c.b16 %v3493, %v3489
      %v3722 = vpack.c.b16 %v3494, %v3490
      %v3723 = vpack.c.b16 %v3495, %v3491
      %v3724 = vpack.c.b16 %v3500, %v3496
      %v3725 = vpack.c.b16 %v3501, %v3497
      %v3726 = vpack.c.b16 %v3502, %v3498
      %v3727 = vpack.c.b16 %v3503, %v3499
      %v3728 = vpack.c.b16 %v3508, %v3504
      %v3729 = vpack.c.b16 %v3509, %v3505
      %v3730 = vpack.c.b16 %v3510, %v3506
      %v3731 = vpack.c.b16 %v3511, %v3507
      %v3732 = vpack.c.b16 %v3516, %v3512
      %v3733 = vpack.c.b16 %v3517, %v3513
      %v3734 = vpack.c.b16 %v3518, %v3514
      %v3735 = vpack.c.b16 %v3519, %v3515
      %v3736 = vpack.c.b16 %v3524, %v3520
      %v3737 = vpack.c.b16 %v3525, %v3521
      %v3738 = vpack.c.b16 %v3526, %v3522
      %v3739 = vpack.c.b16 %v3527, %v3523
      %v3740 = vpack.c.b16 %v3532, %v3528
      %v3741 = vpack.c.b16 %v3533, %v3529
      %v3742 = vpack.c.b16 %v3534, %v3530
      %v3743 = vpack.c.b16 %v3535, %v3531
      %v3744 = vpack.c.b16 %v3540, %v3536
      %v3745 = vpack.c.b16 %v3541, %v3537
      %v3746 = vpack.c.b16 %v3542, %v3538
      %v3747 = vpack.c.b16 %v3543, %v3539
      %v3748 = vpack.c.b16 %v3548, %v3544
      %v3749 = vpack.c.b16 %v3549, %v3545
      %v3750 = vpack.c.b16 %v3550, %v3546
      %v3751 = vpack.c.b16 %v3551, %v3547
      %v3752 = vpack.c.b16 %v3556, %v3552
      %v3753 = vpack.c.b16 %v3557, %v3553
      %v3754 = vpack.c.b16 %v3558, %v3554
      %v3755 = vpack.c.b16 %v3559, %v3555
      %v3756 = vpack.c.b16 %v3564, %v3560
      %v3757 = vpack.c.b16 %v3565, %v3561
      %v3758 = vpack.c.b16 %v3566, %v3562
      %v3759 = vpack.c.b16 %v3567, %v3563
      %v3760 = vpack.c.b16 %v3572, %v3568
      %v3761 = vpack.c.b16 %v3573, %v3569
      %v3762 = vpack.c.b16 %v3574, %v3570
      %v3763 = vpack.c.b16 %v3575, %v3571
      %v3764 = vpack.c.b16 %v3580, %v3576
      %v3765 = vpack.c.b16 %v3581, %v3577
      %v3766 = vpack.c.b16 %v3582, %v3578
      %v3767 = vpack.c.b16 %v3583, %v3579
      %v3768 = vpack.c.b16 %v3588, %v3584
      %v3769 = vpack.c.b16 %v3589, %v3585
      %v3770 = vpack.c.b16 %v3590, %v3586
      %v3771 = vpack.c.b16 %v3591, %v3587
      %v3772 = vpack.c.b16 %v3596, %v3592
      %v3773 = vpack.c.b16 %v3597, %v3593
      %v3774 = vpack.c.b16 %v3598, %v3594
      %v3775 = vpack.c.b16 %v3599, %v3595
      %v3776 = vpack.c.b16 %v3604, %v3600
      %v3777 = vpack.c.b16 %v3605, %v3601
      %v3778 = vpack.c.b16 %v3606, %v3602
      %v3779 = vpack.c.b16 %v3607, %v3603
      %v3780 = vpack.c.b16 %v3612, %v3608
      %v3781 = vpack.c.b16 %v3613, %v3609
      %v3782 = vpack.c.b16 %v3614, %v3610
      %v3783 = vpack.c.b16 %v3615, %v3611
      %v3784 = vpack.c.b16 %v3620, %v3616
      %v3785 = vpack.c.b16 %v3621, %v3617
      %v3786 = vpack.c.b16 %v3622, %v3618
      %v3787 = vpack.c.b16 %v3623, %v3619
      %v3788 = vpack.c.b16 %v3628, %v3624
      %v3789 = vpack.c.b16 %v3629, %v3625
      %v3790 = vpack.c.b16 %v3630, %v3626
      %v3791 = vpack.c.b16 %v3631, %v3627
      %v3792 = vpack.c.b16 %v3636, %v3632
      %v3793 = vpack.c.b16 %v3637, %v3633
      %v3794 = vpack.c.b16 %v3638, %v3634
      %v3795 = vpack.c.b16 %v3639, %v3635
      %v3796 = vpack.c.b16 %v3644, %v3640
      %v3797 = vpack.c.b16 %v3645, %v3641
      %v3798 = vpack.c.b16 %v3646, %v3642
      %v3799 = vpack.c.b16 %v3647, %v3643
      %v3800 = vpack.c.b16 %v3652, %v3648
      %v3801 = vpack.c.b16 %v3653, %v3649
      %v3802 = vpack.c.b16 %v3654, %v3650
      %v3803 = vpack.c.b16 %v3655, %v3651
      %v3804 = vpack.c.b16 %v3660, %v3656
      %v3805 = vpack.c.b16 %v3661, %v3657
      %v3806 = vpack.c.b16 %v3662, %v3658
      %v3807 = vpack.c.b16 %v3663, %v3659
      %v3808 = vpack.c.b16 %v3668, %v3664
      %v3809 = vpack.c.b16 %v3669, %v3665
      %v3810 = vpack.c.b16 %v3670, %v3666
      %v3811 = vpack.c.b16 %v3671, %v3667
      %v3812 = vpack.c.b16 %v3676, %v3672
      %v3813 = vpack.c.b16 %v3677, %v3673
      %v3814 = vpack.c.b16 %v3678, %v3674
      %v3815 = vpack.c.b16 %v3679, %v3675
      %v3816 = vpack.c.b16 %v3684, %v3680
      %v3817 = vpack.c.b16 %v3685, %v3681
      %v3818 = vpack.c.b16 %v3686, %v3682
      %v3819 = vpack.c.b16 %v3687, %v3683
      %v3820 = vpack.c.b16 %v3692, %v3688
      %v3821 = vpack.c.b16 %v3693, %v3689
      %v3822 = vpack.c.b16 %v3694, %v3690
      %v3823 = vpack.c.b16 %v3695, %v3691
      %3952 = vmatpush.bf16.msra.mxu0 %v3724
      %3953 = vmatpush.bf16.msra.mxu0 %v3720
      %3954 = vmatpush.bf16.msra.mxu0 %v3716
      %3955 = vmatpush.bf16.msra.mxu0 %v3712
      %3956 = vmatpush.bf16.msra.mxu0 %v3708
      %3957 = vmatpush.bf16.msra.mxu0 %v3704
      %3958 = vmatpush.bf16.msra.mxu0 %v3700
      %3959 = vmatpush.bf16.msra.mxu0 %v3696
      %3960 = vmatmul.bf16.gmra.mxu0 %v3110
      %v3961 = vpop.f32.mrf.mxu0
      %v3962 = vadd.f32 %v3304, %v3961
      %v3963 = vpop.f32.mrf.mxu0
      %v3964 = vadd.f32 %v3304, %v3963
      %3965 = vmatmul.bf16.gmra.mxu0 %v3114
      %v3966 = vpop.f32.mrf.mxu0
      %v3967 = vadd.f32 %v3304, %v3966
      %v3968 = vpop.f32.mrf.mxu0
      %v3969 = vadd.f32 %v3304, %v3968
      %3970 = vmatmul.bf16.gmra.mxu0 %v3118
      %v3971 = vpop.f32.mrf.mxu0
      %v3972 = vadd.f32 %v3304, %v3971
      %v3973 = vpop.f32.mrf.mxu0
      %v3974 = vadd.f32 %v3304, %v3973
      %3975 = vmatmul.bf16.gmra.mxu0 %v3122
      %v3976 = vpop.f32.mrf.mxu0
      %v3977 = vadd.f32 %v3304, %v3976
      %v3978 = vpop.f32.mrf.mxu0
      %v3979 = vadd.f32 %v3304, %v3978
      %3980 = vmatmul.bf16.gmra.mxu0 %v3126
      %v3981 = vpop.f32.mrf.mxu0
      %v3982 = vadd.f32 %v3304, %v3981
      %v3983 = vpop.f32.mrf.mxu0
      %v3984 = vadd.f32 %v3304, %v3983
      %3985 = vmatmul.bf16.gmra.mxu0 %v3130
      %v3986 = vpop.f32.mrf.mxu0
      %v3987 = vadd.f32 %v3304, %v3986
      %v3988 = vpop.f32.mrf.mxu0
      %v3989 = vadd.f32 %v3304, %v3988
      %3990 = vmatmul.bf16.gmra.mxu0 %v3134
      %v3991 = vpop.f32.mrf.mxu0
      %v3992 = vadd.f32 %v3304, %v3991
      %v3993 = vpop.f32.mrf.mxu0
      %v3994 = vadd.f32 %v3304, %v3993
      %3995 = vmatmul.bf16.gmra.mxu0 %v3138
      %v3996 = vpop.f32.mrf.mxu0
      %v3997 = vadd.f32 %v3304, %v3996
      %v3998 = vpop.f32.mrf.mxu0
      %v3999 = vadd.f32 %v3304, %v3998
      %4000 = vmatmul.bf16.gmra.mxu0 %v3142
      %v4001 = vpop.f32.mrf.mxu0
      %v4002 = vadd.f32 %v3304, %v4001
      %v4003 = vpop.f32.mrf.mxu0
      %v4004 = vadd.f32 %v3304, %v4003
      %4005 = vmatmul.bf16.gmra.mxu0 %v3146
      %v4006 = vpop.f32.mrf.mxu0
      %v4007 = vadd.f32 %v3304, %v4006
      %v4008 = vpop.f32.mrf.mxu0
      %v4009 = vadd.f32 %v3304, %v4008
      %4010 = vmatmul.bf16.gmra.mxu0 %v3150
      %v4011 = vpop.f32.mrf.mxu0
      %v4012 = vadd.f32 %v3304, %v4011
      %v4013 = vpop.f32.mrf.mxu0
      %v4014 = vadd.f32 %v3304, %v4013
      %4015 = vmatmul.bf16.gmra.mxu0 %v3154
      %v4016 = vpop.f32.mrf.mxu0
      %v4017 = vadd.f32 %v3304, %v4016
      %v4018 = vpop.f32.mrf.mxu0
      %v4019 = vadd.f32 %v3304, %v4018
      %4020 = vmatmul.bf16.gmra.mxu0 %v3158
      %v4021 = vpop.f32.mrf.mxu0
      %v4022 = vadd.f32 %v3304, %v4021
      %v4023 = vpop.f32.mrf.mxu0
      %v4024 = vadd.f32 %v3304, %v4023
      %4025 = vmatmul.bf16.gmra.mxu0 %v3162
      %v4026 = vpop.f32.mrf.mxu0
      %v4027 = vadd.f32 %v3304, %v4026
      %v4028 = vpop.f32.mrf.mxu0
      %v4029 = vadd.f32 %v3304, %v4028
      %4030 = vmatmul.bf16.gmra.mxu0 %v3166
      %v4031 = vpop.f32.mrf.mxu0
      %v4032 = vadd.f32 %v3304, %v4031
      %v4033 = vpop.f32.mrf.mxu0
      %v4034 = vadd.f32 %v3304, %v4033
      %4035 = vmatmul.bf16.gmra.mxu0 %v3170
      %v4036 = vpop.f32.mrf.mxu0
      %v4037 = vadd.f32 %v3304, %v4036
      %v4038 = vpop.f32.mrf.mxu0
      %v4039 = vadd.f32 %v3304, %v4038
      %4040 = vdwg.mxu0
      %4041 = vmatpush.bf16.msra.mxu0 %v3756
      %4042 = vmatpush.bf16.msra.mxu0 %v3752
      %4043 = vmatpush.bf16.msra.mxu0 %v3748
      %4044 = vmatpush.bf16.msra.mxu0 %v3744
      %4045 = vmatpush.bf16.msra.mxu0 %v3740
      %4046 = vmatpush.bf16.msra.mxu0 %v3736
      %4047 = vmatpush.bf16.msra.mxu0 %v3732
      %4048 = vmatpush.bf16.msra.mxu0 %v3728
      %4049 = vmatmul.bf16.gmra.mxu0 %v3111
      %v4050 = vpop.f32.mrf.mxu0
      %v4051 = vadd.f32 %v3962, %v4050
      %v4052 = vpop.f32.mrf.mxu0
      %v4053 = vadd.f32 %v3964, %v4052
      %4054 = vmatmul.bf16.gmra.mxu0 %v3115
      %v4055 = vpop.f32.mrf.mxu0
      %v4056 = vadd.f32 %v3967, %v4055
      %v4057 = vpop.f32.mrf.mxu0
      %v4058 = vadd.f32 %v3969, %v4057
      %4059 = vmatmul.bf16.gmra.mxu0 %v3119
      %v4060 = vpop.f32.mrf.mxu0
      %v4061 = vadd.f32 %v3972, %v4060
      %v4062 = vpop.f32.mrf.mxu0
      %v4063 = vadd.f32 %v3974, %v4062
      %4064 = vmatmul.bf16.gmra.mxu0 %v3123
      %v4065 = vpop.f32.mrf.mxu0
      %v4066 = vadd.f32 %v3977, %v4065
      %v4067 = vpop.f32.mrf.mxu0
      %v4068 = vadd.f32 %v3979, %v4067
      %4069 = vmatmul.bf16.gmra.mxu0 %v3127
      %v4070 = vpop.f32.mrf.mxu0
      %v4071 = vadd.f32 %v3982, %v4070
      %v4072 = vpop.f32.mrf.mxu0
      %v4073 = vadd.f32 %v3984, %v4072
      %4074 = vmatmul.bf16.gmra.mxu0 %v3131
      %v4075 = vpop.f32.mrf.mxu0
      %v4076 = vadd.f32 %v3987, %v4075
      %v4077 = vpop.f32.mrf.mxu0
      %v4078 = vadd.f32 %v3989, %v4077
      %4079 = vmatmul.bf16.gmra.mxu0 %v3135
      %v4080 = vpop.f32.mrf.mxu0
      %v4081 = vadd.f32 %v3992, %v4080
      %v4082 = vpop.f32.mrf.mxu0
      %v4083 = vadd.f32 %v3994, %v4082
      %4084 = vmatmul.bf16.gmra.mxu0 %v3139
      %v4085 = vpop.f32.mrf.mxu0
      %v4086 = vadd.f32 %v3997, %v4085
      %v4087 = vpop.f32.mrf.mxu0
      %v4088 = vadd.f32 %v3999, %v4087
      %4089 = vmatmul.bf16.gmra.mxu0 %v3143
      %v4090 = vpop.f32.mrf.mxu0
      %v4091 = vadd.f32 %v4002, %v4090
      %v4092 = vpop.f32.mrf.mxu0
      %v4093 = vadd.f32 %v4004, %v4092
      %4094 = vmatmul.bf16.gmra.mxu0 %v3147
      %v4095 = vpop.f32.mrf.mxu0
      %v4096 = vadd.f32 %v4007, %v4095
      %v4097 = vpop.f32.mrf.mxu0
      %v4098 = vadd.f32 %v4009, %v4097
      %4099 = vmatmul.bf16.gmra.mxu0 %v3151
      %v4100 = vpop.f32.mrf.mxu0
      %v4101 = vadd.f32 %v4012, %v4100
      %v4102 = vpop.f32.mrf.mxu0
      %v4103 = vadd.f32 %v4014, %v4102
      %4104 = vmatmul.bf16.gmra.mxu0 %v3155
      %v4105 = vpop.f32.mrf.mxu0
      %v4106 = vadd.f32 %v4017, %v4105
      %v4107 = vpop.f32.mrf.mxu0
      %v4108 = vadd.f32 %v4019, %v4107
      %4109 = vmatmul.bf16.gmra.mxu0 %v3159
      %v4110 = vpop.f32.mrf.mxu0
      %v4111 = vadd.f32 %v4022, %v4110
      %v4112 = vpop.f32.mrf.mxu0
      %v4113 = vadd.f32 %v4024, %v4112
      %4114 = vmatmul.bf16.gmra.mxu0 %v3163
      %v4115 = vpop.f32.mrf.mxu0
      %v4116 = vadd.f32 %v4027, %v4115
      %v4117 = vpop.f32.mrf.mxu0
      %v4118 = vadd.f32 %v4029, %v4117
      %4119 = vmatmul.bf16.gmra.mxu0 %v3167
      %v4120 = vpop.f32.mrf.mxu0
      %v4121 = vadd.f32 %v4032, %v4120
      %v4122 = vpop.f32.mrf.mxu0
      %v4123 = vadd.f32 %v4034, %v4122
      %4124 = vmatmul.bf16.gmra.mxu0 %v3171
      %v4125 = vpop.f32.mrf.mxu0
      %v4126 = vadd.f32 %v4037, %v4125
      %v4127 = vpop.f32.mrf.mxu0
      %v4128 = vadd.f32 %v4039, %v4127
      %4129 = vdwg.mxu0
      %4130 = vmatpush.bf16.msra.mxu0 %v3788
      %4131 = vmatpush.bf16.msra.mxu0 %v3784
      %4132 = vmatpush.bf16.msra.mxu0 %v3780
      %4133 = vmatpush.bf16.msra.mxu0 %v3776
      %4134 = vmatpush.bf16.msra.mxu0 %v3772
      %4135 = vmatpush.bf16.msra.mxu0 %v3768
      %4136 = vmatpush.bf16.msra.mxu0 %v3764
      %4137 = vmatpush.bf16.msra.mxu0 %v3760
      %4138 = vmatmul.bf16.gmra.mxu0 %v3112
      %v4139 = vpop.f32.mrf.mxu0
      %v4140 = vadd.f32 %v4051, %v4139
      %v4141 = vpop.f32.mrf.mxu0
      %v4142 = vadd.f32 %v4053, %v4141
      %4143 = vmatmul.bf16.gmra.mxu0 %v3116
      %v4144 = vpop.f32.mrf.mxu0
      %v4145 = vadd.f32 %v4056, %v4144
      %v4146 = vpop.f32.mrf.mxu0
      %v4147 = vadd.f32 %v4058, %v4146
      %4148 = vmatmul.bf16.gmra.mxu0 %v3120
      %v4149 = vpop.f32.mrf.mxu0
      %v4150 = vadd.f32 %v4061, %v4149
      %v4151 = vpop.f32.mrf.mxu0
      %v4152 = vadd.f32 %v4063, %v4151
      %4153 = vmatmul.bf16.gmra.mxu0 %v3124
      %v4154 = vpop.f32.mrf.mxu0
      %v4155 = vadd.f32 %v4066, %v4154
      %v4156 = vpop.f32.mrf.mxu0
      %v4157 = vadd.f32 %v4068, %v4156
      %4158 = vmatmul.bf16.gmra.mxu0 %v3128
      %v4159 = vpop.f32.mrf.mxu0
      %v4160 = vadd.f32 %v4071, %v4159
      %v4161 = vpop.f32.mrf.mxu0
      %v4162 = vadd.f32 %v4073, %v4161
      %4163 = vmatmul.bf16.gmra.mxu0 %v3132
      %v4164 = vpop.f32.mrf.mxu0
      %v4165 = vadd.f32 %v4076, %v4164
      %v4166 = vpop.f32.mrf.mxu0
      %v4167 = vadd.f32 %v4078, %v4166
      %4168 = vmatmul.bf16.gmra.mxu0 %v3136
      %v4169 = vpop.f32.mrf.mxu0
      %v4170 = vadd.f32 %v4081, %v4169
      %v4171 = vpop.f32.mrf.mxu0
      %v4172 = vadd.f32 %v4083, %v4171
      %4173 = vmatmul.bf16.gmra.mxu0 %v3140
      %v4174 = vpop.f32.mrf.mxu0
      %v4175 = vadd.f32 %v4086, %v4174
      %v4176 = vpop.f32.mrf.mxu0
      %v4177 = vadd.f32 %v4088, %v4176
      %4178 = vmatmul.bf16.gmra.mxu0 %v3144
      %v4179 = vpop.f32.mrf.mxu0
      %v4180 = vadd.f32 %v4091, %v4179
      %v4181 = vpop.f32.mrf.mxu0
      %v4182 = vadd.f32 %v4093, %v4181
      %4183 = vmatmul.bf16.gmra.mxu0 %v3148
      %v4184 = vpop.f32.mrf.mxu0
      %v4185 = vadd.f32 %v4096, %v4184
      %v4186 = vpop.f32.mrf.mxu0
      %v4187 = vadd.f32 %v4098, %v4186
      %4188 = vmatmul.bf16.gmra.mxu0 %v3152
      %v4189 = vpop.f32.mrf.mxu0
      %v4190 = vadd.f32 %v4101, %v4189
      %v4191 = vpop.f32.mrf.mxu0
      %v4192 = vadd.f32 %v4103, %v4191
      %4193 = vmatmul.bf16.gmra.mxu0 %v3156
      %v4194 = vpop.f32.mrf.mxu0
      %v4195 = vadd.f32 %v4106, %v4194
      %v4196 = vpop.f32.mrf.mxu0
      %v4197 = vadd.f32 %v4108, %v4196
      %4198 = vmatmul.bf16.gmra.mxu0 %v3160
      %v4199 = vpop.f32.mrf.mxu0
      %v4200 = vadd.f32 %v4111, %v4199
      %v4201 = vpop.f32.mrf.mxu0
      %v4202 = vadd.f32 %v4113, %v4201
      %4203 = vmatmul.bf16.gmra.mxu0 %v3164
      %v4204 = vpop.f32.mrf.mxu0
      %v4205 = vadd.f32 %v4116, %v4204
      %v4206 = vpop.f32.mrf.mxu0
      %v4207 = vadd.f32 %v4118, %v4206
      %4208 = vmatmul.bf16.gmra.mxu0 %v3168
      %v4209 = vpop.f32.mrf.mxu0
      %v4210 = vadd.f32 %v4121, %v4209
      %v4211 = vpop.f32.mrf.mxu0
      %v4212 = vadd.f32 %v4123, %v4211
      %4213 = vmatmul.bf16.gmra.mxu0 %v3172
      %v4214 = vpop.f32.mrf.mxu0
      %v4215 = vadd.f32 %v4126, %v4214
      %v4216 = vpop.f32.mrf.mxu0
      %v4217 = vadd.f32 %v4128, %v4216
      %4218 = vdwg.mxu0
      %4219 = vmatpush.bf16.msra.mxu0 %v3820
      %4220 = vmatpush.bf16.msra.mxu0 %v3816
      %4221 = vmatpush.bf16.msra.mxu0 %v3812
      %4222 = vmatpush.bf16.msra.mxu0 %v3808
      %4223 = vmatpush.bf16.msra.mxu0 %v3804
      %4224 = vmatpush.bf16.msra.mxu0 %v3800
      %4225 = vmatpush.bf16.msra.mxu0 %v3796
      %4226 = vmatpush.bf16.msra.mxu0 %v3792
      %4227 = vmatmul.bf16.gmra.mxu0 %v3113
      %v4228 = vpop.f32.mrf.mxu0
      %v4229 = vadd.f32 %v4140, %v4228
      %v4230 = vpop.f32.mrf.mxu0
      %v4231 = vadd.f32 %v4142, %v4230
      %4232 = vmatmul.bf16.gmra.mxu0 %v3117
      %v4233 = vpop.f32.mrf.mxu0
      %v4234 = vadd.f32 %v4145, %v4233
      %v4235 = vpop.f32.mrf.mxu0
      %v4236 = vadd.f32 %v4147, %v4235
      %4237 = vmatmul.bf16.gmra.mxu0 %v3121
      %v4238 = vpop.f32.mrf.mxu0
      %v4239 = vadd.f32 %v4150, %v4238
      %v4240 = vpop.f32.mrf.mxu0
      %v4241 = vadd.f32 %v4152, %v4240
      %4242 = vmatmul.bf16.gmra.mxu0 %v3125
      %v4243 = vpop.f32.mrf.mxu0
      %v4244 = vadd.f32 %v4155, %v4243
      %v4245 = vpop.f32.mrf.mxu0
      %v4246 = vadd.f32 %v4157, %v4245
      %4247 = vmatmul.bf16.gmra.mxu0 %v3129
      %v4248 = vpop.f32.mrf.mxu0
      %v4249 = vadd.f32 %v4160, %v4248
      %v4250 = vpop.f32.mrf.mxu0
      %v4251 = vadd.f32 %v4162, %v4250
      %4252 = vmatmul.bf16.gmra.mxu0 %v3133
      %v4253 = vpop.f32.mrf.mxu0
      %v4254 = vadd.f32 %v4165, %v4253
      %v4255 = vpop.f32.mrf.mxu0
      %v4256 = vadd.f32 %v4167, %v4255
      %4257 = vmatmul.bf16.gmra.mxu0 %v3137
      %v4258 = vpop.f32.mrf.mxu0
      %v4259 = vadd.f32 %v4170, %v4258
      %v4260 = vpop.f32.mrf.mxu0
      %v4261 = vadd.f32 %v4172, %v4260
      %4262 = vmatmul.bf16.gmra.mxu0 %v3141
      %v4263 = vpop.f32.mrf.mxu0
      %v4264 = vadd.f32 %v4175, %v4263
      %v4265 = vpop.f32.mrf.mxu0
      %v4266 = vadd.f32 %v4177, %v4265
      %4267 = vmatmul.bf16.gmra.mxu0 %v3145
      %v4268 = vpop.f32.mrf.mxu0
      %v4269 = vadd.f32 %v4180, %v4268
      %v4270 = vpop.f32.mrf.mxu0
      %v4271 = vadd.f32 %v4182, %v4270
      %4272 = vmatmul.bf16.gmra.mxu0 %v3149
      %v4273 = vpop.f32.mrf.mxu0
      %v4274 = vadd.f32 %v4185, %v4273
      %v4275 = vpop.f32.mrf.mxu0
      %v4276 = vadd.f32 %v4187, %v4275
      %4277 = vmatmul.bf16.gmra.mxu0 %v3153
      %v4278 = vpop.f32.mrf.mxu0
      %v4279 = vadd.f32 %v4190, %v4278
      %v4280 = vpop.f32.mrf.mxu0
      %v4281 = vadd.f32 %v4192, %v4280
      %4282 = vmatmul.bf16.gmra.mxu0 %v3157
      %v4283 = vpop.f32.mrf.mxu0
      %v4284 = vadd.f32 %v4195, %v4283
      %v4285 = vpop.f32.mrf.mxu0
      %v4286 = vadd.f32 %v4197, %v4285
      %4287 = vmatmul.bf16.gmra.mxu0 %v3161
      %v4288 = vpop.f32.mrf.mxu0
      %v4289 = vadd.f32 %v4200, %v4288
      %v4290 = vpop.f32.mrf.mxu0
      %v4291 = vadd.f32 %v4202, %v4290
      %4292 = vmatmul.bf16.gmra.mxu0 %v3165
      %v4293 = vpop.f32.mrf.mxu0
      %v4294 = vadd.f32 %v4205, %v4293
      %v4295 = vpop.f32.mrf.mxu0
      %v4296 = vadd.f32 %v4207, %v4295
      %4297 = vmatmul.bf16.gmra.mxu0 %v3169
      %v4298 = vpop.f32.mrf.mxu0
      %v4299 = vadd.f32 %v4210, %v4298
      %v4300 = vpop.f32.mrf.mxu0
      %v4301 = vadd.f32 %v4212, %v4300
      %4302 = vmatmul.bf16.gmra.mxu0 %v3173
      %v4303 = vpop.f32.mrf.mxu0
      %v4304 = vadd.f32 %v4215, %v4303
      %v4305 = vpop.f32.mrf.mxu0
      %v4306 = vadd.f32 %v4217, %v4305
      %4307 = vdwg.mxu0
      %4308 = vmatpush.bf16.msra.mxu0 %v3725
      %4309 = vmatpush.bf16.msra.mxu0 %v3721
      %4310 = vmatpush.bf16.msra.mxu0 %v3717
      %4311 = vmatpush.bf16.msra.mxu0 %v3713
      %4312 = vmatpush.bf16.msra.mxu0 %v3709
      %4313 = vmatpush.bf16.msra.mxu0 %v3705
      %4314 = vmatpush.bf16.msra.mxu0 %v3701
      %4315 = vmatpush.bf16.msra.mxu0 %v3697
      %4316 = vmatmul.bf16.gmra.mxu0 %v3110
      %v4317 = vpop.f32.mrf.mxu0
      %v4318 = vadd.f32 %v3305, %v4317
      %v4319 = vpop.f32.mrf.mxu0
      %v4320 = vadd.f32 %v3305, %v4319
      %4321 = vmatmul.bf16.gmra.mxu0 %v3114
      %v4322 = vpop.f32.mrf.mxu0
      %v4323 = vadd.f32 %v3305, %v4322
      %v4324 = vpop.f32.mrf.mxu0
      %v4325 = vadd.f32 %v3305, %v4324
      %4326 = vmatmul.bf16.gmra.mxu0 %v3118
      %v4327 = vpop.f32.mrf.mxu0
      %v4328 = vadd.f32 %v3305, %v4327
      %v4329 = vpop.f32.mrf.mxu0
      %v4330 = vadd.f32 %v3305, %v4329
      %4331 = vmatmul.bf16.gmra.mxu0 %v3122
      %v4332 = vpop.f32.mrf.mxu0
      %v4333 = vadd.f32 %v3305, %v4332
      %v4334 = vpop.f32.mrf.mxu0
      %v4335 = vadd.f32 %v3305, %v4334
      %4336 = vmatmul.bf16.gmra.mxu0 %v3126
      %v4337 = vpop.f32.mrf.mxu0
      %v4338 = vadd.f32 %v3305, %v4337
      %v4339 = vpop.f32.mrf.mxu0
      %v4340 = vadd.f32 %v3305, %v4339
      %4341 = vmatmul.bf16.gmra.mxu0 %v3130
      %v4342 = vpop.f32.mrf.mxu0
      %v4343 = vadd.f32 %v3305, %v4342
      %v4344 = vpop.f32.mrf.mxu0
      %v4345 = vadd.f32 %v3305, %v4344
      %4346 = vmatmul.bf16.gmra.mxu0 %v3134
      %v4347 = vpop.f32.mrf.mxu0
      %v4348 = vadd.f32 %v3305, %v4347
      %v4349 = vpop.f32.mrf.mxu0
      %v4350 = vadd.f32 %v3305, %v4349
      %4351 = vmatmul.bf16.gmra.mxu0 %v3138
      %v4352 = vpop.f32.mrf.mxu0
      %v4353 = vadd.f32 %v3305, %v4352
      %v4354 = vpop.f32.mrf.mxu0
      %v4355 = vadd.f32 %v3305, %v4354
      %4356 = vmatmul.bf16.gmra.mxu0 %v3142
      %v4357 = vpop.f32.mrf.mxu0
      %v4358 = vadd.f32 %v3305, %v4357
      %v4359 = vpop.f32.mrf.mxu0
      %v4360 = vadd.f32 %v3305, %v4359
      %4361 = vmatmul.bf16.gmra.mxu0 %v3146
      %v4362 = vpop.f32.mrf.mxu0
      %v4363 = vadd.f32 %v3305, %v4362
      %v4364 = vpop.f32.mrf.mxu0
      %v4365 = vadd.f32 %v3305, %v4364
      %4366 = vmatmul.bf16.gmra.mxu0 %v3150
      %v4367 = vpop.f32.mrf.mxu0
      %v4368 = vadd.f32 %v3305, %v4367
      %v4369 = vpop.f32.mrf.mxu0
      %v4370 = vadd.f32 %v3305, %v4369
      %4371 = vmatmul.bf16.gmra.mxu0 %v3154
      %v4372 = vpop.f32.mrf.mxu0
      %v4373 = vadd.f32 %v3305, %v4372
      %v4374 = vpop.f32.mrf.mxu0
      %v4375 = vadd.f32 %v3305, %v4374
      %4376 = vmatmul.bf16.gmra.mxu0 %v3158
      %v4377 = vpop.f32.mrf.mxu0
      %v4378 = vadd.f32 %v3305, %v4377
      %v4379 = vpop.f32.mrf.mxu0
      %v4380 = vadd.f32 %v3305, %v4379
      %4381 = vmatmul.bf16.gmra.mxu0 %v3162
      %v4382 = vpop.f32.mrf.mxu0
      %v4383 = vadd.f32 %v3305, %v4382
      %v4384 = vpop.f32.mrf.mxu0
      %v4385 = vadd.f32 %v3305, %v4384
      %4386 = vmatmul.bf16.gmra.mxu0 %v3166
      %v4387 = vpop.f32.mrf.mxu0
      %v4388 = vadd.f32 %v3305, %v4387
      %v4389 = vpop.f32.mrf.mxu0
      %v4390 = vadd.f32 %v3305, %v4389
      %4391 = vmatmul.bf16.gmra.mxu0 %v3170
      %v4392 = vpop.f32.mrf.mxu0
      %v4393 = vadd.f32 %v3305, %v4392
      %v4394 = vpop.f32.mrf.mxu0
      %v4395 = vadd.f32 %v3305, %v4394
      %4396 = vdwg.mxu0
      %4397 = vmatpush.bf16.msra.mxu0 %v3757
      %4398 = vmatpush.bf16.msra.mxu0 %v3753
      %4399 = vmatpush.bf16.msra.mxu0 %v3749
      %4400 = vmatpush.bf16.msra.mxu0 %v3745
      %4401 = vmatpush.bf16.msra.mxu0 %v3741
      %4402 = vmatpush.bf16.msra.mxu0 %v3737
      %4403 = vmatpush.bf16.msra.mxu0 %v3733
      %4404 = vmatpush.bf16.msra.mxu0 %v3729
      %4405 = vmatmul.bf16.gmra.mxu0 %v3111
      %v4406 = vpop.f32.mrf.mxu0
      %v4407 = vadd.f32 %v4318, %v4406
      %v4408 = vpop.f32.mrf.mxu0
      %v4409 = vadd.f32 %v4320, %v4408
      %4410 = vmatmul.bf16.gmra.mxu0 %v3115
      %v4411 = vpop.f32.mrf.mxu0
      %v4412 = vadd.f32 %v4323, %v4411
      %v4413 = vpop.f32.mrf.mxu0
      %v4414 = vadd.f32 %v4325, %v4413
      %4415 = vmatmul.bf16.gmra.mxu0 %v3119
      %v4416 = vpop.f32.mrf.mxu0
      %v4417 = vadd.f32 %v4328, %v4416
      %v4418 = vpop.f32.mrf.mxu0
      %v4419 = vadd.f32 %v4330, %v4418
      %4420 = vmatmul.bf16.gmra.mxu0 %v3123
      %v4421 = vpop.f32.mrf.mxu0
      %v4422 = vadd.f32 %v4333, %v4421
      %v4423 = vpop.f32.mrf.mxu0
      %v4424 = vadd.f32 %v4335, %v4423
      %4425 = vmatmul.bf16.gmra.mxu0 %v3127
      %v4426 = vpop.f32.mrf.mxu0
      %v4427 = vadd.f32 %v4338, %v4426
      %v4428 = vpop.f32.mrf.mxu0
      %v4429 = vadd.f32 %v4340, %v4428
      %4430 = vmatmul.bf16.gmra.mxu0 %v3131
      %v4431 = vpop.f32.mrf.mxu0
      %v4432 = vadd.f32 %v4343, %v4431
      %v4433 = vpop.f32.mrf.mxu0
      %v4434 = vadd.f32 %v4345, %v4433
      %4435 = vmatmul.bf16.gmra.mxu0 %v3135
      %v4436 = vpop.f32.mrf.mxu0
      %v4437 = vadd.f32 %v4348, %v4436
      %v4438 = vpop.f32.mrf.mxu0
      %v4439 = vadd.f32 %v4350, %v4438
      %4440 = vmatmul.bf16.gmra.mxu0 %v3139
      %v4441 = vpop.f32.mrf.mxu0
      %v4442 = vadd.f32 %v4353, %v4441
      %v4443 = vpop.f32.mrf.mxu0
      %v4444 = vadd.f32 %v4355, %v4443
      %4445 = vmatmul.bf16.gmra.mxu0 %v3143
      %v4446 = vpop.f32.mrf.mxu0
      %v4447 = vadd.f32 %v4358, %v4446
      %v4448 = vpop.f32.mrf.mxu0
      %v4449 = vadd.f32 %v4360, %v4448
      %4450 = vmatmul.bf16.gmra.mxu0 %v3147
      %v4451 = vpop.f32.mrf.mxu0
      %v4452 = vadd.f32 %v4363, %v4451
      %v4453 = vpop.f32.mrf.mxu0
      %v4454 = vadd.f32 %v4365, %v4453
      %4455 = vmatmul.bf16.gmra.mxu0 %v3151
      %v4456 = vpop.f32.mrf.mxu0
      %v4457 = vadd.f32 %v4368, %v4456
      %v4458 = vpop.f32.mrf.mxu0
      %v4459 = vadd.f32 %v4370, %v4458
      %4460 = vmatmul.bf16.gmra.mxu0 %v3155
      %v4461 = vpop.f32.mrf.mxu0
      %v4462 = vadd.f32 %v4373, %v4461
      %v4463 = vpop.f32.mrf.mxu0
      %v4464 = vadd.f32 %v4375, %v4463
      %4465 = vmatmul.bf16.gmra.mxu0 %v3159
      %v4466 = vpop.f32.mrf.mxu0
      %v4467 = vadd.f32 %v4378, %v4466
      %v4468 = vpop.f32.mrf.mxu0
      %v4469 = vadd.f32 %v4380, %v4468
      %4470 = vmatmul.bf16.gmra.mxu0 %v3163
      %v4471 = vpop.f32.mrf.mxu0
      %v4472 = vadd.f32 %v4383, %v4471
      %v4473 = vpop.f32.mrf.mxu0
      %v4474 = vadd.f32 %v4385, %v4473
      %4475 = vmatmul.bf16.gmra.mxu0 %v3167
      %v4476 = vpop.f32.mrf.mxu0
      %v4477 = vadd.f32 %v4388, %v4476
      %v4478 = vpop.f32.mrf.mxu0
      %v4479 = vadd.f32 %v4390, %v4478
      %4480 = vmatmul.bf16.gmra.mxu0 %v3171
      %v4481 = vpop.f32.mrf.mxu0
      %v4482 = vadd.f32 %v4393, %v4481
      %v4483 = vpop.f32.mrf.mxu0
      %v4484 = vadd.f32 %v4395, %v4483
      %4485 = vdwg.mxu0
      %4486 = vmatpush.bf16.msra.mxu0 %v3789
      %4487 = vmatpush.bf16.msra.mxu0 %v3785
      %4488 = vmatpush.bf16.msra.mxu0 %v3781
      %4489 = vmatpush.bf16.msra.mxu0 %v3777
      %4490 = vmatpush.bf16.msra.mxu0 %v3773
      %4491 = vmatpush.bf16.msra.mxu0 %v3769
      %4492 = vmatpush.bf16.msra.mxu0 %v3765
      %4493 = vmatpush.bf16.msra.mxu0 %v3761
      %4494 = vmatmul.bf16.gmra.mxu0 %v3112
      %v4495 = vpop.f32.mrf.mxu0
      %v4496 = vadd.f32 %v4407, %v4495
      %v4497 = vpop.f32.mrf.mxu0
      %v4498 = vadd.f32 %v4409, %v4497
      %4499 = vmatmul.bf16.gmra.mxu0 %v3116
      %v4500 = vpop.f32.mrf.mxu0
      %v4501 = vadd.f32 %v4412, %v4500
      %v4502 = vpop.f32.mrf.mxu0
      %v4503 = vadd.f32 %v4414, %v4502
      %4504 = vmatmul.bf16.gmra.mxu0 %v3120
      %v4505 = vpop.f32.mrf.mxu0
      %v4506 = vadd.f32 %v4417, %v4505
      %v4507 = vpop.f32.mrf.mxu0
      %v4508 = vadd.f32 %v4419, %v4507
      %4509 = vmatmul.bf16.gmra.mxu0 %v3124
      %v4510 = vpop.f32.mrf.mxu0
      %v4511 = vadd.f32 %v4422, %v4510
      %v4512 = vpop.f32.mrf.mxu0
      %v4513 = vadd.f32 %v4424, %v4512
      %4514 = vmatmul.bf16.gmra.mxu0 %v3128
      %v4515 = vpop.f32.mrf.mxu0
      %v4516 = vadd.f32 %v4427, %v4515
      %v4517 = vpop.f32.mrf.mxu0
      %v4518 = vadd.f32 %v4429, %v4517
      %4519 = vmatmul.bf16.gmra.mxu0 %v3132
      %v4520 = vpop.f32.mrf.mxu0
      %v4521 = vadd.f32 %v4432, %v4520
      %v4522 = vpop.f32.mrf.mxu0
      %v4523 = vadd.f32 %v4434, %v4522
      %4524 = vmatmul.bf16.gmra.mxu0 %v3136
      %v4525 = vpop.f32.mrf.mxu0
      %v4526 = vadd.f32 %v4437, %v4525
      %v4527 = vpop.f32.mrf.mxu0
      %v4528 = vadd.f32 %v4439, %v4527
      %4529 = vmatmul.bf16.gmra.mxu0 %v3140
      %v4530 = vpop.f32.mrf.mxu0
      %v4531 = vadd.f32 %v4442, %v4530
      %v4532 = vpop.f32.mrf.mxu0
      %v4533 = vadd.f32 %v4444, %v4532
      %4534 = vmatmul.bf16.gmra.mxu0 %v3144
      %v4535 = vpop.f32.mrf.mxu0
      %v4536 = vadd.f32 %v4447, %v4535
      %v4537 = vpop.f32.mrf.mxu0
      %v4538 = vadd.f32 %v4449, %v4537
      %4539 = vmatmul.bf16.gmra.mxu0 %v3148
      %v4540 = vpop.f32.mrf.mxu0
      %v4541 = vadd.f32 %v4452, %v4540
      %v4542 = vpop.f32.mrf.mxu0
      %v4543 = vadd.f32 %v4454, %v4542
      %4544 = vmatmul.bf16.gmra.mxu0 %v3152
      %v4545 = vpop.f32.mrf.mxu0
      %v4546 = vadd.f32 %v4457, %v4545
      %v4547 = vpop.f32.mrf.mxu0
      %v4548 = vadd.f32 %v4459, %v4547
      %4549 = vmatmul.bf16.gmra.mxu0 %v3156
      %v4550 = vpop.f32.mrf.mxu0
      %v4551 = vadd.f32 %v4462, %v4550
      %v4552 = vpop.f32.mrf.mxu0
      %v4553 = vadd.f32 %v4464, %v4552
      %4554 = vmatmul.bf16.gmra.mxu0 %v3160
      %v4555 = vpop.f32.mrf.mxu0
      %v4556 = vadd.f32 %v4467, %v4555
      %v4557 = vpop.f32.mrf.mxu0
      %v4558 = vadd.f32 %v4469, %v4557
      %4559 = vmatmul.bf16.gmra.mxu0 %v3164
      %v4560 = vpop.f32.mrf.mxu0
      %v4561 = vadd.f32 %v4472, %v4560
      %v4562 = vpop.f32.mrf.mxu0
      %v4563 = vadd.f32 %v4474, %v4562
      %4564 = vmatmul.bf16.gmra.mxu0 %v3168
      %v4565 = vpop.f32.mrf.mxu0
      %v4566 = vadd.f32 %v4477, %v4565
      %v4567 = vpop.f32.mrf.mxu0
      %v4568 = vadd.f32 %v4479, %v4567
      %4569 = vmatmul.bf16.gmra.mxu0 %v3172
      %v4570 = vpop.f32.mrf.mxu0
      %v4571 = vadd.f32 %v4482, %v4570
      %v4572 = vpop.f32.mrf.mxu0
      %v4573 = vadd.f32 %v4484, %v4572
      %4574 = vdwg.mxu0
      %4575 = vmatpush.bf16.msra.mxu0 %v3821
      %4576 = vmatpush.bf16.msra.mxu0 %v3817
      %4577 = vmatpush.bf16.msra.mxu0 %v3813
      %4578 = vmatpush.bf16.msra.mxu0 %v3809
      %4579 = vmatpush.bf16.msra.mxu0 %v3805
      %4580 = vmatpush.bf16.msra.mxu0 %v3801
      %4581 = vmatpush.bf16.msra.mxu0 %v3797
      %4582 = vmatpush.bf16.msra.mxu0 %v3793
      %4583 = vmatmul.bf16.gmra.mxu0 %v3113
      %v4584 = vpop.f32.mrf.mxu0
      %v4585 = vadd.f32 %v4496, %v4584
      %v4586 = vpop.f32.mrf.mxu0
      %v4587 = vadd.f32 %v4498, %v4586
      %4588 = vmatmul.bf16.gmra.mxu0 %v3117
      %v4589 = vpop.f32.mrf.mxu0
      %v4590 = vadd.f32 %v4501, %v4589
      %v4591 = vpop.f32.mrf.mxu0
      %v4592 = vadd.f32 %v4503, %v4591
      %4593 = vmatmul.bf16.gmra.mxu0 %v3121
      %v4594 = vpop.f32.mrf.mxu0
      %v4595 = vadd.f32 %v4506, %v4594
      %v4596 = vpop.f32.mrf.mxu0
      %v4597 = vadd.f32 %v4508, %v4596
      %4598 = vmatmul.bf16.gmra.mxu0 %v3125
      %v4599 = vpop.f32.mrf.mxu0
      %v4600 = vadd.f32 %v4511, %v4599
      %v4601 = vpop.f32.mrf.mxu0
      %v4602 = vadd.f32 %v4513, %v4601
      %4603 = vmatmul.bf16.gmra.mxu0 %v3129
      %v4604 = vpop.f32.mrf.mxu0
      %v4605 = vadd.f32 %v4516, %v4604
      %v4606 = vpop.f32.mrf.mxu0
      %v4607 = vadd.f32 %v4518, %v4606
      %4608 = vmatmul.bf16.gmra.mxu0 %v3133
      %v4609 = vpop.f32.mrf.mxu0
      %v4610 = vadd.f32 %v4521, %v4609
      %v4611 = vpop.f32.mrf.mxu0
      %v4612 = vadd.f32 %v4523, %v4611
      %4613 = vmatmul.bf16.gmra.mxu0 %v3137
      %v4614 = vpop.f32.mrf.mxu0
      %v4615 = vadd.f32 %v4526, %v4614
      %v4616 = vpop.f32.mrf.mxu0
      %v4617 = vadd.f32 %v4528, %v4616
      %4618 = vmatmul.bf16.gmra.mxu0 %v3141
      %v4619 = vpop.f32.mrf.mxu0
      %v4620 = vadd.f32 %v4531, %v4619
      %v4621 = vpop.f32.mrf.mxu0
      %v4622 = vadd.f32 %v4533, %v4621
      %4623 = vmatmul.bf16.gmra.mxu0 %v3145
      %v4624 = vpop.f32.mrf.mxu0
      %v4625 = vadd.f32 %v4536, %v4624
      %v4626 = vpop.f32.mrf.mxu0
      %v4627 = vadd.f32 %v4538, %v4626
      %4628 = vmatmul.bf16.gmra.mxu0 %v3149
      %v4629 = vpop.f32.mrf.mxu0
      %v4630 = vadd.f32 %v4541, %v4629
      %v4631 = vpop.f32.mrf.mxu0
      %v4632 = vadd.f32 %v4543, %v4631
      %4633 = vmatmul.bf16.gmra.mxu0 %v3153
      %v4634 = vpop.f32.mrf.mxu0
      %v4635 = vadd.f32 %v4546, %v4634
      %v4636 = vpop.f32.mrf.mxu0
      %v4637 = vadd.f32 %v4548, %v4636
      %4638 = vmatmul.bf16.gmra.mxu0 %v3157
      %v4639 = vpop.f32.mrf.mxu0
      %v4640 = vadd.f32 %v4551, %v4639
      %v4641 = vpop.f32.mrf.mxu0
      %v4642 = vadd.f32 %v4553, %v4641
      %4643 = vmatmul.bf16.gmra.mxu0 %v3161
      %v4644 = vpop.f32.mrf.mxu0
      %v4645 = vadd.f32 %v4556, %v4644
      %v4646 = vpop.f32.mrf.mxu0
      %v4647 = vadd.f32 %v4558, %v4646
      %4648 = vmatmul.bf16.gmra.mxu0 %v3165
      %v4649 = vpop.f32.mrf.mxu0
      %v4650 = vadd.f32 %v4561, %v4649
      %v4651 = vpop.f32.mrf.mxu0
      %v4652 = vadd.f32 %v4563, %v4651
      %4653 = vmatmul.bf16.gmra.mxu0 %v3169
      %v4654 = vpop.f32.mrf.mxu0
      %v4655 = vadd.f32 %v4566, %v4654
      %v4656 = vpop.f32.mrf.mxu0
      %v4657 = vadd.f32 %v4568, %v4656
      %4658 = vmatmul.bf16.gmra.mxu0 %v3173
      %v4659 = vpop.f32.mrf.mxu0
      %v4660 = vadd.f32 %v4571, %v4659
      %v4661 = vpop.f32.mrf.mxu0
      %v4662 = vadd.f32 %v4573, %v4661
      %4663 = vdwg.mxu0
      %4664 = vmatpush.bf16.msra.mxu0 %v3726
      %4665 = vmatpush.bf16.msra.mxu0 %v3722
      %4666 = vmatpush.bf16.msra.mxu0 %v3718
      %4667 = vmatpush.bf16.msra.mxu0 %v3714
      %4668 = vmatpush.bf16.msra.mxu0 %v3710
      %4669 = vmatpush.bf16.msra.mxu0 %v3706
      %4670 = vmatpush.bf16.msra.mxu0 %v3702
      %4671 = vmatpush.bf16.msra.mxu0 %v3698
      %4672 = vmatmul.bf16.gmra.mxu0 %v3110
      %v4673 = vpop.f32.mrf.mxu0
      %v4674 = vadd.f32 %v3306, %v4673
      %v4675 = vpop.f32.mrf.mxu0
      %v4676 = vadd.f32 %v3306, %v4675
      %4677 = vmatmul.bf16.gmra.mxu0 %v3114
      %v4678 = vpop.f32.mrf.mxu0
      %v4679 = vadd.f32 %v3306, %v4678
      %v4680 = vpop.f32.mrf.mxu0
      %v4681 = vadd.f32 %v3306, %v4680
      %4682 = vmatmul.bf16.gmra.mxu0 %v3118
      %v4683 = vpop.f32.mrf.mxu0
      %v4684 = vadd.f32 %v3306, %v4683
      %v4685 = vpop.f32.mrf.mxu0
      %v4686 = vadd.f32 %v3306, %v4685
      %4687 = vmatmul.bf16.gmra.mxu0 %v3122
      %v4688 = vpop.f32.mrf.mxu0
      %v4689 = vadd.f32 %v3306, %v4688
      %v4690 = vpop.f32.mrf.mxu0
      %v4691 = vadd.f32 %v3306, %v4690
      %4692 = vmatmul.bf16.gmra.mxu0 %v3126
      %v4693 = vpop.f32.mrf.mxu0
      %v4694 = vadd.f32 %v3306, %v4693
      %v4695 = vpop.f32.mrf.mxu0
      %v4696 = vadd.f32 %v3306, %v4695
      %4697 = vmatmul.bf16.gmra.mxu0 %v3130
      %v4698 = vpop.f32.mrf.mxu0
      %v4699 = vadd.f32 %v3306, %v4698
      %v4700 = vpop.f32.mrf.mxu0
      %v4701 = vadd.f32 %v3306, %v4700
      %4702 = vmatmul.bf16.gmra.mxu0 %v3134
      %v4703 = vpop.f32.mrf.mxu0
      %v4704 = vadd.f32 %v3306, %v4703
      %v4705 = vpop.f32.mrf.mxu0
      %v4706 = vadd.f32 %v3306, %v4705
      %4707 = vmatmul.bf16.gmra.mxu0 %v3138
      %v4708 = vpop.f32.mrf.mxu0
      %v4709 = vadd.f32 %v3306, %v4708
      %v4710 = vpop.f32.mrf.mxu0
      %v4711 = vadd.f32 %v3306, %v4710
      %4712 = vmatmul.bf16.gmra.mxu0 %v3142
      %v4713 = vpop.f32.mrf.mxu0
      %v4714 = vadd.f32 %v3306, %v4713
      %v4715 = vpop.f32.mrf.mxu0
      %v4716 = vadd.f32 %v3306, %v4715
      %4717 = vmatmul.bf16.gmra.mxu0 %v3146
      %v4718 = vpop.f32.mrf.mxu0
      %v4719 = vadd.f32 %v3306, %v4718
      %v4720 = vpop.f32.mrf.mxu0
      %v4721 = vadd.f32 %v3306, %v4720
      %4722 = vmatmul.bf16.gmra.mxu0 %v3150
      %v4723 = vpop.f32.mrf.mxu0
      %v4724 = vadd.f32 %v3306, %v4723
      %v4725 = vpop.f32.mrf.mxu0
      %v4726 = vadd.f32 %v3306, %v4725
      %4727 = vmatmul.bf16.gmra.mxu0 %v3154
      %v4728 = vpop.f32.mrf.mxu0
      %v4729 = vadd.f32 %v3306, %v4728
      %v4730 = vpop.f32.mrf.mxu0
      %v4731 = vadd.f32 %v3306, %v4730
      %4732 = vmatmul.bf16.gmra.mxu0 %v3158
      %v4733 = vpop.f32.mrf.mxu0
      %v4734 = vadd.f32 %v3306, %v4733
      %v4735 = vpop.f32.mrf.mxu0
      %v4736 = vadd.f32 %v3306, %v4735
      %4737 = vmatmul.bf16.gmra.mxu0 %v3162
      %v4738 = vpop.f32.mrf.mxu0
      %v4739 = vadd.f32 %v3306, %v4738
      %v4740 = vpop.f32.mrf.mxu0
      %v4741 = vadd.f32 %v3306, %v4740
      %4742 = vmatmul.bf16.gmra.mxu0 %v3166
      %v4743 = vpop.f32.mrf.mxu0
      %v4744 = vadd.f32 %v3306, %v4743
      %v4745 = vpop.f32.mrf.mxu0
      %v4746 = vadd.f32 %v3306, %v4745
      %4747 = vmatmul.bf16.gmra.mxu0 %v3170
      %v4748 = vpop.f32.mrf.mxu0
      %v4749 = vadd.f32 %v3306, %v4748
      %v4750 = vpop.f32.mrf.mxu0
      %v4751 = vadd.f32 %v3306, %v4750
      %4752 = vdwg.mxu0
      %4753 = vmatpush.bf16.msra.mxu0 %v3758
      %4754 = vmatpush.bf16.msra.mxu0 %v3754
      %4755 = vmatpush.bf16.msra.mxu0 %v3750
      %4756 = vmatpush.bf16.msra.mxu0 %v3746
      %4757 = vmatpush.bf16.msra.mxu0 %v3742
      %4758 = vmatpush.bf16.msra.mxu0 %v3738
      %4759 = vmatpush.bf16.msra.mxu0 %v3734
      %4760 = vmatpush.bf16.msra.mxu0 %v3730
      %4761 = vmatmul.bf16.gmra.mxu0 %v3111
      %v4762 = vpop.f32.mrf.mxu0
      %v4763 = vadd.f32 %v4674, %v4762
      %v4764 = vpop.f32.mrf.mxu0
      %v4765 = vadd.f32 %v4676, %v4764
      %4766 = vmatmul.bf16.gmra.mxu0 %v3115
      %v4767 = vpop.f32.mrf.mxu0
      %v4768 = vadd.f32 %v4679, %v4767
      %v4769 = vpop.f32.mrf.mxu0
      %v4770 = vadd.f32 %v4681, %v4769
      %4771 = vmatmul.bf16.gmra.mxu0 %v3119
      %v4772 = vpop.f32.mrf.mxu0
      %v4773 = vadd.f32 %v4684, %v4772
      %v4774 = vpop.f32.mrf.mxu0
      %v4775 = vadd.f32 %v4686, %v4774
      %4776 = vmatmul.bf16.gmra.mxu0 %v3123
      %v4777 = vpop.f32.mrf.mxu0
      %v4778 = vadd.f32 %v4689, %v4777
      %v4779 = vpop.f32.mrf.mxu0
      %v4780 = vadd.f32 %v4691, %v4779
      %4781 = vmatmul.bf16.gmra.mxu0 %v3127
      %v4782 = vpop.f32.mrf.mxu0
      %v4783 = vadd.f32 %v4694, %v4782
      %v4784 = vpop.f32.mrf.mxu0
      %v4785 = vadd.f32 %v4696, %v4784
      %4786 = vmatmul.bf16.gmra.mxu0 %v3131
      %v4787 = vpop.f32.mrf.mxu0
      %v4788 = vadd.f32 %v4699, %v4787
      %v4789 = vpop.f32.mrf.mxu0
      %v4790 = vadd.f32 %v4701, %v4789
      %4791 = vmatmul.bf16.gmra.mxu0 %v3135
      %v4792 = vpop.f32.mrf.mxu0
      %v4793 = vadd.f32 %v4704, %v4792
      %v4794 = vpop.f32.mrf.mxu0
      %v4795 = vadd.f32 %v4706, %v4794
      %4796 = vmatmul.bf16.gmra.mxu0 %v3139
      %v4797 = vpop.f32.mrf.mxu0
      %v4798 = vadd.f32 %v4709, %v4797
      %v4799 = vpop.f32.mrf.mxu0
      %v4800 = vadd.f32 %v4711, %v4799
      %4801 = vmatmul.bf16.gmra.mxu0 %v3143
      %v4802 = vpop.f32.mrf.mxu0
      %v4803 = vadd.f32 %v4714, %v4802
      %v4804 = vpop.f32.mrf.mxu0
      %v4805 = vadd.f32 %v4716, %v4804
      %4806 = vmatmul.bf16.gmra.mxu0 %v3147
      %v4807 = vpop.f32.mrf.mxu0
      %v4808 = vadd.f32 %v4719, %v4807
      %v4809 = vpop.f32.mrf.mxu0
      %v4810 = vadd.f32 %v4721, %v4809
      %4811 = vmatmul.bf16.gmra.mxu0 %v3151
      %v4812 = vpop.f32.mrf.mxu0
      %v4813 = vadd.f32 %v4724, %v4812
      %v4814 = vpop.f32.mrf.mxu0
      %v4815 = vadd.f32 %v4726, %v4814
      %4816 = vmatmul.bf16.gmra.mxu0 %v3155
      %v4817 = vpop.f32.mrf.mxu0
      %v4818 = vadd.f32 %v4729, %v4817
      %v4819 = vpop.f32.mrf.mxu0
      %v4820 = vadd.f32 %v4731, %v4819
      %4821 = vmatmul.bf16.gmra.mxu0 %v3159
      %v4822 = vpop.f32.mrf.mxu0
      %v4823 = vadd.f32 %v4734, %v4822
      %v4824 = vpop.f32.mrf.mxu0
      %v4825 = vadd.f32 %v4736, %v4824
      %4826 = vmatmul.bf16.gmra.mxu0 %v3163
      %v4827 = vpop.f32.mrf.mxu0
      %v4828 = vadd.f32 %v4739, %v4827
      %v4829 = vpop.f32.mrf.mxu0
      %v4830 = vadd.f32 %v4741, %v4829
      %4831 = vmatmul.bf16.gmra.mxu0 %v3167
      %v4832 = vpop.f32.mrf.mxu0
      %v4833 = vadd.f32 %v4744, %v4832
      %v4834 = vpop.f32.mrf.mxu0
      %v4835 = vadd.f32 %v4746, %v4834
      %4836 = vmatmul.bf16.gmra.mxu0 %v3171
      %v4837 = vpop.f32.mrf.mxu0
      %v4838 = vadd.f32 %v4749, %v4837
      %v4839 = vpop.f32.mrf.mxu0
      %v4840 = vadd.f32 %v4751, %v4839
      %4841 = vdwg.mxu0
      %4842 = vmatpush.bf16.msra.mxu0 %v3790
      %4843 = vmatpush.bf16.msra.mxu0 %v3786
      %4844 = vmatpush.bf16.msra.mxu0 %v3782
      %4845 = vmatpush.bf16.msra.mxu0 %v3778
      %4846 = vmatpush.bf16.msra.mxu0 %v3774
      %4847 = vmatpush.bf16.msra.mxu0 %v3770
      %4848 = vmatpush.bf16.msra.mxu0 %v3766
      %4849 = vmatpush.bf16.msra.mxu0 %v3762
      %4850 = vmatmul.bf16.gmra.mxu0 %v3112
      %v4851 = vpop.f32.mrf.mxu0
      %v4852 = vadd.f32 %v4763, %v4851
      %v4853 = vpop.f32.mrf.mxu0
      %v4854 = vadd.f32 %v4765, %v4853
      %4855 = vmatmul.bf16.gmra.mxu0 %v3116
      %v4856 = vpop.f32.mrf.mxu0
      %v4857 = vadd.f32 %v4768, %v4856
      %v4858 = vpop.f32.mrf.mxu0
      %v4859 = vadd.f32 %v4770, %v4858
      %4860 = vmatmul.bf16.gmra.mxu0 %v3120
      %v4861 = vpop.f32.mrf.mxu0
      %v4862 = vadd.f32 %v4773, %v4861
      %v4863 = vpop.f32.mrf.mxu0
      %v4864 = vadd.f32 %v4775, %v4863
      %4865 = vmatmul.bf16.gmra.mxu0 %v3124
      %v4866 = vpop.f32.mrf.mxu0
      %v4867 = vadd.f32 %v4778, %v4866
      %v4868 = vpop.f32.mrf.mxu0
      %v4869 = vadd.f32 %v4780, %v4868
      %4870 = vmatmul.bf16.gmra.mxu0 %v3128
      %v4871 = vpop.f32.mrf.mxu0
      %v4872 = vadd.f32 %v4783, %v4871
      %v4873 = vpop.f32.mrf.mxu0
      %v4874 = vadd.f32 %v4785, %v4873
      %4875 = vmatmul.bf16.gmra.mxu0 %v3132
      %v4876 = vpop.f32.mrf.mxu0
      %v4877 = vadd.f32 %v4788, %v4876
      %v4878 = vpop.f32.mrf.mxu0
      %v4879 = vadd.f32 %v4790, %v4878
      %4880 = vmatmul.bf16.gmra.mxu0 %v3136
      %v4881 = vpop.f32.mrf.mxu0
      %v4882 = vadd.f32 %v4793, %v4881
      %v4883 = vpop.f32.mrf.mxu0
      %v4884 = vadd.f32 %v4795, %v4883
      %4885 = vmatmul.bf16.gmra.mxu0 %v3140
      %v4886 = vpop.f32.mrf.mxu0
      %v4887 = vadd.f32 %v4798, %v4886
      %v4888 = vpop.f32.mrf.mxu0
      %v4889 = vadd.f32 %v4800, %v4888
      %4890 = vmatmul.bf16.gmra.mxu0 %v3144
      %v4891 = vpop.f32.mrf.mxu0
      %v4892 = vadd.f32 %v4803, %v4891
      %v4893 = vpop.f32.mrf.mxu0
      %v4894 = vadd.f32 %v4805, %v4893
      %4895 = vmatmul.bf16.gmra.mxu0 %v3148
      %v4896 = vpop.f32.mrf.mxu0
      %v4897 = vadd.f32 %v4808, %v4896
      %v4898 = vpop.f32.mrf.mxu0
      %v4899 = vadd.f32 %v4810, %v4898
      %4900 = vmatmul.bf16.gmra.mxu0 %v3152
      %v4901 = vpop.f32.mrf.mxu0
      %v4902 = vadd.f32 %v4813, %v4901
      %v4903 = vpop.f32.mrf.mxu0
      %v4904 = vadd.f32 %v4815, %v4903
      %4905 = vmatmul.bf16.gmra.mxu0 %v3156
      %v4906 = vpop.f32.mrf.mxu0
      %v4907 = vadd.f32 %v4818, %v4906
      %v4908 = vpop.f32.mrf.mxu0
      %v4909 = vadd.f32 %v4820, %v4908
      %4910 = vmatmul.bf16.gmra.mxu0 %v3160
      %v4911 = vpop.f32.mrf.mxu0
      %v4912 = vadd.f32 %v4823, %v4911
      %v4913 = vpop.f32.mrf.mxu0
      %v4914 = vadd.f32 %v4825, %v4913
      %4915 = vmatmul.bf16.gmra.mxu0 %v3164
      %v4916 = vpop.f32.mrf.mxu0
      %v4917 = vadd.f32 %v4828, %v4916
      %v4918 = vpop.f32.mrf.mxu0
      %v4919 = vadd.f32 %v4830, %v4918
      %4920 = vmatmul.bf16.gmra.mxu0 %v3168
      %v4921 = vpop.f32.mrf.mxu0
      %v4922 = vadd.f32 %v4833, %v4921
      %v4923 = vpop.f32.mrf.mxu0
      %v4924 = vadd.f32 %v4835, %v4923
      %4925 = vmatmul.bf16.gmra.mxu0 %v3172
      %v4926 = vpop.f32.mrf.mxu0
      %v4927 = vadd.f32 %v4838, %v4926
      %v4928 = vpop.f32.mrf.mxu0
      %v4929 = vadd.f32 %v4840, %v4928
      %4930 = vdwg.mxu0
      %4931 = vmatpush.bf16.msra.mxu0 %v3822
      %4932 = vmatpush.bf16.msra.mxu0 %v3818
      %4933 = vmatpush.bf16.msra.mxu0 %v3814
      %4934 = vmatpush.bf16.msra.mxu0 %v3810
      %4935 = vmatpush.bf16.msra.mxu0 %v3806
      %4936 = vmatpush.bf16.msra.mxu0 %v3802
      %4937 = vmatpush.bf16.msra.mxu0 %v3798
      %4938 = vmatpush.bf16.msra.mxu0 %v3794
      %4939 = vmatmul.bf16.gmra.mxu0 %v3113
      %v4940 = vpop.f32.mrf.mxu0
      %v4941 = vadd.f32 %v4852, %v4940
      %v4942 = vpop.f32.mrf.mxu0
      %v4943 = vadd.f32 %v4854, %v4942
      %4944 = vmatmul.bf16.gmra.mxu0 %v3117
      %v4945 = vpop.f32.mrf.mxu0
      %v4946 = vadd.f32 %v4857, %v4945
      %v4947 = vpop.f32.mrf.mxu0
      %v4948 = vadd.f32 %v4859, %v4947
      %4949 = vmatmul.bf16.gmra.mxu0 %v3121
      %v4950 = vpop.f32.mrf.mxu0
      %v4951 = vadd.f32 %v4862, %v4950
      %v4952 = vpop.f32.mrf.mxu0
      %v4953 = vadd.f32 %v4864, %v4952
      %4954 = vmatmul.bf16.gmra.mxu0 %v3125
      %v4955 = vpop.f32.mrf.mxu0
      %v4956 = vadd.f32 %v4867, %v4955
      %v4957 = vpop.f32.mrf.mxu0
      %v4958 = vadd.f32 %v4869, %v4957
      %4959 = vmatmul.bf16.gmra.mxu0 %v3129
      %v4960 = vpop.f32.mrf.mxu0
      %v4961 = vadd.f32 %v4872, %v4960
      %v4962 = vpop.f32.mrf.mxu0
      %v4963 = vadd.f32 %v4874, %v4962
      %4964 = vmatmul.bf16.gmra.mxu0 %v3133
      %v4965 = vpop.f32.mrf.mxu0
      %v4966 = vadd.f32 %v4877, %v4965
      %v4967 = vpop.f32.mrf.mxu0
      %v4968 = vadd.f32 %v4879, %v4967
      %4969 = vmatmul.bf16.gmra.mxu0 %v3137
      %v4970 = vpop.f32.mrf.mxu0
      %v4971 = vadd.f32 %v4882, %v4970
      %v4972 = vpop.f32.mrf.mxu0
      %v4973 = vadd.f32 %v4884, %v4972
      %4974 = vmatmul.bf16.gmra.mxu0 %v3141
      %v4975 = vpop.f32.mrf.mxu0
      %v4976 = vadd.f32 %v4887, %v4975
      %v4977 = vpop.f32.mrf.mxu0
      %v4978 = vadd.f32 %v4889, %v4977
      %4979 = vmatmul.bf16.gmra.mxu0 %v3145
      %v4980 = vpop.f32.mrf.mxu0
      %v4981 = vadd.f32 %v4892, %v4980
      %v4982 = vpop.f32.mrf.mxu0
      %v4983 = vadd.f32 %v4894, %v4982
      %4984 = vmatmul.bf16.gmra.mxu0 %v3149
      %v4985 = vpop.f32.mrf.mxu0
      %v4986 = vadd.f32 %v4897, %v4985
      %v4987 = vpop.f32.mrf.mxu0
      %v4988 = vadd.f32 %v4899, %v4987
      %4989 = vmatmul.bf16.gmra.mxu0 %v3153
      %v4990 = vpop.f32.mrf.mxu0
      %v4991 = vadd.f32 %v4902, %v4990
      %v4992 = vpop.f32.mrf.mxu0
      %v4993 = vadd.f32 %v4904, %v4992
      %4994 = vmatmul.bf16.gmra.mxu0 %v3157
      %v4995 = vpop.f32.mrf.mxu0
      %v4996 = vadd.f32 %v4907, %v4995
      %v4997 = vpop.f32.mrf.mxu0
      %v4998 = vadd.f32 %v4909, %v4997
      %4999 = vmatmul.bf16.gmra.mxu0 %v3161
      %v5000 = vpop.f32.mrf.mxu0
      %v5001 = vadd.f32 %v4912, %v5000
      %v5002 = vpop.f32.mrf.mxu0
      %v5003 = vadd.f32 %v4914, %v5002
      %5004 = vmatmul.bf16.gmra.mxu0 %v3165
      %v5005 = vpop.f32.mrf.mxu0
      %v5006 = vadd.f32 %v4917, %v5005
      %v5007 = vpop.f32.mrf.mxu0
      %v5008 = vadd.f32 %v4919, %v5007
      %5009 = vmatmul.bf16.gmra.mxu0 %v3169
      %v5010 = vpop.f32.mrf.mxu0
      %v5011 = vadd.f32 %v4922, %v5010
      %v5012 = vpop.f32.mrf.mxu0
      %v5013 = vadd.f32 %v4924, %v5012
      %5014 = vmatmul.bf16.gmra.mxu0 %v3173
      %v5015 = vpop.f32.mrf.mxu0
      %v5016 = vadd.f32 %v4927, %v5015
      %v5017 = vpop.f32.mrf.mxu0
      %v5018 = vadd.f32 %v4929, %v5017
      %5019 = vdwg.mxu0
      %5020 = vmatpush.bf16.msra.mxu0 %v3727
      %5021 = vmatpush.bf16.msra.mxu0 %v3723
      %5022 = vmatpush.bf16.msra.mxu0 %v3719
      %5023 = vmatpush.bf16.msra.mxu0 %v3715
      %5024 = vmatpush.bf16.msra.mxu0 %v3711
      %5025 = vmatpush.bf16.msra.mxu0 %v3707
      %5026 = vmatpush.bf16.msra.mxu0 %v3703
      %5027 = vmatpush.bf16.msra.mxu0 %v3699
      %5028 = vmatmul.bf16.gmra.mxu0 %v3110
      %v5029 = vpop.f32.mrf.mxu0
      %v5030 = vadd.f32 %v3307, %v5029
      %v5031 = vpop.f32.mrf.mxu0
      %v5032 = vadd.f32 %v3307, %v5031
      %5033 = vmatmul.bf16.gmra.mxu0 %v3114
      %v5034 = vpop.f32.mrf.mxu0
      %v5035 = vadd.f32 %v3307, %v5034
      %v5036 = vpop.f32.mrf.mxu0
      %v5037 = vadd.f32 %v3307, %v5036
      %5038 = vmatmul.bf16.gmra.mxu0 %v3118
      %v5039 = vpop.f32.mrf.mxu0
      %v5040 = vadd.f32 %v3307, %v5039
      %v5041 = vpop.f32.mrf.mxu0
      %v5042 = vadd.f32 %v3307, %v5041
      %5043 = vmatmul.bf16.gmra.mxu0 %v3122
      %v5044 = vpop.f32.mrf.mxu0
      %v5045 = vadd.f32 %v3307, %v5044
      %v5046 = vpop.f32.mrf.mxu0
      %v5047 = vadd.f32 %v3307, %v5046
      %5048 = vmatmul.bf16.gmra.mxu0 %v3126
      %v5049 = vpop.f32.mrf.mxu0
      %v5050 = vadd.f32 %v3307, %v5049
      %v5051 = vpop.f32.mrf.mxu0
      %v5052 = vadd.f32 %v3307, %v5051
      %5053 = vmatmul.bf16.gmra.mxu0 %v3130
      %v5054 = vpop.f32.mrf.mxu0
      %v5055 = vadd.f32 %v3307, %v5054
      %v5056 = vpop.f32.mrf.mxu0
      %v5057 = vadd.f32 %v3307, %v5056
      %5058 = vmatmul.bf16.gmra.mxu0 %v3134
      %v5059 = vpop.f32.mrf.mxu0
      %v5060 = vadd.f32 %v3307, %v5059
      %v5061 = vpop.f32.mrf.mxu0
      %v5062 = vadd.f32 %v3307, %v5061
      %5063 = vmatmul.bf16.gmra.mxu0 %v3138
      %v5064 = vpop.f32.mrf.mxu0
      %v5065 = vadd.f32 %v3307, %v5064
      %v5066 = vpop.f32.mrf.mxu0
      %v5067 = vadd.f32 %v3307, %v5066
      %5068 = vmatmul.bf16.gmra.mxu0 %v3142
      %v5069 = vpop.f32.mrf.mxu0
      %v5070 = vadd.f32 %v3307, %v5069
      %v5071 = vpop.f32.mrf.mxu0
      %v5072 = vadd.f32 %v3307, %v5071
      %5073 = vmatmul.bf16.gmra.mxu0 %v3146
      %v5074 = vpop.f32.mrf.mxu0
      %v5075 = vadd.f32 %v3307, %v5074
      %v5076 = vpop.f32.mrf.mxu0
      %v5077 = vadd.f32 %v3307, %v5076
      %5078 = vmatmul.bf16.gmra.mxu0 %v3150
      %v5079 = vpop.f32.mrf.mxu0
      %v5080 = vadd.f32 %v3307, %v5079
      %v5081 = vpop.f32.mrf.mxu0
      %v5082 = vadd.f32 %v3307, %v5081
      %5083 = vmatmul.bf16.gmra.mxu0 %v3154
      %v5084 = vpop.f32.mrf.mxu0
      %v5085 = vadd.f32 %v3307, %v5084
      %v5086 = vpop.f32.mrf.mxu0
      %v5087 = vadd.f32 %v3307, %v5086
      %5088 = vmatmul.bf16.gmra.mxu0 %v3158
      %v5089 = vpop.f32.mrf.mxu0
      %v5090 = vadd.f32 %v3307, %v5089
      %v5091 = vpop.f32.mrf.mxu0
      %v5092 = vadd.f32 %v3307, %v5091
      %5093 = vmatmul.bf16.gmra.mxu0 %v3162
      %v5094 = vpop.f32.mrf.mxu0
      %v5095 = vadd.f32 %v3307, %v5094
      %v5096 = vpop.f32.mrf.mxu0
      %v5097 = vadd.f32 %v3307, %v5096
      %5098 = vmatmul.bf16.gmra.mxu0 %v3166
      %v5099 = vpop.f32.mrf.mxu0
      %v5100 = vadd.f32 %v3307, %v5099
      %v5101 = vpop.f32.mrf.mxu0
      %v5102 = vadd.f32 %v3307, %v5101
      %5103 = vmatmul.bf16.gmra.mxu0 %v3170
      %v5104 = vpop.f32.mrf.mxu0
      %v5105 = vadd.f32 %v3307, %v5104
      %v5106 = vpop.f32.mrf.mxu0
      %v5107 = vadd.f32 %v3307, %v5106
      %5108 = vdwg.mxu0
      %5109 = vmatpush.bf16.msra.mxu0 %v3759
      %5110 = vmatpush.bf16.msra.mxu0 %v3755
      %5111 = vmatpush.bf16.msra.mxu0 %v3751
      %5112 = vmatpush.bf16.msra.mxu0 %v3747
      %5113 = vmatpush.bf16.msra.mxu0 %v3743
      %5114 = vmatpush.bf16.msra.mxu0 %v3739
      %5115 = vmatpush.bf16.msra.mxu0 %v3735
      %5116 = vmatpush.bf16.msra.mxu0 %v3731
      %5117 = vmatmul.bf16.gmra.mxu0 %v3111
      %v5118 = vpop.f32.mrf.mxu0
      %v5119 = vadd.f32 %v5030, %v5118
      %v5120 = vpop.f32.mrf.mxu0
      %v5121 = vadd.f32 %v5032, %v5120
      %5122 = vmatmul.bf16.gmra.mxu0 %v3115
      %v5123 = vpop.f32.mrf.mxu0
      %v5124 = vadd.f32 %v5035, %v5123
      %v5125 = vpop.f32.mrf.mxu0
      %v5126 = vadd.f32 %v5037, %v5125
      %5127 = vmatmul.bf16.gmra.mxu0 %v3119
      %v5128 = vpop.f32.mrf.mxu0
      %v5129 = vadd.f32 %v5040, %v5128
      %v5130 = vpop.f32.mrf.mxu0
      %v5131 = vadd.f32 %v5042, %v5130
      %5132 = vmatmul.bf16.gmra.mxu0 %v3123
      %v5133 = vpop.f32.mrf.mxu0
      %v5134 = vadd.f32 %v5045, %v5133
      %v5135 = vpop.f32.mrf.mxu0
      %v5136 = vadd.f32 %v5047, %v5135
      %5137 = vmatmul.bf16.gmra.mxu0 %v3127
      %v5138 = vpop.f32.mrf.mxu0
      %v5139 = vadd.f32 %v5050, %v5138
      %v5140 = vpop.f32.mrf.mxu0
      %v5141 = vadd.f32 %v5052, %v5140
      %5142 = vmatmul.bf16.gmra.mxu0 %v3131
      %v5143 = vpop.f32.mrf.mxu0
      %v5144 = vadd.f32 %v5055, %v5143
      %v5145 = vpop.f32.mrf.mxu0
      %v5146 = vadd.f32 %v5057, %v5145
      %5147 = vmatmul.bf16.gmra.mxu0 %v3135
      %v5148 = vpop.f32.mrf.mxu0
      %v5149 = vadd.f32 %v5060, %v5148
      %v5150 = vpop.f32.mrf.mxu0
      %v5151 = vadd.f32 %v5062, %v5150
      %5152 = vmatmul.bf16.gmra.mxu0 %v3139
      %v5153 = vpop.f32.mrf.mxu0
      %v5154 = vadd.f32 %v5065, %v5153
      %v5155 = vpop.f32.mrf.mxu0
      %v5156 = vadd.f32 %v5067, %v5155
      %5157 = vmatmul.bf16.gmra.mxu0 %v3143
      %v5158 = vpop.f32.mrf.mxu0
      %v5159 = vadd.f32 %v5070, %v5158
      %v5160 = vpop.f32.mrf.mxu0
      %v5161 = vadd.f32 %v5072, %v5160
      %5162 = vmatmul.bf16.gmra.mxu0 %v3147
      %v5163 = vpop.f32.mrf.mxu0
      %v5164 = vadd.f32 %v5075, %v5163
      %v5165 = vpop.f32.mrf.mxu0
      %v5166 = vadd.f32 %v5077, %v5165
      %5167 = vmatmul.bf16.gmra.mxu0 %v3151
      %v5168 = vpop.f32.mrf.mxu0
      %v5169 = vadd.f32 %v5080, %v5168
      %v5170 = vpop.f32.mrf.mxu0
      %v5171 = vadd.f32 %v5082, %v5170
      %5172 = vmatmul.bf16.gmra.mxu0 %v3155
      %v5173 = vpop.f32.mrf.mxu0
      %v5174 = vadd.f32 %v5085, %v5173
      %v5175 = vpop.f32.mrf.mxu0
      %v5176 = vadd.f32 %v5087, %v5175
      %5177 = vmatmul.bf16.gmra.mxu0 %v3159
      %v5178 = vpop.f32.mrf.mxu0
      %v5179 = vadd.f32 %v5090, %v5178
      %v5180 = vpop.f32.mrf.mxu0
      %v5181 = vadd.f32 %v5092, %v5180
      %5182 = vmatmul.bf16.gmra.mxu0 %v3163
      %v5183 = vpop.f32.mrf.mxu0
      %v5184 = vadd.f32 %v5095, %v5183
      %v5185 = vpop.f32.mrf.mxu0
      %v5186 = vadd.f32 %v5097, %v5185
      %5187 = vmatmul.bf16.gmra.mxu0 %v3167
      %v5188 = vpop.f32.mrf.mxu0
      %v5189 = vadd.f32 %v5100, %v5188
      %v5190 = vpop.f32.mrf.mxu0
      %v5191 = vadd.f32 %v5102, %v5190
      %5192 = vmatmul.bf16.gmra.mxu0 %v3171
      %v5193 = vpop.f32.mrf.mxu0
      %v5194 = vadd.f32 %v5105, %v5193
      %v5195 = vpop.f32.mrf.mxu0
      %v5196 = vadd.f32 %v5107, %v5195
      %5197 = vdwg.mxu0
      %5198 = vmatpush.bf16.msra.mxu0 %v3791
      %5199 = vmatpush.bf16.msra.mxu0 %v3787
      %5200 = vmatpush.bf16.msra.mxu0 %v3783
      %5201 = vmatpush.bf16.msra.mxu0 %v3779
      %5202 = vmatpush.bf16.msra.mxu0 %v3775
      %5203 = vmatpush.bf16.msra.mxu0 %v3771
      %5204 = vmatpush.bf16.msra.mxu0 %v3767
      %5205 = vmatpush.bf16.msra.mxu0 %v3763
      %5206 = vmatmul.bf16.gmra.mxu0 %v3112
      %v5207 = vpop.f32.mrf.mxu0
      %v5208 = vadd.f32 %v5119, %v5207
      %v5209 = vpop.f32.mrf.mxu0
      %v5210 = vadd.f32 %v5121, %v5209
      %5211 = vmatmul.bf16.gmra.mxu0 %v3116
      %v5212 = vpop.f32.mrf.mxu0
      %v5213 = vadd.f32 %v5124, %v5212
      %v5214 = vpop.f32.mrf.mxu0
      %v5215 = vadd.f32 %v5126, %v5214
      %5216 = vmatmul.bf16.gmra.mxu0 %v3120
      %v5217 = vpop.f32.mrf.mxu0
      %v5218 = vadd.f32 %v5129, %v5217
      %v5219 = vpop.f32.mrf.mxu0
      %v5220 = vadd.f32 %v5131, %v5219
      %5221 = vmatmul.bf16.gmra.mxu0 %v3124
      %v5222 = vpop.f32.mrf.mxu0
      %v5223 = vadd.f32 %v5134, %v5222
      %v5224 = vpop.f32.mrf.mxu0
      %v5225 = vadd.f32 %v5136, %v5224
      %5226 = vmatmul.bf16.gmra.mxu0 %v3128
      %v5227 = vpop.f32.mrf.mxu0
      %v5228 = vadd.f32 %v5139, %v5227
      %v5229 = vpop.f32.mrf.mxu0
      %v5230 = vadd.f32 %v5141, %v5229
      %5231 = vmatmul.bf16.gmra.mxu0 %v3132
      %v5232 = vpop.f32.mrf.mxu0
      %v5233 = vadd.f32 %v5144, %v5232
      %v5234 = vpop.f32.mrf.mxu0
      %v5235 = vadd.f32 %v5146, %v5234
      %5236 = vmatmul.bf16.gmra.mxu0 %v3136
      %v5237 = vpop.f32.mrf.mxu0
      %v5238 = vadd.f32 %v5149, %v5237
      %v5239 = vpop.f32.mrf.mxu0
      %v5240 = vadd.f32 %v5151, %v5239
      %5241 = vmatmul.bf16.gmra.mxu0 %v3140
      %v5242 = vpop.f32.mrf.mxu0
      %v5243 = vadd.f32 %v5154, %v5242
      %v5244 = vpop.f32.mrf.mxu0
      %v5245 = vadd.f32 %v5156, %v5244
      %5246 = vmatmul.bf16.gmra.mxu0 %v3144
      %v5247 = vpop.f32.mrf.mxu0
      %v5248 = vadd.f32 %v5159, %v5247
      %v5249 = vpop.f32.mrf.mxu0
      %v5250 = vadd.f32 %v5161, %v5249
      %5251 = vmatmul.bf16.gmra.mxu0 %v3148
      %v5252 = vpop.f32.mrf.mxu0
      %v5253 = vadd.f32 %v5164, %v5252
      %v5254 = vpop.f32.mrf.mxu0
      %v5255 = vadd.f32 %v5166, %v5254
      %5256 = vmatmul.bf16.gmra.mxu0 %v3152
      %v5257 = vpop.f32.mrf.mxu0
      %v5258 = vadd.f32 %v5169, %v5257
      %v5259 = vpop.f32.mrf.mxu0
      %v5260 = vadd.f32 %v5171, %v5259
      %5261 = vmatmul.bf16.gmra.mxu0 %v3156
      %v5262 = vpop.f32.mrf.mxu0
      %v5263 = vadd.f32 %v5174, %v5262
      %v5264 = vpop.f32.mrf.mxu0
      %v5265 = vadd.f32 %v5176, %v5264
      %5266 = vmatmul.bf16.gmra.mxu0 %v3160
      %v5267 = vpop.f32.mrf.mxu0
      %v5268 = vadd.f32 %v5179, %v5267
      %v5269 = vpop.f32.mrf.mxu0
      %v5270 = vadd.f32 %v5181, %v5269
      %5271 = vmatmul.bf16.gmra.mxu0 %v3164
      %v5272 = vpop.f32.mrf.mxu0
      %v5273 = vadd.f32 %v5184, %v5272
      %v5274 = vpop.f32.mrf.mxu0
      %v5275 = vadd.f32 %v5186, %v5274
      %5276 = vmatmul.bf16.gmra.mxu0 %v3168
      %v5277 = vpop.f32.mrf.mxu0
      %v5278 = vadd.f32 %v5189, %v5277
      %v5279 = vpop.f32.mrf.mxu0
      %v5280 = vadd.f32 %v5191, %v5279
      %5281 = vmatmul.bf16.gmra.mxu0 %v3172
      %v5282 = vpop.f32.mrf.mxu0
      %v5283 = vadd.f32 %v5194, %v5282
      %v5284 = vpop.f32.mrf.mxu0
      %v5285 = vadd.f32 %v5196, %v5284
      %5286 = vdwg.mxu0
      %5287 = vmatpush.bf16.msra.mxu0 %v3823
      %5288 = vmatpush.bf16.msra.mxu0 %v3819
      %5289 = vmatpush.bf16.msra.mxu0 %v3815
      %5290 = vmatpush.bf16.msra.mxu0 %v3811
      %5291 = vmatpush.bf16.msra.mxu0 %v3807
      %5292 = vmatpush.bf16.msra.mxu0 %v3803
      %5293 = vmatpush.bf16.msra.mxu0 %v3799
      %5294 = vmatpush.bf16.msra.mxu0 %v3795
      %5295 = vmatmul.bf16.gmra.mxu0 %v3113
      %v5296 = vpop.f32.mrf.mxu0
      %v5297 = vadd.f32 %v5208, %v5296
      %v5298 = vpop.f32.mrf.mxu0
      %v5299 = vadd.f32 %v5210, %v5298
      %5300 = vmatmul.bf16.gmra.mxu0 %v3117
      %v5301 = vpop.f32.mrf.mxu0
      %v5302 = vadd.f32 %v5213, %v5301
      %v5303 = vpop.f32.mrf.mxu0
      %v5304 = vadd.f32 %v5215, %v5303
      %5305 = vmatmul.bf16.gmra.mxu0 %v3121
      %v5306 = vpop.f32.mrf.mxu0
      %v5307 = vadd.f32 %v5218, %v5306
      %v5308 = vpop.f32.mrf.mxu0
      %v5309 = vadd.f32 %v5220, %v5308
      %5310 = vmatmul.bf16.gmra.mxu0 %v3125
      %v5311 = vpop.f32.mrf.mxu0
      %v5312 = vadd.f32 %v5223, %v5311
      %v5313 = vpop.f32.mrf.mxu0
      %v5314 = vadd.f32 %v5225, %v5313
      %5315 = vmatmul.bf16.gmra.mxu0 %v3129
      %v5316 = vpop.f32.mrf.mxu0
      %v5317 = vadd.f32 %v5228, %v5316
      %v5318 = vpop.f32.mrf.mxu0
      %v5319 = vadd.f32 %v5230, %v5318
      %5320 = vmatmul.bf16.gmra.mxu0 %v3133
      %v5321 = vpop.f32.mrf.mxu0
      %v5322 = vadd.f32 %v5233, %v5321
      %v5323 = vpop.f32.mrf.mxu0
      %v5324 = vadd.f32 %v5235, %v5323
      %5325 = vmatmul.bf16.gmra.mxu0 %v3137
      %v5326 = vpop.f32.mrf.mxu0
      %v5327 = vadd.f32 %v5238, %v5326
      %v5328 = vpop.f32.mrf.mxu0
      %v5329 = vadd.f32 %v5240, %v5328
      %5330 = vmatmul.bf16.gmra.mxu0 %v3141
      %v5331 = vpop.f32.mrf.mxu0
      %v5332 = vadd.f32 %v5243, %v5331
      %v5333 = vpop.f32.mrf.mxu0
      %v5334 = vadd.f32 %v5245, %v5333
      %5335 = vmatmul.bf16.gmra.mxu0 %v3145
      %v5336 = vpop.f32.mrf.mxu0
      %v5337 = vadd.f32 %v5248, %v5336
      %v5338 = vpop.f32.mrf.mxu0
      %v5339 = vadd.f32 %v5250, %v5338
      %5340 = vmatmul.bf16.gmra.mxu0 %v3149
      %v5341 = vpop.f32.mrf.mxu0
      %v5342 = vadd.f32 %v5253, %v5341
      %v5343 = vpop.f32.mrf.mxu0
      %v5344 = vadd.f32 %v5255, %v5343
      %5345 = vmatmul.bf16.gmra.mxu0 %v3153
      %v5346 = vpop.f32.mrf.mxu0
      %v5347 = vadd.f32 %v5258, %v5346
      %v5348 = vpop.f32.mrf.mxu0
      %v5349 = vadd.f32 %v5260, %v5348
      %5350 = vmatmul.bf16.gmra.mxu0 %v3157
      %v5351 = vpop.f32.mrf.mxu0
      %v5352 = vadd.f32 %v5263, %v5351
      %v5353 = vpop.f32.mrf.mxu0
      %v5354 = vadd.f32 %v5265, %v5353
      %5355 = vmatmul.bf16.gmra.mxu0 %v3161
      %v5356 = vpop.f32.mrf.mxu0
      %v5357 = vadd.f32 %v5268, %v5356
      %v5358 = vpop.f32.mrf.mxu0
      %v5359 = vadd.f32 %v5270, %v5358
      %5360 = vmatmul.bf16.gmra.mxu0 %v3165
      %v5361 = vpop.f32.mrf.mxu0
      %v5362 = vadd.f32 %v5273, %v5361
      %v5363 = vpop.f32.mrf.mxu0
      %v5364 = vadd.f32 %v5275, %v5363
      %5365 = vmatmul.bf16.gmra.mxu0 %v3169
      %v5366 = vpop.f32.mrf.mxu0
      %v5367 = vadd.f32 %v5278, %v5366
      %v5368 = vpop.f32.mrf.mxu0
      %v5369 = vadd.f32 %v5280, %v5368
      %5370 = vmatmul.bf16.gmra.mxu0 %v3173
      %v5371 = vpop.f32.mrf.mxu0
      %v5372 = vadd.f32 %v5283, %v5371
      %v5373 = vpop.f32.mrf.mxu0
      %v5374 = vadd.f32 %v5285, %v5373
      %5375 = vdwg.mxu0
      %v5376 = vmax.f32 %v4229, 0.0
      %v5377 = vmax.f32 %v4585, 0.0
      %v5378 = vmax.f32 %v4941, 0.0
      %v5379 = vmax.f32 %v5297, 0.0
      %v5380 = vmax.f32 %v4231, 0.0
      %v5381 = vmax.f32 %v4587, 0.0
      %v5382 = vmax.f32 %v4943, 0.0
      %v5383 = vmax.f32 %v5299, 0.0
      %v5384 = vmax.f32 %v4234, 0.0
      %v5385 = vmax.f32 %v4590, 0.0
      %v5386 = vmax.f32 %v4946, 0.0
      %v5387 = vmax.f32 %v5302, 0.0
      %v5388 = vmax.f32 %v4236, 0.0
      %v5389 = vmax.f32 %v4592, 0.0
      %v5390 = vmax.f32 %v4948, 0.0
      %v5391 = vmax.f32 %v5304, 0.0
      %v5392 = vmax.f32 %v4239, 0.0
      %v5393 = vmax.f32 %v4595, 0.0
      %v5394 = vmax.f32 %v4951, 0.0
      %v5395 = vmax.f32 %v5307, 0.0
      %v5396 = vmax.f32 %v4241, 0.0
      %v5397 = vmax.f32 %v4597, 0.0
      %v5398 = vmax.f32 %v4953, 0.0
      %v5399 = vmax.f32 %v5309, 0.0
      %v5400 = vmax.f32 %v4244, 0.0
      %v5401 = vmax.f32 %v4600, 0.0
      %v5402 = vmax.f32 %v4956, 0.0
      %v5403 = vmax.f32 %v5312, 0.0
      %v5404 = vmax.f32 %v4246, 0.0
      %v5405 = vmax.f32 %v4602, 0.0
      %v5406 = vmax.f32 %v4958, 0.0
      %v5407 = vmax.f32 %v5314, 0.0
      %v5408 = vmax.f32 %v4249, 0.0
      %v5409 = vmax.f32 %v4605, 0.0
      %v5410 = vmax.f32 %v4961, 0.0
      %v5411 = vmax.f32 %v5317, 0.0
      %v5412 = vmax.f32 %v4251, 0.0
      %v5413 = vmax.f32 %v4607, 0.0
      %v5414 = vmax.f32 %v4963, 0.0
      %v5415 = vmax.f32 %v5319, 0.0
      %v5416 = vmax.f32 %v4254, 0.0
      %v5417 = vmax.f32 %v4610, 0.0
      %v5418 = vmax.f32 %v4966, 0.0
      %v5419 = vmax.f32 %v5322, 0.0
      %v5420 = vmax.f32 %v4256, 0.0
      %v5421 = vmax.f32 %v4612, 0.0
      %v5422 = vmax.f32 %v4968, 0.0
      %v5423 = vmax.f32 %v5324, 0.0
      %v5424 = vmax.f32 %v4259, 0.0
      %v5425 = vmax.f32 %v4615, 0.0
      %v5426 = vmax.f32 %v4971, 0.0
      %v5427 = vmax.f32 %v5327, 0.0
      %v5428 = vmax.f32 %v4261, 0.0
      %v5429 = vmax.f32 %v4617, 0.0
      %v5430 = vmax.f32 %v4973, 0.0
      %v5431 = vmax.f32 %v5329, 0.0
      %v5432 = vmax.f32 %v4264, 0.0
      %v5433 = vmax.f32 %v4620, 0.0
      %v5434 = vmax.f32 %v4976, 0.0
      %v5435 = vmax.f32 %v5332, 0.0
      %v5436 = vmax.f32 %v4266, 0.0
      %v5437 = vmax.f32 %v4622, 0.0
      %v5438 = vmax.f32 %v4978, 0.0
      %v5439 = vmax.f32 %v5334, 0.0
      %v5440 = vmax.f32 %v4269, 0.0
      %v5441 = vmax.f32 %v4625, 0.0
      %v5442 = vmax.f32 %v4981, 0.0
      %v5443 = vmax.f32 %v5337, 0.0
      %v5444 = vmax.f32 %v4271, 0.0
      %v5445 = vmax.f32 %v4627, 0.0
      %v5446 = vmax.f32 %v4983, 0.0
      %v5447 = vmax.f32 %v5339, 0.0
      %v5448 = vmax.f32 %v4274, 0.0
      %v5449 = vmax.f32 %v4630, 0.0
      %v5450 = vmax.f32 %v4986, 0.0
      %v5451 = vmax.f32 %v5342, 0.0
      %v5452 = vmax.f32 %v4276, 0.0
      %v5453 = vmax.f32 %v4632, 0.0
      %v5454 = vmax.f32 %v4988, 0.0
      %v5455 = vmax.f32 %v5344, 0.0
      %v5456 = vmax.f32 %v4279, 0.0
      %v5457 = vmax.f32 %v4635, 0.0
      %v5458 = vmax.f32 %v4991, 0.0
      %v5459 = vmax.f32 %v5347, 0.0
      %v5460 = vmax.f32 %v4281, 0.0
      %v5461 = vmax.f32 %v4637, 0.0
      %v5462 = vmax.f32 %v4993, 0.0
      %v5463 = vmax.f32 %v5349, 0.0
      %v5464 = vmax.f32 %v4284, 0.0
      %v5465 = vmax.f32 %v4640, 0.0
      %v5466 = vmax.f32 %v4996, 0.0
      %v5467 = vmax.f32 %v5352, 0.0
      %v5468 = vmax.f32 %v4286, 0.0
      %v5469 = vmax.f32 %v4642, 0.0
      %v5470 = vmax.f32 %v4998, 0.0
      %v5471 = vmax.f32 %v5354, 0.0
      %v5472 = vmax.f32 %v4289, 0.0
      %v5473 = vmax.f32 %v4645, 0.0
      %v5474 = vmax.f32 %v5001, 0.0
      %v5475 = vmax.f32 %v5357, 0.0
      %v5476 = vmax.f32 %v4291, 0.0
      %v5477 = vmax.f32 %v4647, 0.0
      %v5478 = vmax.f32 %v5003, 0.0
      %v5479 = vmax.f32 %v5359, 0.0
      %v5480 = vmax.f32 %v4294, 0.0
      %v5481 = vmax.f32 %v4650, 0.0
      %v5482 = vmax.f32 %v5006, 0.0
      %v5483 = vmax.f32 %v5362, 0.0
      %v5484 = vmax.f32 %v4296, 0.0
      %v5485 = vmax.f32 %v4652, 0.0
      %v5486 = vmax.f32 %v5008, 0.0
      %v5487 = vmax.f32 %v5364, 0.0
      %v5488 = vmax.f32 %v4299, 0.0
      %v5489 = vmax.f32 %v4655, 0.0
      %v5490 = vmax.f32 %v5011, 0.0
      %v5491 = vmax.f32 %v5367, 0.0
      %v5492 = vmax.f32 %v4301, 0.0
      %v5493 = vmax.f32 %v4657, 0.0
      %v5494 = vmax.f32 %v5013, 0.0
      %v5495 = vmax.f32 %v5369, 0.0
      %v5496 = vmax.f32 %v4304, 0.0
      %v5497 = vmax.f32 %v4660, 0.0
      %v5498 = vmax.f32 %v5016, 0.0
      %v5499 = vmax.f32 %v5372, 0.0
      %v5500 = vmax.f32 %v4306, 0.0
      %v5501 = vmax.f32 %v4662, 0.0
      %v5502 = vmax.f32 %v5018, 0.0
      %v5503 = vmax.f32 %v5374, 0.0
      %v5504 = vpack.c.bf16 %v5380, %v5376
      %v5505 = vpack.c.bf16 %v5381, %v5377
      %v5506 = vpack.c.bf16 %v5382, %v5378
      %v5507 = vpack.c.bf16 %v5383, %v5379
      %v5508 = vpack.c.bf16 %v5388, %v5384
      %v5509 = vpack.c.bf16 %v5389, %v5385
      %v5510 = vpack.c.bf16 %v5390, %v5386
      %v5511 = vpack.c.bf16 %v5391, %v5387
      %v5512 = vpack.c.bf16 %v5396, %v5392
      %v5513 = vpack.c.bf16 %v5397, %v5393
      %v5514 = vpack.c.bf16 %v5398, %v5394
      %v5515 = vpack.c.bf16 %v5399, %v5395
      %v5516 = vpack.c.bf16 %v5404, %v5400
      %v5517 = vpack.c.bf16 %v5405, %v5401
      %v5518 = vpack.c.bf16 %v5406, %v5402
      %v5519 = vpack.c.bf16 %v5407, %v5403
      %v5520 = vpack.c.bf16 %v5412, %v5408
      %v5521 = vpack.c.bf16 %v5413, %v5409
      %v5522 = vpack.c.bf16 %v5414, %v5410
      %v5523 = vpack.c.bf16 %v5415, %v5411
      %v5524 = vpack.c.bf16 %v5420, %v5416
      %v5525 = vpack.c.bf16 %v5421, %v5417
      %v5526 = vpack.c.bf16 %v5422, %v5418
      %v5527 = vpack.c.bf16 %v5423, %v5419
      %v5528 = vpack.c.bf16 %v5428, %v5424
      %v5529 = vpack.c.bf16 %v5429, %v5425
      %v5530 = vpack.c.bf16 %v5430, %v5426
      %v5531 = vpack.c.bf16 %v5431, %v5427
      %v5532 = vpack.c.bf16 %v5436, %v5432
      %v5533 = vpack.c.bf16 %v5437, %v5433
      %v5534 = vpack.c.bf16 %v5438, %v5434
      %v5535 = vpack.c.bf16 %v5439, %v5435
      %v5536 = vpack.c.bf16 %v5444, %v5440
      %v5537 = vpack.c.bf16 %v5445, %v5441
      %v5538 = vpack.c.bf16 %v5446, %v5442
      %v5539 = vpack.c.bf16 %v5447, %v5443
      %v5540 = vpack.c.bf16 %v5452, %v5448
      %v5541 = vpack.c.bf16 %v5453, %v5449
      %v5542 = vpack.c.bf16 %v5454, %v5450
      %v5543 = vpack.c.bf16 %v5455, %v5451
      %v5544 = vpack.c.bf16 %v5460, %v5456
      %v5545 = vpack.c.bf16 %v5461, %v5457
      %v5546 = vpack.c.bf16 %v5462, %v5458
      %v5547 = vpack.c.bf16 %v5463, %v5459
      %v5548 = vpack.c.bf16 %v5468, %v5464
      %v5549 = vpack.c.bf16 %v5469, %v5465
      %v5550 = vpack.c.bf16 %v5470, %v5466
      %v5551 = vpack.c.bf16 %v5471, %v5467
      %v5552 = vpack.c.bf16 %v5476, %v5472
      %v5553 = vpack.c.bf16 %v5477, %v5473
      %v5554 = vpack.c.bf16 %v5478, %v5474
      %v5555 = vpack.c.bf16 %v5479, %v5475
      %v5556 = vpack.c.bf16 %v5484, %v5480
      %v5557 = vpack.c.bf16 %v5485, %v5481
      %v5558 = vpack.c.bf16 %v5486, %v5482
      %v5559 = vpack.c.bf16 %v5487, %v5483
      %v5560 = vpack.c.bf16 %v5492, %v5488
      %v5561 = vpack.c.bf16 %v5493, %v5489
      %v5562 = vpack.c.bf16 %v5494, %v5490
      %v5563 = vpack.c.bf16 %v5495, %v5491
      %v5564 = vpack.c.bf16 %v5500, %v5496
      %v5565 = vpack.c.bf16 %v5501, %v5497
      %v5566 = vpack.c.bf16 %v5502, %v5498
      %v5567 = vpack.c.bf16 %v5503, %v5499
      %v5568 = vld [vmem:[%s6] sm:$0xf]
      %v5569 = vld [vmem:[%s6 + $0x4] sm:$0xf]
      %v5570 = vld [vmem:[%s6 + $0x8] sm:$0xf]
      %v5571 = vld [vmem:[%s6 + $0xc] sm:$0xf]
      %v5572 = vld [vmem:[%s6 + $0x10] sm:$0xf]
      %v5573 = vld [vmem:[%s6 + $0x14] sm:$0xf]
      %v5574 = vld [vmem:[%s6 + $0x18] sm:$0xf]
      %v5575 = vld [vmem:[%s6 + $0x1c] sm:$0xf]
      %v5576 = vld [vmem:[%s6 + $0x20] sm:$0xf]
      %v5577 = vld [vmem:[%s6 + $0x24] sm:$0xf]
      %v5578 = vld [vmem:[%s6 + $0x28] sm:$0xf]
      %v5579 = vld [vmem:[%s6 + $0x2c] sm:$0xf]
      %v5580 = vld [vmem:[%s6 + $0x30] sm:$0xf]
      %v5581 = vld [vmem:[%s6 + $0x34] sm:$0xf]
      %v5582 = vld [vmem:[%s6 + $0x38] sm:$0xf]
      %v5583 = vld [vmem:[%s6 + $0x3c] sm:$0xf]
      %v5584 = vld [vmem:[%s6 + $0x40] sm:$0xf]
      %v5585 = vld [vmem:[%s6 + $0x44] sm:$0xf]
      %v5586 = vld [vmem:[%s6 + $0x48] sm:$0xf]
      %v5587 = vld [vmem:[%s6 + $0x4c] sm:$0xf]
      %v5588 = vld [vmem:[%s6 + $0x50] sm:$0xf]
      %v5589 = vld [vmem:[%s6 + $0x54] sm:$0xf]
      %v5590 = vld [vmem:[%s6 + $0x58] sm:$0xf]
      %v5591 = vld [vmem:[%s6 + $0x5c] sm:$0xf]
      %v5592 = vld [vmem:[%s6 + $0x60] sm:$0xf]
      %v5593 = vld [vmem:[%s6 + $0x64] sm:$0xf]
      %v5594 = vld [vmem:[%s6 + $0x68] sm:$0xf]
      %v5595 = vld [vmem:[%s6 + $0x6c] sm:$0xf]
      %v5596 = vld [vmem:[%s6 + $0x70] sm:$0xf]
      %v5597 = vld [vmem:[%s6 + $0x74] sm:$0xf]
      %v5598 = vld [vmem:[%s6 + $0x78] sm:$0xf]
      %v5599 = vld [vmem:[%s6 + $0x7c] sm:$0xf]
      %v5600 = vld [vmem:[%s6 + $0x80] sm:$0xf]
      %v5601 = vld [vmem:[%s6 + $0x84] sm:$0xf]
      %v5602 = vld [vmem:[%s6 + $0x88] sm:$0xf]
      %v5603 = vld [vmem:[%s6 + $0x8c] sm:$0xf]
      %v5604 = vld [vmem:[%s6 + $0x90] sm:$0xf]
      %v5605 = vld [vmem:[%s6 + $0x94] sm:$0xf]
      %v5606 = vld [vmem:[%s6 + $0x98] sm:$0xf]
      %v5607 = vld [vmem:[%s6 + $0x9c] sm:$0xf]
      %v5608 = vld [vmem:[%s6 + $0xa0] sm:$0xf]
      %v5609 = vld [vmem:[%s6 + $0xa4] sm:$0xf]
      %v5610 = vld [vmem:[%s6 + $0xa8] sm:$0xf]
      %v5611 = vld [vmem:[%s6 + $0xac] sm:$0xf]
      %v5612 = vld [vmem:[%s6 + $0xb0] sm:$0xf]
      %v5613 = vld [vmem:[%s6 + $0xb4] sm:$0xf]
      %v5614 = vld [vmem:[%s6 + $0xb8] sm:$0xf]
      %v5615 = vld [vmem:[%s6 + $0xbc] sm:$0xf]
      %v5616 = vld [vmem:[%s6 + $0xc0] sm:$0xf]
      %v5617 = vld [vmem:[%s6 + $0xc4] sm:$0xf]
      %v5618 = vld [vmem:[%s6 + $0xc8] sm:$0xf]
      %v5619 = vld [vmem:[%s6 + $0xcc] sm:$0xf]
      %v5620 = vld [vmem:[%s6 + $0xd0] sm:$0xf]
      %v5621 = vld [vmem:[%s6 + $0xd4] sm:$0xf]
      %v5622 = vld [vmem:[%s6 + $0xd8] sm:$0xf]
      %v5623 = vld [vmem:[%s6 + $0xdc] sm:$0xf]
      %v5624 = vld [vmem:[%s6 + $0xe0] sm:$0xf]
      %v5625 = vld [vmem:[%s6 + $0xe4] sm:$0xf]
      %v5626 = vld [vmem:[%s6 + $0xe8] sm:$0xf]
      %v5627 = vld [vmem:[%s6 + $0xec] sm:$0xf]
      %v5628 = vld [vmem:[%s6 + $0xf0] sm:$0xf]
      %v5629 = vld [vmem:[%s6 + $0xf4] sm:$0xf]
      %v5630 = vld [vmem:[%s6 + $0xf8] sm:$0xf]
      %v5631 = vld [vmem:[%s6 + $0xfc] sm:$0xf]
      %v5632 = vld [vmem:[%s7] sm:$0x1]
      %v5634 = vperm.slane %v5632, 0
      %v5700 = vunpack.c.l.b16 %v5568
      %v5701 = vunpack.c.l.b16 %v5569
      %v5702 = vunpack.c.l.b16 %v5570
      %v5703 = vunpack.c.l.b16 %v5571
      %v5704 = vunpack.c.l.b16 %v5572
      %v5705 = vunpack.c.l.b16 %v5573
      %v5706 = vunpack.c.l.b16 %v5574
      %v5707 = vunpack.c.l.b16 %v5575
      %v5708 = vunpack.c.l.b16 %v5576
      %v5709 = vunpack.c.l.b16 %v5577
      %v5710 = vunpack.c.l.b16 %v5578
      %v5711 = vunpack.c.l.b16 %v5579
      %v5712 = vunpack.c.l.b16 %v5580
      %v5713 = vunpack.c.l.b16 %v5581
      %v5714 = vunpack.c.l.b16 %v5582
      %v5715 = vunpack.c.l.b16 %v5583
      %v5716 = vunpack.c.l.b16 %v5584
      %v5717 = vunpack.c.l.b16 %v5585
      %v5718 = vunpack.c.l.b16 %v5586
      %v5719 = vunpack.c.l.b16 %v5587
      %v5720 = vunpack.c.l.b16 %v5588
      %v5721 = vunpack.c.l.b16 %v5589
      %v5722 = vunpack.c.l.b16 %v5590
      %v5723 = vunpack.c.l.b16 %v5591
      %v5724 = vunpack.c.l.b16 %v5592
      %v5725 = vunpack.c.l.b16 %v5593
      %v5726 = vunpack.c.l.b16 %v5594
      %v5727 = vunpack.c.l.b16 %v5595
      %v5728 = vunpack.c.l.b16 %v5596
      %v5729 = vunpack.c.l.b16 %v5597
      %v5730 = vunpack.c.l.b16 %v5598
      %v5731 = vunpack.c.l.b16 %v5599
      %v5732 = vunpack.c.l.b16 %v5600
      %v5733 = vunpack.c.l.b16 %v5601
      %v5734 = vunpack.c.l.b16 %v5602
      %v5735 = vunpack.c.l.b16 %v5603
      %v5736 = vunpack.c.l.b16 %v5604
      %v5737 = vunpack.c.l.b16 %v5605
      %v5738 = vunpack.c.l.b16 %v5606
      %v5739 = vunpack.c.l.b16 %v5607
      %v5740 = vunpack.c.l.b16 %v5608
      %v5741 = vunpack.c.l.b16 %v5609
      %v5742 = vunpack.c.l.b16 %v5610
      %v5743 = vunpack.c.l.b16 %v5611
      %v5744 = vunpack.c.l.b16 %v5612
      %v5745 = vunpack.c.l.b16 %v5613
      %v5746 = vunpack.c.l.b16 %v5614
      %v5747 = vunpack.c.l.b16 %v5615
      %v5748 = vunpack.c.l.b16 %v5616
      %v5749 = vunpack.c.l.b16 %v5617
      %v5750 = vunpack.c.l.b16 %v5618
      %v5751 = vunpack.c.l.b16 %v5619
      %v5752 = vunpack.c.l.b16 %v5620
      %v5753 = vunpack.c.l.b16 %v5621
      %v5754 = vunpack.c.l.b16 %v5622
      %v5755 = vunpack.c.l.b16 %v5623
      %v5756 = vunpack.c.l.b16 %v5624
      %v5757 = vunpack.c.l.b16 %v5625
      %v5758 = vunpack.c.l.b16 %v5626
      %v5759 = vunpack.c.l.b16 %v5627
      %v5760 = vunpack.c.l.b16 %v5628
      %v5761 = vunpack.c.l.b16 %v5629
      %v5762 = vunpack.c.l.b16 %v5630
      %v5763 = vunpack.c.l.b16 %v5631
      %v5764 = vpack.c.b16 %v5701, %v5700
      %v5765 = vpack.c.b16 %v5703, %v5702
      %v5766 = vpack.c.b16 %v5705, %v5704
      %v5767 = vpack.c.b16 %v5707, %v5706
      %v5768 = vpack.c.b16 %v5709, %v5708
      %v5769 = vpack.c.b16 %v5711, %v5710
      %v5770 = vpack.c.b16 %v5713, %v5712
      %v5771 = vpack.c.b16 %v5715, %v5714
      %v5772 = vpack.c.b16 %v5717, %v5716
      %v5773 = vpack.c.b16 %v5719, %v5718
      %v5774 = vpack.c.b16 %v5721, %v5720
      %v5775 = vpack.c.b16 %v5723, %v5722
      %v5776 = vpack.c.b16 %v5725, %v5724
      %v5777 = vpack.c.b16 %v5727, %v5726
      %v5778 = vpack.c.b16 %v5729, %v5728
      %v5779 = vpack.c.b16 %v5731, %v5730
      %v5780 = vpack.c.b16 %v5733, %v5732
      %v5781 = vpack.c.b16 %v5735, %v5734
      %v5782 = vpack.c.b16 %v5737, %v5736
      %v5783 = vpack.c.b16 %v5739, %v5738
      %v5784 = vpack.c.b16 %v5741, %v5740
      %v5785 = vpack.c.b16 %v5743, %v5742
      %v5786 = vpack.c.b16 %v5745, %v5744
      %v5787 = vpack.c.b16 %v5747, %v5746
      %v5788 = vpack.c.b16 %v5749, %v5748
      %v5789 = vpack.c.b16 %v5751, %v5750
      %v5790 = vpack.c.b16 %v5753, %v5752
      %v5791 = vpack.c.b16 %v5755, %v5754
      %v5792 = vpack.c.b16 %v5757, %v5756
      %v5793 = vpack.c.b16 %v5759, %v5758
      %v5794 = vpack.c.b16 %v5761, %v5760
      %v5795 = vpack.c.b16 %v5763, %v5762
      %5828 = vmatpush.bf16.msra.mxu0 %v5771
      %5829 = vmatpush.bf16.msra.mxu0 %v5770
      %5830 = vmatpush.bf16.msra.mxu0 %v5769
      %5831 = vmatpush.bf16.msra.mxu0 %v5768
      %5832 = vmatpush.bf16.msra.mxu0 %v5767
      %5833 = vmatpush.bf16.msra.mxu0 %v5766
      %5834 = vmatpush.bf16.msra.mxu0 %v5765
      %5835 = vmatpush.bf16.msra.mxu0 %v5764
      %5836 = vmatmul.bf16.gmra.mxu0 %v5504
      %v5837 = vpop.f32.mrf.mxu0
      %v5838 = vadd.f32 %v5634, %v5837
      %v5839 = vpop.f32.mrf.mxu0
      %v5840 = vadd.f32 %v5634, %v5839
      %5841 = vmatmul.bf16.gmra.mxu0 %v5508
      %v5842 = vpop.f32.mrf.mxu0
      %v5843 = vadd.f32 %v5634, %v5842
      %v5844 = vpop.f32.mrf.mxu0
      %v5845 = vadd.f32 %v5634, %v5844
      %5846 = vmatmul.bf16.gmra.mxu0 %v5512
      %v5847 = vpop.f32.mrf.mxu0
      %v5848 = vadd.f32 %v5634, %v5847
      %v5849 = vpop.f32.mrf.mxu0
      %v5850 = vadd.f32 %v5634, %v5849
      %5851 = vmatmul.bf16.gmra.mxu0 %v5516
      %v5852 = vpop.f32.mrf.mxu0
      %v5853 = vadd.f32 %v5634, %v5852
      %v5854 = vpop.f32.mrf.mxu0
      %v5855 = vadd.f32 %v5634, %v5854
      %5856 = vmatmul.bf16.gmra.mxu0 %v5520
      %v5857 = vpop.f32.mrf.mxu0
      %v5858 = vadd.f32 %v5634, %v5857
      %v5859 = vpop.f32.mrf.mxu0
      %v5860 = vadd.f32 %v5634, %v5859
      %5861 = vmatmul.bf16.gmra.mxu0 %v5524
      %v5862 = vpop.f32.mrf.mxu0
      %v5863 = vadd.f32 %v5634, %v5862
      %v5864 = vpop.f32.mrf.mxu0
      %v5865 = vadd.f32 %v5634, %v5864
      %5866 = vmatmul.bf16.gmra.mxu0 %v5528
      %v5867 = vpop.f32.mrf.mxu0
      %v5868 = vadd.f32 %v5634, %v5867
      %v5869 = vpop.f32.mrf.mxu0
      %v5870 = vadd.f32 %v5634, %v5869
      %5871 = vmatmul.bf16.gmra.mxu0 %v5532
      %v5872 = vpop.f32.mrf.mxu0
      %v5873 = vadd.f32 %v5634, %v5872
      %v5874 = vpop.f32.mrf.mxu0
      %v5875 = vadd.f32 %v5634, %v5874
      %5876 = vmatmul.bf16.gmra.mxu0 %v5536
      %v5877 = vpop.f32.mrf.mxu0
      %v5878 = vadd.f32 %v5634, %v5877
      %v5879 = vpop.f32.mrf.mxu0
      %v5880 = vadd.f32 %v5634, %v5879
      %5881 = vmatmul.bf16.gmra.mxu0 %v5540
      %v5882 = vpop.f32.mrf.mxu0
      %v5883 = vadd.f32 %v5634, %v5882
      %v5884 = vpop.f32.mrf.mxu0
      %v5885 = vadd.f32 %v5634, %v5884
      %5886 = vmatmul.bf16.gmra.mxu0 %v5544
      %v5887 = vpop.f32.mrf.mxu0
      %v5888 = vadd.f32 %v5634, %v5887
      %v5889 = vpop.f32.mrf.mxu0
      %v5890 = vadd.f32 %v5634, %v5889
      %5891 = vmatmul.bf16.gmra.mxu0 %v5548
      %v5892 = vpop.f32.mrf.mxu0
      %v5893 = vadd.f32 %v5634, %v5892
      %v5894 = vpop.f32.mrf.mxu0
      %v5895 = vadd.f32 %v5634, %v5894
      %5896 = vmatmul.bf16.gmra.mxu0 %v5552
      %v5897 = vpop.f32.mrf.mxu0
      %v5898 = vadd.f32 %v5634, %v5897
      %v5899 = vpop.f32.mrf.mxu0
      %v5900 = vadd.f32 %v5634, %v5899
      %5901 = vmatmul.bf16.gmra.mxu0 %v5556
      %v5902 = vpop.f32.mrf.mxu0
      %v5903 = vadd.f32 %v5634, %v5902
      %v5904 = vpop.f32.mrf.mxu0
      %v5905 = vadd.f32 %v5634, %v5904
      %5906 = vmatmul.bf16.gmra.mxu0 %v5560
      %v5907 = vpop.f32.mrf.mxu0
      %v5908 = vadd.f32 %v5634, %v5907
      %v5909 = vpop.f32.mrf.mxu0
      %v5910 = vadd.f32 %v5634, %v5909
      %5911 = vmatmul.bf16.gmra.mxu0 %v5564
      %v5912 = vpop.f32.mrf.mxu0
      %v5913 = vadd.f32 %v5634, %v5912
      %v5914 = vpop.f32.mrf.mxu0
      %v5915 = vadd.f32 %v5634, %v5914
      %5916 = vdwg.mxu0
      %5917 = vmatpush.bf16.msra.mxu0 %v5779
      %5918 = vmatpush.bf16.msra.mxu0 %v5778
      %5919 = vmatpush.bf16.msra.mxu0 %v5777
      %5920 = vmatpush.bf16.msra.mxu0 %v5776
      %5921 = vmatpush.bf16.msra.mxu0 %v5775
      %5922 = vmatpush.bf16.msra.mxu0 %v5774
      %5923 = vmatpush.bf16.msra.mxu0 %v5773
      %5924 = vmatpush.bf16.msra.mxu0 %v5772
      %5925 = vmatmul.bf16.gmra.mxu0 %v5505
      %v5926 = vpop.f32.mrf.mxu0
      %v5927 = vadd.f32 %v5838, %v5926
      %v5928 = vpop.f32.mrf.mxu0
      %v5929 = vadd.f32 %v5840, %v5928
      %5930 = vmatmul.bf16.gmra.mxu0 %v5509
      %v5931 = vpop.f32.mrf.mxu0
      %v5932 = vadd.f32 %v5843, %v5931
      %v5933 = vpop.f32.mrf.mxu0
      %v5934 = vadd.f32 %v5845, %v5933
      %5935 = vmatmul.bf16.gmra.mxu0 %v5513
      %v5936 = vpop.f32.mrf.mxu0
      %v5937 = vadd.f32 %v5848, %v5936
      %v5938 = vpop.f32.mrf.mxu0
      %v5939 = vadd.f32 %v5850, %v5938
      %5940 = vmatmul.bf16.gmra.mxu0 %v5517
      %v5941 = vpop.f32.mrf.mxu0
      %v5942 = vadd.f32 %v5853, %v5941
      %v5943 = vpop.f32.mrf.mxu0
      %v5944 = vadd.f32 %v5855, %v5943
      %5945 = vmatmul.bf16.gmra.mxu0 %v5521
      %v5946 = vpop.f32.mrf.mxu0
      %v5947 = vadd.f32 %v5858, %v5946
      %v5948 = vpop.f32.mrf.mxu0
      %v5949 = vadd.f32 %v5860, %v5948
      %5950 = vmatmul.bf16.gmra.mxu0 %v5525
      %v5951 = vpop.f32.mrf.mxu0
      %v5952 = vadd.f32 %v5863, %v5951
      %v5953 = vpop.f32.mrf.mxu0
      %v5954 = vadd.f32 %v5865, %v5953
      %5955 = vmatmul.bf16.gmra.mxu0 %v5529
      %v5956 = vpop.f32.mrf.mxu0
      %v5957 = vadd.f32 %v5868, %v5956
      %v5958 = vpop.f32.mrf.mxu0
      %v5959 = vadd.f32 %v5870, %v5958
      %5960 = vmatmul.bf16.gmra.mxu0 %v5533
      %v5961 = vpop.f32.mrf.mxu0
      %v5962 = vadd.f32 %v5873, %v5961
      %v5963 = vpop.f32.mrf.mxu0
      %v5964 = vadd.f32 %v5875, %v5963
      %5965 = vmatmul.bf16.gmra.mxu0 %v5537
      %v5966 = vpop.f32.mrf.mxu0
      %v5967 = vadd.f32 %v5878, %v5966
      %v5968 = vpop.f32.mrf.mxu0
      %v5969 = vadd.f32 %v5880, %v5968
      %5970 = vmatmul.bf16.gmra.mxu0 %v5541
      %v5971 = vpop.f32.mrf.mxu0
      %v5972 = vadd.f32 %v5883, %v5971
      %v5973 = vpop.f32.mrf.mxu0
      %v5974 = vadd.f32 %v5885, %v5973
      %5975 = vmatmul.bf16.gmra.mxu0 %v5545
      %v5976 = vpop.f32.mrf.mxu0
      %v5977 = vadd.f32 %v5888, %v5976
      %v5978 = vpop.f32.mrf.mxu0
      %v5979 = vadd.f32 %v5890, %v5978
      %5980 = vmatmul.bf16.gmra.mxu0 %v5549
      %v5981 = vpop.f32.mrf.mxu0
      %v5982 = vadd.f32 %v5893, %v5981
      %v5983 = vpop.f32.mrf.mxu0
      %v5984 = vadd.f32 %v5895, %v5983
      %5985 = vmatmul.bf16.gmra.mxu0 %v5553
      %v5986 = vpop.f32.mrf.mxu0
      %v5987 = vadd.f32 %v5898, %v5986
      %v5988 = vpop.f32.mrf.mxu0
      %v5989 = vadd.f32 %v5900, %v5988
      %5990 = vmatmul.bf16.gmra.mxu0 %v5557
      %v5991 = vpop.f32.mrf.mxu0
      %v5992 = vadd.f32 %v5903, %v5991
      %v5993 = vpop.f32.mrf.mxu0
      %v5994 = vadd.f32 %v5905, %v5993
      %5995 = vmatmul.bf16.gmra.mxu0 %v5561
      %v5996 = vpop.f32.mrf.mxu0
      %v5997 = vadd.f32 %v5908, %v5996
      %v5998 = vpop.f32.mrf.mxu0
      %v5999 = vadd.f32 %v5910, %v5998
      %6000 = vmatmul.bf16.gmra.mxu0 %v5565
      %v6001 = vpop.f32.mrf.mxu0
      %v6002 = vadd.f32 %v5913, %v6001
      %v6003 = vpop.f32.mrf.mxu0
      %v6004 = vadd.f32 %v5915, %v6003
      %6005 = vdwg.mxu0
      %6006 = vmatpush.bf16.msra.mxu0 %v5787
      %6007 = vmatpush.bf16.msra.mxu0 %v5786
      %6008 = vmatpush.bf16.msra.mxu0 %v5785
      %6009 = vmatpush.bf16.msra.mxu0 %v5784
      %6010 = vmatpush.bf16.msra.mxu0 %v5783
      %6011 = vmatpush.bf16.msra.mxu0 %v5782
      %6012 = vmatpush.bf16.msra.mxu0 %v5781
      %6013 = vmatpush.bf16.msra.mxu0 %v5780
      %6014 = vmatmul.bf16.gmra.mxu0 %v5506
      %v6015 = vpop.f32.mrf.mxu0
      %v6016 = vadd.f32 %v5927, %v6015
      %v6017 = vpop.f32.mrf.mxu0
      %v6018 = vadd.f32 %v5929, %v6017
      %6019 = vmatmul.bf16.gmra.mxu0 %v5510
      %v6020 = vpop.f32.mrf.mxu0
      %v6021 = vadd.f32 %v5932, %v6020
      %v6022 = vpop.f32.mrf.mxu0
      %v6023 = vadd.f32 %v5934, %v6022
      %6024 = vmatmul.bf16.gmra.mxu0 %v5514
      %v6025 = vpop.f32.mrf.mxu0
      %v6026 = vadd.f32 %v5937, %v6025
      %v6027 = vpop.f32.mrf.mxu0
      %v6028 = vadd.f32 %v5939, %v6027
      %6029 = vmatmul.bf16.gmra.mxu0 %v5518
      %v6030 = vpop.f32.mrf.mxu0
      %v6031 = vadd.f32 %v5942, %v6030
      %v6032 = vpop.f32.mrf.mxu0
      %v6033 = vadd.f32 %v5944, %v6032
      %6034 = vmatmul.bf16.gmra.mxu0 %v5522
      %v6035 = vpop.f32.mrf.mxu0
      %v6036 = vadd.f32 %v5947, %v6035
      %v6037 = vpop.f32.mrf.mxu0
      %v6038 = vadd.f32 %v5949, %v6037
      %6039 = vmatmul.bf16.gmra.mxu0 %v5526
      %v6040 = vpop.f32.mrf.mxu0
      %v6041 = vadd.f32 %v5952, %v6040
      %v6042 = vpop.f32.mrf.mxu0
      %v6043 = vadd.f32 %v5954, %v6042
      %6044 = vmatmul.bf16.gmra.mxu0 %v5530
      %v6045 = vpop.f32.mrf.mxu0
      %v6046 = vadd.f32 %v5957, %v6045
      %v6047 = vpop.f32.mrf.mxu0
      %v6048 = vadd.f32 %v5959, %v6047
      %6049 = vmatmul.bf16.gmra.mxu0 %v5534
      %v6050 = vpop.f32.mrf.mxu0
      %v6051 = vadd.f32 %v5962, %v6050
      %v6052 = vpop.f32.mrf.mxu0
      %v6053 = vadd.f32 %v5964, %v6052
      %6054 = vmatmul.bf16.gmra.mxu0 %v5538
      %v6055 = vpop.f32.mrf.mxu0
      %v6056 = vadd.f32 %v5967, %v6055
      %v6057 = vpop.f32.mrf.mxu0
      %v6058 = vadd.f32 %v5969, %v6057
      %6059 = vmatmul.bf16.gmra.mxu0 %v5542
      %v6060 = vpop.f32.mrf.mxu0
      %v6061 = vadd.f32 %v5972, %v6060
      %v6062 = vpop.f32.mrf.mxu0
      %v6063 = vadd.f32 %v5974, %v6062
      %6064 = vmatmul.bf16.gmra.mxu0 %v5546
      %v6065 = vpop.f32.mrf.mxu0
      %v6066 = vadd.f32 %v5977, %v6065
      %v6067 = vpop.f32.mrf.mxu0
      %v6068 = vadd.f32 %v5979, %v6067
      %6069 = vmatmul.bf16.gmra.mxu0 %v5550
      %v6070 = vpop.f32.mrf.mxu0
      %v6071 = vadd.f32 %v5982, %v6070
      %v6072 = vpop.f32.mrf.mxu0
      %v6073 = vadd.f32 %v5984, %v6072
      %6074 = vmatmul.bf16.gmra.mxu0 %v5554
      %v6075 = vpop.f32.mrf.mxu0
      %v6076 = vadd.f32 %v5987, %v6075
      %v6077 = vpop.f32.mrf.mxu0
      %v6078 = vadd.f32 %v5989, %v6077
      %6079 = vmatmul.bf16.gmra.mxu0 %v5558
      %v6080 = vpop.f32.mrf.mxu0
      %v6081 = vadd.f32 %v5992, %v6080
      %v6082 = vpop.f32.mrf.mxu0
      %v6083 = vadd.f32 %v5994, %v6082
      %6084 = vmatmul.bf16.gmra.mxu0 %v5562
      %v6085 = vpop.f32.mrf.mxu0
      %v6086 = vadd.f32 %v5997, %v6085
      %v6087 = vpop.f32.mrf.mxu0
      %v6088 = vadd.f32 %v5999, %v6087
      %6089 = vmatmul.bf16.gmra.mxu0 %v5566
      %v6090 = vpop.f32.mrf.mxu0
      %v6091 = vadd.f32 %v6002, %v6090
      %v6092 = vpop.f32.mrf.mxu0
      %v6093 = vadd.f32 %v6004, %v6092
      %6094 = vdwg.mxu0
      %6095 = vmatpush.bf16.msra.mxu0 %v5795
      %6096 = vmatpush.bf16.msra.mxu0 %v5794
      %6097 = vmatpush.bf16.msra.mxu0 %v5793
      %6098 = vmatpush.bf16.msra.mxu0 %v5792
      %6099 = vmatpush.bf16.msra.mxu0 %v5791
      %6100 = vmatpush.bf16.msra.mxu0 %v5790
      %6101 = vmatpush.bf16.msra.mxu0 %v5789
      %6102 = vmatpush.bf16.msra.mxu0 %v5788
      %6103 = vmatmul.bf16.gmra.mxu0 %v5507
      %v6104 = vpop.f32.mrf.mxu0
      %v6105 = vadd.f32 %v6016, %v6104
      %v6106 = vpop.f32.mrf.mxu0
      %v6107 = vadd.f32 %v6018, %v6106
      %6108 = vmatmul.bf16.gmra.mxu0 %v5511
      %v6109 = vpop.f32.mrf.mxu0
      %v6110 = vadd.f32 %v6021, %v6109
      %v6111 = vpop.f32.mrf.mxu0
      %v6112 = vadd.f32 %v6023, %v6111
      %6113 = vmatmul.bf16.gmra.mxu0 %v5515
      %v6114 = vpop.f32.mrf.mxu0
      %v6115 = vadd.f32 %v6026, %v6114
      %v6116 = vpop.f32.mrf.mxu0
      %v6117 = vadd.f32 %v6028, %v6116
      %6118 = vmatmul.bf16.gmra.mxu0 %v5519
      %v6119 = vpop.f32.mrf.mxu0
      %v6120 = vadd.f32 %v6031, %v6119
      %v6121 = vpop.f32.mrf.mxu0
      %v6122 = vadd.f32 %v6033, %v6121
      %6123 = vmatmul.bf16.gmra.mxu0 %v5523
      %v6124 = vpop.f32.mrf.mxu0
      %v6125 = vadd.f32 %v6036, %v6124
      %v6126 = vpop.f32.mrf.mxu0
      %v6127 = vadd.f32 %v6038, %v6126
      %6128 = vmatmul.bf16.gmra.mxu0 %v5527
      %v6129 = vpop.f32.mrf.mxu0
      %v6130 = vadd.f32 %v6041, %v6129
      %v6131 = vpop.f32.mrf.mxu0
      %v6132 = vadd.f32 %v6043, %v6131
      %6133 = vmatmul.bf16.gmra.mxu0 %v5531
      %v6134 = vpop.f32.mrf.mxu0
      %v6135 = vadd.f32 %v6046, %v6134
      %v6136 = vpop.f32.mrf.mxu0
      %v6137 = vadd.f32 %v6048, %v6136
      %6138 = vmatmul.bf16.gmra.mxu0 %v5535
      %v6139 = vpop.f32.mrf.mxu0
      %v6140 = vadd.f32 %v6051, %v6139
      %v6141 = vpop.f32.mrf.mxu0
      %v6142 = vadd.f32 %v6053, %v6141
      %6143 = vmatmul.bf16.gmra.mxu0 %v5539
      %v6144 = vpop.f32.mrf.mxu0
      %v6145 = vadd.f32 %v6056, %v6144
      %v6146 = vpop.f32.mrf.mxu0
      %v6147 = vadd.f32 %v6058, %v6146
      %6148 = vmatmul.bf16.gmra.mxu0 %v5543
      %v6149 = vpop.f32.mrf.mxu0
      %v6150 = vadd.f32 %v6061, %v6149
      %v6151 = vpop.f32.mrf.mxu0
      %v6152 = vadd.f32 %v6063, %v6151
      %6153 = vmatmul.bf16.gmra.mxu0 %v5547
      %v6154 = vpop.f32.mrf.mxu0
      %v6155 = vadd.f32 %v6066, %v6154
      %v6156 = vpop.f32.mrf.mxu0
      %v6157 = vadd.f32 %v6068, %v6156
      %6158 = vmatmul.bf16.gmra.mxu0 %v5551
      %v6159 = vpop.f32.mrf.mxu0
      %v6160 = vadd.f32 %v6071, %v6159
      %v6161 = vpop.f32.mrf.mxu0
      %v6162 = vadd.f32 %v6073, %v6161
      %6163 = vmatmul.bf16.gmra.mxu0 %v5555
      %v6164 = vpop.f32.mrf.mxu0
      %v6165 = vadd.f32 %v6076, %v6164
      %v6166 = vpop.f32.mrf.mxu0
      %v6167 = vadd.f32 %v6078, %v6166
      %6168 = vmatmul.bf16.gmra.mxu0 %v5559
      %v6169 = vpop.f32.mrf.mxu0
      %v6170 = vadd.f32 %v6081, %v6169
      %v6171 = vpop.f32.mrf.mxu0
      %v6172 = vadd.f32 %v6083, %v6171
      %6173 = vmatmul.bf16.gmra.mxu0 %v5563
      %v6174 = vpop.f32.mrf.mxu0
      %v6175 = vadd.f32 %v6086, %v6174
      %v6176 = vpop.f32.mrf.mxu0
      %v6177 = vadd.f32 %v6088, %v6176
      %6178 = vmatmul.bf16.gmra.mxu0 %v5567
      %v6179 = vpop.f32.mrf.mxu0
      %v6180 = vadd.f32 %v6091, %v6179
      %v6181 = vpop.f32.mrf.mxu0
      %v6182 = vadd.f32 %v6093, %v6181
      %6183 = vdwg.mxu0
      %6184 = vst [vmem:[%s394] sm:$0xff] %v6105
      %6185 = vst [vmem:[%s394 + $0x8] sm:$0xff] %v6107
      %6186 = vst [vmem:[%s394 + $0x10] sm:$0xff] %v6110
      %6187 = vst [vmem:[%s394 + $0x18] sm:$0xff] %v6112
      %6188 = vst [vmem:[%s394 + $0x20] sm:$0xff] %v6115
      %6189 = vst [vmem:[%s394 + $0x28] sm:$0xff] %v6117
      %6190 = vst [vmem:[%s394 + $0x30] sm:$0xff] %v6120
      %6191 = vst [vmem:[%s394 + $0x38] sm:$0xff] %v6122
      %6192 = vst [vmem:[%s394 + $0x40] sm:$0xff] %v6125
      %6193 = vst [vmem:[%s394 + $0x48] sm:$0xff] %v6127
      %6194 = vst [vmem:[%s394 + $0x50] sm:$0xff] %v6130
      %6195 = vst [vmem:[%s394 + $0x58] sm:$0xff] %v6132
      %6196 = vst [vmem:[%s394 + $0x60] sm:$0xff] %v6135
      %6197 = vst [vmem:[%s394 + $0x68] sm:$0xff] %v6137
      %6198 = vst [vmem:[%s394 + $0x70] sm:$0xff] %v6140
      %6199 = vst [vmem:[%s394 + $0x78] sm:$0xff] %v6142
      %6200 = vst [vmem:[%s394 + $0x80] sm:$0xff] %v6145
      %6201 = vst [vmem:[%s394 + $0x88] sm:$0xff] %v6147
      %6202 = vst [vmem:[%s394 + $0x90] sm:$0xff] %v6150
      %6203 = vst [vmem:[%s394 + $0x98] sm:$0xff] %v6152
      %6204 = vst [vmem:[%s394 + $0xa0] sm:$0xff] %v6155
      %6205 = vst [vmem:[%s394 + $0xa8] sm:$0xff] %v6157
      %6206 = vst [vmem:[%s394 + $0xb0] sm:$0xff] %v6160
      %6207 = vst [vmem:[%s394 + $0xb8] sm:$0xff] %v6162
      %6208 = vst [vmem:[%s394 + $0xc0] sm:$0xff] %v6165
      %6209 = vst [vmem:[%s394 + $0xc8] sm:$0xff] %v6167
      %6210 = vst [vmem:[%s394 + $0xd0] sm:$0xff] %v6170
      %6211 = vst [vmem:[%s394 + $0xd8] sm:$0xff] %v6172
      %6212 = vst [vmem:[%s394 + $0xe0] sm:$0xff] %v6175
      %6213 = vst [vmem:[%s394 + $0xe8] sm:$0xff] %v6177
      %6214 = vst [vmem:[%s394 + $0xf0] sm:$0xff] %v6180
      %6215 = vst [vmem:[%s394 + $0xf8] sm:$0xff] %v6182
      %s6216 = smul.u32 32, %s27
      %p6217 = scmp.lt.s32.totalorder %s6216, 351
      %s6218 = scalar_select %p6217, %s6216, 351
      %s6219 = smul.addr %s6218, 8
      %s6220 = scalar_lea.vmem %s8, %s6219
      // Predicated region
      $region49: #{mlp_with_switch.3} parent=47 // pred_check
        %p6221 = pneg %p225
      $region50: #{mlp_with_switch.3} parent=47 // pred_check_branch
        %6223 = sbr.rel (%p6221) target = $region52
      $region51: #{mlp_with_switch.3} parent=47 // pred_region
        %s6224 = smul.u32 32, %s27
      $region52: #{mlp_with_switch.3} parent=47 // pred_fallthru
        _
    $region48: #{mlp_with_switch.3} parent=5 // pred_fallthru
      _
    %p6225 = scmp.le.s32.totalorder 2, %s22
    // Predicated region
    $region53: #{mlp_with_switch.3} parent=5 // pred_check
      %p6226 = pneg %p6225
    $region54: #{mlp_with_switch.3} parent=5 // pred_check_branch
      %6228 = sbr.rel (%p6226) target = $region56
    $region55: #{mlp_with_switch.3} parent=5 // pred_region
      %s6229 = ssub.s32 %s22, 2
      // Predicated region
      $region57: #{mlp_with_switch.3} parent=55 // pred_check
        %p6230 = pneg %p231
      $region58: #{mlp_with_switch.3} parent=55 // pred_check_branch
        %6232 = sbr.rel (%p6230) target = $region60
      $region59: #{mlp_with_switch.3} parent=55 // pred_region
        %s6233 = smul.u32 32, %s28
        %p6234 = scmp.lt.s32.totalorder %s6233, 351
        %s6235 = scalar_select %p6234, %s6233, 351
        %s6236 = smul.addr %s6235, 8
        %s6237 = scalar_lea.vmem %s8, %s6236
      $region60: #{mlp_with_switch.3} parent=55 // pred_fallthru
        _
    $region56: #{mlp_with_switch.3} parent=5 // pred_fallthru
      _
  $region6: #{mlp_with_switch.3} parent=0 // loop_footer
    %s26 = sadd.s32 1, %s22
  $region7: #{mlp_with_switch.3} parent=0 // loop_footer_branch
    %21 = sbr.rel target = $region3
  $region8: #{mlp_with_switch.3} parent=0 // loop_exit
    _

</llo_original>
